<compile_context>
chip_gen: v6e
topology: v6e:2x2x1
jax: 0.10.0
libtpu: 0.0.40
codegen_flags: <defaults>
</compile_context>

<pallas_src>
import functools

import jax
import jax.numpy as jnp
from jax import lax
from jax.experimental import pallas as pl
from jax.experimental.pallas import tpu as pltpu

LRELU_SLOPE = 0.1
PERIODS = (2, 3, 5, 7, 11)

# Per-DiscriminatorP conv stack configuration (from __init__):
#   (C_in, C_out, K, stride, pad)
CONV_CFG = [
    (1, 32, 5, 3, 2),
    (32, 128, 5, 3, 2),
    (128, 512, 5, 3, 2),
    (512, 1024, 5, 3, 2),
    (1024, 1024, 5, 1, 2),
]
POST_CFG = (1024, 1, 3, 1, 1)

_TM_MAX = 256                      # row tile (sublane-aligned)
_TK_MAX = 2560                     # max contraction tile before splitting K
_VMEM_LIMIT = 48 * 1024 * 1024     # explicit scoped-VMEM limit (safe on v5e/v6e/v7x)


def _round_up(x, m):
    return ((x + m - 1) // m) * m


def _cdiv(a, b):
    return -(-a // b)


def _tile_cfg(cin, cout, k):
    """Static tiling decisions for one conv layer."""
    kdim = k * cin
    n_p = _round_up(cout, 128)
    tn = 256 if n_p % 256 == 0 else 128       # fill the 256-wide MXU on v6e / v7x
    nk = max(1, _cdiv(kdim, _TK_MAX))
    if nk == 1:
        tk, kp = kdim, kdim                   # full contraction, block == array dim
    else:
        tk = _round_up(_cdiv(kdim, nk), 128)  # lane-aligned contraction tile
        kp = tk * nk
    return kdim, kp, tk, nk, n_p, tn


# ---------------------------------------------------------------------------
# Pallas kernel: tiled (bf16 patches @ bf16 W) with f32 accumulator; bias +
# leaky_relu fused into the final contraction step.
# ---------------------------------------------------------------------------
def _conv_mm_kernel(p_ref, w_ref, b_ref, o_ref, acc_ref, *, apply_lrelu):
    @pl.when(pl.program_id(2) == 0)
    def _():
        acc_ref[...] = jnp.zeros_like(acc_ref)

    acc_ref[...] += jnp.dot(p_ref[...], w_ref[...],
                            preferred_element_type=jnp.float32)

    @pl.when(pl.program_id(2) == pl.num_programs(2) - 1)
    def _():
        out = acc_ref[...] + b_ref[...]
        if apply_lrelu:
            out = jnp.where(out > 0, out, LRELU_SLOPE * out)
        o_ref[...] = out


def conv2d_kx1(x, w_mat, b_row, cfg, *, apply_lrelu):
    """Conv2d with kernel (K,1), stride (S,1), padding (pad,0).

    x:     (B, H, W, C_in) float32 (NHWC compute layout)
    w_mat: (Kp, Np) bfloat16, pre-transposed/padded weight matrix ((k, c_in) -> c_out)
    b_row: (1, Np) float32, padded bias row
    Returns (B, H_out, W, C_out) float32.
    """
    cin, cout, k, stride, pad = cfg
    B, H, W, Cin = x.shape
    assert Cin == cin
    kdim, kp, tk, nk, n_p, tn = _tile_cfg(cin, cout, k)

    # Zero-pad along H (conv padding) and im2col (XLA glue, fused with the bf16 cast).
    h_out = (H + 2 * pad - k) // stride + 1
    xp = jnp.pad(x, ((0, 0), (pad, pad), (0, 0), (0, 0)))
    idx = jnp.arange(h_out)[:, None] * stride + jnp.arange(k)[None, :]   # (h_out, K)
    patches = xp[:, idx]                                  # (B, h_out, K, W, Cin)
    patches = jnp.transpose(patches, (0, 1, 3, 2, 4))     # (B, h_out, W, K, Cin)
    m = B * h_out * W
    patches = patches.reshape(m, kdim).astype(jnp.bfloat16)

    tm = min(_TM_MAX, _round_up(m, 8))
    mp = _round_up(m, tm)
    patches = jnp.pad(patches, ((0, mp - m), (0, kp - kdim)))

    grid = (mp // tm, n_p // tn, nk)
    out = pl.pallas_call(
        functools.partial(_conv_mm_kernel, apply_lrelu=apply_lrelu),
        out_shape=jax.ShapeDtypeStruct((mp, n_p), jnp.float32),
        grid_spec=pltpu.PrefetchScalarGridSpec(
            num_scalar_prefetch=0,
            grid=grid,
            in_specs=[
                pl.BlockSpec((tm, tk), lambda i, j, kk: (i, kk)),   # patch tile
                pl.BlockSpec((tk, tn), lambda i, j, kk: (kk, j)),   # weight tile
                pl.BlockSpec((1, tn), lambda i, j, kk: (0, j)),     # bias tile
            ],
            out_specs=pl.BlockSpec((tm, tn), lambda i, j, kk: (i, j)),
            scratch_shapes=[pltpu.VMEM((tm, tn), jnp.float32)],
        ),
        compiler_params=pltpu.CompilerParams(
            dimension_semantics=("parallel", "parallel", "arbitrary"),
            vmem_limit_bytes=_VMEM_LIMIT,
        ),
    )(patches, w_mat, b_row)

    return out[:m, :cout].reshape(B, h_out, W, cout)


# ---------------------------------------------------------------------------
# DiscriminatorP / MultiPeriodDiscriminator forward (glue in plain JAX).
# ---------------------------------------------------------------------------
@functools.partial(jax.jit, static_argnames=("period",))
def discriminator_p_forward(params, x, *, period):
    """x: (B, 1, T) float32 -> (flattened logits (B, -1), fmap tuple in NHWC)."""
    b, c, t = x.shape
    if t % period != 0:
        n_pad = period - t % period
        x = jnp.pad(x, ((0, 0), (0, 0), (0, n_pad)), mode="reflect")
        t = t + n_pad
    x = x.reshape(b, c, t // period, period)        # NCHW, H = t // period, W = period
    x = jnp.transpose(x, (0, 2, 3, 1))              # -> NHWC compute layout

    fmap = []
    for (w_mat, b_row), cfg in zip(params["convs"], CONV_CFG):
        x = conv2d_kx1(x, w_mat, b_row, cfg, apply_lrelu=True)
        # fmaps kept NHWC (values identical to PyTorch's NCHW maps; the
        # feature-matching consumer is elementwise, so layout is irrelevant and we
        # skip a full extra HBM copy per layer).
        fmap.append(x)

    w_mat, b_row = params["conv_post"]
    x = conv2d_kx1(x, w_mat, b_row, POST_CFG, apply_lrelu=False)
    fmap.append(x)

    # conv_post has C_out == 1, so NHWC (B,H,W,1) flatten == NCHW (B,1,H,W) flatten,
    # i.e. identical to torch.flatten(x, 1, -1).
    logits = x.reshape(b, -1)
    return logits, tuple(fmap)


def multi_period_discriminator_forward(all_params, y, y_hat):
    """Runs y and y_hat through each DiscriminatorP in a single batched pass."""
    B = y.shape[0]
    yy = jnp.concatenate([y, y_hat], axis=0)        # halves pallas_call / launch count
    y_d_rs, y_d_gs, fmap_rs, fmap_gs = [], [], [], []
    for params, period in zip(all_params, PERIODS):
        logits, fmaps = discriminator_p_forward(params, yy, period=period)
        y_d_rs.append(logits[:B])
        y_d_gs.append(logits[B:])
        fmap_rs.append([f[:B] for f in fmaps])
        fmap_gs.append([f[B:] for f in fmaps])
    return y_d_rs, y_d_gs, fmap_rs, fmap_gs


# ---------------------------------------------------------------------------
# Parameters: raw PyTorch-layout weights (for the reference) + a one-time
# prepare step that builds the matmul-ready bf16 weight matrices / padded biases.
# ---------------------------------------------------------------------------
def make_raw_params(key):
    """Synthetic deterministic params; weight_norm at init => effective w = v."""
    all_params = []
    for _ in PERIODS:
        convs = []
        for (cin, cout, k, _, _) in CONV_CFG:
            key, kw, kb = jax.random.split(key, 3)
            std = (2.0 / (cin * k)) ** 0.5
            w = std * jax.random.normal(kw, (cout, cin, k), jnp.float32)
            b = 0.01 * jax.random.normal(kb, (cout,), jnp.float32)
            convs.append((w, b))
        cin, cout, k, _, _ = POST_CFG
        key, kw, kb = jax.random.split(key, 3)
        std = (2.0 / (cin * k)) ** 0.5
        w_post = std * jax.random.normal(kw, (cout, cin, k), jnp.float32)
        b_post = 0.01 * jax.random.normal(kb, (cout,), jnp.float32)
        all_params.append({"convs": convs, "conv_post": (w_post, b_post)})
    return all_params


def _prep_conv(w, b, cfg):
    cin, cout, k, _, _ = cfg
    kdim, kp, _, _, n_p, _ = _tile_cfg(cin, cout, k)
    w_mat = jnp.transpose(w, (2, 1, 0)).reshape(kdim, cout)   # (k, c_in) -> c_out
    w_mat = jnp.pad(w_mat, ((0, kp - kdim), (0, n_p - cout))).astype(jnp.bfloat16)
    b_row = jnp.pad(b, (0, n_p - cout)).reshape(1, n_p).astype(jnp.float32)
    return w_mat, b_row


def prepare_params(raw_params):
    prepped = []
    for p in raw_params:
        convs = [_prep_conv(w, b, cfg) for (w, b), cfg in zip(p["convs"], CONV_CFG)]
        post = _prep_conv(p["conv_post"][0], p["conv_post"][1], POST_CFG)
        prepped.append({"convs": convs, "conv_post": post})
    return prepped


# ---------------------------------------------------------------------------
# Pure-JAX reference (lax.conv) for a single DiscriminatorP, using the same
# bf16-input / f32-accumulation precision as the Pallas path.
# ---------------------------------------------------------------------------
def ref_discriminator_p(raw_params, period, x):
    b, c, t = x.shape
    if t % period != 0:
        n_pad = period - t % period
        x = jnp.pad(x, ((0, 0), (0, 0), (0, n_pad)), mode="reflect")
        t = t + n_pad
    x = x.reshape(b, c, t // period, period)

    def conv(x, w, bias, stride, pad):
        out = lax.conv_general_dilated(
            x.astype(jnp.bfloat16), w[..., None].astype(jnp.bfloat16),
            (stride, 1), ((pad, pad), (0, 0)),
            dimension_numbers=("NCHW", "OIHW", "NCHW"),
            preferred_element_type=jnp.float32)
        return out + bias[None, :, None, None]

    for (w, bias), (_, _, _, stride, pad) in zip(raw_params["convs"], CONV_CFG):
        x = conv(x, w, bias, stride, pad)
        x = jnp.where(x > 0, x, LRELU_SLOPE * x)
    w, bias = raw_params["conv_post"]
    x = conv(x, w, bias, POST_CFG[3], POST_CFG[4])
    return x.reshape(b, -1)


if __name__ == "__main__":
    key = jax.random.PRNGKey(0)
    k_params, k_y, k_yh = jax.random.split(key, 3)

    # Small inputs: batch=2, channels=1, T=64 (matches (B, C, T) expected by the module).
    B, C, T = 2, 1, 64
    y = jax.random.normal(k_y, (B, C, T), jnp.float32)
    y_hat = jax.random.normal(k_yh, (B, C, T), jnp.float32)

    raw_params = make_raw_params(k_params)
    all_params = prepare_params(raw_params)

    outs = multi_period_discriminator_forward(all_params, y, y_hat)
    jax.block_until_ready(jax.tree_util.tree_leaves(outs))
    y_d_rs, y_d_gs, fmap_rs, fmap_gs = outs

    # Sanity check the Pallas path against a (same-precision) lax.conv reference.
    ref_r = ref_discriminator_p(raw_params[1], PERIODS[1], y)
    ref_g = ref_discriminator_p(raw_params[1], PERIODS[1], y_hat)
    assert jnp.allclose(y_d_rs[1], ref_r, rtol=2e-2, atol=2e-2), "mismatch vs reference (real)"
    assert jnp.allclose(y_d_gs[1], ref_g, rtol=2e-2, atol=2e-2), "mismatch vs reference (gen)"

    # Basic structural checks (5 discriminators, 6 fmaps each, batch split correct).
    assert len(y_d_rs) == 5 and len(y_d_gs) == 5
    assert all(len(fm) == 6 for fm in fmap_rs) and all(len(fm) == 6 for fm in fmap_gs)
    assert all(fm.shape[0] == B for fms in fmap_rs for fm in fms)

    print("KERNEL_OK")
</pallas_src>

<mosaic_0001>
module attributes {stable_mosaic.version = 11 : i64} {
  func.func @_conv_mm_kernel(%arg0: i32, %arg1: i32, %arg2: i32, %arg3: memref<88x5xbf16, #tpu.memory_space<vmem>>, %arg4: memref<5x128xbf16, #tpu.memory_space<vmem>>, %arg5: memref<1x128xf32, #tpu.memory_space<vmem>>, %arg6: memref<88x128xf32, #tpu.memory_space<vmem>>, %arg7: memref<88x128xf32, #tpu.memory_space<vmem>>) attributes {dimension_semantics = [#tpu.dimension_semantics<parallel>, #tpu.dimension_semantics<parallel>, #tpu.dimension_semantics<arbitrary>], iteration_bounds = array<i64: 1, 1, 1>, scalar_prefetch = 0 : i64, scratch_operands = 1 : i64, tpu.core_type = #tpu.core_type<tc>, window_params = [{transform_indices = @transform_0, window_bounds = array<i64: 88, 5>}, {transform_indices = @transform_1, window_bounds = array<i64: 5, 128>}, {transform_indices = @transform_2, window_bounds = array<i64: 1, 128>}, {transform_indices = @transform_3, window_bounds = array<i64: 88, 128>}]} {
    %c0_i32 = arith.constant 0 : i32
    %0 = arith.cmpi eq, %arg2, %c0_i32 : i32
    %1 = arith.extui %0 : i1 to i32
    %c0_i32_0 = arith.constant 0 : i32
    %2 = arith.cmpi ne, %1, %c0_i32_0 : i32
    scf.if %2 {
      %cst_10 = arith.constant 0.000000e+00 : f32
      %12 = vector.broadcast %cst_10 : f32 to vector<88x128xf32>
      %c0_11 = arith.constant 0 : index
      %c0_12 = arith.constant 0 : index
      %13 = vector.load %arg7[%c0_11, %c0_12] : memref<88x128xf32, #tpu.memory_space<vmem>>, vector<88x128xf32>
      tpu.vector_store %arg7[%c0_11, %c0_12], %12 {strides = array<i32>} : memref<88x128xf32, #tpu.memory_space<vmem>>, vector<88x128xf32>,
    } else {
    }
    %c0 = arith.constant 0 : index
    %c0_1 = arith.constant 0 : index
    %3 = vector.load %arg7[%c0, %c0_1] : memref<88x128xf32, #tpu.memory_space<vmem>>, vector<88x128xf32>
    %c0_2 = arith.constant 0 : index
    %c0_3 = arith.constant 0 : index
    %4 = vector.load %arg3[%c0_2, %c0_3] : memref<88x5xbf16, #tpu.memory_space<vmem>>, vector<88x5xbf16>
    %c0_4 = arith.constant 0 : index
    %c0_5 = arith.constant 0 : index
    %5 = vector.load %arg4[%c0_4, %c0_5] : memref<5x128xbf16, #tpu.memory_space<vmem>>, vector<5x128xbf16>
    %cst = arith.constant dense<0.000000e+00> : vector<88x128xf32>
    %6 = tpu.matmul %4, %5, %cst {dimension_numbers = #tpu.dot_dimension_numbers<[1], [0], [0], [1], [0, 0, 1, 1], [], []>} : vector<88x5xbf16>, vector<5x128xbf16>, vector<88x128xf32> -> vector<88x128xf32>
    %7 = arith.addf %3, %6 : vector<88x128xf32>
    %c0_6 = arith.constant 0 : index
    %c0_7 = arith.constant 0 : index
    %8 = vector.load %arg7[%c0_6, %c0_7] : memref<88x128xf32, #tpu.memory_space<vmem>>, vector<88x128xf32>
    tpu.vector_store %arg7[%c0_6, %c0_7], %7 {strides = array<i32>} : memref<88x128xf32, #tpu.memory_space<vmem>>, vector<88x128xf32>,
    %c0_i32_8 = arith.constant 0 : i32
    %9 = arith.cmpi eq, %arg2, %c0_i32_8 : i32
    %10 = arith.extui %9 : i1 to i32
    %c0_i32_9 = arith.constant 0 : i32
    %11 = arith.cmpi ne, %10, %c0_i32_9 : i32
    scf.if %11 {
      %c0_10 = arith.constant 0 : index
      %c0_11 = arith.constant 0 : index
      %12 = vector.load %arg7[%c0_10, %c0_11] : memref<88x128xf32, #tpu.memory_space<vmem>>, vector<88x128xf32>
      %c0_12 = arith.constant 0 : index
      %c0_13 = arith.constant 0 : index
      %13 = vector.load %arg5[%c0_12, %c0_13] : memref<1x128xf32, #tpu.memory_space<vmem>>, vector<1x128xf32>
      %14 = vector.broadcast %13 : vector<1x128xf32> to vector<88x128xf32>
      %15 = arith.addf %12, %14 : vector<88x128xf32>
      %cst_14 = arith.constant 0.000000e+00 : f32
      %16 = vector.broadcast %cst_14 : f32 to vector<88x128xf32>
      %17 = arith.cmpf ogt, %15, %16 : vector<88x128xf32>
      %cst_15 = arith.constant 1.000000e-01 : f32
      %18 = vector.broadcast %cst_15 : f32 to vector<88x128xf32>
      %19 = arith.mulf %18, %15 : vector<88x128xf32>
      %20 = arith.select %17, %15, %19 : vector<88x128xi1>, vector<88x128xf32>
      %c0_16 = arith.constant 0 : index
      %c0_17 = arith.constant 0 : index
      %21 = vector.load %arg6[%c0_16, %c0_17] : memref<88x128xf32, #tpu.memory_space<vmem>>, vector<88x128xf32>
      tpu.vector_store %arg6[%c0_16, %c0_17], %20 {strides = array<i32>} : memref<88x128xf32, #tpu.memory_space<vmem>>, vector<88x128xf32>,
    } else {
    }
    return
  }
  func.func @transform_0(%arg0: i32, %arg1: i32, %arg2: i32) -> (i32, i32) {
    %c0_i32 = arith.constant 0 : i32
    return %arg0, %arg2 : i32, i32
  }
  func.func @transform_1(%arg0: i32, %arg1: i32, %arg2: i32) -> (i32, i32) {
    %c0_i32 = arith.constant 0 : i32
    return %arg2, %arg1 : i32, i32
  }
  func.func @transform_2(%arg0: i32, %arg1: i32, %arg2: i32) -> (i32, i32) {
    %c0_i32 = arith.constant 0 : i32
    %c0_i32_0 = arith.constant 0 : i32
    return %c0_i32, %arg1 : i32, i32
  }
  func.func @transform_3(%arg0: i32, %arg1: i32, %arg2: i32) -> (i32, i32) {
    %c0_i32 = arith.constant 0 : i32
    return %arg0, %arg1 : i32, i32
  }
}

module attributes {stable_mosaic.version = 11 : i64} {
  func.func @_conv_mm_kernel(%arg0: i32, %arg1: i32, %arg2: i32, %arg3: memref<32x160xbf16, #tpu.memory_space<vmem>>, %arg4: memref<160x128xbf16, #tpu.memory_space<vmem>>, %arg5: memref<1x128xf32, #tpu.memory_space<vmem>>, %arg6: memref<32x128xf32, #tpu.memory_space<vmem>>, %arg7: memref<32x128xf32, #tpu.memory_space<vmem>>) attributes {dimension_semantics = [#tpu.dimension_semantics<parallel>, #tpu.dimension_semantics<parallel>, #tpu.dimension_semantics<arbitrary>], iteration_bounds = array<i64: 1, 1, 1>, scalar_prefetch = 0 : i64, scratch_operands = 1 : i64, tpu.core_type = #tpu.core_type<tc>, window_params = [{transform_indices = @transform_0, window_bounds = array<i64: 32, 160>}, {transform_indices = @transform_1, window_bounds = array<i64: 160, 128>}, {transform_indices = @transform_2, window_bounds = array<i64: 1, 128>}, {transform_indices = @transform_3, window_bounds = array<i64: 32, 128>}]} {
    %c0_i32 = arith.constant 0 : i32
    %0 = arith.cmpi eq, %arg2, %c0_i32 : i32
    %1 = arith.extui %0 : i1 to i32
    %c0_i32_0 = arith.constant 0 : i32
    %2 = arith.cmpi ne, %1, %c0_i32_0 : i32
    scf.if %2 {
      %cst_10 = arith.constant 0.000000e+00 : f32
      %12 = vector.broadcast %cst_10 : f32 to vector<32x128xf32>
      %c0_11 = arith.constant 0 : index
      %c0_12 = arith.constant 0 : index
      %13 = vector.load %arg7[%c0_11, %c0_12] : memref<32x128xf32, #tpu.memory_space<vmem>>, vector<32x128xf32>
      tpu.vector_store %arg7[%c0_11, %c0_12], %12 {strides = array<i32>} : memref<32x128xf32, #tpu.memory_space<vmem>>, vector<32x128xf32>,
    } else {
    }
    %c0 = arith.constant 0 : index
    %c0_1 = arith.constant 0 : index
    %3 = vector.load %arg7[%c0, %c0_1] : memref<32x128xf32, #tpu.memory_space<vmem>>, vector<32x128xf32>
    %c0_2 = arith.constant 0 : index
    %c0_3 = arith.constant 0 : index
    %4 = vector.load %arg3[%c0_2, %c0_3] : memref<32x160xbf16, #tpu.memory_space<vmem>>, vector<32x160xbf16>
    %c0_4 = arith.constant 0 : index
    %c0_5 = arith.constant 0 : index
    %5 = vector.load %arg4[%c0_4, %c0_5] : memref<160x128xbf16, #tpu.memory_space<vmem>>, vector<160x128xbf16>
    %cst = arith.constant dense<0.000000e+00> : vector<32x128xf32>
    %6 = tpu.matmul %4, %5, %cst {dimension_numbers = #tpu.dot_dimension_numbers<[1], [0], [0], [1], [0, 0, 1, 1], [], []>} : vector<32x160xbf16>, vector<160x128xbf16>, vector<32x128xf32> -> vector<32x128xf32>
    %7 = arith.addf %3, %6 : vector<32x128xf32>
    %c0_6 = arith.constant 0 : index
    %c0_7 = arith.constant 0 : index
    %8 = vector.load %arg7[%c0_6, %c0_7] : memref<32x128xf32, #tpu.memory_space<vmem>>, vector<32x128xf32>
    tpu.vector_store %arg7[%c0_6, %c0_7], %7 {strides = array<i32>} : memref<32x128xf32, #tpu.memory_space<vmem>>, vector<32x128xf32>,
    %c0_i32_8 = arith.constant 0 : i32
    %9 = arith.cmpi eq, %arg2, %c0_i32_8 : i32
    %10 = arith.extui %9 : i1 to i32
    %c0_i32_9 = arith.constant 0 : i32
    %11 = arith.cmpi ne, %10, %c0_i32_9 : i32
    scf.if %11 {
      %c0_10 = arith.constant 0 : index
      %c0_11 = arith.constant 0 : index
      %12 = vector.load %arg7[%c0_10, %c0_11] : memref<32x128xf32, #tpu.memory_space<vmem>>, vector<32x128xf32>
      %c0_12 = arith.constant 0 : index
      %c0_13 = arith.constant 0 : index
      %13 = vector.load %arg5[%c0_12, %c0_13] : memref<1x128xf32, #tpu.memory_space<vmem>>, vector<1x128xf32>
      %14 = vector.broadcast %13 : vector<1x128xf32> to vector<32x128xf32>
      %15 = arith.addf %12, %14 : vector<32x128xf32>
      %cst_14 = arith.constant 0.000000e+00 : f32
      %16 = vector.broadcast %cst_14 : f32 to vector<32x128xf32>
      %17 = arith.cmpf ogt, %15, %16 : vector<32x128xf32>
      %cst_15 = arith.constant 1.000000e-01 : f32
      %18 = vector.broadcast %cst_15 : f32 to vector<32x128xf32>
      %19 = arith.mulf %18, %15 : vector<32x128xf32>
      %20 = arith.select %17, %15, %19 : vector<32x128xi1>, vector<32x128xf32>
      %c0_16 = arith.constant 0 : index
      %c0_17 = arith.constant 0 : index
      %21 = vector.load %arg6[%c0_16, %c0_17] : memref<32x128xf32, #tpu.memory_space<vmem>>, vector<32x128xf32>
      tpu.vector_store %arg6[%c0_16, %c0_17], %20 {strides = array<i32>} : memref<32x128xf32, #tpu.memory_space<vmem>>, vector<32x128xf32>,
    } else {
    }
    return
  }
  func.func @transform_0(%arg0: i32, %arg1: i32, %arg2: i32) -> (i32, i32) {
    %c0_i32 = arith.constant 0 : i32
    return %arg0, %arg2 : i32, i32
  }
  func.func @transform_1(%arg0: i32, %arg1: i32, %arg2: i32) -> (i32, i32) {
    %c0_i32 = arith.constant 0 : i32
    return %arg2, %arg1 : i32, i32
  }
  func.func @transform_2(%arg0: i32, %arg1: i32, %arg2: i32) -> (i32, i32) {
    %c0_i32 = arith.constant 0 : i32
    %c0_i32_0 = arith.constant 0 : i32
    return %c0_i32, %arg1 : i32, i32
  }
  func.func @transform_3(%arg0: i32, %arg1: i32, %arg2: i32) -> (i32, i32) {
    %c0_i32 = arith.constant 0 : i32
    return %arg0, %arg1 : i32, i32
  }
}

module attributes {stable_mosaic.version = 11 : i64} {
  func.func @_conv_mm_kernel(%arg0: i32, %arg1: i32, %arg2: i32, %arg3: memref<16x640xbf16, #tpu.memory_space<vmem>>, %arg4: memref<640x256xbf16, #tpu.memory_space<vmem>>, %arg5: memref<1x256xf32, #tpu.memory_space<vmem>>, %arg6: memref<16x256xf32, #tpu.memory_space<vmem>>, %arg7: memref<16x256xf32, #tpu.memory_space<vmem>>) attributes {dimension_semantics = [#tpu.dimension_semantics<parallel>, #tpu.dimension_semantics<parallel>, #tpu.dimension_semantics<arbitrary>], iteration_bounds = array<i64: 1, 2, 1>, scalar_prefetch = 0 : i64, scratch_operands = 1 : i64, tpu.core_type = #tpu.core_type<tc>, window_params = [{transform_indices = @transform_0, window_bounds = array<i64: 16, 640>}, {transform_indices = @transform_1, window_bounds = array<i64: 640, 256>}, {transform_indices = @transform_2, window_bounds = array<i64: 1, 256>}, {transform_indices = @transform_3, window_bounds = array<i64: 16, 256>}]} {
    %c0_i32 = arith.constant 0 : i32
    %0 = arith.cmpi eq, %arg2, %c0_i32 : i32
    %1 = arith.extui %0 : i1 to i32
    %c0_i32_0 = arith.constant 0 : i32
    %2 = arith.cmpi ne, %1, %c0_i32_0 : i32
    scf.if %2 {
      %cst_10 = arith.constant 0.000000e+00 : f32
      %12 = vector.broadcast %cst_10 : f32 to vector<16x256xf32>
      %c0_11 = arith.constant 0 : index
      %c0_12 = arith.constant 0 : index
      %13 = vector.load %arg7[%c0_11, %c0_12] : memref<16x256xf32, #tpu.memory_space<vmem>>, vector<16x256xf32>
      tpu.vector_store %arg7[%c0_11, %c0_12], %12 {strides = array<i32>} : memref<16x256xf32, #tpu.memory_space<vmem>>, vector<16x256xf32>,
    } else {
    }
    %c0 = arith.constant 0 : index
    %c0_1 = arith.constant 0 : index
    %3 = vector.load %arg7[%c0, %c0_1] : memref<16x256xf32, #tpu.memory_space<vmem>>, vector<16x256xf32>
    %c0_2 = arith.constant 0 : index
    %c0_3 = arith.constant 0 : index
    %4 = vector.load %arg3[%c0_2, %c0_3] : memref<16x640xbf16, #tpu.memory_space<vmem>>, vector<16x640xbf16>
    %c0_4 = arith.constant 0 : index
    %c0_5 = arith.constant 0 : index
    %5 = vector.load %arg4[%c0_4, %c0_5] : memref<640x256xbf16, #tpu.memory_space<vmem>>, vector<640x256xbf16>
    %cst = arith.constant dense<0.000000e+00> : vector<16x256xf32>
    %6 = tpu.matmul %4, %5, %cst {dimension_numbers = #tpu.dot_dimension_numbers<[1], [0], [0], [1], [0, 0, 1, 1], [], []>} : vector<16x640xbf16>, vector<640x256xbf16>, vector<16x256xf32> -> vector<16x256xf32>
    %7 = arith.addf %3, %6 : vector<16x256xf32>
    %c0_6 = arith.constant 0 : index
    %c0_7 = arith.constant 0 : index
    %8 = vector.load %arg7[%c0_6, %c0_7] : memref<16x256xf32, #tpu.memory_space<vmem>>, vector<16x256xf32>
    tpu.vector_store %arg7[%c0_6, %c0_7], %7 {strides = array<i32>} : memref<16x256xf32, #tpu.memory_space<vmem>>, vector<16x256xf32>,
    %c0_i32_8 = arith.constant 0 : i32
    %9 = arith.cmpi eq, %arg2, %c0_i32_8 : i32
    %10 = arith.extui %9 : i1 to i32
    %c0_i32_9 = arith.constant 0 : i32
    %11 = arith.cmpi ne, %10, %c0_i32_9 : i32
    scf.if %11 {
      %c0_10 = arith.constant 0 : index
      %c0_11 = arith.constant 0 : index
      %12 = vector.load %arg7[%c0_10, %c0_11] : memref<16x256xf32, #tpu.memory_space<vmem>>, vector<16x256xf32>
      %c0_12 = arith.constant 0 : index
      %c0_13 = arith.constant 0 : index
      %13 = vector.load %arg5[%c0_12, %c0_13] : memref<1x256xf32, #tpu.memory_space<vmem>>, vector<1x256xf32>
      %14 = vector.broadcast %13 : vector<1x256xf32> to vector<16x256xf32>
      %15 = arith.addf %12, %14 : vector<16x256xf32>
      %cst_14 = arith.constant 0.000000e+00 : f32
      %16 = vector.broadcast %cst_14 : f32 to vector<16x256xf32>
      %17 = arith.cmpf ogt, %15, %16 : vector<16x256xf32>
      %cst_15 = arith.constant 1.000000e-01 : f32
      %18 = vector.broadcast %cst_15 : f32 to vector<16x256xf32>
      %19 = arith.mulf %18, %15 : vector<16x256xf32>
      %20 = arith.select %17, %15, %19 : vector<16x256xi1>, vector<16x256xf32>
      %c0_16 = arith.constant 0 : index
      %c0_17 = arith.constant 0 : index
      %21 = vector.load %arg6[%c0_16, %c0_17] : memref<16x256xf32, #tpu.memory_space<vmem>>, vector<16x256xf32>
      tpu.vector_store %arg6[%c0_16, %c0_17], %20 {strides = array<i32>} : memref<16x256xf32, #tpu.memory_space<vmem>>, vector<16x256xf32>,
    } else {
    }
    return
  }
  func.func @transform_0(%arg0: i32, %arg1: i32, %arg2: i32) -> (i32, i32) {
    %c0_i32 = arith.constant 0 : i32
    return %arg0, %arg2 : i32, i32
  }
  func.func @transform_1(%arg0: i32, %arg1: i32, %arg2: i32) -> (i32, i32) {
    %c0_i32 = arith.constant 0 : i32
    return %arg2, %arg1 : i32, i32
  }
  func.func @transform_2(%arg0: i32, %arg1: i32, %arg2: i32) -> (i32, i32) {
    %c0_i32 = arith.constant 0 : i32
    %c0_i32_0 = arith.constant 0 : i32
    return %c0_i32, %arg1 : i32, i32
  }
  func.func @transform_3(%arg0: i32, %arg1: i32, %arg2: i32) -> (i32, i32) {
    %c0_i32 = arith.constant 0 : i32
    return %arg0, %arg1 : i32, i32
  }
}

module attributes {stable_mosaic.version = 11 : i64} {
  func.func @_conv_mm_kernel(%arg0: i32, %arg1: i32, %arg2: i32, %arg3: memref<8x2560xbf16, #tpu.memory_space<vmem>>, %arg4: memref<2560x256xbf16, #tpu.memory_space<vmem>>, %arg5: memref<1x256xf32, #tpu.memory_space<vmem>>, %arg6: memref<8x256xf32, #tpu.memory_space<vmem>>, %arg7: memref<8x256xf32, #tpu.memory_space<vmem>>) attributes {dimension_semantics = [#tpu.dimension_semantics<parallel>, #tpu.dimension_semantics<parallel>, #tpu.dimension_semantics<arbitrary>], iteration_bounds = array<i64: 1, 4, 1>, scalar_prefetch = 0 : i64, scratch_operands = 1 : i64, tpu.core_type = #tpu.core_type<tc>, window_params = [{transform_indices = @transform_0, window_bounds = array<i64: 8, 2560>}, {transform_indices = @transform_1, window_bounds = array<i64: 2560, 256>}, {transform_indices = @transform_2, window_bounds = array<i64: 1, 256>}, {transform_indices = @transform_3, window_bounds = array<i64: 8, 256>}]} {
    %c0_i32 = arith.constant 0 : i32
    %0 = arith.cmpi eq, %arg2, %c0_i32 : i32
    %1 = arith.extui %0 : i1 to i32
    %c0_i32_0 = arith.constant 0 : i32
    %2 = arith.cmpi ne, %1, %c0_i32_0 : i32
    scf.if %2 {
      %cst_10 = arith.constant 0.000000e+00 : f32
      %12 = vector.broadcast %cst_10 : f32 to vector<8x256xf32>
      %c0_11 = arith.constant 0 : index
      %c0_12 = arith.constant 0 : index
      %13 = vector.load %arg7[%c0_11, %c0_12] : memref<8x256xf32, #tpu.memory_space<vmem>>, vector<8x256xf32>
      tpu.vector_store %arg7[%c0_11, %c0_12], %12 {strides = array<i32>} : memref<8x256xf32, #tpu.memory_space<vmem>>, vector<8x256xf32>,
    } else {
    }
    %c0 = arith.constant 0 : index
    %c0_1 = arith.constant 0 : index
    %3 = vector.load %arg7[%c0, %c0_1] : memref<8x256xf32, #tpu.memory_space<vmem>>, vector<8x256xf32>
    %c0_2 = arith.constant 0 : index
    %c0_3 = arith.constant 0 : index
    %4 = vector.load %arg3[%c0_2, %c0_3] : memref<8x2560xbf16, #tpu.memory_space<vmem>>, vector<8x2560xbf16>
    %c0_4 = arith.constant 0 : index
    %c0_5 = arith.constant 0 : index
    %5 = vector.load %arg4[%c0_4, %c0_5] : memref<2560x256xbf16, #tpu.memory_space<vmem>>, vector<2560x256xbf16>
    %cst = arith.constant dense<0.000000e+00> : vector<8x256xf32>
    %6 = tpu.matmul %4, %5, %cst {dimension_numbers = #tpu.dot_dimension_numbers<[1], [0], [0], [1], [0, 0, 1, 1], [], []>} : vector<8x2560xbf16>, vector<2560x256xbf16>, vector<8x256xf32> -> vector<8x256xf32>
    %7 = arith.addf %3, %6 : vector<8x256xf32>
    %c0_6 = arith.constant 0 : index
    %c0_7 = arith.constant 0 : index
    %8 = vector.load %arg7[%c0_6, %c0_7] : memref<8x256xf32, #tpu.memory_space<vmem>>, vector<8x256xf32>
    tpu.vector_store %arg7[%c0_6, %c0_7], %7 {strides = array<i32>} : memref<8x256xf32, #tpu.memory_space<vmem>>, vector<8x256xf32>,
    %c0_i32_8 = arith.constant 0 : i32
    %9 = arith.cmpi eq, %arg2, %c0_i32_8 : i32
    %10 = arith.extui %9 : i1 to i32
    %c0_i32_9 = arith.constant 0 : i32
    %11 = arith.cmpi ne, %10, %c0_i32_9 : i32
    scf.if %11 {
      %c0_10 = arith.constant 0 : index
      %c0_11 = arith.constant 0 : index
      %12 = vector.load %arg7[%c0_10, %c0_11] : memref<8x256xf32, #tpu.memory_space<vmem>>, vector<8x256xf32>
      %c0_12 = arith.constant 0 : index
      %c0_13 = arith.constant 0 : index
      %13 = vector.load %arg5[%c0_12, %c0_13] : memref<1x256xf32, #tpu.memory_space<vmem>>, vector<1x256xf32>
      %14 = vector.broadcast %13 : vector<1x256xf32> to vector<8x256xf32>
      %15 = arith.addf %12, %14 : vector<8x256xf32>
      %cst_14 = arith.constant 0.000000e+00 : f32
      %16 = vector.broadcast %cst_14 : f32 to vector<8x256xf32>
      %17 = arith.cmpf ogt, %15, %16 : vector<8x256xf32>
      %cst_15 = arith.constant 1.000000e-01 : f32
      %18 = vector.broadcast %cst_15 : f32 to vector<8x256xf32>
      %19 = arith.mulf %18, %15 : vector<8x256xf32>
      %20 = arith.select %17, %15, %19 : vector<8x256xi1>, vector<8x256xf32>
      %c0_16 = arith.constant 0 : index
      %c0_17 = arith.constant 0 : index
      %21 = vector.load %arg6[%c0_16, %c0_17] : memref<8x256xf32, #tpu.memory_space<vmem>>, vector<8x256xf32>
      tpu.vector_store %arg6[%c0_16, %c0_17], %20 {strides = array<i32>} : memref<8x256xf32, #tpu.memory_space<vmem>>, vector<8x256xf32>,
    } else {
    }
    return
  }
  func.func @transform_0(%arg0: i32, %arg1: i32, %arg2: i32) -> (i32, i32) {
    %c0_i32 = arith.constant 0 : i32
    return %arg0, %arg2 : i32, i32
  }
  func.func @transform_1(%arg0: i32, %arg1: i32, %arg2: i32) -> (i32, i32) {
    %c0_i32 = arith.constant 0 : i32
    return %arg2, %arg1 : i32, i32
  }
  func.func @transform_2(%arg0: i32, %arg1: i32, %arg2: i32) -> (i32, i32) {
    %c0_i32 = arith.constant 0 : i32
    %c0_i32_0 = arith.constant 0 : i32
    return %c0_i32, %arg1 : i32, i32
  }
  func.func @transform_3(%arg0: i32, %arg1: i32, %arg2: i32) -> (i32, i32) {
    %c0_i32 = arith.constant 0 : i32
    return %arg0, %arg1 : i32, i32
  }
}

module attributes {stable_mosaic.version = 11 : i64} {
  func.func @_conv_mm_kernel(%arg0: i32, %arg1: i32, %arg2: i32, %arg3: memref<8x2560xbf16, #tpu.memory_space<vmem>>, %arg4: memref<2560x256xbf16, #tpu.memory_space<vmem>>, %arg5: memref<1x256xf32, #tpu.memory_space<vmem>>, %arg6: memref<8x256xf32, #tpu.memory_space<vmem>>, %arg7: memref<8x256xf32, #tpu.memory_space<vmem>>) attributes {dimension_semantics = [#tpu.dimension_semantics<parallel>, #tpu.dimension_semantics<parallel>, #tpu.dimension_semantics<arbitrary>], iteration_bounds = array<i64: 1, 4, 2>, scalar_prefetch = 0 : i64, scratch_operands = 1 : i64, tpu.core_type = #tpu.core_type<tc>, window_params = [{transform_indices = @transform_0, window_bounds = array<i64: 8, 2560>}, {transform_indices = @transform_1, window_bounds = array<i64: 2560, 256>}, {transform_indices = @transform_2, window_bounds = array<i64: 1, 256>}, {transform_indices = @transform_3, window_bounds = array<i64: 8, 256>}]} {
    %c0_i32 = arith.constant 0 : i32
    %0 = arith.cmpi eq, %arg2, %c0_i32 : i32
    %1 = arith.extui %0 : i1 to i32
    %c0_i32_0 = arith.constant 0 : i32
    %2 = arith.cmpi ne, %1, %c0_i32_0 : i32
    scf.if %2 {
      %cst_9 = arith.constant 0.000000e+00 : f32
      %12 = vector.broadcast %cst_9 : f32 to vector<8x256xf32>
      %c0_10 = arith.constant 0 : index
      %c0_11 = arith.constant 0 : index
      %13 = vector.load %arg7[%c0_10, %c0_11] : memref<8x256xf32, #tpu.memory_space<vmem>>, vector<8x256xf32>
      tpu.vector_store %arg7[%c0_10, %c0_11], %12 {strides = array<i32>} : memref<8x256xf32, #tpu.memory_space<vmem>>, vector<8x256xf32>,
    } else {
    }
    %c0 = arith.constant 0 : index
    %c0_1 = arith.constant 0 : index
    %3 = vector.load %arg7[%c0, %c0_1] : memref<8x256xf32, #tpu.memory_space<vmem>>, vector<8x256xf32>
    %c0_2 = arith.constant 0 : index
    %c0_3 = arith.constant 0 : index
    %4 = vector.load %arg3[%c0_2, %c0_3] : memref<8x2560xbf16, #tpu.memory_space<vmem>>, vector<8x2560xbf16>
    %c0_4 = arith.constant 0 : index
    %c0_5 = arith.constant 0 : index
    %5 = vector.load %arg4[%c0_4, %c0_5] : memref<2560x256xbf16, #tpu.memory_space<vmem>>, vector<2560x256xbf16>
    %cst = arith.constant dense<0.000000e+00> : vector<8x256xf32>
    %6 = tpu.matmul %4, %5, %cst {dimension_numbers = #tpu.dot_dimension_numbers<[1], [0], [0], [1], [0, 0, 1, 1], [], []>} : vector<8x2560xbf16>, vector<2560x256xbf16>, vector<8x256xf32> -> vector<8x256xf32>
    %7 = arith.addf %3, %6 : vector<8x256xf32>
    %c0_6 = arith.constant 0 : index
    %c0_7 = arith.constant 0 : index
    %8 = vector.load %arg7[%c0_6, %c0_7] : memref<8x256xf32, #tpu.memory_space<vmem>>, vector<8x256xf32>
    tpu.vector_store %arg7[%c0_6, %c0_7], %7 {strides = array<i32>} : memref<8x256xf32, #tpu.memory_space<vmem>>, vector<8x256xf32>,
    %c1_i32 = arith.constant 1 : i32
    %9 = arith.cmpi eq, %arg2, %c1_i32 : i32
    %10 = arith.extui %9 : i1 to i32
    %c0_i32_8 = arith.constant 0 : i32
    %11 = arith.cmpi ne, %10, %c0_i32_8 : i32
    scf.if %11 {
      %c0_9 = arith.constant 0 : index
      %c0_10 = arith.constant 0 : index
      %12 = vector.load %arg7[%c0_9, %c0_10] : memref<8x256xf32, #tpu.memory_space<vmem>>, vector<8x256xf32>
      %c0_11 = arith.constant 0 : index
      %c0_12 = arith.constant 0 : index
      %13 = vector.load %arg5[%c0_11, %c0_12] : memref<1x256xf32, #tpu.memory_space<vmem>>, vector<1x256xf32>
      %14 = vector.broadcast %13 : vector<1x256xf32> to vector<8x256xf32>
      %15 = arith.addf %12, %14 : vector<8x256xf32>
      %cst_13 = arith.constant 0.000000e+00 : f32
      %16 = vector.broadcast %cst_13 : f32 to vector<8x256xf32>
      %17 = arith.cmpf ogt, %15, %16 : vector<8x256xf32>
      %cst_14 = arith.constant 1.000000e-01 : f32
      %18 = vector.broadcast %cst_14 : f32 to vector<8x256xf32>
      %19 = arith.mulf %18, %15 : vector<8x256xf32>
      %20 = arith.select %17, %15, %19 : vector<8x256xi1>, vector<8x256xf32>
      %c0_15 = arith.constant 0 : index
      %c0_16 = arith.constant 0 : index
      %21 = vector.load %arg6[%c0_15, %c0_16] : memref<8x256xf32, #tpu.memory_space<vmem>>, vector<8x256xf32>
      tpu.vector_store %arg6[%c0_15, %c0_16], %20 {strides = array<i32>} : memref<8x256xf32, #tpu.memory_space<vmem>>, vector<8x256xf32>,
    } else {
    }
    return
  }
  func.func @transform_0(%arg0: i32, %arg1: i32, %arg2: i32) -> (i32, i32) {
    %c0_i32 = arith.constant 0 : i32
    return %arg0, %arg2 : i32, i32
  }
  func.func @transform_1(%arg0: i32, %arg1: i32, %arg2: i32) -> (i32, i32) {
    %c0_i32 = arith.constant 0 : i32
    return %arg2, %arg1 : i32, i32
  }
  func.func @transform_2(%arg0: i32, %arg1: i32, %arg2: i32) -> (i32, i32) {
    %c0_i32 = arith.constant 0 : i32
    %c0_i32_0 = arith.constant 0 : i32
    return %c0_i32, %arg1 : i32, i32
  }
  func.func @transform_3(%arg0: i32, %arg1: i32, %arg2: i32) -> (i32, i32) {
    %c0_i32 = arith.constant 0 : i32
    return %arg0, %arg1 : i32, i32
  }
}

module attributes {stable_mosaic.version = 11 : i64} {
  func.func @_conv_mm_kernel(%arg0: i32, %arg1: i32, %arg2: i32, %arg3: memref<8x1536xbf16, #tpu.memory_space<vmem>>, %arg4: memref<1536x128xbf16, #tpu.memory_space<vmem>>, %arg5: memref<1x128xf32, #tpu.memory_space<vmem>>, %arg6: memref<8x128xf32, #tpu.memory_space<vmem>>, %arg7: memref<8x128xf32, #tpu.memory_space<vmem>>) attributes {dimension_semantics = [#tpu.dimension_semantics<parallel>, #tpu.dimension_semantics<parallel>, #tpu.dimension_semantics<arbitrary>], iteration_bounds = array<i64: 1, 1, 2>, scalar_prefetch = 0 : i64, scratch_operands = 1 : i64, tpu.core_type = #tpu.core_type<tc>, window_params = [{transform_indices = @transform_0, window_bounds = array<i64: 8, 1536>}, {transform_indices = @transform_1, window_bounds = array<i64: 1536, 128>}, {transform_indices = @transform_2, window_bounds = array<i64: 1, 128>}, {transform_indices = @transform_3, window_bounds = array<i64: 8, 128>}]} {
    %c0_i32 = arith.constant 0 : i32
    %0 = arith.cmpi eq, %arg2, %c0_i32 : i32
    %1 = arith.extui %0 : i1 to i32
    %c0_i32_0 = arith.constant 0 : i32
    %2 = arith.cmpi ne, %1, %c0_i32_0 : i32
    scf.if %2 {
      %cst_9 = arith.constant 0.000000e+00 : f32
      %12 = vector.broadcast %cst_9 : f32 to vector<8x128xf32>
      %c0_10 = arith.constant 0 : index
      %c0_11 = arith.constant 0 : index
      %13 = vector.load %arg7[%c0_10, %c0_11] : memref<8x128xf32, #tpu.memory_space<vmem>>, vector<8x128xf32>
      tpu.vector_store %arg7[%c0_10, %c0_11], %12 {strides = array<i32>} : memref<8x128xf32, #tpu.memory_space<vmem>>, vector<8x128xf32>,
    } else {
    }
    %c0 = arith.constant 0 : index
    %c0_1 = arith.constant 0 : index
    %3 = vector.load %arg7[%c0, %c0_1] : memref<8x128xf32, #tpu.memory_space<vmem>>, vector<8x128xf32>
    %c0_2 = arith.constant 0 : index
    %c0_3 = arith.constant 0 : index
    %4 = vector.load %arg3[%c0_2, %c0_3] : memref<8x1536xbf16, #tpu.memory_space<vmem>>, vector<8x1536xbf16>
    %c0_4 = arith.constant 0 : index
    %c0_5 = arith.constant 0 : index
    %5 = vector.load %arg4[%c0_4, %c0_5] : memref<1536x128xbf16, #tpu.memory_space<vmem>>, vector<1536x128xbf16>
    %cst = arith.constant dense<0.000000e+00> : vector<8x128xf32>
    %6 = tpu.matmul %4, %5, %cst {dimension_numbers = #tpu.dot_dimension_numbers<[1], [0], [0], [1], [0, 0, 1, 1], [], []>} : vector<8x1536xbf16>, vector<1536x128xbf16>, vector<8x128xf32> -> vector<8x128xf32>
    %7 = arith.addf %3, %6 : vector<8x128xf32>
    %c0_6 = arith.constant 0 : index
    %c0_7 = arith.constant 0 : index
    %8 = vector.load %arg7[%c0_6, %c0_7] : memref<8x128xf32, #tpu.memory_space<vmem>>, vector<8x128xf32>
    tpu.vector_store %arg7[%c0_6, %c0_7], %7 {strides = array<i32>} : memref<8x128xf32, #tpu.memory_space<vmem>>, vector<8x128xf32>,
    %c1_i32 = arith.constant 1 : i32
    %9 = arith.cmpi eq, %arg2, %c1_i32 : i32
    %10 = arith.extui %9 : i1 to i32
    %c0_i32_8 = arith.constant 0 : i32
    %11 = arith.cmpi ne, %10, %c0_i32_8 : i32
    scf.if %11 {
      %c0_9 = arith.constant 0 : index
      %c0_10 = arith.constant 0 : index
      %12 = vector.load %arg7[%c0_9, %c0_10] : memref<8x128xf32, #tpu.memory_space<vmem>>, vector<8x128xf32>
      %c0_11 = arith.constant 0 : index
      %c0_12 = arith.constant 0 : index
      %13 = vector.load %arg5[%c0_11, %c0_12] : memref<1x128xf32, #tpu.memory_space<vmem>>, vector<1x128xf32>
      %14 = vector.broadcast %13 : vector<1x128xf32> to vector<8x128xf32>
      %15 = arith.addf %12, %14 : vector<8x128xf32>
      %c0_13 = arith.constant 0 : index
      %c0_14 = arith.constant 0 : index
      %16 = vector.load %arg6[%c0_13, %c0_14] : memref<8x128xf32, #tpu.memory_space<vmem>>, vector<8x128xf32>
      tpu.vector_store %arg6[%c0_13, %c0_14], %15 {strides = array<i32>} : memref<8x128xf32, #tpu.memory_space<vmem>>, vector<8x128xf32>,
    } else {
    }
    return
  }
  func.func @transform_0(%arg0: i32, %arg1: i32, %arg2: i32) -> (i32, i32) {
    %c0_i32 = arith.constant 0 : i32
    return %arg0, %arg2 : i32, i32
  }
  func.func @transform_1(%arg0: i32, %arg1: i32, %arg2: i32) -> (i32, i32) {
    %c0_i32 = arith.constant 0 : i32
    return %arg2, %arg1 : i32, i32
  }
  func.func @transform_2(%arg0: i32, %arg1: i32, %arg2: i32) -> (i32, i32) {
    %c0_i32 = arith.constant 0 : i32
    %c0_i32_0 = arith.constant 0 : i32
    return %c0_i32, %arg1 : i32, i32
  }
  func.func @transform_3(%arg0: i32, %arg1: i32, %arg2: i32) -> (i32, i32) {
    %c0_i32 = arith.constant 0 : i32
    return %arg0, %arg1 : i32, i32
  }
}

</mosaic_0001>

<llo_original>
// kernel: discriminator_p_forward.6
$region0: #{discriminator_p_forward.6}
  #allocation0 [shape = 'u32[]', space=smem, size = 0x4, offset = 0x4, fixed_abs, tag = 'smem constant byte address 0x4 - core index']
  #allocation1 [shape = 'u32[144,128]{1,0:T(1,128)}', space=vmem, size = 0x12000, scoped, tag = 'internal scratch']
  #allocation2 [shape = 'f32[88,128]{1,0:T(8,128)}', space=vmem, size = 0xb000, scoped, tag = 'scratch operand']
  %s0 = inlined_call_operand.vmem [shape: bf16[88,5], index: 0, kind: input, shape index: {}]
  %s1 = inlined_call_operand.hbm [shape: bf16[5,128], index: 1, kind: input, shape index: {}]
  %s2 = inlined_call_operand.hbm [shape: f32[1,128], index: 2, kind: input, shape index: {}]
  %s3 = inlined_call_operand.vmem [shape: f32[88,128], index: 3, kind: output, shape index: {}]
  %s4 = sld [smem:[#allocation0]]
  $region38: #{discriminator_p_forward.6} parent=0
    _
  %s6 = ssub.s32 1, %s4
  %s7 = scalar_select 0, %s6, %s4
  $region1: #{discriminator_p_forward.6} parent=0
    #allocation3 [shape = 'u8[2048]{0}', space=vmem, size = 0x800, scoped, tag = 'input window, operand 1, single buffered']
    #allocation4 [shape = 's32[1]{0}', space=sflag, size = 0x4, scoped, tag = 'scoped memory for discriminator_p_forward.6']
    #allocation5 [shape = 'u8[512]{0}', space=vmem, size = 0x400, scoped, tag = 'input window, operand 2, single buffered']
    #allocation6 [shape = 's32[1]{0}', space=sflag, size = 0x4, scoped, tag = 'scoped memory for discriminator_p_forward.6']
    %8 = vsyncpa [#allocation4], 0
    %9 = vsyncpa [#allocation6], 0
    // Predicated region
    $region2: #{discriminator_p_forward.6} parent=1 // pred_check
      _
    $region3: #{discriminator_p_forward.6} parent=1 // pred_check_branch
      %11 = sbr.rel (0) target = $region5
    $region4: #{discriminator_p_forward.6} parent=1 // pred_region
      _
    $region5: #{discriminator_p_forward.6} parent=1 // pred_fallthru
      _
    // Predicated region
    $region6: #{discriminator_p_forward.6} parent=1 // pred_check
      _
    $region7: #{discriminator_p_forward.6} parent=1 // pred_check_branch
      %13 = sbr.rel (0) target = $region9
    $region8: #{discriminator_p_forward.6} parent=1 // pred_region
      %s15 = ssub.s32 64, 64
      %16 = vsyncadd [#allocation4], %s15
      %s18 = sshll.u32 [#allocation3], 4
      %s19 = int_to_ptr.vmem [resolvable:$true] %s18
      %21 = dma.hbm_to_vmem [thread:$0]  %s1, 64, %s19, [#allocation4]
    $region9: #{discriminator_p_forward.6} parent=1 // pred_fallthru
      _
    // Predicated region
    $region10: #{discriminator_p_forward.6} parent=1 // pred_check
      _
    $region11: #{discriminator_p_forward.6} parent=1 // pred_check_branch
      %23 = sbr.rel (0) target = $region13
    $region12: #{discriminator_p_forward.6} parent=1 // pred_region
      %s25 = ssub.s32 16, 16
      %26 = vsyncadd [#allocation6], %s25
      %s28 = sshll.u32 [#allocation5], 4
      %s29 = int_to_ptr.vmem [resolvable:$true] %s28
      %31 = dma.hbm_to_vmem [thread:$0]  %s2, 16, %s29, [#allocation6]
    $region13: #{discriminator_p_forward.6} parent=1 // pred_fallthru
      _
    // Predicated region
    $region14: #{discriminator_p_forward.6} parent=1 // pred_check
      _
    $region15: #{discriminator_p_forward.6} parent=1 // pred_check_branch
      %33 = sbr.rel (0) target = $region17
    $region16: #{discriminator_p_forward.6} parent=1 // pred_region
      %34 = dma.done [#allocation4], 64
    $region17: #{discriminator_p_forward.6} parent=1 // pred_fallthru
      _
    // Predicated region
    $region18: #{discriminator_p_forward.6} parent=1 // pred_check
      _
    $region19: #{discriminator_p_forward.6} parent=1 // pred_check_branch
      %36 = sbr.rel (0) target = $region21
    $region20: #{discriminator_p_forward.6} parent=1 // pred_region
      %37 = dma.done [#allocation6], 16
    $region21: #{discriminator_p_forward.6} parent=1 // pred_fallthru
      _
    %p39 = scmp.eq.s32.totalorder 0, 0
    // Predicated region
    $region22: #{discriminator_p_forward.6} parent=1 // pred_check
      %p40 = pneg %p39
    $region23: #{discriminator_p_forward.6} parent=1 // pred_check_branch
      %42 = sbr.rel (%p40) target = $region25
    $region24: #{discriminator_p_forward.6} parent=1 // pred_region
      %43 = vst [vmem:[#allocation2] sm:$0xff] 0.0
      %44 = vst [vmem:[#allocation2 + $0x8] sm:$0xff] 0.0
      %45 = vst [vmem:[#allocation2 + $0x10] sm:$0xff] 0.0
      %46 = vst [vmem:[#allocation2 + $0x18] sm:$0xff] 0.0
      %47 = vst [vmem:[#allocation2 + $0x20] sm:$0xff] 0.0
      %48 = vst [vmem:[#allocation2 + $0x28] sm:$0xff] 0.0
      %49 = vst [vmem:[#allocation2 + $0x30] sm:$0xff] 0.0
      %50 = vst [vmem:[#allocation2 + $0x38] sm:$0xff] 0.0
      %51 = vst [vmem:[#allocation2 + $0x40] sm:$0xff] 0.0
      %52 = vst [vmem:[#allocation2 + $0x48] sm:$0xff] 0.0
      %53 = vst [vmem:[#allocation2 + $0x50] sm:$0xff] 0.0
    $region25: #{discriminator_p_forward.6} parent=1 // pred_fallthru
      _
    %v54 = vld [vmem:[#allocation2] sm:$0xff]
    %v55 = vld [vmem:[#allocation2 + $0x8] sm:$0xff]
    %v56 = vld [vmem:[#allocation2 + $0x10] sm:$0xff]
    %v57 = vld [vmem:[#allocation2 + $0x18] sm:$0xff]
    %v58 = vld [vmem:[#allocation2 + $0x20] sm:$0xff]
    %v59 = vld [vmem:[#allocation2 + $0x28] sm:$0xff]
    %v60 = vld [vmem:[#allocation2 + $0x30] sm:$0xff]
    %v61 = vld [vmem:[#allocation2 + $0x38] sm:$0xff]
    %v62 = vld [vmem:[#allocation2 + $0x40] sm:$0xff]
    %v63 = vld [vmem:[#allocation2 + $0x48] sm:$0xff]
    %v64 = vld [vmem:[#allocation2 + $0x50] sm:$0xff]
    %v65 = vld [vmem:[%s0] sm:$0xf]
    %v66 = vld [vmem:[%s0 + $0x4] sm:$0xf]
    %v67 = vld [vmem:[%s0 + $0x8] sm:$0xf]
    %v68 = vld [vmem:[%s0 + $0xc] sm:$0xf]
    %v69 = vld [vmem:[%s0 + $0x10] sm:$0xf]
    %v70 = vld [vmem:[%s0 + $0x14] sm:$0xf]
    %v71 = vld [vmem:[%s0 + $0x18] sm:$0xf]
    %v72 = vld [vmem:[%s0 + $0x1c] sm:$0xf]
    %v73 = vld [vmem:[%s0 + $0x20] sm:$0xf]
    %v74 = vld [vmem:[%s0 + $0x24] sm:$0xf]
    %v75 = vld [vmem:[%s0 + $0x28] sm:$0xf]
    %v76 = vld [vmem:[#allocation3] sm:$0x7]
    %v88 = vunpack.c.l.b16 %v65
    %v89 = vunpack.c.l.b16 %v66
    %v90 = vunpack.c.l.b16 %v67
    %v91 = vunpack.c.l.b16 %v68
    %v92 = vunpack.c.l.b16 %v69
    %v93 = vunpack.c.l.b16 %v70
    %v94 = vunpack.c.l.b16 %v71
    %v95 = vunpack.c.l.b16 %v72
    %v96 = vunpack.c.l.b16 %v73
    %v97 = vunpack.c.l.b16 %v74
    %v98 = vunpack.c.l.b16 %v75
    %v99 = vpack.c.b16 %v89, %v88
    %v100 = vpack.c.b16 %v91, %v90
    %v101 = vpack.c.b16 %v93, %v92
    %v102 = vpack.c.b16 %v95, %v94
    %v103 = vpack.c.b16 %v97, %v96
    %v104 = vpack.c.b16 %v98, %v98
    %vm105 = vcmask 39936
    %v107 = vsel %vm105, %v99, 0
    %v110 = vsel %vm105, %v100, 0
    %v113 = vsel %vm105, %v101, 0
    %v116 = vsel %vm105, %v102, 0
    %v119 = vsel %vm105, %v103, 0
    %v122 = vsel %vm105, %v104, 0
    %vm124 = vcmask 1041408
    %vm125 = vcmask 1042432
    %v126 = vsel %vm124, 4294967295, 65535
    %v127 = vsel %vm125, %v126, 0
    %v129 = vand.u32 %v76, %v127
    %131 = vmatprep.subr.bf16.mxu0 0
    %132 = vmatpush1.bf16.msra.mxu0 0
    %133 = vmatprep.subr.bf16.mxu0 0
    %134 = vmatpush1.bf16.msra.mxu0 0
    %135 = vmatprep.subr.bf16.mxu0 0
    %136 = vmatpush1.bf16.msra.mxu0 0
    %137 = vmatprep.subr.bf16.mxu0 0
    %138 = vmatpush1.bf16.msra.mxu0 0
    %139 = vmatprep.subr.bf16.mxu0 0
    %140 = vmatpush1.bf16.msra.mxu0 0
    %141 = vmatprep.subr.bf16.mxu0 0
    %142 = vmatpush1.bf16.msra.mxu0 0
    %143 = vmatprep.subr.bf16.mxu0 0
    %144 = vmatpush1.bf16.msra.mxu0 0
    %145 = vmatprep.subr.bf16.mxu0 0
    %146 = vmatpush1.bf16.msra.mxu0 %v129
    %147 = vmatprep.subr.bf16.mxu0 0
    %148 = vmatpush2.bf16.msra.mxu0 0
    %149 = vmatprep.subr.bf16.mxu0 0
    %150 = vmatpush2.bf16.msra.mxu0 0
    %151 = vmatprep.subr.bf16.mxu0 0
    %152 = vmatpush2.bf16.msra.mxu0 0
    %153 = vmatprep.subr.bf16.mxu0 0
    %154 = vmatpush2.bf16.msra.mxu0 0
    %155 = vmatprep.subr.bf16.mxu0 0
    %156 = vmatpush2.bf16.msra.mxu0 0
    %157 = vmatprep.subr.bf16.mxu0 0
    %158 = vmatpush2.bf16.msra.mxu0 0
    %159 = vmatprep.subr.bf16.mxu0 0
    %160 = vmatpush2.bf16.msra.mxu0 0
    %161 = vmatprep.subr.bf16.mxu0 0
    %162 = vmatpush2.bf16.msra.mxu0 0
    %163 = vmatprep.mubr.bf16.mxu0 0
    %164 = vmatmul.mubr.bf16.gmra.mxu0 %v107
    %v165 = vpop.f32.mrf.mxu0
    %v166 = vadd.f32 0.0, %v165
    %v167 = vpop.f32.mrf.mxu0
    %v168 = vpop.f32.mrf.mxu0
    %v169 = vadd.f32 0.0, %v168
    %v170 = vpop.f32.mrf.mxu0
    %171 = vmatprep.mubr.bf16.mxu0 0
    %172 = vmatmul.mubr.bf16.gmra.mxu0 %v110
    %v173 = vpop.f32.mrf.mxu0
    %v174 = vadd.f32 0.0, %v173
    %v175 = vpop.f32.mrf.mxu0
    %v176 = vpop.f32.mrf.mxu0
    %v177 = vadd.f32 0.0, %v176
    %v178 = vpop.f32.mrf.mxu0
    %179 = vmatprep.mubr.bf16.mxu0 0
    %180 = vmatmul.mubr.bf16.gmra.mxu0 %v113
    %v181 = vpop.f32.mrf.mxu0
    %v182 = vadd.f32 0.0, %v181
    %v183 = vpop.f32.mrf.mxu0
    %v184 = vpop.f32.mrf.mxu0
    %v185 = vadd.f32 0.0, %v184
    %v186 = vpop.f32.mrf.mxu0
    %187 = vmatprep.mubr.bf16.mxu0 0
    %188 = vmatmul.mubr.bf16.gmra.mxu0 %v116
    %v189 = vpop.f32.mrf.mxu0
    %v190 = vadd.f32 0.0, %v189
    %v191 = vpop.f32.mrf.mxu0
    %v192 = vpop.f32.mrf.mxu0
    %v193 = vadd.f32 0.0, %v192
    %v194 = vpop.f32.mrf.mxu0
    %195 = vmatprep.mubr.bf16.mxu0 0
    %196 = vmatmul.mubr.bf16.gmra.mxu0 %v119
    %v197 = vpop.f32.mrf.mxu0
    %v198 = vadd.f32 0.0, %v197
    %v199 = vpop.f32.mrf.mxu0
    %v200 = vpop.f32.mrf.mxu0
    %v201 = vadd.f32 0.0, %v200
    %v202 = vpop.f32.mrf.mxu0
    %203 = vmatprep.mubr.bf16.mxu0 0
    %204 = vmatmul.mubr.bf16.gmra.mxu0 %v122
    %v205 = vpop.f32.mrf.mxu0
    %v206 = vadd.f32 0.0, %v205
    %v207 = vpop.f32.mrf.mxu0
    %v208 = vpop.f32.mrf.mxu0
    %v209 = vpop.f32.mrf.mxu0
    %210 = vdwg.mxu0
    %v211 = vadd.f32 %v54, %v166
    %v212 = vadd.f32 %v55, %v169
    %v213 = vadd.f32 %v56, %v174
    %v214 = vadd.f32 %v57, %v177
    %v215 = vadd.f32 %v58, %v182
    %v216 = vadd.f32 %v59, %v185
    %v217 = vadd.f32 %v60, %v190
    %v218 = vadd.f32 %v61, %v193
    %v219 = vadd.f32 %v62, %v198
    %v220 = vadd.f32 %v63, %v201
    %v221 = vadd.f32 %v64, %v206
    %222 = vst [vmem:[#allocation2] sm:$0xff] %v211
    %223 = vst [vmem:[#allocation2 + $0x8] sm:$0xff] %v212
    %224 = vst [vmem:[#allocation2 + $0x10] sm:$0xff] %v213
    %225 = vst [vmem:[#allocation2 + $0x18] sm:$0xff] %v214
    %226 = vst [vmem:[#allocation2 + $0x20] sm:$0xff] %v215
    %227 = vst [vmem:[#allocation2 + $0x28] sm:$0xff] %v216
    %228 = vst [vmem:[#allocation2 + $0x30] sm:$0xff] %v217
    %229 = vst [vmem:[#allocation2 + $0x38] sm:$0xff] %v218
    %230 = vst [vmem:[#allocation2 + $0x40] sm:$0xff] %v219
    %231 = vst [vmem:[#allocation2 + $0x48] sm:$0xff] %v220
    %232 = vst [vmem:[#allocation2 + $0x50] sm:$0xff] %v221
    // Predicated region
    $region26: #{discriminator_p_forward.6} parent=1 // pred_check
      %p233 = pneg %p39
    $region27: #{discriminator_p_forward.6} parent=1 // pred_check_branch
      %235 = sbr.rel (%p233) target = $region29
    $region28: #{discriminator_p_forward.6} parent=1 // pred_region
      %v236 = vld [vmem:[#allocation2] sm:$0xff]
      %v237 = vld [vmem:[#allocation2 + $0x8] sm:$0xff]
      %v238 = vld [vmem:[#allocation2 + $0x10] sm:$0xff]
      %v239 = vld [vmem:[#allocation2 + $0x18] sm:$0xff]
      %v240 = vld [vmem:[#allocation2 + $0x20] sm:$0xff]
      %v241 = vld [vmem:[#allocation2 + $0x28] sm:$0xff]
      %v242 = vld [vmem:[#allocation2 + $0x30] sm:$0xff]
      %v243 = vld [vmem:[#allocation2 + $0x38] sm:$0xff]
      %v244 = vld [vmem:[#allocation2 + $0x40] sm:$0xff]
      %v245 = vld [vmem:[#allocation2 + $0x48] sm:$0xff]
      %v246 = vld [vmem:[#allocation2 + $0x50] sm:$0xff]
      %v247 = vld [vmem:[#allocation5] sm:$0x1]
      %v249 = vlaneseq
      %v250 = vshrl.u32 %v249, 7
      %v251 = vsub.s32 0, %v250
      %v252 = vrot.slane %v247, %v251
      %v254 = vadd.f32 %v236, %v252
      %v255 = vadd.f32 %v237, %v252
      %v256 = vadd.f32 %v238, %v252
      %v257 = vadd.f32 %v239, %v252
      %v258 = vadd.f32 %v240, %v252
      %v259 = vadd.f32 %v241, %v252
      %v260 = vadd.f32 %v242, %v252
      %v261 = vadd.f32 %v243, %v252
      %v262 = vadd.f32 %v244, %v252
      %v263 = vadd.f32 %v245, %v252
      %v264 = vadd.f32 %v246, %v252
      %vm265 = vcmp.gt.f32.partialorder %v254, 0.0
      %vm266 = vcmp.gt.f32.partialorder %v255, 0.0
      %vm267 = vcmp.gt.f32.partialorder %v256, 0.0
      %vm268 = vcmp.gt.f32.partialorder %v257, 0.0
      %vm269 = vcmp.gt.f32.partialorder %v258, 0.0
      %vm270 = vcmp.gt.f32.partialorder %v259, 0.0
      %vm271 = vcmp.gt.f32.partialorder %v260, 0.0
      %vm272 = vcmp.gt.f32.partialorder %v261, 0.0
      %vm273 = vcmp.gt.f32.partialorder %v262, 0.0
      %vm274 = vcmp.gt.f32.partialorder %v263, 0.0
      %vm275 = vcmp.gt.f32.partialorder %v264, 0.0
      %v276 = vmul.f32 %v254, 0.1
      %v277 = vmul.f32 %v255, 0.1
      %v278 = vmul.f32 %v256, 0.1
      %v279 = vmul.f32 %v257, 0.1
      %v280 = vmul.f32 %v258, 0.1
      %v281 = vmul.f32 %v259, 0.1
      %v282 = vmul.f32 %v260, 0.1
      %v283 = vmul.f32 %v261, 0.1
      %v284 = vmul.f32 %v262, 0.1
      %v285 = vmul.f32 %v263, 0.1
      %v286 = vmul.f32 %v264, 0.1
      %v287 = vsel %vm265, %v254, %v276
      %v288 = vsel %vm266, %v255, %v277
      %v289 = vsel %vm267, %v256, %v278
      %v290 = vsel %vm268, %v257, %v279
      %v291 = vsel %vm269, %v258, %v280
      %v292 = vsel %vm270, %v259, %v281
      %v293 = vsel %vm271, %v260, %v282
      %v294 = vsel %vm272, %v261, %v283
      %v295 = vsel %vm273, %v262, %v284
      %v296 = vsel %vm274, %v263, %v285
      %v297 = vsel %vm275, %v264, %v286
      %298 = vst [vmem:[%s3] sm:$0xff] %v287
      %299 = vst [vmem:[%s3 + $0x8] sm:$0xff] %v288
      %300 = vst [vmem:[%s3 + $0x10] sm:$0xff] %v289
      %301 = vst [vmem:[%s3 + $0x18] sm:$0xff] %v290
      %302 = vst [vmem:[%s3 + $0x20] sm:$0xff] %v291
      %303 = vst [vmem:[%s3 + $0x28] sm:$0xff] %v292
      %304 = vst [vmem:[%s3 + $0x30] sm:$0xff] %v293
      %305 = vst [vmem:[%s3 + $0x38] sm:$0xff] %v294
      %306 = vst [vmem:[%s3 + $0x40] sm:$0xff] %v295
      %307 = vst [vmem:[%s3 + $0x48] sm:$0xff] %v296
      %308 = vst [vmem:[%s3 + $0x50] sm:$0xff] %v297
    $region29: #{discriminator_p_forward.6} parent=1 // pred_fallthru
      _
    // Predicated region
    $region30: #{discriminator_p_forward.6} parent=1 // pred_check
      _
    $region31: #{discriminator_p_forward.6} parent=1 // pred_check_branch
      %310 = sbr.rel (0) target = $region33
    $region32: #{discriminator_p_forward.6} parent=1 // pred_region
      _
    $region33: #{discriminator_p_forward.6} parent=1 // pred_fallthru
      _
    // Predicated region
    $region34: #{discriminator_p_forward.6} parent=1 // pred_check
      _
    $region35: #{discriminator_p_forward.6} parent=1 // pred_check_branch
      %312 = sbr.rel (0) target = $region37
    $region36: #{discriminator_p_forward.6} parent=1 // pred_region
      _
    $region37: #{discriminator_p_forward.6} parent=1 // pred_fallthru
      _
    %313 = vsyncpa [#allocation4], 1
    %314 = vsyncpa [#allocation6], 1

// kernel: discriminator_p_forward.7
$region0: #{discriminator_p_forward.7}
  #allocation0 [shape = 'u32[]', space=smem, size = 0x4, offset = 0x4, fixed_abs, tag = 'smem constant byte address 0x4 - core index']
  #allocation1 [shape = 'u32[144,128]{1,0:T(1,128)}', space=vmem, size = 0x12000, scoped, tag = 'internal scratch']
  #allocation2 [shape = 'f32[32,128]{1,0:T(8,128)}', space=vmem, size = 0x4000, scoped, tag = 'scratch operand']
  %s0 = inlined_call_operand.vmem [shape: bf16[32,160], index: 0, kind: input, shape index: {}]
  %s1 = inlined_call_operand.hbm [shape: bf16[160,128], index: 1, kind: input, shape index: {}]
  %s2 = inlined_call_operand.hbm [shape: f32[1,128], index: 2, kind: input, shape index: {}]
  %s3 = inlined_call_operand.vmem [shape: f32[32,128], index: 3, kind: output, shape index: {}]
  %s4 = sld [smem:[#allocation0]]
  $region38: #{discriminator_p_forward.7} parent=0
    _
  %s6 = ssub.s32 1, %s4
  %s7 = scalar_select 0, %s6, %s4
  $region1: #{discriminator_p_forward.7} parent=0
    #allocation3 [shape = 'u8[40960]{0}', space=vmem, size = 0xa000, scoped, tag = 'input window, operand 1, single buffered']
    #allocation4 [shape = 's32[1]{0}', space=sflag, size = 0x4, scoped, tag = 'scoped memory for discriminator_p_forward.7']
    #allocation5 [shape = 'u8[512]{0}', space=vmem, size = 0x400, scoped, tag = 'input window, operand 2, single buffered']
    #allocation6 [shape = 's32[1]{0}', space=sflag, size = 0x4, scoped, tag = 'scoped memory for discriminator_p_forward.7']
    %8 = vsyncpa [#allocation4], 0
    %9 = vsyncpa [#allocation6], 0
    // Predicated region
    $region2: #{discriminator_p_forward.7} parent=1 // pred_check
      _
    $region3: #{discriminator_p_forward.7} parent=1 // pred_check_branch
      %11 = sbr.rel (0) target = $region5
    $region4: #{discriminator_p_forward.7} parent=1 // pred_region
      _
    $region5: #{discriminator_p_forward.7} parent=1 // pred_fallthru
      _
    // Predicated region
    $region6: #{discriminator_p_forward.7} parent=1 // pred_check
      _
    $region7: #{discriminator_p_forward.7} parent=1 // pred_check_branch
      %13 = sbr.rel (0) target = $region9
    $region8: #{discriminator_p_forward.7} parent=1 // pred_region
      %s15 = ssub.s32 1280, 1280
      %16 = vsyncadd [#allocation4], %s15
      %s17 = sshll.u32 [#allocation3], 4
      %s18 = int_to_ptr.vmem [resolvable:$true] %s17
      %23 = dma.hbm_to_vmem [thread:$0]  %s1, 1280, %s18, [#allocation4], 64, 64, 4
    $region9: #{discriminator_p_forward.7} parent=1 // pred_fallthru
      _
    // Predicated region
    $region10: #{discriminator_p_forward.7} parent=1 // pred_check
      _
    $region11: #{discriminator_p_forward.7} parent=1 // pred_check_branch
      %25 = sbr.rel (0) target = $region13
    $region12: #{discriminator_p_forward.7} parent=1 // pred_region
      %s27 = ssub.s32 16, 16
      %28 = vsyncadd [#allocation6], %s27
      %s30 = sshll.u32 [#allocation5], 4
      %s31 = int_to_ptr.vmem [resolvable:$true] %s30
      %33 = dma.hbm_to_vmem [thread:$0]  %s2, 16, %s31, [#allocation6]
    $region13: #{discriminator_p_forward.7} parent=1 // pred_fallthru
      _
    // Predicated region
    $region14: #{discriminator_p_forward.7} parent=1 // pred_check
      _
    $region15: #{discriminator_p_forward.7} parent=1 // pred_check_branch
      %35 = sbr.rel (0) target = $region17
    $region16: #{discriminator_p_forward.7} parent=1 // pred_region
      %36 = dma.done [#allocation4], 1280
    $region17: #{discriminator_p_forward.7} parent=1 // pred_fallthru
      _
    // Predicated region
    $region18: #{discriminator_p_forward.7} parent=1 // pred_check
      _
    $region19: #{discriminator_p_forward.7} parent=1 // pred_check_branch
      %38 = sbr.rel (0) target = $region21
    $region20: #{discriminator_p_forward.7} parent=1 // pred_region
      %39 = dma.done [#allocation6], 16
    $region21: #{discriminator_p_forward.7} parent=1 // pred_fallthru
      _
    %p41 = scmp.eq.s32.totalorder 0, 0
    // Predicated region
    $region22: #{discriminator_p_forward.7} parent=1 // pred_check
      %p42 = pneg %p41
    $region23: #{discriminator_p_forward.7} parent=1 // pred_check_branch
      %44 = sbr.rel (%p42) target = $region25
    $region24: #{discriminator_p_forward.7} parent=1 // pred_region
      %45 = vst [vmem:[#allocation2] sm:$0xff] 0.0
      %46 = vst [vmem:[#allocation2 + $0x8] sm:$0xff] 0.0
      %47 = vst [vmem:[#allocation2 + $0x10] sm:$0xff] 0.0
      %48 = vst [vmem:[#allocation2 + $0x18] sm:$0xff] 0.0
    $region25: #{discriminator_p_forward.7} parent=1 // pred_fallthru
      _
    %v49 = vld [vmem:[#allocation2] sm:$0xff]
    %v50 = vld [vmem:[#allocation2 + $0x8] sm:$0xff]
    %v51 = vld [vmem:[#allocation2 + $0x10] sm:$0xff]
    %v52 = vld [vmem:[#allocation2 + $0x18] sm:$0xff]
    %v53 = vld [vmem:[%s0] sm:$0xff]
    %v54 = vld [vmem:[%s0 + $0x8] sm:$0xff]
    %v55 = vld [vmem:[%s0 + $0x10] sm:$0xff]
    %v56 = vld [vmem:[%s0 + $0x18] sm:$0xff]
    %v57 = vld [vmem:[#allocation3] sm:$0xf]
    %v58 = vld [vmem:[#allocation3 + $0x4] sm:$0xf]
    %v59 = vld [vmem:[#allocation3 + $0x8] sm:$0xf]
    %v60 = vld [vmem:[#allocation3 + $0xc] sm:$0xf]
    %v61 = vld [vmem:[#allocation3 + $0x10] sm:$0xf]
    %v62 = vld [vmem:[#allocation3 + $0x14] sm:$0xf]
    %v63 = vld [vmem:[#allocation3 + $0x18] sm:$0xf]
    %v64 = vld [vmem:[#allocation3 + $0x1c] sm:$0xf]
    %v65 = vld [vmem:[#allocation3 + $0x20] sm:$0xf]
    %v66 = vld [vmem:[#allocation3 + $0x24] sm:$0xf]
    %v67 = vld [vmem:[#allocation3 + $0x28] sm:$0xf]
    %v68 = vld [vmem:[#allocation3 + $0x2c] sm:$0xf]
    %v69 = vld [vmem:[#allocation3 + $0x30] sm:$0xf]
    %v70 = vld [vmem:[#allocation3 + $0x34] sm:$0xf]
    %v71 = vld [vmem:[#allocation3 + $0x38] sm:$0xf]
    %v72 = vld [vmem:[#allocation3 + $0x3c] sm:$0xf]
    %v73 = vld [vmem:[#allocation3 + $0x40] sm:$0xf]
    %v74 = vld [vmem:[#allocation3 + $0x44] sm:$0xf]
    %v75 = vld [vmem:[#allocation3 + $0x48] sm:$0xf]
    %v76 = vld [vmem:[#allocation3 + $0x4c] sm:$0xf]
    %v81 = vunpack.c.l.b16 %v53
    %v82 = vunpack.c.h.b16 %v53
    %v83 = vunpack.c.l.b16 %v54
    %v84 = vunpack.c.h.b16 %v54
    %v85 = vunpack.c.l.b16 %v55
    %v86 = vunpack.c.h.b16 %v55
    %v87 = vunpack.c.l.b16 %v56
    %v88 = vunpack.c.h.b16 %v56
    %v89 = vpack.c.b16 %v83, %v81
    %v90 = vpack.c.b16 %v84, %v82
    %v91 = vpack.c.b16 %v87, %v85
    %v92 = vpack.c.b16 %v88, %v86
    %v115 = vunpack.c.l.b16 %v57
    %v116 = vunpack.c.l.b16 %v58
    %v117 = vunpack.c.l.b16 %v59
    %v118 = vunpack.c.l.b16 %v60
    %v119 = vunpack.c.l.b16 %v61
    %v120 = vunpack.c.l.b16 %v62
    %v121 = vunpack.c.l.b16 %v63
    %v122 = vunpack.c.l.b16 %v64
    %v123 = vunpack.c.l.b16 %v65
    %v124 = vunpack.c.l.b16 %v66
    %v125 = vunpack.c.l.b16 %v67
    %v126 = vunpack.c.l.b16 %v68
    %v127 = vunpack.c.l.b16 %v69
    %v128 = vunpack.c.l.b16 %v70
    %v129 = vunpack.c.l.b16 %v71
    %v130 = vunpack.c.l.b16 %v72
    %v131 = vunpack.c.l.b16 %v73
    %v132 = vunpack.c.l.b16 %v74
    %v133 = vunpack.c.l.b16 %v75
    %v134 = vunpack.c.l.b16 %v76
    %v135 = vpack.c.b16 %v116, %v115
    %v136 = vpack.c.b16 %v118, %v117
    %v137 = vpack.c.b16 %v120, %v119
    %v138 = vpack.c.b16 %v122, %v121
    %v139 = vpack.c.b16 %v124, %v123
    %v140 = vpack.c.b16 %v126, %v125
    %v141 = vpack.c.b16 %v128, %v127
    %v142 = vpack.c.b16 %v130, %v129
    %v143 = vpack.c.b16 %v132, %v131
    %v144 = vpack.c.b16 %v134, %v133
    %vm155 = vcmask 261120
    %v157 = vsel %vm155, %v90, 0
    %v160 = vsel %vm155, %v92, 0
    %162 = vmatprep.subr.bf16.mxu0 0
    %163 = vmatpush1.bf16.msra.mxu0 %v142
    %164 = vmatprep.subr.bf16.mxu0 0
    %165 = vmatpush1.bf16.msra.mxu0 %v141
    %166 = vmatprep.subr.bf16.mxu0 0
    %167 = vmatpush1.bf16.msra.mxu0 %v140
    %168 = vmatprep.subr.bf16.mxu0 0
    %169 = vmatpush1.bf16.msra.mxu0 %v139
    %170 = vmatprep.subr.bf16.mxu0 0
    %171 = vmatpush1.bf16.msra.mxu0 %v138
    %172 = vmatprep.subr.bf16.mxu0 0
    %173 = vmatpush1.bf16.msra.mxu0 %v137
    %174 = vmatprep.subr.bf16.mxu0 0
    %175 = vmatpush1.bf16.msra.mxu0 %v136
    %176 = vmatprep.subr.bf16.mxu0 0
    %177 = vmatpush1.bf16.msra.mxu0 %v135
    %178 = vmatprep.subr.bf16.mxu0 0
    %179 = vmatpush2.bf16.msra.mxu0 0
    %180 = vmatprep.subr.bf16.mxu0 0
    %181 = vmatpush2.bf16.msra.mxu0 0
    %182 = vmatprep.subr.bf16.mxu0 0
    %183 = vmatpush2.bf16.msra.mxu0 0
    %184 = vmatprep.subr.bf16.mxu0 0
    %185 = vmatpush2.bf16.msra.mxu0 0
    %186 = vmatprep.subr.bf16.mxu0 0
    %187 = vmatpush2.bf16.msra.mxu0 0
    %188 = vmatprep.subr.bf16.mxu0 0
    %189 = vmatpush2.bf16.msra.mxu0 0
    %190 = vmatprep.subr.bf16.mxu0 0
    %191 = vmatpush2.bf16.msra.mxu0 %v144
    %192 = vmatprep.subr.bf16.mxu0 0
    %193 = vmatpush2.bf16.msra.mxu0 %v143
    %194 = vmatprep.mubr.bf16.mxu0 %v157
    %195 = vmatmul.mubr.bf16.gmra.mxu0 %v89
    %v196 = vpop.f32.mrf.mxu0
    %v197 = vadd.f32 0.0, %v196
    %v198 = vpop.f32.mrf.mxu0
    %v199 = vpop.f32.mrf.mxu0
    %v200 = vadd.f32 0.0, %v199
    %v201 = vpop.f32.mrf.mxu0
    %202 = vmatprep.mubr.bf16.mxu0 %v160
    %203 = vmatmul.mubr.bf16.gmra.mxu0 %v91
    %v204 = vpop.f32.mrf.mxu0
    %v205 = vadd.f32 0.0, %v204
    %v206 = vpop.f32.mrf.mxu0
    %v207 = vpop.f32.mrf.mxu0
    %v208 = vadd.f32 0.0, %v207
    %v209 = vpop.f32.mrf.mxu0
    %210 = vdwg.mxu0
    %v211 = vadd.f32 %v49, %v197
    %v212 = vadd.f32 %v50, %v200
    %v213 = vadd.f32 %v51, %v205
    %v214 = vadd.f32 %v52, %v208
    %215 = vst [vmem:[#allocation2] sm:$0xff] %v211
    %216 = vst [vmem:[#allocation2 + $0x8] sm:$0xff] %v212
    %217 = vst [vmem:[#allocation2 + $0x10] sm:$0xff] %v213
    %218 = vst [vmem:[#allocation2 + $0x18] sm:$0xff] %v214
    // Predicated region
    $region26: #{discriminator_p_forward.7} parent=1 // pred_check
      %p219 = pneg %p41
    $region27: #{discriminator_p_forward.7} parent=1 // pred_check_branch
      %221 = sbr.rel (%p219) target = $region29
    $region28: #{discriminator_p_forward.7} parent=1 // pred_region
      %v222 = vld [vmem:[#allocation2] sm:$0xff]
      %v223 = vld [vmem:[#allocation2 + $0x8] sm:$0xff]
      %v224 = vld [vmem:[#allocation2 + $0x10] sm:$0xff]
      %v225 = vld [vmem:[#allocation2 + $0x18] sm:$0xff]
      %v226 = vld [vmem:[#allocation5] sm:$0x1]
      %v228 = vlaneseq
      %v229 = vshrl.u32 %v228, 7
      %v230 = vsub.s32 0, %v229
      %v231 = vrot.slane %v226, %v230
      %v233 = vadd.f32 %v222, %v231
      %v234 = vadd.f32 %v223, %v231
      %v235 = vadd.f32 %v224, %v231
      %v236 = vadd.f32 %v225, %v231
      %vm237 = vcmp.gt.f32.partialorder %v233, 0.0
      %vm238 = vcmp.gt.f32.partialorder %v234, 0.0
      %vm239 = vcmp.gt.f32.partialorder %v235, 0.0
      %vm240 = vcmp.gt.f32.partialorder %v236, 0.0
      %v241 = vmul.f32 %v233, 0.1
      %v242 = vmul.f32 %v234, 0.1
      %v243 = vmul.f32 %v235, 0.1
      %v244 = vmul.f32 %v236, 0.1
      %v245 = vsel %vm237, %v233, %v241
      %v246 = vsel %vm238, %v234, %v242
      %v247 = vsel %vm239, %v235, %v243
      %v248 = vsel %vm240, %v236, %v244
      %249 = vst [vmem:[%s3] sm:$0xff] %v245
      %250 = vst [vmem:[%s3 + $0x8] sm:$0xff] %v246
      %251 = vst [vmem:[%s3 + $0x10] sm:$0xff] %v247
      %252 = vst [vmem:[%s3 + $0x18] sm:$0xff] %v248
    $region29: #{discriminator_p_forward.7} parent=1 // pred_fallthru
      _
    // Predicated region
    $region30: #{discriminator_p_forward.7} parent=1 // pred_check
      _
    $region31: #{discriminator_p_forward.7} parent=1 // pred_check_branch
      %254 = sbr.rel (0) target = $region33
    $region32: #{discriminator_p_forward.7} parent=1 // pred_region
      _
    $region33: #{discriminator_p_forward.7} parent=1 // pred_fallthru
      _
    // Predicated region
    $region34: #{discriminator_p_forward.7} parent=1 // pred_check
      _
    $region35: #{discriminator_p_forward.7} parent=1 // pred_check_branch
      %256 = sbr.rel (0) target = $region37
    $region36: #{discriminator_p_forward.7} parent=1 // pred_region
      _
    $region37: #{discriminator_p_forward.7} parent=1 // pred_fallthru
      _
    %257 = vsyncpa [#allocation4], 1
    %258 = vsyncpa [#allocation6], 1

// kernel: discriminator_p_forward.8
$region0: #{discriminator_p_forward.8}
  #allocation0 [shape = 'u32[]', space=smem, size = 0x4, offset = 0x4, fixed_abs, tag = 'smem constant byte address 0x4 - core index']
  #allocation1 [shape = 'u32[144,128]{1,0:T(1,128)}', space=vmem, size = 0x12000, scoped, tag = 'internal scratch']
  #allocation2 [shape = 'f32[16,256]{1,0:T(8,128)}', space=vmem, size = 0x4000, scoped, tag = 'scratch operand']
  %s0 = inlined_call_operand.vmem [shape: bf16[16,640], index: 0, kind: input, shape index: {}]
  %s1 = inlined_call_operand.hbm [shape: bf16[640,512], index: 1, kind: input, shape index: {}]
  %s2 = inlined_call_operand.hbm [shape: f32[1,512], index: 2, kind: input, shape index: {}]
  %s3 = inlined_call_operand.vmem [shape: f32[16,512], index: 3, kind: output, shape index: {}]
  %s4 = sld [smem:[#allocation0]]
  $region80: #{discriminator_p_forward.8} parent=0
    _
  %s6 = ssub.s32 1, %s4
  %s7 = scalar_select 0, %s6, %s4
  $region1: #{discriminator_p_forward.8} parent=0
    #allocation3 [shape = 'u8[655360]{0}', space=vmem, size = 0xa0000, scoped, tag = 'input window, operand 1']
    #allocation4 [shape = 's32[2]{0}', space=sflag, size = 0x8, scoped, tag = 'scoped memory for discriminator_p_forward.8']
    #allocation5 [shape = 'u8[2048]{0}', space=vmem, size = 0x800, scoped, tag = 'input window, operand 2']
    #allocation6 [shape = 's32[2]{0}', space=sflag, size = 0x8, scoped, tag = 'scoped memory for discriminator_p_forward.8']
    #allocation7 [shape = 'u8[32768]{0}', space=vmem, size = 0x8000, scoped, tag = 'output window, operand 0']
    %8 = vsyncpa [#allocation4], 0
    %s9 = scalar_lea.sflag [#allocation4], 1
    %10 = vsyncpa %s9, 0
    %11 = vsyncpa [#allocation6], 0
    %s12 = scalar_lea.sflag [#allocation6], 1
    %13 = vsyncpa %s12, 0
    loop: start=0, step=1, limit=4
    $region2: #{discriminator_p_forward.8} parent=1 // loop_pre_header
      _
    $region3: #{discriminator_p_forward.8} parent=1 // loop_header
      %s15 = sphi 0, %s19
      %p16 = scmp.ge.s32.totalorder %s15, 4
      %s22 = sphi 0, %s41
      %s23 = sphi 0, %s37
      %s24 = sphi 0, %s33
      %s25 = sphi 0, %s22
      %s26 = sphi 0, %s23
      %s27 = sphi 0, %s24
      %s28 = sphi 0, %s25
      %s29 = sphi 0, %s26
      %s30 = sphi 0, %s27
      %s46 = sphi 0, %s48
      %s49 = sphi 0, %s46
      %s50 = sphi 0, %s49
      %s66 = sphi 0, %s50
      %s74 = sphi 0, %s76
      %s77 = sphi 0, %s74
      %s78 = sphi 0, %s77
      %s94 = sphi 0, %s78
      %s100 = sphi 0, %s102
      %s103 = sphi 0, %s100
      %s104 = sphi 0, %s103
      %s120 = sphi 0, %s104
      %s128 = sphi 0, %s130
      %s131 = sphi 0, %s128
      %s132 = sphi 0, %s131
      %s148 = sphi 0, %s132
    $region4: #{discriminator_p_forward.8} parent=1 // loop_header_branch
      %18 = sbr.rel (%p16) target = $region8
    $region5: #{discriminator_p_forward.8} parent=1 // loop_body
      %s20 = ssub.s32 %s15, 1
      %s21 = ssub.s32 %s15, 2
      %s31 = sadd.s32 1, %s24
      %p32 = scmp.ge.s32.totalorder %s31, 1
      %s33 = scalar_select %p32, 0, %s31
      %s34 = sadd.s32 1, %s23
      %s35 = scalar_select %p32, %s34, %s23
      %p36 = scmp.ge.s32.totalorder %s35, 2
      %s37 = scalar_select %p36, 0, %s35
      %s38 = sadd.s32 1, %s22
      %s39 = scalar_select %p36, %s38, %s22
      %p40 = scmp.ge.s32.totalorder %s39, 1
      %s41 = scalar_select %p40, 0, %s39
      %s42 = ssub.s32 %s22, %s41
      %s43 = ssub.s32 %s24, %s33
      %s44 = sor.u32 %s42, %s43
      %p45 = scmp.eq.s32.totalorder %s44, 0
      %s47 = sadd.s32 %s46, 1
      %s48 = scalar_select %p45, %s46, %s47
      %p51 = pneg %p45
      %p52 = scmp.eq.s32.totalorder %s15, 1
      %p53 = por %p51, %p52
      %p54 = scmp.ne.s32.totalorder %s46, %s49
      %p55 = scmp.eq.s32.totalorder %s15, 0
      %p56 = por %p54, %p55
      %p57 = scmp.ne.s32.totalorder %s46, %s49
      %p58 = scmp.eq.s32.totalorder %s20, 1
      %p59 = por %p57, %p58
      %p60 = scmp.ne.s32.totalorder %s49, %s50
      %p61 = scmp.eq.s32.totalorder %s20, 0
      %p62 = por %p60, %p61
      %p63 = scmp.ne.s32.totalorder %s49, %s50
      %p64 = scmp.eq.s32.totalorder %s21, 1
      %p65 = por %p63, %p64
      %p67 = scmp.ne.s32.totalorder %s50, %s66
      %p68 = scmp.eq.s32.totalorder %s21, 0
      %p69 = por %p67, %p68
      %s70 = ssub.s32 %s24, %s33
      %s71 = ssub.s32 %s23, %s37
      %s72 = sor.u32 %s70, %s71
      %p73 = scmp.eq.s32.totalorder %s72, 0
      %s75 = sadd.s32 %s74, 1
      %s76 = scalar_select %p73, %s74, %s75
      %p79 = pneg %p73
      %p80 = scmp.eq.s32.totalorder %s15, 1
      %p81 = por %p79, %p80
      %p82 = scmp.ne.s32.totalorder %s74, %s77
      %p83 = scmp.eq.s32.totalorder %s15, 0
      %p84 = por %p82, %p83
      %p85 = scmp.ne.s32.totalorder %s74, %s77
      %p86 = scmp.eq.s32.totalorder %s20, 1
      %p87 = por %p85, %p86
      %p88 = scmp.ne.s32.totalorder %s77, %s78
      %p89 = scmp.eq.s32.totalorder %s20, 0
      %p90 = por %p88, %p89
      %p91 = scmp.ne.s32.totalorder %s77, %s78
      %p92 = scmp.eq.s32.totalorder %s21, 1
      %p93 = por %p91, %p92
      %p95 = scmp.ne.s32.totalorder %s78, %s94
      %p96 = scmp.eq.s32.totalorder %s21, 0
      %p97 = por %p95, %p96
      %s98 = ssub.s32 %s23, %s37
      %p99 = scmp.eq.s32.totalorder %s98, 0
      %s101 = sadd.s32 %s100, 1
      %s102 = scalar_select %p99, %s100, %s101
      %p105 = pneg %p99
      %p106 = scmp.eq.s32.totalorder %s15, 1
      %p107 = por %p105, %p106
      %p108 = scmp.ne.s32.totalorder %s100, %s103
      %p109 = scmp.eq.s32.totalorder %s15, 0
      %p110 = por %p108, %p109
      %p111 = scmp.ne.s32.totalorder %s100, %s103
      %p112 = scmp.eq.s32.totalorder %s20, 1
      %p113 = por %p111, %p112
      %p114 = scmp.ne.s32.totalorder %s103, %s104
      %p115 = scmp.eq.s32.totalorder %s20, 0
      %p116 = por %p114, %p115
      %p117 = scmp.ne.s32.totalorder %s103, %s104
      %p118 = scmp.eq.s32.totalorder %s21, 1
      %p119 = por %p117, %p118
      %p121 = scmp.ne.s32.totalorder %s104, %s120
      %p122 = scmp.eq.s32.totalorder %s21, 0
      %p123 = por %p121, %p122
      %s124 = ssub.s32 %s22, %s41
      %s125 = ssub.s32 %s23, %s37
      %s126 = sor.u32 %s124, %s125
      %p127 = scmp.eq.s32.totalorder %s126, 0
      %s129 = sadd.s32 %s128, 1
      %s130 = scalar_select %p127, %s128, %s129
      %p133 = pneg %p127
      %p134 = scmp.eq.s32.totalorder %s15, 1
      %p135 = por %p133, %p134
      %p136 = scmp.ne.s32.totalorder %s128, %s131
      %p137 = scmp.eq.s32.totalorder %s15, 0
      %p138 = por %p136, %p137
      %p139 = scmp.ne.s32.totalorder %s128, %s131
      %p140 = scmp.eq.s32.totalorder %s20, 1
      %p141 = por %p139, %p140
      %p142 = scmp.ne.s32.totalorder %s131, %s132
      %p143 = scmp.eq.s32.totalorder %s20, 0
      %p144 = por %p142, %p143
      %p145 = scmp.ne.s32.totalorder %s131, %s132
      %p146 = scmp.eq.s32.totalorder %s21, 1
      %p147 = por %p145, %p146
      %p149 = scmp.ne.s32.totalorder %s132, %s148
      %p150 = scmp.eq.s32.totalorder %s21, 0
      %p151 = por %p149, %p150
      %p152 = scmp.le.s32.totalorder 1, %s15
      %p153 = scmp.lt.s32.totalorder %s15, 3
      %p154 = pnand %p152, %p153
      %p155 = pneg %p154
      // Predicated region
      $region9: #{discriminator_p_forward.8} parent=5 // pred_check
        _
      $region10: #{discriminator_p_forward.8} parent=5 // pred_check_branch
        %157 = sbr.rel (%p154) target = $region12
      $region11: #{discriminator_p_forward.8} parent=5 // pred_region
        %s158 = ssub.s32 %s15, 1
        // Predicated region
        $region13: #{discriminator_p_forward.8} parent=11 // pred_check
          %p159 = pneg %p62
        $region14: #{discriminator_p_forward.8} parent=11 // pred_check_branch
          %161 = sbr.rel (%p159) target = $region16
        $region15: #{discriminator_p_forward.8} parent=11 // pred_region
          %s162 = smul.u32 2, %s25
          %s163 = smul.u32 5, %s27
          %p164 = scmp.lt.s32.totalorder %s162, 1
          %s165 = scalar_select %p164, %s162, 1
          %p166 = scmp.lt.s32.totalorder %s163, 4
          %s167 = scalar_select %p166, %s163, 4
          %s168 = smul.addr %s165, 5
          %s169 = sadd.s32 %s167, %s168
          %s170 = smul.addr %s169, 4
          %s171 = scalar_lea.vmem %s0, %s170
          %s172 = smul.u32 2, %s25
          %s173 = smul.u32 5, %s27
        $region16: #{discriminator_p_forward.8} parent=11 // pred_fallthru
          _
      $region12: #{discriminator_p_forward.8} parent=5 // pred_fallthru
        _
      %p174 = scmp.lt.s32.totalorder %s15, 2
      // Predicated region
      $region17: #{discriminator_p_forward.8} parent=5 // pred_check
        %p175 = pneg %p174
      $region18: #{discriminator_p_forward.8} parent=5 // pred_check_branch
        %177 = sbr.rel (%p175) target = $region20
      $region19: #{discriminator_p_forward.8} parent=5 // pred_region
        // Predicated region
        $region21: #{discriminator_p_forward.8} parent=19 // pred_check
          %p178 = pneg %p84
        $region22: #{discriminator_p_forward.8} parent=19 // pred_check_branch
          %180 = sbr.rel (%p178) target = $region24
        $region23: #{discriminator_p_forward.8} parent=19 // pred_region
          %s181 = sand.u32 %s74, 1
          %s182 = scalar_lea.sflag [#allocation4], %s181
          %s183 = sand.u32 %s74, 1
          %s184 = smul.addr %s183, 640
          %s185 = scalar_lea.vmem [#allocation3], %s184
          %s186 = smul.u32 80, %s24
          %s187 = smul.u32 2, %s23
          %s189 = ssub.s32 10240, 10240
          %190 = vsyncadd %s182, %s189
          %s191 = smul.addr %s186, 4
          %s192 = sadd.s32 %s187, %s191
          %s193 = smul.addr %s192, 64
          %s194 = scalar_lea.hbm %s1, %s193
          %s195 = sshll.u32 %s185, 4
          %s196 = int_to_ptr.vmem [resolvable:$true] %s195
          %201 = dma.hbm_to_vmem [thread:$0]  %s194, 10240, %s196, %s182, 256, 128, 8
        $region24: #{discriminator_p_forward.8} parent=19 // pred_fallthru
          _
        // Predicated region
        $region25: #{discriminator_p_forward.8} parent=19 // pred_check
          %p202 = pneg %p110
        $region26: #{discriminator_p_forward.8} parent=19 // pred_check_branch
          %204 = sbr.rel (%p202) target = $region28
        $region27: #{discriminator_p_forward.8} parent=19 // pred_region
          %s205 = sand.u32 %s100, 1
          %s206 = scalar_lea.sflag [#allocation6], %s205
          %s207 = sand.u32 %s100, 1
          %s208 = smul.addr %s207, 2
          %s209 = scalar_lea.vmem [#allocation5], %s208
          %s210 = smul.u32 2, %s23
          %s212 = ssub.s32 32, 32
          %213 = vsyncadd %s206, %s212
          %s214 = smul.addr %s210, 16
          %s215 = scalar_lea.hbm %s2, %s214
          %s217 = sshll.u32 %s209, 4
          %s218 = int_to_ptr.vmem [resolvable:$true] %s217
          %220 = dma.hbm_to_vmem [thread:$0]  %s215, 32, %s218, %s206
        $region28: #{discriminator_p_forward.8} parent=19 // pred_fallthru
          _
      $region20: #{discriminator_p_forward.8} parent=5 // pred_fallthru
        _
      %p221 = scmp.le.s32.totalorder 1, %s15
      %p222 = scmp.lt.s32.totalorder %s15, 3
      %p223 = pnand %p221, %p222
      %p224 = pneg %p223
      // Predicated region
      $region29: #{discriminator_p_forward.8} parent=5 // pred_check
        _
      $region30: #{discriminator_p_forward.8} parent=5 // pred_check_branch
        %226 = sbr.rel (%p223) target = $region32
      $region31: #{discriminator_p_forward.8} parent=5 // pred_region
        %s227 = ssub.s32 %s15, 1
        %s228 = sand.u32 %s77, 1
        %s229 = scalar_lea.sflag [#allocation4], %s228
        %s230 = sand.u32 %s77, 1
        %s231 = smul.addr %s230, 640
        %s232 = scalar_lea.vmem [#allocation3], %s231
        // Predicated region
        $region33: #{discriminator_p_forward.8} parent=31 // pred_check
          %p233 = pneg %p90
        $region34: #{discriminator_p_forward.8} parent=31 // pred_check_branch
          %235 = sbr.rel (%p233) target = $region36
        $region35: #{discriminator_p_forward.8} parent=31 // pred_region
          %236 = dma.done %s229, 10240
        $region36: #{discriminator_p_forward.8} parent=31 // pred_fallthru
          _
        %s237 = sand.u32 %s103, 1
        %s238 = scalar_lea.sflag [#allocation6], %s237
        %s239 = sand.u32 %s103, 1
        %s240 = smul.addr %s239, 2
        %s241 = scalar_lea.vmem [#allocation5], %s240
        // Predicated region
        $region37: #{discriminator_p_forward.8} parent=31 // pred_check
          %p242 = pneg %p116
        $region38: #{discriminator_p_forward.8} parent=31 // pred_check_branch
          %244 = sbr.rel (%p242) target = $region40
        $region39: #{discriminator_p_forward.8} parent=31 // pred_region
          %245 = dma.done %s238, 32
        $region40: #{discriminator_p_forward.8} parent=31 // pred_fallthru
          _
        %s246 = smul.u32 2, %s25
        %s247 = smul.u32 5, %s27
        %p248 = scmp.lt.s32.totalorder %s246, 1
        %s249 = scalar_select %p248, %s246, 1
        %p250 = scmp.lt.s32.totalorder %s247, 4
        %s251 = scalar_select %p250, %s247, 4
        %s252 = smul.addr %s249, 5
        %s253 = sadd.s32 %s251, %s252
        %s254 = smul.addr %s253, 4
        %s255 = scalar_lea.vmem %s0, %s254
        %p256 = pneg %p62
        %p257 = pneg %p59
        %s258 = sand.u32 %s77, 1
        %s259 = scalar_lea.sflag [#allocation4], %s258
        %s260 = sand.u32 %s77, 1
        %s261 = smul.addr %s260, 640
        %s262 = scalar_lea.vmem [#allocation3], %s261
        %p263 = pneg %p90
        %p264 = pneg %p87
        %s265 = sand.u32 %s103, 1
        %s266 = scalar_lea.sflag [#allocation6], %s265
        %s267 = sand.u32 %s103, 1
        %s268 = smul.addr %s267, 2
        %s269 = scalar_lea.vmem [#allocation5], %s268
        %p270 = pneg %p116
        %p271 = pneg %p113
        %p272 = pneg %p144
        %p273 = pneg %p141
        %s274 = sand.u32 %s131, 1
        %s275 = sand.u32 %s131, 1
        %s276 = smul.addr %s275, 32
        %s277 = scalar_lea.vmem [#allocation7], %s276
        %s278 = smul.u32 2, %s25
        %s279 = smul.u32 5, %s27
        %p280 = scmp.lt.s32.totalorder %s278, 1
        %s281 = scalar_select %p280, %s278, 1
        %p282 = scmp.lt.s32.totalorder %s279, 4
        %s283 = scalar_select %p282, %s279, 4
        %s284 = smul.addr %s281, 5
        %s285 = sadd.s32 %s283, %s284
        %s286 = smul.addr %s285, 4
        %s287 = scalar_lea.vmem %s0, %s286
        %s288 = smul.u32 2, %s25
        %s289 = smul.u32 5, %s27
        %s290 = smul.u32 80, %s27
        %s291 = smul.u32 2, %s26
        %s292 = smul.u32 2, %s26
        %s293 = smul.u32 2, %s25
        %s294 = smul.u32 2, %s26
        %p296 = scmp.eq.s32.totalorder %s27, 0
        // Predicated region
        $region41: #{discriminator_p_forward.8} parent=31 // pred_check
          %p297 = pneg %p296
        $region42: #{discriminator_p_forward.8} parent=31 // pred_check_branch
          %299 = sbr.rel (%p297) target = $region44
        $region43: #{discriminator_p_forward.8} parent=31 // pred_region
          %300 = vst [vmem:[#allocation2] sm:$0xff] 0.0
          %301 = vst [vmem:[#allocation2 + $0x8] sm:$0xff] 0.0
          %302 = vst [vmem:[#allocation2 + $0x10] sm:$0xff] 0.0
          %303 = vst [vmem:[#allocation2 + $0x18] sm:$0xff] 0.0
        $region44: #{discriminator_p_forward.8} parent=31 // pred_fallthru
          _
        %v304 = vld [vmem:[#allocation2] sm:$0xff]
        %v305 = vld [vmem:[#allocation2 + $0x8] sm:$0xff]
        %v306 = vld [vmem:[#allocation2 + $0x10] sm:$0xff]
        %v307 = vld [vmem:[#allocation2 + $0x18] sm:$0xff]
        %v308 = vld [vmem:[%s287] sm:$0xff]
        %v309 = vld [vmem:[%s287 + $0x8] sm:$0xff]
        %v310 = vld [vmem:[%s287 + $0x10] sm:$0xf]
        %v311 = vld [vmem:[%s287 + $0x14] sm:$0xff]
        %v312 = vld [vmem:[%s287 + $0x1c] sm:$0xff]
        %v313 = vld [vmem:[%s287 + $0x24] sm:$0xf]
        %v314 = vld [vmem:[%s232] sm:$0xff]
        %v315 = vld [vmem:[%s232 + $0x8] sm:$0xff]
        %v316 = vld [vmem:[%s232 + $0x10] sm:$0xff]
        %v317 = vld [vmem:[%s232 + $0x18] sm:$0xff]
        %v318 = vld [vmem:[%s232 + $0x20] sm:$0xff]
        %v319 = vld [vmem:[%s232 + $0x28] sm:$0xff]
        %v320 = vld [vmem:[%s232 + $0x30] sm:$0xff]
        %v321 = vld [vmem:[%s232 + $0x38] sm:$0xff]
        %v322 = vld [vmem:[%s232 + $0x40] sm:$0xff]
        %v323 = vld [vmem:[%s232 + $0x48] sm:$0xff]
        %v324 = vld [vmem:[%s232 + $0x50] sm:$0xff]
        %v325 = vld [vmem:[%s232 + $0x58] sm:$0xff]
        %v326 = vld [vmem:[%s232 + $0x60] sm:$0xff]
        %v327 = vld [vmem:[%s232 + $0x68] sm:$0xff]
        %v328 = vld [vmem:[%s232 + $0x70] sm:$0xff]
        %v329 = vld [vmem:[%s232 + $0x78] sm:$0xff]
        %v330 = vld [vmem:[%s232 + $0x80] sm:$0xff]
        %v331 = vld [vmem:[%s232 + $0x88] sm:$0xff]
        %v332 = vld [vmem:[%s232 + $0x90] sm:$0xff]
        %v333 = vld [vmem:[%s232 + $0x98] sm:$0xff]
        %v334 = vld [vmem:[%s232 + $0xa0] sm:$0xff]
        %v335 = vld [vmem:[%s232 + $0xa8] sm:$0xff]
        %v336 = vld [vmem:[%s232 + $0xb0] sm:$0xff]
        %v337 = vld [vmem:[%s232 + $0xb8] sm:$0xff]
        %v338 = vld [vmem:[%s232 + $0xc0] sm:$0xff]
        %v339 = vld [vmem:[%s232 + $0xc8] sm:$0xff]
        %v340 = vld [vmem:[%s232 + $0xd0] sm:$0xff]
        %v341 = vld [vmem:[%s232 + $0xd8] sm:$0xff]
        %v342 = vld [vmem:[%s232 + $0xe0] sm:$0xff]
        %v343 = vld [vmem:[%s232 + $0xe8] sm:$0xff]
        %v344 = vld [vmem:[%s232 + $0xf0] sm:$0xff]
        %v345 = vld [vmem:[%s232 + $0xf8] sm:$0xff]
        %v346 = vld [vmem:[%s232 + $0x100] sm:$0xff]
        %v347 = vld [vmem:[%s232 + $0x108] sm:$0xff]
        %v348 = vld [vmem:[%s232 + $0x110] sm:$0xff]
        %v349 = vld [vmem:[%s232 + $0x118] sm:$0xff]
        %v350 = vld [vmem:[%s232 + $0x120] sm:$0xff]
        %v351 = vld [vmem:[%s232 + $0x128] sm:$0xff]
        %v352 = vld [vmem:[%s232 + $0x130] sm:$0xff]
        %v353 = vld [vmem:[%s232 + $0x138] sm:$0xff]
        %v354 = vld [vmem:[%s232 + $0x140] sm:$0xff]
        %v355 = vld [vmem:[%s232 + $0x148] sm:$0xff]
        %v356 = vld [vmem:[%s232 + $0x150] sm:$0xff]
        %v357 = vld [vmem:[%s232 + $0x158] sm:$0xff]
        %v358 = vld [vmem:[%s232 + $0x160] sm:$0xff]
        %v359 = vld [vmem:[%s232 + $0x168] sm:$0xff]
        %v360 = vld [vmem:[%s232 + $0x170] sm:$0xff]
        %v361 = vld [vmem:[%s232 + $0x178] sm:$0xff]
        %v362 = vld [vmem:[%s232 + $0x180] sm:$0xff]
        %v363 = vld [vmem:[%s232 + $0x188] sm:$0xff]
        %v364 = vld [vmem:[%s232 + $0x190] sm:$0xff]
        %v365 = vld [vmem:[%s232 + $0x198] sm:$0xff]
        %v366 = vld [vmem:[%s232 + $0x1a0] sm:$0xff]
        %v367 = vld [vmem:[%s232 + $0x1a8] sm:$0xff]
        %v368 = vld [vmem:[%s232 + $0x1b0] sm:$0xff]
        %v369 = vld [vmem:[%s232 + $0x1b8] sm:$0xff]
        %v370 = vld [vmem:[%s232 + $0x1c0] sm:$0xff]
        %v371 = vld [vmem:[%s232 + $0x1c8] sm:$0xff]
        %v372 = vld [vmem:[%s232 + $0x1d0] sm:$0xff]
        %v373 = vld [vmem:[%s232 + $0x1d8] sm:$0xff]
        %v374 = vld [vmem:[%s232 + $0x1e0] sm:$0xff]
        %v375 = vld [vmem:[%s232 + $0x1e8] sm:$0xff]
        %v376 = vld [vmem:[%s232 + $0x1f0] sm:$0xff]
        %v377 = vld [vmem:[%s232 + $0x1f8] sm:$0xff]
        %v378 = vld [vmem:[%s232 + $0x200] sm:$0xff]
        %v379 = vld [vmem:[%s232 + $0x208] sm:$0xff]
        %v380 = vld [vmem:[%s232 + $0x210] sm:$0xff]
        %v381 = vld [vmem:[%s232 + $0x218] sm:$0xff]
        %v382 = vld [vmem:[%s232 + $0x220] sm:$0xff]
        %v383 = vld [vmem:[%s232 + $0x228] sm:$0xff]
        %v384 = vld [vmem:[%s232 + $0x230] sm:$0xff]
        %v385 = vld [vmem:[%s232 + $0x238] sm:$0xff]
        %v386 = vld [vmem:[%s232 + $0x240] sm:$0xff]
        %v387 = vld [vmem:[%s232 + $0x248] sm:$0xff]
        %v388 = vld [vmem:[%s232 + $0x250] sm:$0xff]
        %v389 = vld [vmem:[%s232 + $0x258] sm:$0xff]
        %v390 = vld [vmem:[%s232 + $0x260] sm:$0xff]
        %v391 = vld [vmem:[%s232 + $0x268] sm:$0xff]
        %v392 = vld [vmem:[%s232 + $0x270] sm:$0xff]
        %v393 = vld [vmem:[%s232 + $0x278] sm:$0xff]
        %v400 = vunpack.c.l.b16 %v308
        %v401 = vunpack.c.h.b16 %v308
        %v402 = vunpack.c.l.b16 %v309
        %v403 = vunpack.c.h.b16 %v309
        %v404 = vunpack.c.l.b16 %v310
        %v405 = vunpack.c.l.b16 %v311
        %v406 = vunpack.c.h.b16 %v311
        %v407 = vunpack.c.l.b16 %v312
        %v408 = vunpack.c.h.b16 %v312
        %v409 = vunpack.c.l.b16 %v313
        %v410 = vpack.c.b16 %v405, %v400
        %v411 = vpack.c.b16 %v406, %v401
        %v412 = vpack.c.b16 %v407, %v402
        %v413 = vpack.c.b16 %v408, %v403
        %v414 = vpack.c.b16 %v409, %v404
        %v500 = vunpack.c.l.b16 %v314
        %v501 = vunpack.c.h.b16 %v314
        %v502 = vunpack.c.l.b16 %v315
        %v503 = vunpack.c.h.b16 %v315
        %v504 = vunpack.c.l.b16 %v316
        %v505 = vunpack.c.h.b16 %v316
        %v506 = vunpack.c.l.b16 %v317
        %v507 = vunpack.c.h.b16 %v317
        %v508 = vunpack.c.l.b16 %v318
        %v509 = vunpack.c.h.b16 %v318
        %v510 = vunpack.c.l.b16 %v319
        %v511 = vunpack.c.h.b16 %v319
        %v512 = vunpack.c.l.b16 %v320
        %v513 = vunpack.c.h.b16 %v320
        %v514 = vunpack.c.l.b16 %v321
        %v515 = vunpack.c.h.b16 %v321
        %v516 = vunpack.c.l.b16 %v322
        %v517 = vunpack.c.h.b16 %v322
        %v518 = vunpack.c.l.b16 %v323
        %v519 = vunpack.c.h.b16 %v323
        %v520 = vunpack.c.l.b16 %v324
        %v521 = vunpack.c.h.b16 %v324
        %v522 = vunpack.c.l.b16 %v325
        %v523 = vunpack.c.h.b16 %v325
        %v524 = vunpack.c.l.b16 %v326
        %v525 = vunpack.c.h.b16 %v326
        %v526 = vunpack.c.l.b16 %v327
        %v527 = vunpack.c.h.b16 %v327
        %v528 = vunpack.c.l.b16 %v328
        %v529 = vunpack.c.h.b16 %v328
        %v530 = vunpack.c.l.b16 %v329
        %v531 = vunpack.c.h.b16 %v329
        %v532 = vunpack.c.l.b16 %v330
        %v533 = vunpack.c.h.b16 %v330
        %v534 = vunpack.c.l.b16 %v331
        %v535 = vunpack.c.h.b16 %v331
        %v536 = vunpack.c.l.b16 %v332
        %v537 = vunpack.c.h.b16 %v332
        %v538 = vunpack.c.l.b16 %v333
        %v539 = vunpack.c.h.b16 %v333
        %v540 = vunpack.c.l.b16 %v334
        %v541 = vunpack.c.h.b16 %v334
        %v542 = vunpack.c.l.b16 %v335
        %v543 = vunpack.c.h.b16 %v335
        %v544 = vunpack.c.l.b16 %v336
        %v545 = vunpack.c.h.b16 %v336
        %v546 = vunpack.c.l.b16 %v337
        %v547 = vunpack.c.h.b16 %v337
        %v548 = vunpack.c.l.b16 %v338
        %v549 = vunpack.c.h.b16 %v338
        %v550 = vunpack.c.l.b16 %v339
        %v551 = vunpack.c.h.b16 %v339
        %v552 = vunpack.c.l.b16 %v340
        %v553 = vunpack.c.h.b16 %v340
        %v554 = vunpack.c.l.b16 %v341
        %v555 = vunpack.c.h.b16 %v341
        %v556 = vunpack.c.l.b16 %v342
        %v557 = vunpack.c.h.b16 %v342
        %v558 = vunpack.c.l.b16 %v343
        %v559 = vunpack.c.h.b16 %v343
        %v560 = vunpack.c.l.b16 %v344
        %v561 = vunpack.c.h.b16 %v344
        %v562 = vunpack.c.l.b16 %v345
        %v563 = vunpack.c.h.b16 %v345
        %v564 = vunpack.c.l.b16 %v346
        %v565 = vunpack.c.h.b16 %v346
        %v566 = vunpack.c.l.b16 %v347
        %v567 = vunpack.c.h.b16 %v347
        %v568 = vunpack.c.l.b16 %v348
        %v569 = vunpack.c.h.b16 %v348
        %v570 = vunpack.c.l.b16 %v349
        %v571 = vunpack.c.h.b16 %v349
        %v572 = vunpack.c.l.b16 %v350
        %v573 = vunpack.c.h.b16 %v350
        %v574 = vunpack.c.l.b16 %v351
        %v575 = vunpack.c.h.b16 %v351
        %v576 = vunpack.c.l.b16 %v352
        %v577 = vunpack.c.h.b16 %v352
        %v578 = vunpack.c.l.b16 %v353
        %v579 = vunpack.c.h.b16 %v353
        %v580 = vunpack.c.l.b16 %v354
        %v581 = vunpack.c.h.b16 %v354
        %v582 = vunpack.c.l.b16 %v355
        %v583 = vunpack.c.h.b16 %v355
        %v584 = vunpack.c.l.b16 %v356
        %v585 = vunpack.c.h.b16 %v356
        %v586 = vunpack.c.l.b16 %v357
        %v587 = vunpack.c.h.b16 %v357
        %v588 = vunpack.c.l.b16 %v358
        %v589 = vunpack.c.h.b16 %v358
        %v590 = vunpack.c.l.b16 %v359
        %v591 = vunpack.c.h.b16 %v359
        %v592 = vunpack.c.l.b16 %v360
        %v593 = vunpack.c.h.b16 %v360
        %v594 = vunpack.c.l.b16 %v361
        %v595 = vunpack.c.h.b16 %v361
        %v596 = vunpack.c.l.b16 %v362
        %v597 = vunpack.c.h.b16 %v362
        %v598 = vunpack.c.l.b16 %v363
        %v599 = vunpack.c.h.b16 %v363
        %v600 = vunpack.c.l.b16 %v364
        %v601 = vunpack.c.h.b16 %v364
        %v602 = vunpack.c.l.b16 %v365
        %v603 = vunpack.c.h.b16 %v365
        %v604 = vunpack.c.l.b16 %v366
        %v605 = vunpack.c.h.b16 %v366
        %v606 = vunpack.c.l.b16 %v367
        %v607 = vunpack.c.h.b16 %v367
        %v608 = vunpack.c.l.b16 %v368
        %v609 = vunpack.c.h.b16 %v368
        %v610 = vunpack.c.l.b16 %v369
        %v611 = vunpack.c.h.b16 %v369
        %v612 = vunpack.c.l.b16 %v370
        %v613 = vunpack.c.h.b16 %v370
        %v614 = vunpack.c.l.b16 %v371
        %v615 = vunpack.c.h.b16 %v371
        %v616 = vunpack.c.l.b16 %v372
        %v617 = vunpack.c.h.b16 %v372
        %v618 = vunpack.c.l.b16 %v373
        %v619 = vunpack.c.h.b16 %v373
        %v620 = vunpack.c.l.b16 %v374
        %v621 = vunpack.c.h.b16 %v374
        %v622 = vunpack.c.l.b16 %v375
        %v623 = vunpack.c.h.b16 %v375
        %v624 = vunpack.c.l.b16 %v376
        %v625 = vunpack.c.h.b16 %v376
        %v626 = vunpack.c.l.b16 %v377
        %v627 = vunpack.c.h.b16 %v377
        %v628 = vunpack.c.l.b16 %v378
        %v629 = vunpack.c.h.b16 %v378
        %v630 = vunpack.c.l.b16 %v379
        %v631 = vunpack.c.h.b16 %v379
        %v632 = vunpack.c.l.b16 %v380
        %v633 = vunpack.c.h.b16 %v380
        %v634 = vunpack.c.l.b16 %v381
        %v635 = vunpack.c.h.b16 %v381
        %v636 = vunpack.c.l.b16 %v382
        %v637 = vunpack.c.h.b16 %v382
        %v638 = vunpack.c.l.b16 %v383
        %v639 = vunpack.c.h.b16 %v383
        %v640 = vunpack.c.l.b16 %v384
        %v641 = vunpack.c.h.b16 %v384
        %v642 = vunpack.c.l.b16 %v385
        %v643 = vunpack.c.h.b16 %v385
        %v644 = vunpack.c.l.b16 %v386
        %v645 = vunpack.c.h.b16 %v386
        %v646 = vunpack.c.l.b16 %v387
        %v647 = vunpack.c.h.b16 %v387
        %v648 = vunpack.c.l.b16 %v388
        %v649 = vunpack.c.h.b16 %v388
        %v650 = vunpack.c.l.b16 %v389
        %v651 = vunpack.c.h.b16 %v389
        %v652 = vunpack.c.l.b16 %v390
        %v653 = vunpack.c.h.b16 %v390
        %v654 = vunpack.c.l.b16 %v391
        %v655 = vunpack.c.h.b16 %v391
        %v656 = vunpack.c.l.b16 %v392
        %v657 = vunpack.c.h.b16 %v392
        %v658 = vunpack.c.l.b16 %v393
        %v659 = vunpack.c.h.b16 %v393
        %v660 = vpack.c.b16 %v502, %v500
        %v661 = vpack.c.b16 %v503, %v501
        %v662 = vpack.c.b16 %v506, %v504
        %v663 = vpack.c.b16 %v507, %v505
        %v664 = vpack.c.b16 %v510, %v508
        %v665 = vpack.c.b16 %v511, %v509
        %v666 = vpack.c.b16 %v514, %v512
        %v667 = vpack.c.b16 %v515, %v513
        %v668 = vpack.c.b16 %v518, %v516
        %v669 = vpack.c.b16 %v519, %v517
        %v670 = vpack.c.b16 %v522, %v520
        %v671 = vpack.c.b16 %v523, %v521
        %v672 = vpack.c.b16 %v526, %v524
        %v673 = vpack.c.b16 %v527, %v525
        %v674 = vpack.c.b16 %v530, %v528
        %v675 = vpack.c.b16 %v531, %v529
        %v676 = vpack.c.b16 %v534, %v532
        %v677 = vpack.c.b16 %v535, %v533
        %v678 = vpack.c.b16 %v538, %v536
        %v679 = vpack.c.b16 %v539, %v537
        %v680 = vpack.c.b16 %v542, %v540
        %v681 = vpack.c.b16 %v543, %v541
        %v682 = vpack.c.b16 %v546, %v544
        %v683 = vpack.c.b16 %v547, %v545
        %v684 = vpack.c.b16 %v550, %v548
        %v685 = vpack.c.b16 %v551, %v549
        %v686 = vpack.c.b16 %v554, %v552
        %v687 = vpack.c.b16 %v555, %v553
        %v688 = vpack.c.b16 %v558, %v556
        %v689 = vpack.c.b16 %v559, %v557
        %v690 = vpack.c.b16 %v562, %v560
        %v691 = vpack.c.b16 %v563, %v561
        %v692 = vpack.c.b16 %v566, %v564
        %v693 = vpack.c.b16 %v567, %v565
        %v694 = vpack.c.b16 %v570, %v568
        %v695 = vpack.c.b16 %v571, %v569
        %v696 = vpack.c.b16 %v574, %v572
        %v697 = vpack.c.b16 %v575, %v573
        %v698 = vpack.c.b16 %v578, %v576
        %v699 = vpack.c.b16 %v579, %v577
        %v700 = vpack.c.b16 %v582, %v580
        %v701 = vpack.c.b16 %v583, %v581
        %v702 = vpack.c.b16 %v586, %v584
        %v703 = vpack.c.b16 %v587, %v585
        %v704 = vpack.c.b16 %v590, %v588
        %v705 = vpack.c.b16 %v591, %v589
        %v706 = vpack.c.b16 %v594, %v592
        %v707 = vpack.c.b16 %v595, %v593
        %v708 = vpack.c.b16 %v598, %v596
        %v709 = vpack.c.b16 %v599, %v597
        %v710 = vpack.c.b16 %v602, %v600
        %v711 = vpack.c.b16 %v603, %v601
        %v712 = vpack.c.b16 %v606, %v604
        %v713 = vpack.c.b16 %v607, %v605
        %v714 = vpack.c.b16 %v610, %v608
        %v715 = vpack.c.b16 %v611, %v609
        %v716 = vpack.c.b16 %v614, %v612
        %v717 = vpack.c.b16 %v615, %v613
        %v718 = vpack.c.b16 %v618, %v616
        %v719 = vpack.c.b16 %v619, %v617
        %v720 = vpack.c.b16 %v622, %v620
        %v721 = vpack.c.b16 %v623, %v621
        %v722 = vpack.c.b16 %v626, %v624
        %v723 = vpack.c.b16 %v627, %v625
        %v724 = vpack.c.b16 %v630, %v628
        %v725 = vpack.c.b16 %v631, %v629
        %v726 = vpack.c.b16 %v634, %v632
        %v727 = vpack.c.b16 %v635, %v633
        %v728 = vpack.c.b16 %v638, %v636
        %v729 = vpack.c.b16 %v639, %v637
        %v730 = vpack.c.b16 %v642, %v640
        %v731 = vpack.c.b16 %v643, %v641
        %v732 = vpack.c.b16 %v646, %v644
        %v733 = vpack.c.b16 %v647, %v645
        %v734 = vpack.c.b16 %v650, %v648
        %v735 = vpack.c.b16 %v651, %v649
        %v736 = vpack.c.b16 %v654, %v652
        %v737 = vpack.c.b16 %v655, %v653
        %v738 = vpack.c.b16 %v658, %v656
        %v739 = vpack.c.b16 %v659, %v657
        %820 = vmatprep.subr.bf16.mxu0 %v675
        %821 = vmatpush1.bf16.msra.mxu0 %v674
        %822 = vmatprep.subr.bf16.mxu0 %v673
        %823 = vmatpush1.bf16.msra.mxu0 %v672
        %824 = vmatprep.subr.bf16.mxu0 %v671
        %825 = vmatpush1.bf16.msra.mxu0 %v670
        %826 = vmatprep.subr.bf16.mxu0 %v669
        %827 = vmatpush1.bf16.msra.mxu0 %v668
        %828 = vmatprep.subr.bf16.mxu0 %v667
        %829 = vmatpush1.bf16.msra.mxu0 %v666
        %830 = vmatprep.subr.bf16.mxu0 %v665
        %831 = vmatpush1.bf16.msra.mxu0 %v664
        %832 = vmatprep.subr.bf16.mxu0 %v663
        %833 = vmatpush1.bf16.msra.mxu0 %v662
        %834 = vmatprep.subr.bf16.mxu0 %v661
        %835 = vmatpush1.bf16.msra.mxu0 %v660
        %836 = vmatprep.subr.bf16.mxu0 %v691
        %837 = vmatpush2.bf16.msra.mxu0 %v690
        %838 = vmatprep.subr.bf16.mxu0 %v689
        %839 = vmatpush2.bf16.msra.mxu0 %v688
        %840 = vmatprep.subr.bf16.mxu0 %v687
        %841 = vmatpush2.bf16.msra.mxu0 %v686
        %842 = vmatprep.subr.bf16.mxu0 %v685
        %843 = vmatpush2.bf16.msra.mxu0 %v684
        %844 = vmatprep.subr.bf16.mxu0 %v683
        %845 = vmatpush2.bf16.msra.mxu0 %v682
        %846 = vmatprep.subr.bf16.mxu0 %v681
        %847 = vmatpush2.bf16.msra.mxu0 %v680
        %848 = vmatprep.subr.bf16.mxu0 %v679
        %849 = vmatpush2.bf16.msra.mxu0 %v678
        %850 = vmatprep.subr.bf16.mxu0 %v677
        %851 = vmatpush2.bf16.msra.mxu0 %v676
        %852 = vmatprep.mubr.bf16.mxu0 %v411
        %853 = vmatmul.mubr.bf16.gmra.mxu0 %v410
        %v854 = vpop.f32.mrf.mxu0
        %v855 = vadd.f32 0.0, %v854
        %v856 = vpop.f32.mrf.mxu0
        %v857 = vadd.f32 0.0, %v856
        %v858 = vpop.f32.mrf.mxu0
        %v859 = vadd.f32 0.0, %v858
        %v860 = vpop.f32.mrf.mxu0
        %v861 = vadd.f32 0.0, %v860
        %862 = vdwg.mxu0
        %863 = vmatprep.subr.bf16.mxu0 %v707
        %864 = vmatpush1.bf16.msra.mxu0 %v706
        %865 = vmatprep.subr.bf16.mxu0 %v705
        %866 = vmatpush1.bf16.msra.mxu0 %v704
        %867 = vmatprep.subr.bf16.mxu0 %v703
        %868 = vmatpush1.bf16.msra.mxu0 %v702
        %869 = vmatprep.subr.bf16.mxu0 %v701
        %870 = vmatpush1.bf16.msra.mxu0 %v700
        %871 = vmatprep.subr.bf16.mxu0 %v699
        %872 = vmatpush1.bf16.msra.mxu0 %v698
        %873 = vmatprep.subr.bf16.mxu0 %v697
        %874 = vmatpush1.bf16.msra.mxu0 %v696
        %875 = vmatprep.subr.bf16.mxu0 %v695
        %876 = vmatpush1.bf16.msra.mxu0 %v694
        %877 = vmatprep.subr.bf16.mxu0 %v693
        %878 = vmatpush1.bf16.msra.mxu0 %v692
        %879 = vmatprep.subr.bf16.mxu0 %v723
        %880 = vmatpush2.bf16.msra.mxu0 %v722
        %881 = vmatprep.subr.bf16.mxu0 %v721
        %882 = vmatpush2.bf16.msra.mxu0 %v720
        %883 = vmatprep.subr.bf16.mxu0 %v719
        %884 = vmatpush2.bf16.msra.mxu0 %v718
        %885 = vmatprep.subr.bf16.mxu0 %v717
        %886 = vmatpush2.bf16.msra.mxu0 %v716
        %887 = vmatprep.subr.bf16.mxu0 %v715
        %888 = vmatpush2.bf16.msra.mxu0 %v714
        %889 = vmatprep.subr.bf16.mxu0 %v713
        %890 = vmatpush2.bf16.msra.mxu0 %v712
        %891 = vmatprep.subr.bf16.mxu0 %v711
        %892 = vmatpush2.bf16.msra.mxu0 %v710
        %893 = vmatprep.subr.bf16.mxu0 %v709
        %894 = vmatpush2.bf16.msra.mxu0 %v708
        %895 = vmatprep.mubr.bf16.mxu0 %v413
        %896 = vmatmul.mubr.bf16.gmra.mxu0 %v412
        %v897 = vpop.f32.mrf.mxu0
        %v898 = vadd.f32 %v855, %v897
        %v899 = vpop.f32.mrf.mxu0
        %v900 = vadd.f32 %v857, %v899
        %v901 = vpop.f32.mrf.mxu0
        %v902 = vadd.f32 %v859, %v901
        %v903 = vpop.f32.mrf.mxu0
        %v904 = vadd.f32 %v861, %v903
        %905 = vdwg.mxu0
        %906 = vmatprep.subr.bf16.mxu0 %v739
        %907 = vmatpush1.bf16.msra.mxu0 %v738
        %908 = vmatprep.subr.bf16.mxu0 %v737
        %909 = vmatpush1.bf16.msra.mxu0 %v736
        %910 = vmatprep.subr.bf16.mxu0 %v735
        %911 = vmatpush1.bf16.msra.mxu0 %v734
        %912 = vmatprep.subr.bf16.mxu0 %v733
        %913 = vmatpush1.bf16.msra.mxu0 %v732
        %914 = vmatprep.subr.bf16.mxu0 %v731
        %915 = vmatpush1.bf16.msra.mxu0 %v730
        %916 = vmatprep.subr.bf16.mxu0 %v729
        %917 = vmatpush1.bf16.msra.mxu0 %v728
        %918 = vmatprep.subr.bf16.mxu0 %v727
        %919 = vmatpush1.bf16.msra.mxu0 %v726
        %920 = vmatprep.subr.bf16.mxu0 %v725
        %921 = vmatpush1.bf16.msra.mxu0 %v724
        %922 = vmatprep.subr.bf16.mxu0 0
        %923 = vmatpush2.bf16.msra.mxu0 0
        %924 = vmatprep.subr.bf16.mxu0 0
        %925 = vmatpush2.bf16.msra.mxu0 0
        %926 = vmatprep.subr.bf16.mxu0 0
        %927 = vmatpush2.bf16.msra.mxu0 0
        %928 = vmatprep.subr.bf16.mxu0 0
        %929 = vmatpush2.bf16.msra.mxu0 0
        %930 = vmatprep.subr.bf16.mxu0 0
        %931 = vmatpush2.bf16.msra.mxu0 0
        %932 = vmatprep.subr.bf16.mxu0 0
        %933 = vmatpush2.bf16.msra.mxu0 0
        %934 = vmatprep.subr.bf16.mxu0 0
        %935 = vmatpush2.bf16.msra.mxu0 0
        %936 = vmatprep.subr.bf16.mxu0 0
        %937 = vmatpush2.bf16.msra.mxu0 0
        %938 = vmatprep.mubr.bf16.mxu0 0
        %939 = vmatmul.mubr.bf16.gmra.mxu0 %v414
        %v940 = vpop.f32.mrf.mxu0
        %v941 = vadd.f32 %v898, %v940
        %v942 = vpop.f32.mrf.mxu0
        %v943 = vadd.f32 %v900, %v942
        %v944 = vpop.f32.mrf.mxu0
        %v945 = vadd.f32 %v902, %v944
        %v946 = vpop.f32.mrf.mxu0
        %v947 = vadd.f32 %v904, %v946
        %948 = vdwg.mxu0
        %v949 = vadd.f32 %v304, %v941
        %v950 = vadd.f32 %v305, %v943
        %v951 = vadd.f32 %v306, %v945
        %v952 = vadd.f32 %v307, %v947
        %953 = vst [vmem:[#allocation2] sm:$0xff] %v949
        %954 = vst [vmem:[#allocation2 + $0x8] sm:$0xff] %v950
        %955 = vst [vmem:[#allocation2 + $0x10] sm:$0xff] %v951
        %956 = vst [vmem:[#allocation2 + $0x18] sm:$0xff] %v952
        // Predicated region
        $region45: #{discriminator_p_forward.8} parent=31 // pred_check
          %p957 = pneg %p296
        $region46: #{discriminator_p_forward.8} parent=31 // pred_check_branch
          %959 = sbr.rel (%p957) target = $region48
        $region47: #{discriminator_p_forward.8} parent=31 // pred_region
          %v960 = vld [vmem:[#allocation2] sm:$0xff]
          %v961 = vld [vmem:[#allocation2 + $0x8] sm:$0xff]
          %v962 = vld [vmem:[#allocation2 + $0x10] sm:$0xff]
          %v963 = vld [vmem:[#allocation2 + $0x18] sm:$0xff]
          %v964 = vld [vmem:[%s241] sm:$0x3]
          %v966 = vlaneseq
          %v967 = vshrl.u32 %v966, 7
          %v968 = vsub.s32 0, %v967
          %v969 = vrot.slane %v964, %v968
          %v970 = vlaneseq
          %v971 = vshrl.u32 %v970, 7
          %v972 = vsub.s32 1, %v971
          %v973 = vrot.slane %v964, %v972
          %v976 = vadd.f32 %v960, %v969
          %v977 = vadd.f32 %v961, %v973
          %v978 = vadd.f32 %v962, %v969
          %v979 = vadd.f32 %v963, %v973
          %vm980 = vcmp.gt.f32.partialorder %v976, 0.0
          %vm981 = vcmp.gt.f32.partialorder %v977, 0.0
          %vm982 = vcmp.gt.f32.partialorder %v978, 0.0
          %vm983 = vcmp.gt.f32.partialorder %v979, 0.0
          %v984 = vmul.f32 %v976, 0.1
          %v985 = vmul.f32 %v977, 0.1
          %v986 = vmul.f32 %v978, 0.1
          %v987 = vmul.f32 %v979, 0.1
          %v988 = vsel %vm980, %v976, %v984
          %v989 = vsel %vm981, %v977, %v985
          %v990 = vsel %vm982, %v978, %v986
          %v991 = vsel %vm983, %v979, %v987
          %992 = vst [vmem:[%s277] sm:$0xff] %v988
          %993 = vst [vmem:[%s277 + $0x8] sm:$0xff] %v989
          %994 = vst [vmem:[%s277 + $0x10] sm:$0xff] %v990
          %995 = vst [vmem:[%s277 + $0x18] sm:$0xff] %v991
        $region48: #{discriminator_p_forward.8} parent=31 // pred_fallthru
          _
        %s996 = sand.u32 %s131, 1
        %s997 = sand.u32 %s131, 1
        %s998 = smul.addr %s997, 32
        %s999 = scalar_lea.vmem [#allocation7], %s998
        // Predicated region
        $region49: #{discriminator_p_forward.8} parent=31 // pred_check
          %p1000 = pneg %p141
        $region50: #{discriminator_p_forward.8} parent=31 // pred_check_branch
          %1002 = sbr.rel (%p1000) target = $region52
        $region51: #{discriminator_p_forward.8} parent=31 // pred_region
          %s1003 = smul.u32 2, %s25
          %s1004 = smul.u32 2, %s26
          %s1005 = smul.addr %s1003, 4
          %s1006 = sadd.s32 %s1004, %s1005
          %s1007 = smul.addr %s1006, 8
          %s1008 = scalar_lea.vmem %s3, %s1007
          // Predicated region
          $region53: #{discriminator_p_forward.8} parent=51 // pred_check
            _
          $region54: #{discriminator_p_forward.8} parent=51 // pred_check_branch
            %1010 = sbr.rel (0) target = $region56
          $region55: #{discriminator_p_forward.8} parent=51 // pred_region
            // Predicated region
            $region57: #{discriminator_p_forward.8} parent=55 // pred_check
              _
            $region58: #{discriminator_p_forward.8} parent=55 // pred_check_branch
              %1012 = sbr.rel (0) target = $region60
            $region59: #{discriminator_p_forward.8} parent=55 // pred_region
              loop: start=0, step=1, limit=1
              $region61: #{discriminator_p_forward.8} parent=59 // loop_pre_header
                _
              $region62: #{discriminator_p_forward.8} parent=59 // loop_header
                %s1014 = sphi 0, %s1018
                %p1015 = scmp.ge.s32.totalorder %s1014, 1
                %s1019 = sphi %s999, %s999
                %s1020 = sphi %s1008, %s1008
              $region63: #{discriminator_p_forward.8} parent=59 // loop_header_branch
                %1017 = sbr.rel (%p1015) target = $region67
              $region64: #{discriminator_p_forward.8} parent=59 // loop_body
                %v1021 = vld [vmem:[%s1019] sm:$0xff]
                %1022 = vst [vmem:[%s1020] sm:$0xff] %v1021
                %v1023 = vld [vmem:[%s1019 + $0x8] sm:$0xff]
                %1024 = vst [vmem:[%s1020 + $0x8] sm:$0xff] %v1023
                %v1025 = vld [vmem:[%s1019 + $0x10] sm:$0xff]
                %1026 = vst [vmem:[%s1020 + $0x20] sm:$0xff] %v1025
                %v1027 = vld [vmem:[%s1019 + $0x18] sm:$0xff]
                %1028 = vst [vmem:[%s1020 + $0x28] sm:$0xff] %v1027
              $region65: #{discriminator_p_forward.8} parent=59 // loop_footer
                %s1018 = sadd.s32 1, %s1014
              $region66: #{discriminator_p_forward.8} parent=59 // loop_footer_branch
                %1013 = sbr.rel target = $region62
              $region67: #{discriminator_p_forward.8} parent=59 // loop_exit
                _
            $region60: #{discriminator_p_forward.8} parent=55 // pred_fallthru
              _
            // Predicated region
            $region68: #{discriminator_p_forward.8} parent=55 // pred_check
              _
            $region69: #{discriminator_p_forward.8} parent=55 // pred_check_branch
              %1030 = sbr.rel target = $region71
            $region70: #{discriminator_p_forward.8} parent=55 // pred_region
              _
            $region71: #{discriminator_p_forward.8} parent=55 // pred_fallthru
              _
          $region56: #{discriminator_p_forward.8} parent=51 // pred_fallthru
            _
          %1031 = vnop
        $region52: #{discriminator_p_forward.8} parent=31 // pred_fallthru
          _
      $region32: #{discriminator_p_forward.8} parent=5 // pred_fallthru
        _
      %p1032 = scmp.le.s32.totalorder 2, %s15
      // Predicated region
      $region72: #{discriminator_p_forward.8} parent=5 // pred_check
        %p1033 = pneg %p1032
      $region73: #{discriminator_p_forward.8} parent=5 // pred_check_branch
        %1035 = sbr.rel (%p1033) target = $region75
      $region74: #{discriminator_p_forward.8} parent=5 // pred_region
        %s1036 = ssub.s32 %s15, 2
        // Predicated region
        $region76: #{discriminator_p_forward.8} parent=74 // pred_check
          %p1037 = pneg %p147
        $region77: #{discriminator_p_forward.8} parent=74 // pred_check_branch
          %1039 = sbr.rel (%p1037) target = $region79
        $region78: #{discriminator_p_forward.8} parent=74 // pred_region
          %s1040 = sand.u32 %s132, 1
          %s1041 = sand.u32 %s132, 1
          %s1042 = smul.addr %s1041, 32
          %s1043 = scalar_lea.vmem [#allocation7], %s1042
        $region79: #{discriminator_p_forward.8} parent=74 // pred_fallthru
          _
      $region75: #{discriminator_p_forward.8} parent=5 // pred_fallthru
        _
    $region6: #{discriminator_p_forward.8} parent=1 // loop_footer
      %s19 = sadd.s32 1, %s15
    $region7: #{discriminator_p_forward.8} parent=1 // loop_footer_branch
      %14 = sbr.rel target = $region3
    $region8: #{discriminator_p_forward.8} parent=1 // loop_exit
      _
    %1044 = vsyncpa [#allocation4], 1
    %s1045 = scalar_lea.sflag [#allocation4], 1
    %1046 = vsyncpa %s1045, 1
    %1047 = vsyncpa [#allocation6], 1
    %s1048 = scalar_lea.sflag [#allocation6], 1
    %1049 = vsyncpa %s1048, 1

// kernel: discriminator_p_forward.9
$region0: #{discriminator_p_forward.9}
  #allocation0 [shape = 'u32[]', space=smem, size = 0x4, offset = 0x4, fixed_abs, tag = 'smem constant byte address 0x4 - core index']
  #allocation1 [shape = 'u32[144,128]{1,0:T(1,128)}', space=vmem, size = 0x12000, scoped, tag = 'internal scratch']
  #allocation2 [shape = 'f32[8,256]{1,0:T(8,128)}', space=vmem, size = 0x2000, scoped, tag = 'scratch operand']
  %s0 = inlined_call_operand.vmem [shape: bf16[8,2560], index: 0, kind: input, shape index: {}]
  %s1 = inlined_call_operand.hbm [shape: bf16[2560,1024], index: 1, kind: input, shape index: {}]
  %s2 = inlined_call_operand.hbm [shape: f32[1,1024], index: 2, kind: input, shape index: {}]
  %s3 = inlined_call_operand.vmem [shape: f32[8,1024], index: 3, kind: output, shape index: {}]
  %s4 = sld [smem:[#allocation0]]
  $region61: #{discriminator_p_forward.9} parent=0
    _
  %s6 = ssub.s32 1, %s4
  %s7 = scalar_select 0, %s6, %s4
  $region1: #{discriminator_p_forward.9} parent=0
    #allocation3 [shape = 'u8[2621440]{0}', space=vmem, size = 0x280000, scoped, tag = 'input window, operand 1']
    #allocation4 [shape = 's32[2]{0}', space=sflag, size = 0x8, scoped, tag = 'scoped memory for discriminator_p_forward.9']
    #allocation5 [shape = 'u8[2048]{0}', space=vmem, size = 0x800, scoped, tag = 'input window, operand 2']
    #allocation6 [shape = 's32[2]{0}', space=sflag, size = 0x8, scoped, tag = 'scoped memory for discriminator_p_forward.9']
    %8 = vsyncpa [#allocation4], 0
    %s9 = scalar_lea.sflag [#allocation4], 1
    %10 = vsyncpa %s9, 0
    %11 = vsyncpa [#allocation6], 0
    %s12 = scalar_lea.sflag [#allocation6], 1
    %13 = vsyncpa %s12, 0
    loop: start=0, step=1, limit=6
    $region2: #{discriminator_p_forward.9} parent=1 // loop_pre_header
      _
    $region3: #{discriminator_p_forward.9} parent=1 // loop_header
      %s15 = sphi 0, %s19
      %p16 = scmp.ge.s32.totalorder %s15, 6
      %s22 = sphi 0, %s41
      %s23 = sphi 0, %s37
      %s24 = sphi 0, %s33
      %s25 = sphi 0, %s22
      %s26 = sphi 0, %s23
      %s27 = sphi 0, %s24
      %s28 = sphi 0, %s25
      %s29 = sphi 0, %s26
      %s30 = sphi 0, %s27
      %s46 = sphi 0, %s48
      %s49 = sphi 0, %s46
      %s50 = sphi 0, %s49
      %s66 = sphi 0, %s50
      %s74 = sphi 0, %s76
      %s77 = sphi 0, %s74
      %s78 = sphi 0, %s77
      %s94 = sphi 0, %s78
      %s100 = sphi 0, %s102
      %s103 = sphi 0, %s100
      %s104 = sphi 0, %s103
      %s120 = sphi 0, %s104
      %s128 = sphi 0, %s130
      %s131 = sphi 0, %s128
      %s132 = sphi 0, %s131
      %s148 = sphi 0, %s132
    $region4: #{discriminator_p_forward.9} parent=1 // loop_header_branch
      %18 = sbr.rel (%p16) target = $region8
    $region5: #{discriminator_p_forward.9} parent=1 // loop_body
      %s20 = ssub.s32 %s15, 1
      %s21 = ssub.s32 %s15, 2
      %s31 = sadd.s32 1, %s24
      %p32 = scmp.ge.s32.totalorder %s31, 1
      %s33 = scalar_select %p32, 0, %s31
      %s34 = sadd.s32 1, %s23
      %s35 = scalar_select %p32, %s34, %s23
      %p36 = scmp.ge.s32.totalorder %s35, 4
      %s37 = scalar_select %p36, 0, %s35
      %s38 = sadd.s32 1, %s22
      %s39 = scalar_select %p36, %s38, %s22
      %p40 = scmp.ge.s32.totalorder %s39, 1
      %s41 = scalar_select %p40, 0, %s39
      %s42 = ssub.s32 %s22, %s41
      %s43 = ssub.s32 %s24, %s33
      %s44 = sor.u32 %s42, %s43
      %p45 = scmp.eq.s32.totalorder %s44, 0
      %s47 = sadd.s32 %s46, 1
      %s48 = scalar_select %p45, %s46, %s47
      %p51 = pneg %p45
      %p52 = scmp.eq.s32.totalorder %s15, 3
      %p53 = por %p51, %p52
      %p54 = scmp.ne.s32.totalorder %s46, %s49
      %p55 = scmp.eq.s32.totalorder %s15, 0
      %p56 = por %p54, %p55
      %p57 = scmp.ne.s32.totalorder %s46, %s49
      %p58 = scmp.eq.s32.totalorder %s20, 3
      %p59 = por %p57, %p58
      %p60 = scmp.ne.s32.totalorder %s49, %s50
      %p61 = scmp.eq.s32.totalorder %s20, 0
      %p62 = por %p60, %p61
      %p63 = scmp.ne.s32.totalorder %s49, %s50
      %p64 = scmp.eq.s32.totalorder %s21, 3
      %p65 = por %p63, %p64
      %p67 = scmp.ne.s32.totalorder %s50, %s66
      %p68 = scmp.eq.s32.totalorder %s21, 0
      %p69 = por %p67, %p68
      %s70 = ssub.s32 %s24, %s33
      %s71 = ssub.s32 %s23, %s37
      %s72 = sor.u32 %s70, %s71
      %p73 = scmp.eq.s32.totalorder %s72, 0
      %s75 = sadd.s32 %s74, 1
      %s76 = scalar_select %p73, %s74, %s75
      %p79 = pneg %p73
      %p80 = scmp.eq.s32.totalorder %s15, 3
      %p81 = por %p79, %p80
      %p82 = scmp.ne.s32.totalorder %s74, %s77
      %p83 = scmp.eq.s32.totalorder %s15, 0
      %p84 = por %p82, %p83
      %p85 = scmp.ne.s32.totalorder %s74, %s77
      %p86 = scmp.eq.s32.totalorder %s20, 3
      %p87 = por %p85, %p86
      %p88 = scmp.ne.s32.totalorder %s77, %s78
      %p89 = scmp.eq.s32.totalorder %s20, 0
      %p90 = por %p88, %p89
      %p91 = scmp.ne.s32.totalorder %s77, %s78
      %p92 = scmp.eq.s32.totalorder %s21, 3
      %p93 = por %p91, %p92
      %p95 = scmp.ne.s32.totalorder %s78, %s94
      %p96 = scmp.eq.s32.totalorder %s21, 0
      %p97 = por %p95, %p96
      %s98 = ssub.s32 %s23, %s37
      %p99 = scmp.eq.s32.totalorder %s98, 0
      %s101 = sadd.s32 %s100, 1
      %s102 = scalar_select %p99, %s100, %s101
      %p105 = pneg %p99
      %p106 = scmp.eq.s32.totalorder %s15, 3
      %p107 = por %p105, %p106
      %p108 = scmp.ne.s32.totalorder %s100, %s103
      %p109 = scmp.eq.s32.totalorder %s15, 0
      %p110 = por %p108, %p109
      %p111 = scmp.ne.s32.totalorder %s100, %s103
      %p112 = scmp.eq.s32.totalorder %s20, 3
      %p113 = por %p111, %p112
      %p114 = scmp.ne.s32.totalorder %s103, %s104
      %p115 = scmp.eq.s32.totalorder %s20, 0
      %p116 = por %p114, %p115
      %p117 = scmp.ne.s32.totalorder %s103, %s104
      %p118 = scmp.eq.s32.totalorder %s21, 3
      %p119 = por %p117, %p118
      %p121 = scmp.ne.s32.totalorder %s104, %s120
      %p122 = scmp.eq.s32.totalorder %s21, 0
      %p123 = por %p121, %p122
      %s124 = ssub.s32 %s22, %s41
      %s125 = ssub.s32 %s23, %s37
      %s126 = sor.u32 %s124, %s125
      %p127 = scmp.eq.s32.totalorder %s126, 0
      %s129 = sadd.s32 %s128, 1
      %s130 = scalar_select %p127, %s128, %s129
      %p133 = pneg %p127
      %p134 = scmp.eq.s32.totalorder %s15, 3
      %p135 = por %p133, %p134
      %p136 = scmp.ne.s32.totalorder %s128, %s131
      %p137 = scmp.eq.s32.totalorder %s15, 0
      %p138 = por %p136, %p137
      %p139 = scmp.ne.s32.totalorder %s128, %s131
      %p140 = scmp.eq.s32.totalorder %s20, 3
      %p141 = por %p139, %p140
      %p142 = scmp.ne.s32.totalorder %s131, %s132
      %p143 = scmp.eq.s32.totalorder %s20, 0
      %p144 = por %p142, %p143
      %p145 = scmp.ne.s32.totalorder %s131, %s132
      %p146 = scmp.eq.s32.totalorder %s21, 3
      %p147 = por %p145, %p146
      %p149 = scmp.ne.s32.totalorder %s132, %s148
      %p150 = scmp.eq.s32.totalorder %s21, 0
      %p151 = por %p149, %p150
      %p152 = scmp.le.s32.totalorder 1, %s15
      %p153 = scmp.lt.s32.totalorder %s15, 5
      %p154 = pnand %p152, %p153
      %p155 = pneg %p154
      // Predicated region
      $region9: #{discriminator_p_forward.9} parent=5 // pred_check
        _
      $region10: #{discriminator_p_forward.9} parent=5 // pred_check_branch
        %157 = sbr.rel (%p154) target = $region12
      $region11: #{discriminator_p_forward.9} parent=5 // pred_region
        %s158 = ssub.s32 %s15, 1
        // Predicated region
        $region13: #{discriminator_p_forward.9} parent=11 // pred_check
          %p159 = pneg %p62
        $region14: #{discriminator_p_forward.9} parent=11 // pred_check_branch
          %161 = sbr.rel (%p159) target = $region16
        $region15: #{discriminator_p_forward.9} parent=11 // pred_region
          %s162 = smul.u32 20, %s27
          %p163 = scmp.lt.s32.totalorder %s25, 0
          %s164 = scalar_select %p163, %s25, 0
          %p165 = scmp.lt.s32.totalorder %s162, 19
          %s166 = scalar_select %p165, %s162, 19
          %s167 = smul.addr %s164, 20
          %s168 = sadd.s32 %s166, %s167
          %s169 = smul.addr %s168, 4
          %s170 = scalar_lea.vmem %s0, %s169
          %s171 = smul.u32 20, %s27
        $region16: #{discriminator_p_forward.9} parent=11 // pred_fallthru
          _
      $region12: #{discriminator_p_forward.9} parent=5 // pred_fallthru
        _
      %p172 = scmp.lt.s32.totalorder %s15, 4
      // Predicated region
      $region17: #{discriminator_p_forward.9} parent=5 // pred_check
        %p173 = pneg %p172
      $region18: #{discriminator_p_forward.9} parent=5 // pred_check_branch
        %175 = sbr.rel (%p173) target = $region20
      $region19: #{discriminator_p_forward.9} parent=5 // pred_region
        // Predicated region
        $region21: #{discriminator_p_forward.9} parent=19 // pred_check
          %p176 = pneg %p84
        $region22: #{discriminator_p_forward.9} parent=19 // pred_check_branch
          %178 = sbr.rel (%p176) target = $region24
        $region23: #{discriminator_p_forward.9} parent=19 // pred_region
          %s179 = sand.u32 %s74, 1
          %s180 = scalar_lea.sflag [#allocation4], %s179
          %s181 = sand.u32 %s74, 1
          %s182 = smul.addr %s181, 2560
          %s183 = scalar_lea.vmem [#allocation3], %s182
          %s184 = smul.u32 320, %s24
          %s185 = smul.u32 2, %s23
          %s187 = ssub.s32 40960, 40960
          %188 = vsyncadd %s180, %s187
          %s189 = smul.addr %s184, 8
          %s190 = sadd.s32 %s185, %s189
          %s191 = smul.addr %s190, 64
          %s192 = scalar_lea.hbm %s1, %s191
          %s193 = sshll.u32 %s183, 4
          %s194 = int_to_ptr.vmem [resolvable:$true] %s193
          %199 = dma.hbm_to_vmem [thread:$0]  %s192, 40960, %s194, %s180, 512, 128, 8
        $region24: #{discriminator_p_forward.9} parent=19 // pred_fallthru
          _
        // Predicated region
        $region25: #{discriminator_p_forward.9} parent=19 // pred_check
          %p200 = pneg %p110
        $region26: #{discriminator_p_forward.9} parent=19 // pred_check_branch
          %202 = sbr.rel (%p200) target = $region28
        $region27: #{discriminator_p_forward.9} parent=19 // pred_region
          %s203 = sand.u32 %s100, 1
          %s204 = scalar_lea.sflag [#allocation6], %s203
          %s205 = sand.u32 %s100, 1
          %s206 = smul.addr %s205, 2
          %s207 = scalar_lea.vmem [#allocation5], %s206
          %s208 = smul.u32 2, %s23
          %s210 = ssub.s32 32, 32
          %211 = vsyncadd %s204, %s210
          %s212 = smul.addr %s208, 16
          %s213 = scalar_lea.hbm %s2, %s212
          %s215 = sshll.u32 %s207, 4
          %s216 = int_to_ptr.vmem [resolvable:$true] %s215
          %218 = dma.hbm_to_vmem [thread:$0]  %s213, 32, %s216, %s204
        $region28: #{discriminator_p_forward.9} parent=19 // pred_fallthru
          _
      $region20: #{discriminator_p_forward.9} parent=5 // pred_fallthru
        _
      %p219 = scmp.le.s32.totalorder 1, %s15
      %p220 = scmp.lt.s32.totalorder %s15, 5
      %p221 = pnand %p219, %p220
      %p222 = pneg %p221
      // Predicated region
      $region29: #{discriminator_p_forward.9} parent=5 // pred_check
        _
      $region30: #{discriminator_p_forward.9} parent=5 // pred_check_branch
        %224 = sbr.rel (%p221) target = $region32
      $region31: #{discriminator_p_forward.9} parent=5 // pred_region
        %s225 = ssub.s32 %s15, 1
        %s226 = sand.u32 %s77, 1
        %s227 = scalar_lea.sflag [#allocation4], %s226
        %s228 = sand.u32 %s77, 1
        %s229 = smul.addr %s228, 2560
        %s230 = scalar_lea.vmem [#allocation3], %s229
        // Predicated region
        $region33: #{discriminator_p_forward.9} parent=31 // pred_check
          %p231 = pneg %p90
        $region34: #{discriminator_p_forward.9} parent=31 // pred_check_branch
          %233 = sbr.rel (%p231) target = $region36
        $region35: #{discriminator_p_forward.9} parent=31 // pred_region
          %234 = dma.done %s227, 40960
        $region36: #{discriminator_p_forward.9} parent=31 // pred_fallthru
          _
        %s235 = sand.u32 %s103, 1
        %s236 = scalar_lea.sflag [#allocation6], %s235
        %s237 = sand.u32 %s103, 1
        %s238 = smul.addr %s237, 2
        %s239 = scalar_lea.vmem [#allocation5], %s238
        // Predicated region
        $region37: #{discriminator_p_forward.9} parent=31 // pred_check
          %p240 = pneg %p116
        $region38: #{discriminator_p_forward.9} parent=31 // pred_check_branch
          %242 = sbr.rel (%p240) target = $region40
        $region39: #{discriminator_p_forward.9} parent=31 // pred_region
          %243 = dma.done %s236, 32
        $region40: #{discriminator_p_forward.9} parent=31 // pred_fallthru
          _
        %s244 = smul.u32 20, %s27
        %p245 = scmp.lt.s32.totalorder %s25, 0
        %s246 = scalar_select %p245, %s25, 0
        %p247 = scmp.lt.s32.totalorder %s244, 19
        %s248 = scalar_select %p247, %s244, 19
        %s249 = smul.addr %s246, 20
        %s250 = sadd.s32 %s248, %s249
        %s251 = smul.addr %s250, 4
        %s252 = scalar_lea.vmem %s0, %s251
        %p253 = pneg %p62
        %p254 = pneg %p59
        %s255 = sand.u32 %s77, 1
        %s256 = scalar_lea.sflag [#allocation4], %s255
        %s257 = sand.u32 %s77, 1
        %s258 = smul.addr %s257, 2560
        %s259 = scalar_lea.vmem [#allocation3], %s258
        %p260 = pneg %p90
        %p261 = pneg %p87
        %s262 = sand.u32 %s103, 1
        %s263 = scalar_lea.sflag [#allocation6], %s262
        %s264 = sand.u32 %s103, 1
        %s265 = smul.addr %s264, 2
        %s266 = scalar_lea.vmem [#allocation5], %s265
        %p267 = pneg %p116
        %p268 = pneg %p113
        %p269 = pneg %p144
        %p270 = pneg %p141
        %s271 = smul.u32 2, %s26
        %p272 = scmp.lt.s32.totalorder %s25, 0
        %s273 = scalar_select %p272, %s25, 0
        %p274 = scmp.lt.s32.totalorder %s271, 7
        %s275 = scalar_select %p274, %s271, 7
        %s276 = smul.addr %s273, 8
        %s277 = sadd.s32 %s275, %s276
        %s278 = smul.addr %s277, 8
        %s279 = scalar_lea.vmem %s3, %s278
        %s280 = smul.u32 20, %s27
        %p281 = scmp.lt.s32.totalorder %s25, 0
        %s282 = scalar_select %p281, %s25, 0
        %p283 = scmp.lt.s32.totalorder %s280, 19
        %s284 = scalar_select %p283, %s280, 19
        %s285 = smul.addr %s282, 20
        %s286 = sadd.s32 %s284, %s285
        %s287 = smul.addr %s286, 4
        %s288 = scalar_lea.vmem %s0, %s287
        %s289 = smul.u32 20, %s27
        %s290 = smul.u32 320, %s27
        %s291 = smul.u32 2, %s26
        %s292 = smul.u32 2, %s26
        %s293 = smul.u32 2, %s26
        %p294 = scmp.lt.s32.totalorder %s25, 0
        %s295 = scalar_select %p294, %s25, 0
        %p296 = scmp.lt.s32.totalorder %s293, 7
        %s297 = scalar_select %p296, %s293, 7
        %s298 = smul.addr %s295, 8
        %s299 = sadd.s32 %s297, %s298
        %s300 = smul.addr %s299, 8
        %s301 = scalar_lea.vmem %s3, %s300
        %s302 = smul.u32 2, %s26
        %p303 = scmp.eq.s32.totalorder %s27, 0
        // Predicated region
        $region41: #{discriminator_p_forward.9} parent=31 // pred_check
          %p304 = pneg %p303
        $region42: #{discriminator_p_forward.9} parent=31 // pred_check_branch
          %306 = sbr.rel (%p304) target = $region44
        $region43: #{discriminator_p_forward.9} parent=31 // pred_region
          %307 = vst [vmem:[#allocation2] sm:$0xff] 0.0
          %308 = vst [vmem:[#allocation2 + $0x8] sm:$0xff] 0.0
        $region44: #{discriminator_p_forward.9} parent=31 // pred_fallthru
          _
        %v309 = vld [vmem:[#allocation2] sm:$0xff]
        %v310 = vld [vmem:[#allocation2 + $0x8] sm:$0xff]
        %v311 = vld [vmem:[%s288] sm:$0xff]
        %v312 = vld [vmem:[%s288 + $0x8] sm:$0xff]
        %v313 = vld [vmem:[%s288 + $0x10] sm:$0xff]
        %v314 = vld [vmem:[%s288 + $0x18] sm:$0xff]
        %v315 = vld [vmem:[%s288 + $0x20] sm:$0xff]
        %v316 = vld [vmem:[%s288 + $0x28] sm:$0xff]
        %v317 = vld [vmem:[%s288 + $0x30] sm:$0xff]
        %v318 = vld [vmem:[%s288 + $0x38] sm:$0xff]
        %v319 = vld [vmem:[%s288 + $0x40] sm:$0xff]
        %v320 = vld [vmem:[%s288 + $0x48] sm:$0xff]
        %v321 = vld [vmem:[%s230] sm:$0xff]
        %v322 = vld [vmem:[%s230 + $0x8] sm:$0xff]
        %v323 = vld [vmem:[%s230 + $0x10] sm:$0xff]
        %v324 = vld [vmem:[%s230 + $0x18] sm:$0xff]
        %v325 = vld [vmem:[%s230 + $0x20] sm:$0xff]
        %v326 = vld [vmem:[%s230 + $0x28] sm:$0xff]
        %v327 = vld [vmem:[%s230 + $0x30] sm:$0xff]
        %v328 = vld [vmem:[%s230 + $0x38] sm:$0xff]
        %v329 = vld [vmem:[%s230 + $0x40] sm:$0xff]
        %v330 = vld [vmem:[%s230 + $0x48] sm:$0xff]
        %v331 = vld [vmem:[%s230 + $0x50] sm:$0xff]
        %v332 = vld [vmem:[%s230 + $0x58] sm:$0xff]
        %v333 = vld [vmem:[%s230 + $0x60] sm:$0xff]
        %v334 = vld [vmem:[%s230 + $0x68] sm:$0xff]
        %v335 = vld [vmem:[%s230 + $0x70] sm:$0xff]
        %v336 = vld [vmem:[%s230 + $0x78] sm:$0xff]
        %v337 = vld [vmem:[%s230 + $0x80] sm:$0xff]
        %v338 = vld [vmem:[%s230 + $0x88] sm:$0xff]
        %v339 = vld [vmem:[%s230 + $0x90] sm:$0xff]
        %v340 = vld [vmem:[%s230 + $0x98] sm:$0xff]
        %v341 = vld [vmem:[%s230 + $0xa0] sm:$0xff]
        %v342 = vld [vmem:[%s230 + $0xa8] sm:$0xff]
        %v343 = vld [vmem:[%s230 + $0xb0] sm:$0xff]
        %v344 = vld [vmem:[%s230 + $0xb8] sm:$0xff]
        %v345 = vld [vmem:[%s230 + $0xc0] sm:$0xff]
        %v346 = vld [vmem:[%s230 + $0xc8] sm:$0xff]
        %v347 = vld [vmem:[%s230 + $0xd0] sm:$0xff]
        %v348 = vld [vmem:[%s230 + $0xd8] sm:$0xff]
        %v349 = vld [vmem:[%s230 + $0xe0] sm:$0xff]
        %v350 = vld [vmem:[%s230 + $0xe8] sm:$0xff]
        %v351 = vld [vmem:[%s230 + $0xf0] sm:$0xff]
        %v352 = vld [vmem:[%s230 + $0xf8] sm:$0xff]
        %v353 = vld [vmem:[%s230 + $0x100] sm:$0xff]
        %v354 = vld [vmem:[%s230 + $0x108] sm:$0xff]
        %v355 = vld [vmem:[%s230 + $0x110] sm:$0xff]
        %v356 = vld [vmem:[%s230 + $0x118] sm:$0xff]
        %v357 = vld [vmem:[%s230 + $0x120] sm:$0xff]
        %v358 = vld [vmem:[%s230 + $0x128] sm:$0xff]
        %v359 = vld [vmem:[%s230 + $0x130] sm:$0xff]
        %v360 = vld [vmem:[%s230 + $0x138] sm:$0xff]
        %v361 = vld [vmem:[%s230 + $0x140] sm:$0xff]
        %v362 = vld [vmem:[%s230 + $0x148] sm:$0xff]
        %v363 = vld [vmem:[%s230 + $0x150] sm:$0xff]
        %v364 = vld [vmem:[%s230 + $0x158] sm:$0xff]
        %v365 = vld [vmem:[%s230 + $0x160] sm:$0xff]
        %v366 = vld [vmem:[%s230 + $0x168] sm:$0xff]
        %v367 = vld [vmem:[%s230 + $0x170] sm:$0xff]
        %v368 = vld [vmem:[%s230 + $0x178] sm:$0xff]
        %v369 = vld [vmem:[%s230 + $0x180] sm:$0xff]
        %v370 = vld [vmem:[%s230 + $0x188] sm:$0xff]
        %v371 = vld [vmem:[%s230 + $0x190] sm:$0xff]
        %v372 = vld [vmem:[%s230 + $0x198] sm:$0xff]
        %v373 = vld [vmem:[%s230 + $0x1a0] sm:$0xff]
        %v374 = vld [vmem:[%s230 + $0x1a8] sm:$0xff]
        %v375 = vld [vmem:[%s230 + $0x1b0] sm:$0xff]
        %v376 = vld [vmem:[%s230 + $0x1b8] sm:$0xff]
        %v377 = vld [vmem:[%s230 + $0x1c0] sm:$0xff]
        %v378 = vld [vmem:[%s230 + $0x1c8] sm:$0xff]
        %v379 = vld [vmem:[%s230 + $0x1d0] sm:$0xff]
        %v380 = vld [vmem:[%s230 + $0x1d8] sm:$0xff]
        %v381 = vld [vmem:[%s230 + $0x1e0] sm:$0xff]
        %v382 = vld [vmem:[%s230 + $0x1e8] sm:$0xff]
        %v383 = vld [vmem:[%s230 + $0x1f0] sm:$0xff]
        %v384 = vld [vmem:[%s230 + $0x1f8] sm:$0xff]
        %v385 = vld [vmem:[%s230 + $0x200] sm:$0xff]
        %v386 = vld [vmem:[%s230 + $0x208] sm:$0xff]
        %v387 = vld [vmem:[%s230 + $0x210] sm:$0xff]
        %v388 = vld [vmem:[%s230 + $0x218] sm:$0xff]
        %v389 = vld [vmem:[%s230 + $0x220] sm:$0xff]
        %v390 = vld [vmem:[%s230 + $0x228] sm:$0xff]
        %v391 = vld [vmem:[%s230 + $0x230] sm:$0xff]
        %v392 = vld [vmem:[%s230 + $0x238] sm:$0xff]
        %v393 = vld [vmem:[%s230 + $0x240] sm:$0xff]
        %v394 = vld [vmem:[%s230 + $0x248] sm:$0xff]
        %v395 = vld [vmem:[%s230 + $0x250] sm:$0xff]
        %v396 = vld [vmem:[%s230 + $0x258] sm:$0xff]
        %v397 = vld [vmem:[%s230 + $0x260] sm:$0xff]
        %v398 = vld [vmem:[%s230 + $0x268] sm:$0xff]
        %v399 = vld [vmem:[%s230 + $0x270] sm:$0xff]
        %v400 = vld [vmem:[%s230 + $0x278] sm:$0xff]
        %v401 = vld [vmem:[%s230 + $0x280] sm:$0xff]
        %v402 = vld [vmem:[%s230 + $0x288] sm:$0xff]
        %v403 = vld [vmem:[%s230 + $0x290] sm:$0xff]
        %v404 = vld [vmem:[%s230 + $0x298] sm:$0xff]
        %v405 = vld [vmem:[%s230 + $0x2a0] sm:$0xff]
        %v406 = vld [vmem:[%s230 + $0x2a8] sm:$0xff]
        %v407 = vld [vmem:[%s230 + $0x2b0] sm:$0xff]
        %v408 = vld [vmem:[%s230 + $0x2b8] sm:$0xff]
        %v409 = vld [vmem:[%s230 + $0x2c0] sm:$0xff]
        %v410 = vld [vmem:[%s230 + $0x2c8] sm:$0xff]
        %v411 = vld [vmem:[%s230 + $0x2d0] sm:$0xff]
        %v412 = vld [vmem:[%s230 + $0x2d8] sm:$0xff]
        %v413 = vld [vmem:[%s230 + $0x2e0] sm:$0xff]
        %v414 = vld [vmem:[%s230 + $0x2e8] sm:$0xff]
        %v415 = vld [vmem:[%s230 + $0x2f0] sm:$0xff]
        %v416 = vld [vmem:[%s230 + $0x2f8] sm:$0xff]
        %v417 = vld [vmem:[%s230 + $0x300] sm:$0xff]
        %v418 = vld [vmem:[%s230 + $0x308] sm:$0xff]
        %v419 = vld [vmem:[%s230 + $0x310] sm:$0xff]
        %v420 = vld [vmem:[%s230 + $0x318] sm:$0xff]
        %v421 = vld [vmem:[%s230 + $0x320] sm:$0xff]
        %v422 = vld [vmem:[%s230 + $0x328] sm:$0xff]
        %v423 = vld [vmem:[%s230 + $0x330] sm:$0xff]
        %v424 = vld [vmem:[%s230 + $0x338] sm:$0xff]
        %v425 = vld [vmem:[%s230 + $0x340] sm:$0xff]
        %v426 = vld [vmem:[%s230 + $0x348] sm:$0xff]
        %v427 = vld [vmem:[%s230 + $0x350] sm:$0xff]
        %v428 = vld [vmem:[%s230 + $0x358] sm:$0xff]
        %v429 = vld [vmem:[%s230 + $0x360] sm:$0xff]
        %v430 = vld [vmem:[%s230 + $0x368] sm:$0xff]
        %v431 = vld [vmem:[%s230 + $0x370] sm:$0xff]
        %v432 = vld [vmem:[%s230 + $0x378] sm:$0xff]
        %v433 = vld [vmem:[%s230 + $0x380] sm:$0xff]
        %v434 = vld [vmem:[%s230 + $0x388] sm:$0xff]
        %v435 = vld [vmem:[%s230 + $0x390] sm:$0xff]
        %v436 = vld [vmem:[%s230 + $0x398] sm:$0xff]
        %v437 = vld [vmem:[%s230 + $0x3a0] sm:$0xff]
        %v438 = vld [vmem:[%s230 + $0x3a8] sm:$0xff]
        %v439 = vld [vmem:[%s230 + $0x3b0] sm:$0xff]
        %v440 = vld [vmem:[%s230 + $0x3b8] sm:$0xff]
        %v441 = vld [vmem:[%s230 + $0x3c0] sm:$0xff]
        %v442 = vld [vmem:[%s230 + $0x3c8] sm:$0xff]
        %v443 = vld [vmem:[%s230 + $0x3d0] sm:$0xff]
        %v444 = vld [vmem:[%s230 + $0x3d8] sm:$0xff]
        %v445 = vld [vmem:[%s230 + $0x3e0] sm:$0xff]
        %v446 = vld [vmem:[%s230 + $0x3e8] sm:$0xff]
        %v447 = vld [vmem:[%s230 + $0x3f0] sm:$0xff]
        %v448 = vld [vmem:[%s230 + $0x3f8] sm:$0xff]
        %v449 = vld [vmem:[%s230 + $0x400] sm:$0xff]
        %v450 = vld [vmem:[%s230 + $0x408] sm:$0xff]
        %v451 = vld [vmem:[%s230 + $0x410] sm:$0xff]
        %v452 = vld [vmem:[%s230 + $0x418] sm:$0xff]
        %v453 = vld [vmem:[%s230 + $0x420] sm:$0xff]
        %v454 = vld [vmem:[%s230 + $0x428] sm:$0xff]
        %v455 = vld [vmem:[%s230 + $0x430] sm:$0xff]
        %v456 = vld [vmem:[%s230 + $0x438] sm:$0xff]
        %v457 = vld [vmem:[%s230 + $0x440] sm:$0xff]
        %v458 = vld [vmem:[%s230 + $0x448] sm:$0xff]
        %v459 = vld [vmem:[%s230 + $0x450] sm:$0xff]
        %v460 = vld [vmem:[%s230 + $0x458] sm:$0xff]
        %v461 = vld [vmem:[%s230 + $0x460] sm:$0xff]
        %v462 = vld [vmem:[%s230 + $0x468] sm:$0xff]
        %v463 = vld [vmem:[%s230 + $0x470] sm:$0xff]
        %v464 = vld [vmem:[%s230 + $0x478] sm:$0xff]
        %v465 = vld [vmem:[%s230 + $0x480] sm:$0xff]
        %v466 = vld [vmem:[%s230 + $0x488] sm:$0xff]
        %v467 = vld [vmem:[%s230 + $0x490] sm:$0xff]
        %v468 = vld [vmem:[%s230 + $0x498] sm:$0xff]
        %v469 = vld [vmem:[%s230 + $0x4a0] sm:$0xff]
        %v470 = vld [vmem:[%s230 + $0x4a8] sm:$0xff]
        %v471 = vld [vmem:[%s230 + $0x4b0] sm:$0xff]
        %v472 = vld [vmem:[%s230 + $0x4b8] sm:$0xff]
        %v473 = vld [vmem:[%s230 + $0x4c0] sm:$0xff]
        %v474 = vld [vmem:[%s230 + $0x4c8] sm:$0xff]
        %v475 = vld [vmem:[%s230 + $0x4d0] sm:$0xff]
        %v476 = vld [vmem:[%s230 + $0x4d8] sm:$0xff]
        %v477 = vld [vmem:[%s230 + $0x4e0] sm:$0xff]
        %v478 = vld [vmem:[%s230 + $0x4e8] sm:$0xff]
        %v479 = vld [vmem:[%s230 + $0x4f0] sm:$0xff]
        %v480 = vld [vmem:[%s230 + $0x4f8] sm:$0xff]
        %v481 = vld [vmem:[%s230 + $0x500] sm:$0xff]
        %v482 = vld [vmem:[%s230 + $0x508] sm:$0xff]
        %v483 = vld [vmem:[%s230 + $0x510] sm:$0xff]
        %v484 = vld [vmem:[%s230 + $0x518] sm:$0xff]
        %v485 = vld [vmem:[%s230 + $0x520] sm:$0xff]
        %v486 = vld [vmem:[%s230 + $0x528] sm:$0xff]
        %v487 = vld [vmem:[%s230 + $0x530] sm:$0xff]
        %v488 = vld [vmem:[%s230 + $0x538] sm:$0xff]
        %v489 = vld [vmem:[%s230 + $0x540] sm:$0xff]
        %v490 = vld [vmem:[%s230 + $0x548] sm:$0xff]
        %v491 = vld [vmem:[%s230 + $0x550] sm:$0xff]
        %v492 = vld [vmem:[%s230 + $0x558] sm:$0xff]
        %v493 = vld [vmem:[%s230 + $0x560] sm:$0xff]
        %v494 = vld [vmem:[%s230 + $0x568] sm:$0xff]
        %v495 = vld [vmem:[%s230 + $0x570] sm:$0xff]
        %v496 = vld [vmem:[%s230 + $0x578] sm:$0xff]
        %v497 = vld [vmem:[%s230 + $0x580] sm:$0xff]
        %v498 = vld [vmem:[%s230 + $0x588] sm:$0xff]
        %v499 = vld [vmem:[%s230 + $0x590] sm:$0xff]
        %v500 = vld [vmem:[%s230 + $0x598] sm:$0xff]
        %v501 = vld [vmem:[%s230 + $0x5a0] sm:$0xff]
        %v502 = vld [vmem:[%s230 + $0x5a8] sm:$0xff]
        %v503 = vld [vmem:[%s230 + $0x5b0] sm:$0xff]
        %v504 = vld [vmem:[%s230 + $0x5b8] sm:$0xff]
        %v505 = vld [vmem:[%s230 + $0x5c0] sm:$0xff]
        %v506 = vld [vmem:[%s230 + $0x5c8] sm:$0xff]
        %v507 = vld [vmem:[%s230 + $0x5d0] sm:$0xff]
        %v508 = vld [vmem:[%s230 + $0x5d8] sm:$0xff]
        %v509 = vld [vmem:[%s230 + $0x5e0] sm:$0xff]
        %v510 = vld [vmem:[%s230 + $0x5e8] sm:$0xff]
        %v511 = vld [vmem:[%s230 + $0x5f0] sm:$0xff]
        %v512 = vld [vmem:[%s230 + $0x5f8] sm:$0xff]
        %v513 = vld [vmem:[%s230 + $0x600] sm:$0xff]
        %v514 = vld [vmem:[%s230 + $0x608] sm:$0xff]
        %v515 = vld [vmem:[%s230 + $0x610] sm:$0xff]
        %v516 = vld [vmem:[%s230 + $0x618] sm:$0xff]
        %v517 = vld [vmem:[%s230 + $0x620] sm:$0xff]
        %v518 = vld [vmem:[%s230 + $0x628] sm:$0xff]
        %v519 = vld [vmem:[%s230 + $0x630] sm:$0xff]
        %v520 = vld [vmem:[%s230 + $0x638] sm:$0xff]
        %v521 = vld [vmem:[%s230 + $0x640] sm:$0xff]
        %v522 = vld [vmem:[%s230 + $0x648] sm:$0xff]
        %v523 = vld [vmem:[%s230 + $0x650] sm:$0xff]
        %v524 = vld [vmem:[%s230 + $0x658] sm:$0xff]
        %v525 = vld [vmem:[%s230 + $0x660] sm:$0xff]
        %v526 = vld [vmem:[%s230 + $0x668] sm:$0xff]
        %v527 = vld [vmem:[%s230 + $0x670] sm:$0xff]
        %v528 = vld [vmem:[%s230 + $0x678] sm:$0xff]
        %v529 = vld [vmem:[%s230 + $0x680] sm:$0xff]
        %v530 = vld [vmem:[%s230 + $0x688] sm:$0xff]
        %v531 = vld [vmem:[%s230 + $0x690] sm:$0xff]
        %v532 = vld [vmem:[%s230 + $0x698] sm:$0xff]
        %v533 = vld [vmem:[%s230 + $0x6a0] sm:$0xff]
        %v534 = vld [vmem:[%s230 + $0x6a8] sm:$0xff]
        %v535 = vld [vmem:[%s230 + $0x6b0] sm:$0xff]
        %v536 = vld [vmem:[%s230 + $0x6b8] sm:$0xff]
        %v537 = vld [vmem:[%s230 + $0x6c0] sm:$0xff]
        %v538 = vld [vmem:[%s230 + $0x6c8] sm:$0xff]
        %v539 = vld [vmem:[%s230 + $0x6d0] sm:$0xff]
        %v540 = vld [vmem:[%s230 + $0x6d8] sm:$0xff]
        %v541 = vld [vmem:[%s230 + $0x6e0] sm:$0xff]
        %v542 = vld [vmem:[%s230 + $0x6e8] sm:$0xff]
        %v543 = vld [vmem:[%s230 + $0x6f0] sm:$0xff]
        %v544 = vld [vmem:[%s230 + $0x6f8] sm:$0xff]
        %v545 = vld [vmem:[%s230 + $0x700] sm:$0xff]
        %v546 = vld [vmem:[%s230 + $0x708] sm:$0xff]
        %v547 = vld [vmem:[%s230 + $0x710] sm:$0xff]
        %v548 = vld [vmem:[%s230 + $0x718] sm:$0xff]
        %v549 = vld [vmem:[%s230 + $0x720] sm:$0xff]
        %v550 = vld [vmem:[%s230 + $0x728] sm:$0xff]
        %v551 = vld [vmem:[%s230 + $0x730] sm:$0xff]
        %v552 = vld [vmem:[%s230 + $0x738] sm:$0xff]
        %v553 = vld [vmem:[%s230 + $0x740] sm:$0xff]
        %v554 = vld [vmem:[%s230 + $0x748] sm:$0xff]
        %v555 = vld [vmem:[%s230 + $0x750] sm:$0xff]
        %v556 = vld [vmem:[%s230 + $0x758] sm:$0xff]
        %v557 = vld [vmem:[%s230 + $0x760] sm:$0xff]
        %v558 = vld [vmem:[%s230 + $0x768] sm:$0xff]
        %v559 = vld [vmem:[%s230 + $0x770] sm:$0xff]
        %v560 = vld [vmem:[%s230 + $0x778] sm:$0xff]
        %v561 = vld [vmem:[%s230 + $0x780] sm:$0xff]
        %v562 = vld [vmem:[%s230 + $0x788] sm:$0xff]
        %v563 = vld [vmem:[%s230 + $0x790] sm:$0xff]
        %v564 = vld [vmem:[%s230 + $0x798] sm:$0xff]
        %v565 = vld [vmem:[%s230 + $0x7a0] sm:$0xff]
        %v566 = vld [vmem:[%s230 + $0x7a8] sm:$0xff]
        %v567 = vld [vmem:[%s230 + $0x7b0] sm:$0xff]
        %v568 = vld [vmem:[%s230 + $0x7b8] sm:$0xff]
        %v569 = vld [vmem:[%s230 + $0x7c0] sm:$0xff]
        %v570 = vld [vmem:[%s230 + $0x7c8] sm:$0xff]
        %v571 = vld [vmem:[%s230 + $0x7d0] sm:$0xff]
        %v572 = vld [vmem:[%s230 + $0x7d8] sm:$0xff]
        %v573 = vld [vmem:[%s230 + $0x7e0] sm:$0xff]
        %v574 = vld [vmem:[%s230 + $0x7e8] sm:$0xff]
        %v575 = vld [vmem:[%s230 + $0x7f0] sm:$0xff]
        %v576 = vld [vmem:[%s230 + $0x7f8] sm:$0xff]
        %v577 = vld [vmem:[%s230 + $0x800] sm:$0xff]
        %v578 = vld [vmem:[%s230 + $0x808] sm:$0xff]
        %v579 = vld [vmem:[%s230 + $0x810] sm:$0xff]
        %v580 = vld [vmem:[%s230 + $0x818] sm:$0xff]
        %v581 = vld [vmem:[%s230 + $0x820] sm:$0xff]
        %v582 = vld [vmem:[%s230 + $0x828] sm:$0xff]
        %v583 = vld [vmem:[%s230 + $0x830] sm:$0xff]
        %v584 = vld [vmem:[%s230 + $0x838] sm:$0xff]
        %v585 = vld [vmem:[%s230 + $0x840] sm:$0xff]
        %v586 = vld [vmem:[%s230 + $0x848] sm:$0xff]
        %v587 = vld [vmem:[%s230 + $0x850] sm:$0xff]
        %v588 = vld [vmem:[%s230 + $0x858] sm:$0xff]
        %v589 = vld [vmem:[%s230 + $0x860] sm:$0xff]
        %v590 = vld [vmem:[%s230 + $0x868] sm:$0xff]
        %v591 = vld [vmem:[%s230 + $0x870] sm:$0xff]
        %v592 = vld [vmem:[%s230 + $0x878] sm:$0xff]
        %v593 = vld [vmem:[%s230 + $0x880] sm:$0xff]
        %v594 = vld [vmem:[%s230 + $0x888] sm:$0xff]
        %v595 = vld [vmem:[%s230 + $0x890] sm:$0xff]
        %v596 = vld [vmem:[%s230 + $0x898] sm:$0xff]
        %v597 = vld [vmem:[%s230 + $0x8a0] sm:$0xff]
        %v598 = vld [vmem:[%s230 + $0x8a8] sm:$0xff]
        %v599 = vld [vmem:[%s230 + $0x8b0] sm:$0xff]
        %v600 = vld [vmem:[%s230 + $0x8b8] sm:$0xff]
        %v601 = vld [vmem:[%s230 + $0x8c0] sm:$0xff]
        %v602 = vld [vmem:[%s230 + $0x8c8] sm:$0xff]
        %v603 = vld [vmem:[%s230 + $0x8d0] sm:$0xff]
        %v604 = vld [vmem:[%s230 + $0x8d8] sm:$0xff]
        %v605 = vld [vmem:[%s230 + $0x8e0] sm:$0xff]
        %v606 = vld [vmem:[%s230 + $0x8e8] sm:$0xff]
        %v607 = vld [vmem:[%s230 + $0x8f0] sm:$0xff]
        %v608 = vld [vmem:[%s230 + $0x8f8] sm:$0xff]
        %v609 = vld [vmem:[%s230 + $0x900] sm:$0xff]
        %v610 = vld [vmem:[%s230 + $0x908] sm:$0xff]
        %v611 = vld [vmem:[%s230 + $0x910] sm:$0xff]
        %v612 = vld [vmem:[%s230 + $0x918] sm:$0xff]
        %v613 = vld [vmem:[%s230 + $0x920] sm:$0xff]
        %v614 = vld [vmem:[%s230 + $0x928] sm:$0xff]
        %v615 = vld [vmem:[%s230 + $0x930] sm:$0xff]
        %v616 = vld [vmem:[%s230 + $0x938] sm:$0xff]
        %v617 = vld [vmem:[%s230 + $0x940] sm:$0xff]
        %v618 = vld [vmem:[%s230 + $0x948] sm:$0xff]
        %v619 = vld [vmem:[%s230 + $0x950] sm:$0xff]
        %v620 = vld [vmem:[%s230 + $0x958] sm:$0xff]
        %v621 = vld [vmem:[%s230 + $0x960] sm:$0xff]
        %v622 = vld [vmem:[%s230 + $0x968] sm:$0xff]
        %v623 = vld [vmem:[%s230 + $0x970] sm:$0xff]
        %v624 = vld [vmem:[%s230 + $0x978] sm:$0xff]
        %v625 = vld [vmem:[%s230 + $0x980] sm:$0xff]
        %v626 = vld [vmem:[%s230 + $0x988] sm:$0xff]
        %v627 = vld [vmem:[%s230 + $0x990] sm:$0xff]
        %v628 = vld [vmem:[%s230 + $0x998] sm:$0xff]
        %v629 = vld [vmem:[%s230 + $0x9a0] sm:$0xff]
        %v630 = vld [vmem:[%s230 + $0x9a8] sm:$0xff]
        %v631 = vld [vmem:[%s230 + $0x9b0] sm:$0xff]
        %v632 = vld [vmem:[%s230 + $0x9b8] sm:$0xff]
        %v633 = vld [vmem:[%s230 + $0x9c0] sm:$0xff]
        %v634 = vld [vmem:[%s230 + $0x9c8] sm:$0xff]
        %v635 = vld [vmem:[%s230 + $0x9d0] sm:$0xff]
        %v636 = vld [vmem:[%s230 + $0x9d8] sm:$0xff]
        %v637 = vld [vmem:[%s230 + $0x9e0] sm:$0xff]
        %v638 = vld [vmem:[%s230 + $0x9e8] sm:$0xff]
        %v639 = vld [vmem:[%s230 + $0x9f0] sm:$0xff]
        %v640 = vld [vmem:[%s230 + $0x9f8] sm:$0xff]
        %v651 = vunpack.c.l.b16 %v311
        %v652 = vunpack.c.h.b16 %v311
        %v653 = vunpack.c.l.b16 %v312
        %v654 = vunpack.c.h.b16 %v312
        %v655 = vunpack.c.l.b16 %v313
        %v656 = vunpack.c.h.b16 %v313
        %v657 = vunpack.c.l.b16 %v314
        %v658 = vunpack.c.h.b16 %v314
        %v659 = vunpack.c.l.b16 %v315
        %v660 = vunpack.c.h.b16 %v315
        %v661 = vunpack.c.l.b16 %v316
        %v662 = vunpack.c.h.b16 %v316
        %v663 = vunpack.c.l.b16 %v317
        %v664 = vunpack.c.h.b16 %v317
        %v665 = vunpack.c.l.b16 %v318
        %v666 = vunpack.c.h.b16 %v318
        %v667 = vunpack.c.l.b16 %v319
        %v668 = vunpack.c.h.b16 %v319
        %v669 = vunpack.c.l.b16 %v320
        %v670 = vunpack.c.h.b16 %v320
        %v671 = vpack.c.b16 %v651, %v651
        %v672 = vpack.c.b16 %v652, %v652
        %v673 = vpack.c.b16 %v653, %v653
        %v674 = vpack.c.b16 %v654, %v654
        %v675 = vpack.c.b16 %v655, %v655
        %v676 = vpack.c.b16 %v656, %v656
        %v677 = vpack.c.b16 %v657, %v657
        %v678 = vpack.c.b16 %v658, %v658
        %v679 = vpack.c.b16 %v659, %v659
        %v680 = vpack.c.b16 %v660, %v660
        %v681 = vpack.c.b16 %v661, %v661
        %v682 = vpack.c.b16 %v662, %v662
        %v683 = vpack.c.b16 %v663, %v663
        %v684 = vpack.c.b16 %v664, %v664
        %v685 = vpack.c.b16 %v665, %v665
        %v686 = vpack.c.b16 %v666, %v666
        %v687 = vpack.c.b16 %v667, %v667
        %v688 = vpack.c.b16 %v668, %v668
        %v689 = vpack.c.b16 %v669, %v669
        %v690 = vpack.c.b16 %v670, %v670
        %v1031 = vunpack.c.l.b16 %v321
        %v1032 = vunpack.c.h.b16 %v321
        %v1033 = vunpack.c.l.b16 %v322
        %v1034 = vunpack.c.h.b16 %v322
        %v1035 = vunpack.c.l.b16 %v323
        %v1036 = vunpack.c.h.b16 %v323
        %v1037 = vunpack.c.l.b16 %v324
        %v1038 = vunpack.c.h.b16 %v324
        %v1039 = vunpack.c.l.b16 %v325
        %v1040 = vunpack.c.h.b16 %v325
        %v1041 = vunpack.c.l.b16 %v326
        %v1042 = vunpack.c.h.b16 %v326
        %v1043 = vunpack.c.l.b16 %v327
        %v1044 = vunpack.c.h.b16 %v327
        %v1045 = vunpack.c.l.b16 %v328
        %v1046 = vunpack.c.h.b16 %v328
        %v1047 = vunpack.c.l.b16 %v329
        %v1048 = vunpack.c.h.b16 %v329
        %v1049 = vunpack.c.l.b16 %v330
        %v1050 = vunpack.c.h.b16 %v330
        %v1051 = vunpack.c.l.b16 %v331
        %v1052 = vunpack.c.h.b16 %v331
        %v1053 = vunpack.c.l.b16 %v332
        %v1054 = vunpack.c.h.b16 %v332
        %v1055 = vunpack.c.l.b16 %v333
        %v1056 = vunpack.c.h.b16 %v333
        %v1057 = vunpack.c.l.b16 %v334
        %v1058 = vunpack.c.h.b16 %v334
        %v1059 = vunpack.c.l.b16 %v335
        %v1060 = vunpack.c.h.b16 %v335
        %v1061 = vunpack.c.l.b16 %v336
        %v1062 = vunpack.c.h.b16 %v336
        %v1063 = vunpack.c.l.b16 %v337
        %v1064 = vunpack.c.h.b16 %v337
        %v1065 = vunpack.c.l.b16 %v338
        %v1066 = vunpack.c.h.b16 %v338
        %v1067 = vunpack.c.l.b16 %v339
        %v1068 = vunpack.c.h.b16 %v339
        %v1069 = vunpack.c.l.b16 %v340
        %v1070 = vunpack.c.h.b16 %v340
        %v1071 = vunpack.c.l.b16 %v341
        %v1072 = vunpack.c.h.b16 %v341
        %v1073 = vunpack.c.l.b16 %v342
        %v1074 = vunpack.c.h.b16 %v342
        %v1075 = vunpack.c.l.b16 %v343
        %v1076 = vunpack.c.h.b16 %v343
        %v1077 = vunpack.c.l.b16 %v344
        %v1078 = vunpack.c.h.b16 %v344
        %v1079 = vunpack.c.l.b16 %v345
        %v1080 = vunpack.c.h.b16 %v345
        %v1081 = vunpack.c.l.b16 %v346
        %v1082 = vunpack.c.h.b16 %v346
        %v1083 = vunpack.c.l.b16 %v347
        %v1084 = vunpack.c.h.b16 %v347
        %v1085 = vunpack.c.l.b16 %v348
        %v1086 = vunpack.c.h.b16 %v348
        %v1087 = vunpack.c.l.b16 %v349
        %v1088 = vunpack.c.h.b16 %v349
        %v1089 = vunpack.c.l.b16 %v350
        %v1090 = vunpack.c.h.b16 %v350
        %v1091 = vunpack.c.l.b16 %v351
        %v1092 = vunpack.c.h.b16 %v351
        %v1093 = vunpack.c.l.b16 %v352
        %v1094 = vunpack.c.h.b16 %v352
        %v1095 = vunpack.c.l.b16 %v353
        %v1096 = vunpack.c.h.b16 %v353
        %v1097 = vunpack.c.l.b16 %v354
        %v1098 = vunpack.c.h.b16 %v354
        %v1099 = vunpack.c.l.b16 %v355
        %v1100 = vunpack.c.h.b16 %v355
        %v1101 = vunpack.c.l.b16 %v356
        %v1102 = vunpack.c.h.b16 %v356
        %v1103 = vunpack.c.l.b16 %v357
        %v1104 = vunpack.c.h.b16 %v357
        %v1105 = vunpack.c.l.b16 %v358
        %v1106 = vunpack.c.h.b16 %v358
        %v1107 = vunpack.c.l.b16 %v359
        %v1108 = vunpack.c.h.b16 %v359
        %v1109 = vunpack.c.l.b16 %v360
        %v1110 = vunpack.c.h.b16 %v360
        %v1111 = vunpack.c.l.b16 %v361
        %v1112 = vunpack.c.h.b16 %v361
        %v1113 = vunpack.c.l.b16 %v362
        %v1114 = vunpack.c.h.b16 %v362
        %v1115 = vunpack.c.l.b16 %v363
        %v1116 = vunpack.c.h.b16 %v363
        %v1117 = vunpack.c.l.b16 %v364
        %v1118 = vunpack.c.h.b16 %v364
        %v1119 = vunpack.c.l.b16 %v365
        %v1120 = vunpack.c.h.b16 %v365
        %v1121 = vunpack.c.l.b16 %v366
        %v1122 = vunpack.c.h.b16 %v366
        %v1123 = vunpack.c.l.b16 %v367
        %v1124 = vunpack.c.h.b16 %v367
        %v1125 = vunpack.c.l.b16 %v368
        %v1126 = vunpack.c.h.b16 %v368
        %v1127 = vunpack.c.l.b16 %v369
        %v1128 = vunpack.c.h.b16 %v369
        %v1129 = vunpack.c.l.b16 %v370
        %v1130 = vunpack.c.h.b16 %v370
        %v1131 = vunpack.c.l.b16 %v371
        %v1132 = vunpack.c.h.b16 %v371
        %v1133 = vunpack.c.l.b16 %v372
        %v1134 = vunpack.c.h.b16 %v372
        %v1135 = vunpack.c.l.b16 %v373
        %v1136 = vunpack.c.h.b16 %v373
        %v1137 = vunpack.c.l.b16 %v374
        %v1138 = vunpack.c.h.b16 %v374
        %v1139 = vunpack.c.l.b16 %v375
        %v1140 = vunpack.c.h.b16 %v375
        %v1141 = vunpack.c.l.b16 %v376
        %v1142 = vunpack.c.h.b16 %v376
        %v1143 = vunpack.c.l.b16 %v377
        %v1144 = vunpack.c.h.b16 %v377
        %v1145 = vunpack.c.l.b16 %v378
        %v1146 = vunpack.c.h.b16 %v378
        %v1147 = vunpack.c.l.b16 %v379
        %v1148 = vunpack.c.h.b16 %v379
        %v1149 = vunpack.c.l.b16 %v380
        %v1150 = vunpack.c.h.b16 %v380
        %v1151 = vunpack.c.l.b16 %v381
        %v1152 = vunpack.c.h.b16 %v381
        %v1153 = vunpack.c.l.b16 %v382
        %v1154 = vunpack.c.h.b16 %v382
        %v1155 = vunpack.c.l.b16 %v383
        %v1156 = vunpack.c.h.b16 %v383
        %v1157 = vunpack.c.l.b16 %v384
        %v1158 = vunpack.c.h.b16 %v384
        %v1159 = vunpack.c.l.b16 %v385
        %v1160 = vunpack.c.h.b16 %v385
        %v1161 = vunpack.c.l.b16 %v386
        %v1162 = vunpack.c.h.b16 %v386
        %v1163 = vunpack.c.l.b16 %v387
        %v1164 = vunpack.c.h.b16 %v387
        %v1165 = vunpack.c.l.b16 %v388
        %v1166 = vunpack.c.h.b16 %v388
        %v1167 = vunpack.c.l.b16 %v389
        %v1168 = vunpack.c.h.b16 %v389
        %v1169 = vunpack.c.l.b16 %v390
        %v1170 = vunpack.c.h.b16 %v390
        %v1171 = vunpack.c.l.b16 %v391
        %v1172 = vunpack.c.h.b16 %v391
        %v1173 = vunpack.c.l.b16 %v392
        %v1174 = vunpack.c.h.b16 %v392
        %v1175 = vunpack.c.l.b16 %v393
        %v1176 = vunpack.c.h.b16 %v393
        %v1177 = vunpack.c.l.b16 %v394
        %v1178 = vunpack.c.h.b16 %v394
        %v1179 = vunpack.c.l.b16 %v395
        %v1180 = vunpack.c.h.b16 %v395
        %v1181 = vunpack.c.l.b16 %v396
        %v1182 = vunpack.c.h.b16 %v396
        %v1183 = vunpack.c.l.b16 %v397
        %v1184 = vunpack.c.h.b16 %v397
        %v1185 = vunpack.c.l.b16 %v398
        %v1186 = vunpack.c.h.b16 %v398
        %v1187 = vunpack.c.l.b16 %v399
        %v1188 = vunpack.c.h.b16 %v399
        %v1189 = vunpack.c.l.b16 %v400
        %v1190 = vunpack.c.h.b16 %v400
        %v1191 = vunpack.c.l.b16 %v401
        %v1192 = vunpack.c.h.b16 %v401
        %v1193 = vunpack.c.l.b16 %v402
        %v1194 = vunpack.c.h.b16 %v402
        %v1195 = vunpack.c.l.b16 %v403
        %v1196 = vunpack.c.h.b16 %v403
        %v1197 = vunpack.c.l.b16 %v404
        %v1198 = vunpack.c.h.b16 %v404
        %v1199 = vunpack.c.l.b16 %v405
        %v1200 = vunpack.c.h.b16 %v405
        %v1201 = vunpack.c.l.b16 %v406
        %v1202 = vunpack.c.h.b16 %v406
        %v1203 = vunpack.c.l.b16 %v407
        %v1204 = vunpack.c.h.b16 %v407
        %v1205 = vunpack.c.l.b16 %v408
        %v1206 = vunpack.c.h.b16 %v408
        %v1207 = vunpack.c.l.b16 %v409
        %v1208 = vunpack.c.h.b16 %v409
        %v1209 = vunpack.c.l.b16 %v410
        %v1210 = vunpack.c.h.b16 %v410
        %v1211 = vunpack.c.l.b16 %v411
        %v1212 = vunpack.c.h.b16 %v411
        %v1213 = vunpack.c.l.b16 %v412
        %v1214 = vunpack.c.h.b16 %v412
        %v1215 = vunpack.c.l.b16 %v413
        %v1216 = vunpack.c.h.b16 %v413
        %v1217 = vunpack.c.l.b16 %v414
        %v1218 = vunpack.c.h.b16 %v414
        %v1219 = vunpack.c.l.b16 %v415
        %v1220 = vunpack.c.h.b16 %v415
        %v1221 = vunpack.c.l.b16 %v416
        %v1222 = vunpack.c.h.b16 %v416
        %v1223 = vunpack.c.l.b16 %v417
        %v1224 = vunpack.c.h.b16 %v417
        %v1225 = vunpack.c.l.b16 %v418
        %v1226 = vunpack.c.h.b16 %v418
        %v1227 = vunpack.c.l.b16 %v419
        %v1228 = vunpack.c.h.b16 %v419
        %v1229 = vunpack.c.l.b16 %v420
        %v1230 = vunpack.c.h.b16 %v420
        %v1231 = vunpack.c.l.b16 %v421
        %v1232 = vunpack.c.h.b16 %v421
        %v1233 = vunpack.c.l.b16 %v422
        %v1234 = vunpack.c.h.b16 %v422
        %v1235 = vunpack.c.l.b16 %v423
        %v1236 = vunpack.c.h.b16 %v423
        %v1237 = vunpack.c.l.b16 %v424
        %v1238 = vunpack.c.h.b16 %v424
        %v1239 = vunpack.c.l.b16 %v425
        %v1240 = vunpack.c.h.b16 %v425
        %v1241 = vunpack.c.l.b16 %v426
        %v1242 = vunpack.c.h.b16 %v426
        %v1243 = vunpack.c.l.b16 %v427
        %v1244 = vunpack.c.h.b16 %v427
        %v1245 = vunpack.c.l.b16 %v428
        %v1246 = vunpack.c.h.b16 %v428
        %v1247 = vunpack.c.l.b16 %v429
        %v1248 = vunpack.c.h.b16 %v429
        %v1249 = vunpack.c.l.b16 %v430
        %v1250 = vunpack.c.h.b16 %v430
        %v1251 = vunpack.c.l.b16 %v431
        %v1252 = vunpack.c.h.b16 %v431
        %v1253 = vunpack.c.l.b16 %v432
        %v1254 = vunpack.c.h.b16 %v432
        %v1255 = vunpack.c.l.b16 %v433
        %v1256 = vunpack.c.h.b16 %v433
        %v1257 = vunpack.c.l.b16 %v434
        %v1258 = vunpack.c.h.b16 %v434
        %v1259 = vunpack.c.l.b16 %v435
        %v1260 = vunpack.c.h.b16 %v435
        %v1261 = vunpack.c.l.b16 %v436
        %v1262 = vunpack.c.h.b16 %v436
        %v1263 = vunpack.c.l.b16 %v437
        %v1264 = vunpack.c.h.b16 %v437
        %v1265 = vunpack.c.l.b16 %v438
        %v1266 = vunpack.c.h.b16 %v438
        %v1267 = vunpack.c.l.b16 %v439
        %v1268 = vunpack.c.h.b16 %v439
        %v1269 = vunpack.c.l.b16 %v440
        %v1270 = vunpack.c.h.b16 %v440
        %v1271 = vunpack.c.l.b16 %v441
        %v1272 = vunpack.c.h.b16 %v441
        %v1273 = vunpack.c.l.b16 %v442
        %v1274 = vunpack.c.h.b16 %v442
        %v1275 = vunpack.c.l.b16 %v443
        %v1276 = vunpack.c.h.b16 %v443
        %v1277 = vunpack.c.l.b16 %v444
        %v1278 = vunpack.c.h.b16 %v444
        %v1279 = vunpack.c.l.b16 %v445
        %v1280 = vunpack.c.h.b16 %v445
        %v1281 = vunpack.c.l.b16 %v446
        %v1282 = vunpack.c.h.b16 %v446
        %v1283 = vunpack.c.l.b16 %v447
        %v1284 = vunpack.c.h.b16 %v447
        %v1285 = vunpack.c.l.b16 %v448
        %v1286 = vunpack.c.h.b16 %v448
        %v1287 = vunpack.c.l.b16 %v449
        %v1288 = vunpack.c.h.b16 %v449
        %v1289 = vunpack.c.l.b16 %v450
        %v1290 = vunpack.c.h.b16 %v450
        %v1291 = vunpack.c.l.b16 %v451
        %v1292 = vunpack.c.h.b16 %v451
        %v1293 = vunpack.c.l.b16 %v452
        %v1294 = vunpack.c.h.b16 %v452
        %v1295 = vunpack.c.l.b16 %v453
        %v1296 = vunpack.c.h.b16 %v453
        %v1297 = vunpack.c.l.b16 %v454
        %v1298 = vunpack.c.h.b16 %v454
        %v1299 = vunpack.c.l.b16 %v455
        %v1300 = vunpack.c.h.b16 %v455
        %v1301 = vunpack.c.l.b16 %v456
        %v1302 = vunpack.c.h.b16 %v456
        %v1303 = vunpack.c.l.b16 %v457
        %v1304 = vunpack.c.h.b16 %v457
        %v1305 = vunpack.c.l.b16 %v458
        %v1306 = vunpack.c.h.b16 %v458
        %v1307 = vunpack.c.l.b16 %v459
        %v1308 = vunpack.c.h.b16 %v459
        %v1309 = vunpack.c.l.b16 %v460
        %v1310 = vunpack.c.h.b16 %v460
        %v1311 = vunpack.c.l.b16 %v461
        %v1312 = vunpack.c.h.b16 %v461
        %v1313 = vunpack.c.l.b16 %v462
        %v1314 = vunpack.c.h.b16 %v462
        %v1315 = vunpack.c.l.b16 %v463
        %v1316 = vunpack.c.h.b16 %v463
        %v1317 = vunpack.c.l.b16 %v464
        %v1318 = vunpack.c.h.b16 %v464
        %v1319 = vunpack.c.l.b16 %v465
        %v1320 = vunpack.c.h.b16 %v465
        %v1321 = vunpack.c.l.b16 %v466
        %v1322 = vunpack.c.h.b16 %v466
        %v1323 = vunpack.c.l.b16 %v467
        %v1324 = vunpack.c.h.b16 %v467
        %v1325 = vunpack.c.l.b16 %v468
        %v1326 = vunpack.c.h.b16 %v468
        %v1327 = vunpack.c.l.b16 %v469
        %v1328 = vunpack.c.h.b16 %v469
        %v1329 = vunpack.c.l.b16 %v470
        %v1330 = vunpack.c.h.b16 %v470
        %v1331 = vunpack.c.l.b16 %v471
        %v1332 = vunpack.c.h.b16 %v471
        %v1333 = vunpack.c.l.b16 %v472
        %v1334 = vunpack.c.h.b16 %v472
        %v1335 = vunpack.c.l.b16 %v473
        %v1336 = vunpack.c.h.b16 %v473
        %v1337 = vunpack.c.l.b16 %v474
        %v1338 = vunpack.c.h.b16 %v474
        %v1339 = vunpack.c.l.b16 %v475
        %v1340 = vunpack.c.h.b16 %v475
        %v1341 = vunpack.c.l.b16 %v476
        %v1342 = vunpack.c.h.b16 %v476
        %v1343 = vunpack.c.l.b16 %v477
        %v1344 = vunpack.c.h.b16 %v477
        %v1345 = vunpack.c.l.b16 %v478
        %v1346 = vunpack.c.h.b16 %v478
        %v1347 = vunpack.c.l.b16 %v479
        %v1348 = vunpack.c.h.b16 %v479
        %v1349 = vunpack.c.l.b16 %v480
        %v1350 = vunpack.c.h.b16 %v480
        %v1351 = vunpack.c.l.b16 %v481
        %v1352 = vunpack.c.h.b16 %v481
        %v1353 = vunpack.c.l.b16 %v482
        %v1354 = vunpack.c.h.b16 %v482
        %v1355 = vunpack.c.l.b16 %v483
        %v1356 = vunpack.c.h.b16 %v483
        %v1357 = vunpack.c.l.b16 %v484
        %v1358 = vunpack.c.h.b16 %v484
        %v1359 = vunpack.c.l.b16 %v485
        %v1360 = vunpack.c.h.b16 %v485
        %v1361 = vunpack.c.l.b16 %v486
        %v1362 = vunpack.c.h.b16 %v486
        %v1363 = vunpack.c.l.b16 %v487
        %v1364 = vunpack.c.h.b16 %v487
        %v1365 = vunpack.c.l.b16 %v488
        %v1366 = vunpack.c.h.b16 %v488
        %v1367 = vunpack.c.l.b16 %v489
        %v1368 = vunpack.c.h.b16 %v489
        %v1369 = vunpack.c.l.b16 %v490
        %v1370 = vunpack.c.h.b16 %v490
        %v1371 = vunpack.c.l.b16 %v491
        %v1372 = vunpack.c.h.b16 %v491
        %v1373 = vunpack.c.l.b16 %v492
        %v1374 = vunpack.c.h.b16 %v492
        %v1375 = vunpack.c.l.b16 %v493
        %v1376 = vunpack.c.h.b16 %v493
        %v1377 = vunpack.c.l.b16 %v494
        %v1378 = vunpack.c.h.b16 %v494
        %v1379 = vunpack.c.l.b16 %v495
        %v1380 = vunpack.c.h.b16 %v495
        %v1381 = vunpack.c.l.b16 %v496
        %v1382 = vunpack.c.h.b16 %v496
        %v1383 = vunpack.c.l.b16 %v497
        %v1384 = vunpack.c.h.b16 %v497
        %v1385 = vunpack.c.l.b16 %v498
        %v1386 = vunpack.c.h.b16 %v498
        %v1387 = vunpack.c.l.b16 %v499
        %v1388 = vunpack.c.h.b16 %v499
        %v1389 = vunpack.c.l.b16 %v500
        %v1390 = vunpack.c.h.b16 %v500
        %v1391 = vunpack.c.l.b16 %v501
        %v1392 = vunpack.c.h.b16 %v501
        %v1393 = vunpack.c.l.b16 %v502
        %v1394 = vunpack.c.h.b16 %v502
        %v1395 = vunpack.c.l.b16 %v503
        %v1396 = vunpack.c.h.b16 %v503
        %v1397 = vunpack.c.l.b16 %v504
        %v1398 = vunpack.c.h.b16 %v504
        %v1399 = vunpack.c.l.b16 %v505
        %v1400 = vunpack.c.h.b16 %v505
        %v1401 = vunpack.c.l.b16 %v506
        %v1402 = vunpack.c.h.b16 %v506
        %v1403 = vunpack.c.l.b16 %v507
        %v1404 = vunpack.c.h.b16 %v507
        %v1405 = vunpack.c.l.b16 %v508
        %v1406 = vunpack.c.h.b16 %v508
        %v1407 = vunpack.c.l.b16 %v509
        %v1408 = vunpack.c.h.b16 %v509
        %v1409 = vunpack.c.l.b16 %v510
        %v1410 = vunpack.c.h.b16 %v510
        %v1411 = vunpack.c.l.b16 %v511
        %v1412 = vunpack.c.h.b16 %v511
        %v1413 = vunpack.c.l.b16 %v512
        %v1414 = vunpack.c.h.b16 %v512
        %v1415 = vunpack.c.l.b16 %v513
        %v1416 = vunpack.c.h.b16 %v513
        %v1417 = vunpack.c.l.b16 %v514
        %v1418 = vunpack.c.h.b16 %v514
        %v1419 = vunpack.c.l.b16 %v515
        %v1420 = vunpack.c.h.b16 %v515
        %v1421 = vunpack.c.l.b16 %v516
        %v1422 = vunpack.c.h.b16 %v516
        %v1423 = vunpack.c.l.b16 %v517
        %v1424 = vunpack.c.h.b16 %v517
        %v1425 = vunpack.c.l.b16 %v518
        %v1426 = vunpack.c.h.b16 %v518
        %v1427 = vunpack.c.l.b16 %v519
        %v1428 = vunpack.c.h.b16 %v519
        %v1429 = vunpack.c.l.b16 %v520
        %v1430 = vunpack.c.h.b16 %v520
        %v1431 = vunpack.c.l.b16 %v521
        %v1432 = vunpack.c.h.b16 %v521
        %v1433 = vunpack.c.l.b16 %v522
        %v1434 = vunpack.c.h.b16 %v522
        %v1435 = vunpack.c.l.b16 %v523
        %v1436 = vunpack.c.h.b16 %v523
        %v1437 = vunpack.c.l.b16 %v524
        %v1438 = vunpack.c.h.b16 %v524
        %v1439 = vunpack.c.l.b16 %v525
        %v1440 = vunpack.c.h.b16 %v525
        %v1441 = vunpack.c.l.b16 %v526
        %v1442 = vunpack.c.h.b16 %v526
        %v1443 = vunpack.c.l.b16 %v527
        %v1444 = vunpack.c.h.b16 %v527
        %v1445 = vunpack.c.l.b16 %v528
        %v1446 = vunpack.c.h.b16 %v528
        %v1447 = vunpack.c.l.b16 %v529
        %v1448 = vunpack.c.h.b16 %v529
        %v1449 = vunpack.c.l.b16 %v530
        %v1450 = vunpack.c.h.b16 %v530
        %v1451 = vunpack.c.l.b16 %v531
        %v1452 = vunpack.c.h.b16 %v531
        %v1453 = vunpack.c.l.b16 %v532
        %v1454 = vunpack.c.h.b16 %v532
        %v1455 = vunpack.c.l.b16 %v533
        %v1456 = vunpack.c.h.b16 %v533
        %v1457 = vunpack.c.l.b16 %v534
        %v1458 = vunpack.c.h.b16 %v534
        %v1459 = vunpack.c.l.b16 %v535
        %v1460 = vunpack.c.h.b16 %v535
        %v1461 = vunpack.c.l.b16 %v536
        %v1462 = vunpack.c.h.b16 %v536
        %v1463 = vunpack.c.l.b16 %v537
        %v1464 = vunpack.c.h.b16 %v537
        %v1465 = vunpack.c.l.b16 %v538
        %v1466 = vunpack.c.h.b16 %v538
        %v1467 = vunpack.c.l.b16 %v539
        %v1468 = vunpack.c.h.b16 %v539
        %v1469 = vunpack.c.l.b16 %v540
        %v1470 = vunpack.c.h.b16 %v540
        %v1471 = vunpack.c.l.b16 %v541
        %v1472 = vunpack.c.h.b16 %v541
        %v1473 = vunpack.c.l.b16 %v542
        %v1474 = vunpack.c.h.b16 %v542
        %v1475 = vunpack.c.l.b16 %v543
        %v1476 = vunpack.c.h.b16 %v543
        %v1477 = vunpack.c.l.b16 %v544
        %v1478 = vunpack.c.h.b16 %v544
        %v1479 = vunpack.c.l.b16 %v545
        %v1480 = vunpack.c.h.b16 %v545
        %v1481 = vunpack.c.l.b16 %v546
        %v1482 = vunpack.c.h.b16 %v546
        %v1483 = vunpack.c.l.b16 %v547
        %v1484 = vunpack.c.h.b16 %v547
        %v1485 = vunpack.c.l.b16 %v548
        %v1486 = vunpack.c.h.b16 %v548
        %v1487 = vunpack.c.l.b16 %v549
        %v1488 = vunpack.c.h.b16 %v549
        %v1489 = vunpack.c.l.b16 %v550
        %v1490 = vunpack.c.h.b16 %v550
        %v1491 = vunpack.c.l.b16 %v551
        %v1492 = vunpack.c.h.b16 %v551
        %v1493 = vunpack.c.l.b16 %v552
        %v1494 = vunpack.c.h.b16 %v552
        %v1495 = vunpack.c.l.b16 %v553
        %v1496 = vunpack.c.h.b16 %v553
        %v1497 = vunpack.c.l.b16 %v554
        %v1498 = vunpack.c.h.b16 %v554
        %v1499 = vunpack.c.l.b16 %v555
        %v1500 = vunpack.c.h.b16 %v555
        %v1501 = vunpack.c.l.b16 %v556
        %v1502 = vunpack.c.h.b16 %v556
        %v1503 = vunpack.c.l.b16 %v557
        %v1504 = vunpack.c.h.b16 %v557
        %v1505 = vunpack.c.l.b16 %v558
        %v1506 = vunpack.c.h.b16 %v558
        %v1507 = vunpack.c.l.b16 %v559
        %v1508 = vunpack.c.h.b16 %v559
        %v1509 = vunpack.c.l.b16 %v560
        %v1510 = vunpack.c.h.b16 %v560
        %v1511 = vunpack.c.l.b16 %v561
        %v1512 = vunpack.c.h.b16 %v561
        %v1513 = vunpack.c.l.b16 %v562
        %v1514 = vunpack.c.h.b16 %v562
        %v1515 = vunpack.c.l.b16 %v563
        %v1516 = vunpack.c.h.b16 %v563
        %v1517 = vunpack.c.l.b16 %v564
        %v1518 = vunpack.c.h.b16 %v564
        %v1519 = vunpack.c.l.b16 %v565
        %v1520 = vunpack.c.h.b16 %v565
        %v1521 = vunpack.c.l.b16 %v566
        %v1522 = vunpack.c.h.b16 %v566
        %v1523 = vunpack.c.l.b16 %v567
        %v1524 = vunpack.c.h.b16 %v567
        %v1525 = vunpack.c.l.b16 %v568
        %v1526 = vunpack.c.h.b16 %v568
        %v1527 = vunpack.c.l.b16 %v569
        %v1528 = vunpack.c.h.b16 %v569
        %v1529 = vunpack.c.l.b16 %v570
        %v1530 = vunpack.c.h.b16 %v570
        %v1531 = vunpack.c.l.b16 %v571
        %v1532 = vunpack.c.h.b16 %v571
        %v1533 = vunpack.c.l.b16 %v572
        %v1534 = vunpack.c.h.b16 %v572
        %v1535 = vunpack.c.l.b16 %v573
        %v1536 = vunpack.c.h.b16 %v573
        %v1537 = vunpack.c.l.b16 %v574
        %v1538 = vunpack.c.h.b16 %v574
        %v1539 = vunpack.c.l.b16 %v575
        %v1540 = vunpack.c.h.b16 %v575
        %v1541 = vunpack.c.l.b16 %v576
        %v1542 = vunpack.c.h.b16 %v576
        %v1543 = vunpack.c.l.b16 %v577
        %v1544 = vunpack.c.h.b16 %v577
        %v1545 = vunpack.c.l.b16 %v578
        %v1546 = vunpack.c.h.b16 %v578
        %v1547 = vunpack.c.l.b16 %v579
        %v1548 = vunpack.c.h.b16 %v579
        %v1549 = vunpack.c.l.b16 %v580
        %v1550 = vunpack.c.h.b16 %v580
        %v1551 = vunpack.c.l.b16 %v581
        %v1552 = vunpack.c.h.b16 %v581
        %v1553 = vunpack.c.l.b16 %v582
        %v1554 = vunpack.c.h.b16 %v582
        %v1555 = vunpack.c.l.b16 %v583
        %v1556 = vunpack.c.h.b16 %v583
        %v1557 = vunpack.c.l.b16 %v584
        %v1558 = vunpack.c.h.b16 %v584
        %v1559 = vunpack.c.l.b16 %v585
        %v1560 = vunpack.c.h.b16 %v585
        %v1561 = vunpack.c.l.b16 %v586
        %v1562 = vunpack.c.h.b16 %v586
        %v1563 = vunpack.c.l.b16 %v587
        %v1564 = vunpack.c.h.b16 %v587
        %v1565 = vunpack.c.l.b16 %v588
        %v1566 = vunpack.c.h.b16 %v588
        %v1567 = vunpack.c.l.b16 %v589
        %v1568 = vunpack.c.h.b16 %v589
        %v1569 = vunpack.c.l.b16 %v590
        %v1570 = vunpack.c.h.b16 %v590
        %v1571 = vunpack.c.l.b16 %v591
        %v1572 = vunpack.c.h.b16 %v591
        %v1573 = vunpack.c.l.b16 %v592
        %v1574 = vunpack.c.h.b16 %v592
        %v1575 = vunpack.c.l.b16 %v593
        %v1576 = vunpack.c.h.b16 %v593
        %v1577 = vunpack.c.l.b16 %v594
        %v1578 = vunpack.c.h.b16 %v594
        %v1579 = vunpack.c.l.b16 %v595
        %v1580 = vunpack.c.h.b16 %v595
        %v1581 = vunpack.c.l.b16 %v596
        %v1582 = vunpack.c.h.b16 %v596
        %v1583 = vunpack.c.l.b16 %v597
        %v1584 = vunpack.c.h.b16 %v597
        %v1585 = vunpack.c.l.b16 %v598
        %v1586 = vunpack.c.h.b16 %v598
        %v1587 = vunpack.c.l.b16 %v599
        %v1588 = vunpack.c.h.b16 %v599
        %v1589 = vunpack.c.l.b16 %v600
        %v1590 = vunpack.c.h.b16 %v600
        %v1591 = vunpack.c.l.b16 %v601
        %v1592 = vunpack.c.h.b16 %v601
        %v1593 = vunpack.c.l.b16 %v602
        %v1594 = vunpack.c.h.b16 %v602
        %v1595 = vunpack.c.l.b16 %v603
        %v1596 = vunpack.c.h.b16 %v603
        %v1597 = vunpack.c.l.b16 %v604
        %v1598 = vunpack.c.h.b16 %v604
        %v1599 = vunpack.c.l.b16 %v605
        %v1600 = vunpack.c.h.b16 %v605
        %v1601 = vunpack.c.l.b16 %v606
        %v1602 = vunpack.c.h.b16 %v606
        %v1603 = vunpack.c.l.b16 %v607
        %v1604 = vunpack.c.h.b16 %v607
        %v1605 = vunpack.c.l.b16 %v608
        %v1606 = vunpack.c.h.b16 %v608
        %v1607 = vunpack.c.l.b16 %v609
        %v1608 = vunpack.c.h.b16 %v609
        %v1609 = vunpack.c.l.b16 %v610
        %v1610 = vunpack.c.h.b16 %v610
        %v1611 = vunpack.c.l.b16 %v611
        %v1612 = vunpack.c.h.b16 %v611
        %v1613 = vunpack.c.l.b16 %v612
        %v1614 = vunpack.c.h.b16 %v612
        %v1615 = vunpack.c.l.b16 %v613
        %v1616 = vunpack.c.h.b16 %v613
        %v1617 = vunpack.c.l.b16 %v614
        %v1618 = vunpack.c.h.b16 %v614
        %v1619 = vunpack.c.l.b16 %v615
        %v1620 = vunpack.c.h.b16 %v615
        %v1621 = vunpack.c.l.b16 %v616
        %v1622 = vunpack.c.h.b16 %v616
        %v1623 = vunpack.c.l.b16 %v617
        %v1624 = vunpack.c.h.b16 %v617
        %v1625 = vunpack.c.l.b16 %v618
        %v1626 = vunpack.c.h.b16 %v618
        %v1627 = vunpack.c.l.b16 %v619
        %v1628 = vunpack.c.h.b16 %v619
        %v1629 = vunpack.c.l.b16 %v620
        %v1630 = vunpack.c.h.b16 %v620
        %v1631 = vunpack.c.l.b16 %v621
        %v1632 = vunpack.c.h.b16 %v621
        %v1633 = vunpack.c.l.b16 %v622
        %v1634 = vunpack.c.h.b16 %v622
        %v1635 = vunpack.c.l.b16 %v623
        %v1636 = vunpack.c.h.b16 %v623
        %v1637 = vunpack.c.l.b16 %v624
        %v1638 = vunpack.c.h.b16 %v624
        %v1639 = vunpack.c.l.b16 %v625
        %v1640 = vunpack.c.h.b16 %v625
        %v1641 = vunpack.c.l.b16 %v626
        %v1642 = vunpack.c.h.b16 %v626
        %v1643 = vunpack.c.l.b16 %v627
        %v1644 = vunpack.c.h.b16 %v627
        %v1645 = vunpack.c.l.b16 %v628
        %v1646 = vunpack.c.h.b16 %v628
        %v1647 = vunpack.c.l.b16 %v629
        %v1648 = vunpack.c.h.b16 %v629
        %v1649 = vunpack.c.l.b16 %v630
        %v1650 = vunpack.c.h.b16 %v630
        %v1651 = vunpack.c.l.b16 %v631
        %v1652 = vunpack.c.h.b16 %v631
        %v1653 = vunpack.c.l.b16 %v632
        %v1654 = vunpack.c.h.b16 %v632
        %v1655 = vunpack.c.l.b16 %v633
        %v1656 = vunpack.c.h.b16 %v633
        %v1657 = vunpack.c.l.b16 %v634
        %v1658 = vunpack.c.h.b16 %v634
        %v1659 = vunpack.c.l.b16 %v635
        %v1660 = vunpack.c.h.b16 %v635
        %v1661 = vunpack.c.l.b16 %v636
        %v1662 = vunpack.c.h.b16 %v636
        %v1663 = vunpack.c.l.b16 %v637
        %v1664 = vunpack.c.h.b16 %v637
        %v1665 = vunpack.c.l.b16 %v638
        %v1666 = vunpack.c.h.b16 %v638
        %v1667 = vunpack.c.l.b16 %v639
        %v1668 = vunpack.c.h.b16 %v639
        %v1669 = vunpack.c.l.b16 %v640
        %v1670 = vunpack.c.h.b16 %v640
        %v1671 = vpack.c.b16 %v1033, %v1031
        %v1672 = vpack.c.b16 %v1034, %v1032
        %v1673 = vpack.c.b16 %v1037, %v1035
        %v1674 = vpack.c.b16 %v1038, %v1036
        %v1675 = vpack.c.b16 %v1041, %v1039
        %v1676 = vpack.c.b16 %v1042, %v1040
        %v1677 = vpack.c.b16 %v1045, %v1043
        %v1678 = vpack.c.b16 %v1046, %v1044
        %v1679 = vpack.c.b16 %v1049, %v1047
        %v1680 = vpack.c.b16 %v1050, %v1048
        %v1681 = vpack.c.b16 %v1053, %v1051
        %v1682 = vpack.c.b16 %v1054, %v1052
        %v1683 = vpack.c.b16 %v1057, %v1055
        %v1684 = vpack.c.b16 %v1058, %v1056
        %v1685 = vpack.c.b16 %v1061, %v1059
        %v1686 = vpack.c.b16 %v1062, %v1060
        %v1687 = vpack.c.b16 %v1065, %v1063
        %v1688 = vpack.c.b16 %v1066, %v1064
        %v1689 = vpack.c.b16 %v1069, %v1067
        %v1690 = vpack.c.b16 %v1070, %v1068
        %v1691 = vpack.c.b16 %v1073, %v1071
        %v1692 = vpack.c.b16 %v1074, %v1072
        %v1693 = vpack.c.b16 %v1077, %v1075
        %v1694 = vpack.c.b16 %v1078, %v1076
        %v1695 = vpack.c.b16 %v1081, %v1079
        %v1696 = vpack.c.b16 %v1082, %v1080
        %v1697 = vpack.c.b16 %v1085, %v1083
        %v1698 = vpack.c.b16 %v1086, %v1084
        %v1699 = vpack.c.b16 %v1089, %v1087
        %v1700 = vpack.c.b16 %v1090, %v1088
        %v1701 = vpack.c.b16 %v1093, %v1091
        %v1702 = vpack.c.b16 %v1094, %v1092
        %v1703 = vpack.c.b16 %v1097, %v1095
        %v1704 = vpack.c.b16 %v1098, %v1096
        %v1705 = vpack.c.b16 %v1101, %v1099
        %v1706 = vpack.c.b16 %v1102, %v1100
        %v1707 = vpack.c.b16 %v1105, %v1103
        %v1708 = vpack.c.b16 %v1106, %v1104
        %v1709 = vpack.c.b16 %v1109, %v1107
        %v1710 = vpack.c.b16 %v1110, %v1108
        %v1711 = vpack.c.b16 %v1113, %v1111
        %v1712 = vpack.c.b16 %v1114, %v1112
        %v1713 = vpack.c.b16 %v1117, %v1115
        %v1714 = vpack.c.b16 %v1118, %v1116
        %v1715 = vpack.c.b16 %v1121, %v1119
        %v1716 = vpack.c.b16 %v1122, %v1120
        %v1717 = vpack.c.b16 %v1125, %v1123
        %v1718 = vpack.c.b16 %v1126, %v1124
        %v1719 = vpack.c.b16 %v1129, %v1127
        %v1720 = vpack.c.b16 %v1130, %v1128
        %v1721 = vpack.c.b16 %v1133, %v1131
        %v1722 = vpack.c.b16 %v1134, %v1132
        %v1723 = vpack.c.b16 %v1137, %v1135
        %v1724 = vpack.c.b16 %v1138, %v1136
        %v1725 = vpack.c.b16 %v1141, %v1139
        %v1726 = vpack.c.b16 %v1142, %v1140
        %v1727 = vpack.c.b16 %v1145, %v1143
        %v1728 = vpack.c.b16 %v1146, %v1144
        %v1729 = vpack.c.b16 %v1149, %v1147
        %v1730 = vpack.c.b16 %v1150, %v1148
        %v1731 = vpack.c.b16 %v1153, %v1151
        %v1732 = vpack.c.b16 %v1154, %v1152
        %v1733 = vpack.c.b16 %v1157, %v1155
        %v1734 = vpack.c.b16 %v1158, %v1156
        %v1735 = vpack.c.b16 %v1161, %v1159
        %v1736 = vpack.c.b16 %v1162, %v1160
        %v1737 = vpack.c.b16 %v1165, %v1163
        %v1738 = vpack.c.b16 %v1166, %v1164
        %v1739 = vpack.c.b16 %v1169, %v1167
        %v1740 = vpack.c.b16 %v1170, %v1168
        %v1741 = vpack.c.b16 %v1173, %v1171
        %v1742 = vpack.c.b16 %v1174, %v1172
        %v1743 = vpack.c.b16 %v1177, %v1175
        %v1744 = vpack.c.b16 %v1178, %v1176
        %v1745 = vpack.c.b16 %v1181, %v1179
        %v1746 = vpack.c.b16 %v1182, %v1180
        %v1747 = vpack.c.b16 %v1185, %v1183
        %v1748 = vpack.c.b16 %v1186, %v1184
        %v1749 = vpack.c.b16 %v1189, %v1187
        %v1750 = vpack.c.b16 %v1190, %v1188
        %v1751 = vpack.c.b16 %v1193, %v1191
        %v1752 = vpack.c.b16 %v1194, %v1192
        %v1753 = vpack.c.b16 %v1197, %v1195
        %v1754 = vpack.c.b16 %v1198, %v1196
        %v1755 = vpack.c.b16 %v1201, %v1199
        %v1756 = vpack.c.b16 %v1202, %v1200
        %v1757 = vpack.c.b16 %v1205, %v1203
        %v1758 = vpack.c.b16 %v1206, %v1204
        %v1759 = vpack.c.b16 %v1209, %v1207
        %v1760 = vpack.c.b16 %v1210, %v1208
        %v1761 = vpack.c.b16 %v1213, %v1211
        %v1762 = vpack.c.b16 %v1214, %v1212
        %v1763 = vpack.c.b16 %v1217, %v1215
        %v1764 = vpack.c.b16 %v1218, %v1216
        %v1765 = vpack.c.b16 %v1221, %v1219
        %v1766 = vpack.c.b16 %v1222, %v1220
        %v1767 = vpack.c.b16 %v1225, %v1223
        %v1768 = vpack.c.b16 %v1226, %v1224
        %v1769 = vpack.c.b16 %v1229, %v1227
        %v1770 = vpack.c.b16 %v1230, %v1228
        %v1771 = vpack.c.b16 %v1233, %v1231
        %v1772 = vpack.c.b16 %v1234, %v1232
        %v1773 = vpack.c.b16 %v1237, %v1235
        %v1774 = vpack.c.b16 %v1238, %v1236
        %v1775 = vpack.c.b16 %v1241, %v1239
        %v1776 = vpack.c.b16 %v1242, %v1240
        %v1777 = vpack.c.b16 %v1245, %v1243
        %v1778 = vpack.c.b16 %v1246, %v1244
        %v1779 = vpack.c.b16 %v1249, %v1247
        %v1780 = vpack.c.b16 %v1250, %v1248
        %v1781 = vpack.c.b16 %v1253, %v1251
        %v1782 = vpack.c.b16 %v1254, %v1252
        %v1783 = vpack.c.b16 %v1257, %v1255
        %v1784 = vpack.c.b16 %v1258, %v1256
        %v1785 = vpack.c.b16 %v1261, %v1259
        %v1786 = vpack.c.b16 %v1262, %v1260
        %v1787 = vpack.c.b16 %v1265, %v1263
        %v1788 = vpack.c.b16 %v1266, %v1264
        %v1789 = vpack.c.b16 %v1269, %v1267
        %v1790 = vpack.c.b16 %v1270, %v1268
        %v1791 = vpack.c.b16 %v1273, %v1271
        %v1792 = vpack.c.b16 %v1274, %v1272
        %v1793 = vpack.c.b16 %v1277, %v1275
        %v1794 = vpack.c.b16 %v1278, %v1276
        %v1795 = vpack.c.b16 %v1281, %v1279
        %v1796 = vpack.c.b16 %v1282, %v1280
        %v1797 = vpack.c.b16 %v1285, %v1283
        %v1798 = vpack.c.b16 %v1286, %v1284
        %v1799 = vpack.c.b16 %v1289, %v1287
        %v1800 = vpack.c.b16 %v1290, %v1288
        %v1801 = vpack.c.b16 %v1293, %v1291
        %v1802 = vpack.c.b16 %v1294, %v1292
        %v1803 = vpack.c.b16 %v1297, %v1295
        %v1804 = vpack.c.b16 %v1298, %v1296
        %v1805 = vpack.c.b16 %v1301, %v1299
        %v1806 = vpack.c.b16 %v1302, %v1300
        %v1807 = vpack.c.b16 %v1305, %v1303
        %v1808 = vpack.c.b16 %v1306, %v1304
        %v1809 = vpack.c.b16 %v1309, %v1307
        %v1810 = vpack.c.b16 %v1310, %v1308
        %v1811 = vpack.c.b16 %v1313, %v1311
        %v1812 = vpack.c.b16 %v1314, %v1312
        %v1813 = vpack.c.b16 %v1317, %v1315
        %v1814 = vpack.c.b16 %v1318, %v1316
        %v1815 = vpack.c.b16 %v1321, %v1319
        %v1816 = vpack.c.b16 %v1322, %v1320
        %v1817 = vpack.c.b16 %v1325, %v1323
        %v1818 = vpack.c.b16 %v1326, %v1324
        %v1819 = vpack.c.b16 %v1329, %v1327
        %v1820 = vpack.c.b16 %v1330, %v1328
        %v1821 = vpack.c.b16 %v1333, %v1331
        %v1822 = vpack.c.b16 %v1334, %v1332
        %v1823 = vpack.c.b16 %v1337, %v1335
        %v1824 = vpack.c.b16 %v1338, %v1336
        %v1825 = vpack.c.b16 %v1341, %v1339
        %v1826 = vpack.c.b16 %v1342, %v1340
        %v1827 = vpack.c.b16 %v1345, %v1343
        %v1828 = vpack.c.b16 %v1346, %v1344
        %v1829 = vpack.c.b16 %v1349, %v1347
        %v1830 = vpack.c.b16 %v1350, %v1348
        %v1831 = vpack.c.b16 %v1353, %v1351
        %v1832 = vpack.c.b16 %v1354, %v1352
        %v1833 = vpack.c.b16 %v1357, %v1355
        %v1834 = vpack.c.b16 %v1358, %v1356
        %v1835 = vpack.c.b16 %v1361, %v1359
        %v1836 = vpack.c.b16 %v1362, %v1360
        %v1837 = vpack.c.b16 %v1365, %v1363
        %v1838 = vpack.c.b16 %v1366, %v1364
        %v1839 = vpack.c.b16 %v1369, %v1367
        %v1840 = vpack.c.b16 %v1370, %v1368
        %v1841 = vpack.c.b16 %v1373, %v1371
        %v1842 = vpack.c.b16 %v1374, %v1372
        %v1843 = vpack.c.b16 %v1377, %v1375
        %v1844 = vpack.c.b16 %v1378, %v1376
        %v1845 = vpack.c.b16 %v1381, %v1379
        %v1846 = vpack.c.b16 %v1382, %v1380
        %v1847 = vpack.c.b16 %v1385, %v1383
        %v1848 = vpack.c.b16 %v1386, %v1384
        %v1849 = vpack.c.b16 %v1389, %v1387
        %v1850 = vpack.c.b16 %v1390, %v1388
        %v1851 = vpack.c.b16 %v1393, %v1391
        %v1852 = vpack.c.b16 %v1394, %v1392
        %v1853 = vpack.c.b16 %v1397, %v1395
        %v1854 = vpack.c.b16 %v1398, %v1396
        %v1855 = vpack.c.b16 %v1401, %v1399
        %v1856 = vpack.c.b16 %v1402, %v1400
        %v1857 = vpack.c.b16 %v1405, %v1403
        %v1858 = vpack.c.b16 %v1406, %v1404
        %v1859 = vpack.c.b16 %v1409, %v1407
        %v1860 = vpack.c.b16 %v1410, %v1408
        %v1861 = vpack.c.b16 %v1413, %v1411
        %v1862 = vpack.c.b16 %v1414, %v1412
        %v1863 = vpack.c.b16 %v1417, %v1415
        %v1864 = vpack.c.b16 %v1418, %v1416
        %v1865 = vpack.c.b16 %v1421, %v1419
        %v1866 = vpack.c.b16 %v1422, %v1420
        %v1867 = vpack.c.b16 %v1425, %v1423
        %v1868 = vpack.c.b16 %v1426, %v1424
        %v1869 = vpack.c.b16 %v1429, %v1427
        %v1870 = vpack.c.b16 %v1430, %v1428
        %v1871 = vpack.c.b16 %v1433, %v1431
        %v1872 = vpack.c.b16 %v1434, %v1432
        %v1873 = vpack.c.b16 %v1437, %v1435
        %v1874 = vpack.c.b16 %v1438, %v1436
        %v1875 = vpack.c.b16 %v1441, %v1439
        %v1876 = vpack.c.b16 %v1442, %v1440
        %v1877 = vpack.c.b16 %v1445, %v1443
        %v1878 = vpack.c.b16 %v1446, %v1444
        %v1879 = vpack.c.b16 %v1449, %v1447
        %v1880 = vpack.c.b16 %v1450, %v1448
        %v1881 = vpack.c.b16 %v1453, %v1451
        %v1882 = vpack.c.b16 %v1454, %v1452
        %v1883 = vpack.c.b16 %v1457, %v1455
        %v1884 = vpack.c.b16 %v1458, %v1456
        %v1885 = vpack.c.b16 %v1461, %v1459
        %v1886 = vpack.c.b16 %v1462, %v1460
        %v1887 = vpack.c.b16 %v1465, %v1463
        %v1888 = vpack.c.b16 %v1466, %v1464
        %v1889 = vpack.c.b16 %v1469, %v1467
        %v1890 = vpack.c.b16 %v1470, %v1468
        %v1891 = vpack.c.b16 %v1473, %v1471
        %v1892 = vpack.c.b16 %v1474, %v1472
        %v1893 = vpack.c.b16 %v1477, %v1475
        %v1894 = vpack.c.b16 %v1478, %v1476
        %v1895 = vpack.c.b16 %v1481, %v1479
        %v1896 = vpack.c.b16 %v1482, %v1480
        %v1897 = vpack.c.b16 %v1485, %v1483
        %v1898 = vpack.c.b16 %v1486, %v1484
        %v1899 = vpack.c.b16 %v1489, %v1487
        %v1900 = vpack.c.b16 %v1490, %v1488
        %v1901 = vpack.c.b16 %v1493, %v1491
        %v1902 = vpack.c.b16 %v1494, %v1492
        %v1903 = vpack.c.b16 %v1497, %v1495
        %v1904 = vpack.c.b16 %v1498, %v1496
        %v1905 = vpack.c.b16 %v1501, %v1499
        %v1906 = vpack.c.b16 %v1502, %v1500
        %v1907 = vpack.c.b16 %v1505, %v1503
        %v1908 = vpack.c.b16 %v1506, %v1504
        %v1909 = vpack.c.b16 %v1509, %v1507
        %v1910 = vpack.c.b16 %v1510, %v1508
        %v1911 = vpack.c.b16 %v1513, %v1511
        %v1912 = vpack.c.b16 %v1514, %v1512
        %v1913 = vpack.c.b16 %v1517, %v1515
        %v1914 = vpack.c.b16 %v1518, %v1516
        %v1915 = vpack.c.b16 %v1521, %v1519
        %v1916 = vpack.c.b16 %v1522, %v1520
        %v1917 = vpack.c.b16 %v1525, %v1523
        %v1918 = vpack.c.b16 %v1526, %v1524
        %v1919 = vpack.c.b16 %v1529, %v1527
        %v1920 = vpack.c.b16 %v1530, %v1528
        %v1921 = vpack.c.b16 %v1533, %v1531
        %v1922 = vpack.c.b16 %v1534, %v1532
        %v1923 = vpack.c.b16 %v1537, %v1535
        %v1924 = vpack.c.b16 %v1538, %v1536
        %v1925 = vpack.c.b16 %v1541, %v1539
        %v1926 = vpack.c.b16 %v1542, %v1540
        %v1927 = vpack.c.b16 %v1545, %v1543
        %v1928 = vpack.c.b16 %v1546, %v1544
        %v1929 = vpack.c.b16 %v1549, %v1547
        %v1930 = vpack.c.b16 %v1550, %v1548
        %v1931 = vpack.c.b16 %v1553, %v1551
        %v1932 = vpack.c.b16 %v1554, %v1552
        %v1933 = vpack.c.b16 %v1557, %v1555
        %v1934 = vpack.c.b16 %v1558, %v1556
        %v1935 = vpack.c.b16 %v1561, %v1559
        %v1936 = vpack.c.b16 %v1562, %v1560
        %v1937 = vpack.c.b16 %v1565, %v1563
        %v1938 = vpack.c.b16 %v1566, %v1564
        %v1939 = vpack.c.b16 %v1569, %v1567
        %v1940 = vpack.c.b16 %v1570, %v1568
        %v1941 = vpack.c.b16 %v1573, %v1571
        %v1942 = vpack.c.b16 %v1574, %v1572
        %v1943 = vpack.c.b16 %v1577, %v1575
        %v1944 = vpack.c.b16 %v1578, %v1576
        %v1945 = vpack.c.b16 %v1581, %v1579
        %v1946 = vpack.c.b16 %v1582, %v1580
        %v1947 = vpack.c.b16 %v1585, %v1583
        %v1948 = vpack.c.b16 %v1586, %v1584
        %v1949 = vpack.c.b16 %v1589, %v1587
        %v1950 = vpack.c.b16 %v1590, %v1588
        %v1951 = vpack.c.b16 %v1593, %v1591
        %v1952 = vpack.c.b16 %v1594, %v1592
        %v1953 = vpack.c.b16 %v1597, %v1595
        %v1954 = vpack.c.b16 %v1598, %v1596
        %v1955 = vpack.c.b16 %v1601, %v1599
        %v1956 = vpack.c.b16 %v1602, %v1600
        %v1957 = vpack.c.b16 %v1605, %v1603
        %v1958 = vpack.c.b16 %v1606, %v1604
        %v1959 = vpack.c.b16 %v1609, %v1607
        %v1960 = vpack.c.b16 %v1610, %v1608
        %v1961 = vpack.c.b16 %v1613, %v1611
        %v1962 = vpack.c.b16 %v1614, %v1612
        %v1963 = vpack.c.b16 %v1617, %v1615
        %v1964 = vpack.c.b16 %v1618, %v1616
        %v1965 = vpack.c.b16 %v1621, %v1619
        %v1966 = vpack.c.b16 %v1622, %v1620
        %v1967 = vpack.c.b16 %v1625, %v1623
        %v1968 = vpack.c.b16 %v1626, %v1624
        %v1969 = vpack.c.b16 %v1629, %v1627
        %v1970 = vpack.c.b16 %v1630, %v1628
        %v1971 = vpack.c.b16 %v1633, %v1631
        %v1972 = vpack.c.b16 %v1634, %v1632
        %v1973 = vpack.c.b16 %v1637, %v1635
        %v1974 = vpack.c.b16 %v1638, %v1636
        %v1975 = vpack.c.b16 %v1641, %v1639
        %v1976 = vpack.c.b16 %v1642, %v1640
        %v1977 = vpack.c.b16 %v1645, %v1643
        %v1978 = vpack.c.b16 %v1646, %v1644
        %v1979 = vpack.c.b16 %v1649, %v1647
        %v1980 = vpack.c.b16 %v1650, %v1648
        %v1981 = vpack.c.b16 %v1653, %v1651
        %v1982 = vpack.c.b16 %v1654, %v1652
        %v1983 = vpack.c.b16 %v1657, %v1655
        %v1984 = vpack.c.b16 %v1658, %v1656
        %v1985 = vpack.c.b16 %v1661, %v1659
        %v1986 = vpack.c.b16 %v1662, %v1660
        %v1987 = vpack.c.b16 %v1665, %v1663
        %v1988 = vpack.c.b16 %v1666, %v1664
        %v1989 = vpack.c.b16 %v1669, %v1667
        %v1990 = vpack.c.b16 %v1670, %v1668
        %2311 = vmatprep.subr.bf16.mxu0 %v1686
        %2312 = vmatpush1.bf16.msra.mxu0 %v1685
        %2313 = vmatprep.subr.bf16.mxu0 %v1684
        %2314 = vmatpush1.bf16.msra.mxu0 %v1683
        %2315 = vmatprep.subr.bf16.mxu0 %v1682
        %2316 = vmatpush1.bf16.msra.mxu0 %v1681
        %2317 = vmatprep.subr.bf16.mxu0 %v1680
        %2318 = vmatpush1.bf16.msra.mxu0 %v1679
        %2319 = vmatprep.subr.bf16.mxu0 %v1678
        %2320 = vmatpush1.bf16.msra.mxu0 %v1677
        %2321 = vmatprep.subr.bf16.mxu0 %v1676
        %2322 = vmatpush1.bf16.msra.mxu0 %v1675
        %2323 = vmatprep.subr.bf16.mxu0 %v1674
        %2324 = vmatpush1.bf16.msra.mxu0 %v1673
        %2325 = vmatprep.subr.bf16.mxu0 %v1672
        %2326 = vmatpush1.bf16.msra.mxu0 %v1671
        %2327 = vmatprep.subr.bf16.mxu0 %v1702
        %2328 = vmatpush2.bf16.msra.mxu0 %v1701
        %2329 = vmatprep.subr.bf16.mxu0 %v1700
        %2330 = vmatpush2.bf16.msra.mxu0 %v1699
        %2331 = vmatprep.subr.bf16.mxu0 %v1698
        %2332 = vmatpush2.bf16.msra.mxu0 %v1697
        %2333 = vmatprep.subr.bf16.mxu0 %v1696
        %2334 = vmatpush2.bf16.msra.mxu0 %v1695
        %2335 = vmatprep.subr.bf16.mxu0 %v1694
        %2336 = vmatpush2.bf16.msra.mxu0 %v1693
        %2337 = vmatprep.subr.bf16.mxu0 %v1692
        %2338 = vmatpush2.bf16.msra.mxu0 %v1691
        %2339 = vmatprep.subr.bf16.mxu0 %v1690
        %2340 = vmatpush2.bf16.msra.mxu0 %v1689
        %2341 = vmatprep.subr.bf16.mxu0 %v1688
        %2342 = vmatpush2.bf16.msra.mxu0 %v1687
        %2343 = vmatprep.mubr.bf16.mxu0 %v672
        %2344 = vmatmul.mubr.bf16.gmra.mxu0 %v671
        %v2345 = vpop.f32.mrf.mxu0
        %v2346 = vadd.f32 0.0, %v2345
        %v2347 = vpop.f32.mrf.mxu0
        %v2348 = vadd.f32 0.0, %v2347
        %v2349 = vpop.f32.mrf.mxu0
        %v2350 = vpop.f32.mrf.mxu0
        %2351 = vdwg.mxu0
        %2352 = vmatprep.subr.bf16.mxu0 %v1718
        %2353 = vmatpush1.bf16.msra.mxu0 %v1717
        %2354 = vmatprep.subr.bf16.mxu0 %v1716
        %2355 = vmatpush1.bf16.msra.mxu0 %v1715
        %2356 = vmatprep.subr.bf16.mxu0 %v1714
        %2357 = vmatpush1.bf16.msra.mxu0 %v1713
        %2358 = vmatprep.subr.bf16.mxu0 %v1712
        %2359 = vmatpush1.bf16.msra.mxu0 %v1711
        %2360 = vmatprep.subr.bf16.mxu0 %v1710
        %2361 = vmatpush1.bf16.msra.mxu0 %v1709
        %2362 = vmatprep.subr.bf16.mxu0 %v1708
        %2363 = vmatpush1.bf16.msra.mxu0 %v1707
        %2364 = vmatprep.subr.bf16.mxu0 %v1706
        %2365 = vmatpush1.bf16.msra.mxu0 %v1705
        %2366 = vmatprep.subr.bf16.mxu0 %v1704
        %2367 = vmatpush1.bf16.msra.mxu0 %v1703
        %2368 = vmatprep.subr.bf16.mxu0 %v1734
        %2369 = vmatpush2.bf16.msra.mxu0 %v1733
        %2370 = vmatprep.subr.bf16.mxu0 %v1732
        %2371 = vmatpush2.bf16.msra.mxu0 %v1731
        %2372 = vmatprep.subr.bf16.mxu0 %v1730
        %2373 = vmatpush2.bf16.msra.mxu0 %v1729
        %2374 = vmatprep.subr.bf16.mxu0 %v1728
        %2375 = vmatpush2.bf16.msra.mxu0 %v1727
        %2376 = vmatprep.subr.bf16.mxu0 %v1726
        %2377 = vmatpush2.bf16.msra.mxu0 %v1725
        %2378 = vmatprep.subr.bf16.mxu0 %v1724
        %2379 = vmatpush2.bf16.msra.mxu0 %v1723
        %2380 = vmatprep.subr.bf16.mxu0 %v1722
        %2381 = vmatpush2.bf16.msra.mxu0 %v1721
        %2382 = vmatprep.subr.bf16.mxu0 %v1720
        %2383 = vmatpush2.bf16.msra.mxu0 %v1719
        %2384 = vmatprep.mubr.bf16.mxu0 %v674
        %2385 = vmatmul.mubr.bf16.gmra.mxu0 %v673
        %v2386 = vpop.f32.mrf.mxu0
        %v2387 = vadd.f32 %v2346, %v2386
        %v2388 = vpop.f32.mrf.mxu0
        %v2389 = vadd.f32 %v2348, %v2388
        %v2390 = vpop.f32.mrf.mxu0
        %v2391 = vpop.f32.mrf.mxu0
        %2392 = vdwg.mxu0
        %2393 = vmatprep.subr.bf16.mxu0 %v1750
        %2394 = vmatpush1.bf16.msra.mxu0 %v1749
        %2395 = vmatprep.subr.bf16.mxu0 %v1748
        %2396 = vmatpush1.bf16.msra.mxu0 %v1747
        %2397 = vmatprep.subr.bf16.mxu0 %v1746
        %2398 = vmatpush1.bf16.msra.mxu0 %v1745
        %2399 = vmatprep.subr.bf16.mxu0 %v1744
        %2400 = vmatpush1.bf16.msra.mxu0 %v1743
        %2401 = vmatprep.subr.bf16.mxu0 %v1742
        %2402 = vmatpush1.bf16.msra.mxu0 %v1741
        %2403 = vmatprep.subr.bf16.mxu0 %v1740
        %2404 = vmatpush1.bf16.msra.mxu0 %v1739
        %2405 = vmatprep.subr.bf16.mxu0 %v1738
        %2406 = vmatpush1.bf16.msra.mxu0 %v1737
        %2407 = vmatprep.subr.bf16.mxu0 %v1736
        %2408 = vmatpush1.bf16.msra.mxu0 %v1735
        %2409 = vmatprep.subr.bf16.mxu0 %v1766
        %2410 = vmatpush2.bf16.msra.mxu0 %v1765
        %2411 = vmatprep.subr.bf16.mxu0 %v1764
        %2412 = vmatpush2.bf16.msra.mxu0 %v1763
        %2413 = vmatprep.subr.bf16.mxu0 %v1762
        %2414 = vmatpush2.bf16.msra.mxu0 %v1761
        %2415 = vmatprep.subr.bf16.mxu0 %v1760
        %2416 = vmatpush2.bf16.msra.mxu0 %v1759
        %2417 = vmatprep.subr.bf16.mxu0 %v1758
        %2418 = vmatpush2.bf16.msra.mxu0 %v1757
        %2419 = vmatprep.subr.bf16.mxu0 %v1756
        %2420 = vmatpush2.bf16.msra.mxu0 %v1755
        %2421 = vmatprep.subr.bf16.mxu0 %v1754
        %2422 = vmatpush2.bf16.msra.mxu0 %v1753
        %2423 = vmatprep.subr.bf16.mxu0 %v1752
        %2424 = vmatpush2.bf16.msra.mxu0 %v1751
        %2425 = vmatprep.mubr.bf16.mxu0 %v676
        %2426 = vmatmul.mubr.bf16.gmra.mxu0 %v675
        %v2427 = vpop.f32.mrf.mxu0
        %v2428 = vadd.f32 %v2387, %v2427
        %v2429 = vpop.f32.mrf.mxu0
        %v2430 = vadd.f32 %v2389, %v2429
        %v2431 = vpop.f32.mrf.mxu0
        %v2432 = vpop.f32.mrf.mxu0
        %2433 = vdwg.mxu0
        %2434 = vmatprep.subr.bf16.mxu0 %v1782
        %2435 = vmatpush1.bf16.msra.mxu0 %v1781
        %2436 = vmatprep.subr.bf16.mxu0 %v1780
        %2437 = vmatpush1.bf16.msra.mxu0 %v1779
        %2438 = vmatprep.subr.bf16.mxu0 %v1778
        %2439 = vmatpush1.bf16.msra.mxu0 %v1777
        %2440 = vmatprep.subr.bf16.mxu0 %v1776
        %2441 = vmatpush1.bf16.msra.mxu0 %v1775
        %2442 = vmatprep.subr.bf16.mxu0 %v1774
        %2443 = vmatpush1.bf16.msra.mxu0 %v1773
        %2444 = vmatprep.subr.bf16.mxu0 %v1772
        %2445 = vmatpush1.bf16.msra.mxu0 %v1771
        %2446 = vmatprep.subr.bf16.mxu0 %v1770
        %2447 = vmatpush1.bf16.msra.mxu0 %v1769
        %2448 = vmatprep.subr.bf16.mxu0 %v1768
        %2449 = vmatpush1.bf16.msra.mxu0 %v1767
        %2450 = vmatprep.subr.bf16.mxu0 %v1798
        %2451 = vmatpush2.bf16.msra.mxu0 %v1797
        %2452 = vmatprep.subr.bf16.mxu0 %v1796
        %2453 = vmatpush2.bf16.msra.mxu0 %v1795
        %2454 = vmatprep.subr.bf16.mxu0 %v1794
        %2455 = vmatpush2.bf16.msra.mxu0 %v1793
        %2456 = vmatprep.subr.bf16.mxu0 %v1792
        %2457 = vmatpush2.bf16.msra.mxu0 %v1791
        %2458 = vmatprep.subr.bf16.mxu0 %v1790
        %2459 = vmatpush2.bf16.msra.mxu0 %v1789
        %2460 = vmatprep.subr.bf16.mxu0 %v1788
        %2461 = vmatpush2.bf16.msra.mxu0 %v1787
        %2462 = vmatprep.subr.bf16.mxu0 %v1786
        %2463 = vmatpush2.bf16.msra.mxu0 %v1785
        %2464 = vmatprep.subr.bf16.mxu0 %v1784
        %2465 = vmatpush2.bf16.msra.mxu0 %v1783
        %2466 = vmatprep.mubr.bf16.mxu0 %v678
        %2467 = vmatmul.mubr.bf16.gmra.mxu0 %v677
        %v2468 = vpop.f32.mrf.mxu0
        %v2469 = vadd.f32 %v2428, %v2468
        %v2470 = vpop.f32.mrf.mxu0
        %v2471 = vadd.f32 %v2430, %v2470
        %v2472 = vpop.f32.mrf.mxu0
        %v2473 = vpop.f32.mrf.mxu0
        %2474 = vdwg.mxu0
        %2475 = vmatprep.subr.bf16.mxu0 %v1814
        %2476 = vmatpush1.bf16.msra.mxu0 %v1813
        %2477 = vmatprep.subr.bf16.mxu0 %v1812
        %2478 = vmatpush1.bf16.msra.mxu0 %v1811
        %2479 = vmatprep.subr.bf16.mxu0 %v1810
        %2480 = vmatpush1.bf16.msra.mxu0 %v1809
        %2481 = vmatprep.subr.bf16.mxu0 %v1808
        %2482 = vmatpush1.bf16.msra.mxu0 %v1807
        %2483 = vmatprep.subr.bf16.mxu0 %v1806
        %2484 = vmatpush1.bf16.msra.mxu0 %v1805
        %2485 = vmatprep.subr.bf16.mxu0 %v1804
        %2486 = vmatpush1.bf16.msra.mxu0 %v1803
        %2487 = vmatprep.subr.bf16.mxu0 %v1802
        %2488 = vmatpush1.bf16.msra.mxu0 %v1801
        %2489 = vmatprep.subr.bf16.mxu0 %v1800
        %2490 = vmatpush1.bf16.msra.mxu0 %v1799
        %2491 = vmatprep.subr.bf16.mxu0 %v1830
        %2492 = vmatpush2.bf16.msra.mxu0 %v1829
        %2493 = vmatprep.subr.bf16.mxu0 %v1828
        %2494 = vmatpush2.bf16.msra.mxu0 %v1827
        %2495 = vmatprep.subr.bf16.mxu0 %v1826
        %2496 = vmatpush2.bf16.msra.mxu0 %v1825
        %2497 = vmatprep.subr.bf16.mxu0 %v1824
        %2498 = vmatpush2.bf16.msra.mxu0 %v1823
        %2499 = vmatprep.subr.bf16.mxu0 %v1822
        %2500 = vmatpush2.bf16.msra.mxu0 %v1821
        %2501 = vmatprep.subr.bf16.mxu0 %v1820
        %2502 = vmatpush2.bf16.msra.mxu0 %v1819
        %2503 = vmatprep.subr.bf16.mxu0 %v1818
        %2504 = vmatpush2.bf16.msra.mxu0 %v1817
        %2505 = vmatprep.subr.bf16.mxu0 %v1816
        %2506 = vmatpush2.bf16.msra.mxu0 %v1815
        %2507 = vmatprep.mubr.bf16.mxu0 %v680
        %2508 = vmatmul.mubr.bf16.gmra.mxu0 %v679
        %v2509 = vpop.f32.mrf.mxu0
        %v2510 = vadd.f32 %v2469, %v2509
        %v2511 = vpop.f32.mrf.mxu0
        %v2512 = vadd.f32 %v2471, %v2511
        %v2513 = vpop.f32.mrf.mxu0
        %v2514 = vpop.f32.mrf.mxu0
        %2515 = vdwg.mxu0
        %2516 = vmatprep.subr.bf16.mxu0 %v1846
        %2517 = vmatpush1.bf16.msra.mxu0 %v1845
        %2518 = vmatprep.subr.bf16.mxu0 %v1844
        %2519 = vmatpush1.bf16.msra.mxu0 %v1843
        %2520 = vmatprep.subr.bf16.mxu0 %v1842
        %2521 = vmatpush1.bf16.msra.mxu0 %v1841
        %2522 = vmatprep.subr.bf16.mxu0 %v1840
        %2523 = vmatpush1.bf16.msra.mxu0 %v1839
        %2524 = vmatprep.subr.bf16.mxu0 %v1838
        %2525 = vmatpush1.bf16.msra.mxu0 %v1837
        %2526 = vmatprep.subr.bf16.mxu0 %v1836
        %2527 = vmatpush1.bf16.msra.mxu0 %v1835
        %2528 = vmatprep.subr.bf16.mxu0 %v1834
        %2529 = vmatpush1.bf16.msra.mxu0 %v1833
        %2530 = vmatprep.subr.bf16.mxu0 %v1832
        %2531 = vmatpush1.bf16.msra.mxu0 %v1831
        %2532 = vmatprep.subr.bf16.mxu0 %v1862
        %2533 = vmatpush2.bf16.msra.mxu0 %v1861
        %2534 = vmatprep.subr.bf16.mxu0 %v1860
        %2535 = vmatpush2.bf16.msra.mxu0 %v1859
        %2536 = vmatprep.subr.bf16.mxu0 %v1858
        %2537 = vmatpush2.bf16.msra.mxu0 %v1857
        %2538 = vmatprep.subr.bf16.mxu0 %v1856
        %2539 = vmatpush2.bf16.msra.mxu0 %v1855
        %2540 = vmatprep.subr.bf16.mxu0 %v1854
        %2541 = vmatpush2.bf16.msra.mxu0 %v1853
        %2542 = vmatprep.subr.bf16.mxu0 %v1852
        %2543 = vmatpush2.bf16.msra.mxu0 %v1851
        %2544 = vmatprep.subr.bf16.mxu0 %v1850
        %2545 = vmatpush2.bf16.msra.mxu0 %v1849
        %2546 = vmatprep.subr.bf16.mxu0 %v1848
        %2547 = vmatpush2.bf16.msra.mxu0 %v1847
        %2548 = vmatprep.mubr.bf16.mxu0 %v682
        %2549 = vmatmul.mubr.bf16.gmra.mxu0 %v681
        %v2550 = vpop.f32.mrf.mxu0
        %v2551 = vadd.f32 %v2510, %v2550
        %v2552 = vpop.f32.mrf.mxu0
        %v2553 = vadd.f32 %v2512, %v2552
        %v2554 = vpop.f32.mrf.mxu0
        %v2555 = vpop.f32.mrf.mxu0
        %2556 = vdwg.mxu0
        %2557 = vmatprep.subr.bf16.mxu0 %v1878
        %2558 = vmatpush1.bf16.msra.mxu0 %v1877
        %2559 = vmatprep.subr.bf16.mxu0 %v1876
        %2560 = vmatpush1.bf16.msra.mxu0 %v1875
        %2561 = vmatprep.subr.bf16.mxu0 %v1874
        %2562 = vmatpush1.bf16.msra.mxu0 %v1873
        %2563 = vmatprep.subr.bf16.mxu0 %v1872
        %2564 = vmatpush1.bf16.msra.mxu0 %v1871
        %2565 = vmatprep.subr.bf16.mxu0 %v1870
        %2566 = vmatpush1.bf16.msra.mxu0 %v1869
        %2567 = vmatprep.subr.bf16.mxu0 %v1868
        %2568 = vmatpush1.bf16.msra.mxu0 %v1867
        %2569 = vmatprep.subr.bf16.mxu0 %v1866
        %2570 = vmatpush1.bf16.msra.mxu0 %v1865
        %2571 = vmatprep.subr.bf16.mxu0 %v1864
        %2572 = vmatpush1.bf16.msra.mxu0 %v1863
        %2573 = vmatprep.subr.bf16.mxu0 %v1894
        %2574 = vmatpush2.bf16.msra.mxu0 %v1893
        %2575 = vmatprep.subr.bf16.mxu0 %v1892
        %2576 = vmatpush2.bf16.msra.mxu0 %v1891
        %2577 = vmatprep.subr.bf16.mxu0 %v1890
        %2578 = vmatpush2.bf16.msra.mxu0 %v1889
        %2579 = vmatprep.subr.bf16.mxu0 %v1888
        %2580 = vmatpush2.bf16.msra.mxu0 %v1887
        %2581 = vmatprep.subr.bf16.mxu0 %v1886
        %2582 = vmatpush2.bf16.msra.mxu0 %v1885
        %2583 = vmatprep.subr.bf16.mxu0 %v1884
        %2584 = vmatpush2.bf16.msra.mxu0 %v1883
        %2585 = vmatprep.subr.bf16.mxu0 %v1882
        %2586 = vmatpush2.bf16.msra.mxu0 %v1881
        %2587 = vmatprep.subr.bf16.mxu0 %v1880
        %2588 = vmatpush2.bf16.msra.mxu0 %v1879
        %2589 = vmatprep.mubr.bf16.mxu0 %v684
        %2590 = vmatmul.mubr.bf16.gmra.mxu0 %v683
        %v2591 = vpop.f32.mrf.mxu0
        %v2592 = vadd.f32 %v2551, %v2591
        %v2593 = vpop.f32.mrf.mxu0
        %v2594 = vadd.f32 %v2553, %v2593
        %v2595 = vpop.f32.mrf.mxu0
        %v2596 = vpop.f32.mrf.mxu0
        %2597 = vdwg.mxu0
        %2598 = vmatprep.subr.bf16.mxu0 %v1910
        %2599 = vmatpush1.bf16.msra.mxu0 %v1909
        %2600 = vmatprep.subr.bf16.mxu0 %v1908
        %2601 = vmatpush1.bf16.msra.mxu0 %v1907
        %2602 = vmatprep.subr.bf16.mxu0 %v1906
        %2603 = vmatpush1.bf16.msra.mxu0 %v1905
        %2604 = vmatprep.subr.bf16.mxu0 %v1904
        %2605 = vmatpush1.bf16.msra.mxu0 %v1903
        %2606 = vmatprep.subr.bf16.mxu0 %v1902
        %2607 = vmatpush1.bf16.msra.mxu0 %v1901
        %2608 = vmatprep.subr.bf16.mxu0 %v1900
        %2609 = vmatpush1.bf16.msra.mxu0 %v1899
        %2610 = vmatprep.subr.bf16.mxu0 %v1898
        %2611 = vmatpush1.bf16.msra.mxu0 %v1897
        %2612 = vmatprep.subr.bf16.mxu0 %v1896
        %2613 = vmatpush1.bf16.msra.mxu0 %v1895
        %2614 = vmatprep.subr.bf16.mxu0 %v1926
        %2615 = vmatpush2.bf16.msra.mxu0 %v1925
        %2616 = vmatprep.subr.bf16.mxu0 %v1924
        %2617 = vmatpush2.bf16.msra.mxu0 %v1923
        %2618 = vmatprep.subr.bf16.mxu0 %v1922
        %2619 = vmatpush2.bf16.msra.mxu0 %v1921
        %2620 = vmatprep.subr.bf16.mxu0 %v1920
        %2621 = vmatpush2.bf16.msra.mxu0 %v1919
        %2622 = vmatprep.subr.bf16.mxu0 %v1918
        %2623 = vmatpush2.bf16.msra.mxu0 %v1917
        %2624 = vmatprep.subr.bf16.mxu0 %v1916
        %2625 = vmatpush2.bf16.msra.mxu0 %v1915
        %2626 = vmatprep.subr.bf16.mxu0 %v1914
        %2627 = vmatpush2.bf16.msra.mxu0 %v1913
        %2628 = vmatprep.subr.bf16.mxu0 %v1912
        %2629 = vmatpush2.bf16.msra.mxu0 %v1911
        %2630 = vmatprep.mubr.bf16.mxu0 %v686
        %2631 = vmatmul.mubr.bf16.gmra.mxu0 %v685
        %v2632 = vpop.f32.mrf.mxu0
        %v2633 = vadd.f32 %v2592, %v2632
        %v2634 = vpop.f32.mrf.mxu0
        %v2635 = vadd.f32 %v2594, %v2634
        %v2636 = vpop.f32.mrf.mxu0
        %v2637 = vpop.f32.mrf.mxu0
        %2638 = vdwg.mxu0
        %2639 = vmatprep.subr.bf16.mxu0 %v1942
        %2640 = vmatpush1.bf16.msra.mxu0 %v1941
        %2641 = vmatprep.subr.bf16.mxu0 %v1940
        %2642 = vmatpush1.bf16.msra.mxu0 %v1939
        %2643 = vmatprep.subr.bf16.mxu0 %v1938
        %2644 = vmatpush1.bf16.msra.mxu0 %v1937
        %2645 = vmatprep.subr.bf16.mxu0 %v1936
        %2646 = vmatpush1.bf16.msra.mxu0 %v1935
        %2647 = vmatprep.subr.bf16.mxu0 %v1934
        %2648 = vmatpush1.bf16.msra.mxu0 %v1933
        %2649 = vmatprep.subr.bf16.mxu0 %v1932
        %2650 = vmatpush1.bf16.msra.mxu0 %v1931
        %2651 = vmatprep.subr.bf16.mxu0 %v1930
        %2652 = vmatpush1.bf16.msra.mxu0 %v1929
        %2653 = vmatprep.subr.bf16.mxu0 %v1928
        %2654 = vmatpush1.bf16.msra.mxu0 %v1927
        %2655 = vmatprep.subr.bf16.mxu0 %v1958
        %2656 = vmatpush2.bf16.msra.mxu0 %v1957
        %2657 = vmatprep.subr.bf16.mxu0 %v1956
        %2658 = vmatpush2.bf16.msra.mxu0 %v1955
        %2659 = vmatprep.subr.bf16.mxu0 %v1954
        %2660 = vmatpush2.bf16.msra.mxu0 %v1953
        %2661 = vmatprep.subr.bf16.mxu0 %v1952
        %2662 = vmatpush2.bf16.msra.mxu0 %v1951
        %2663 = vmatprep.subr.bf16.mxu0 %v1950
        %2664 = vmatpush2.bf16.msra.mxu0 %v1949
        %2665 = vmatprep.subr.bf16.mxu0 %v1948
        %2666 = vmatpush2.bf16.msra.mxu0 %v1947
        %2667 = vmatprep.subr.bf16.mxu0 %v1946
        %2668 = vmatpush2.bf16.msra.mxu0 %v1945
        %2669 = vmatprep.subr.bf16.mxu0 %v1944
        %2670 = vmatpush2.bf16.msra.mxu0 %v1943
        %2671 = vmatprep.mubr.bf16.mxu0 %v688
        %2672 = vmatmul.mubr.bf16.gmra.mxu0 %v687
        %v2673 = vpop.f32.mrf.mxu0
        %v2674 = vadd.f32 %v2633, %v2673
        %v2675 = vpop.f32.mrf.mxu0
        %v2676 = vadd.f32 %v2635, %v2675
        %v2677 = vpop.f32.mrf.mxu0
        %v2678 = vpop.f32.mrf.mxu0
        %2679 = vdwg.mxu0
        %2680 = vmatprep.subr.bf16.mxu0 %v1974
        %2681 = vmatpush1.bf16.msra.mxu0 %v1973
        %2682 = vmatprep.subr.bf16.mxu0 %v1972
        %2683 = vmatpush1.bf16.msra.mxu0 %v1971
        %2684 = vmatprep.subr.bf16.mxu0 %v1970
        %2685 = vmatpush1.bf16.msra.mxu0 %v1969
        %2686 = vmatprep.subr.bf16.mxu0 %v1968
        %2687 = vmatpush1.bf16.msra.mxu0 %v1967
        %2688 = vmatprep.subr.bf16.mxu0 %v1966
        %2689 = vmatpush1.bf16.msra.mxu0 %v1965
        %2690 = vmatprep.subr.bf16.mxu0 %v1964
        %2691 = vmatpush1.bf16.msra.mxu0 %v1963
        %2692 = vmatprep.subr.bf16.mxu0 %v1962
        %2693 = vmatpush1.bf16.msra.mxu0 %v1961
        %2694 = vmatprep.subr.bf16.mxu0 %v1960
        %2695 = vmatpush1.bf16.msra.mxu0 %v1959
        %2696 = vmatprep.subr.bf16.mxu0 %v1990
        %2697 = vmatpush2.bf16.msra.mxu0 %v1989
        %2698 = vmatprep.subr.bf16.mxu0 %v1988
        %2699 = vmatpush2.bf16.msra.mxu0 %v1987
        %2700 = vmatprep.subr.bf16.mxu0 %v1986
        %2701 = vmatpush2.bf16.msra.mxu0 %v1985
        %2702 = vmatprep.subr.bf16.mxu0 %v1984
        %2703 = vmatpush2.bf16.msra.mxu0 %v1983
        %2704 = vmatprep.subr.bf16.mxu0 %v1982
        %2705 = vmatpush2.bf16.msra.mxu0 %v1981
        %2706 = vmatprep.subr.bf16.mxu0 %v1980
        %2707 = vmatpush2.bf16.msra.mxu0 %v1979
        %2708 = vmatprep.subr.bf16.mxu0 %v1978
        %2709 = vmatpush2.bf16.msra.mxu0 %v1977
        %2710 = vmatprep.subr.bf16.mxu0 %v1976
        %2711 = vmatpush2.bf16.msra.mxu0 %v1975
        %2712 = vmatprep.mubr.bf16.mxu0 %v690
        %2713 = vmatmul.mubr.bf16.gmra.mxu0 %v689
        %v2714 = vpop.f32.mrf.mxu0
        %v2715 = vadd.f32 %v2674, %v2714
        %v2716 = vpop.f32.mrf.mxu0
        %v2717 = vadd.f32 %v2676, %v2716
        %v2718 = vpop.f32.mrf.mxu0
        %v2719 = vpop.f32.mrf.mxu0
        %2720 = vdwg.mxu0
        %v2721 = vadd.f32 %v309, %v2715
        %v2722 = vadd.f32 %v310, %v2717
        %2723 = vst [vmem:[#allocation2] sm:$0xff] %v2721
        %2724 = vst [vmem:[#allocation2 + $0x8] sm:$0xff] %v2722
        // Predicated region
        $region45: #{discriminator_p_forward.9} parent=31 // pred_check
          %p2725 = pneg %p303
        $region46: #{discriminator_p_forward.9} parent=31 // pred_check_branch
          %2727 = sbr.rel (%p2725) target = $region48
        $region47: #{discriminator_p_forward.9} parent=31 // pred_region
          %v2728 = vld [vmem:[#allocation2] sm:$0xff]
          %v2729 = vld [vmem:[#allocation2 + $0x8] sm:$0xff]
          %v2730 = vld [vmem:[%s239] sm:$0x3]
          %v2732 = vlaneseq
          %v2733 = vshrl.u32 %v2732, 7
          %v2734 = vsub.s32 0, %v2733
          %v2735 = vrot.slane %v2730, %v2734
          %v2736 = vlaneseq
          %v2737 = vshrl.u32 %v2736, 7
          %v2738 = vsub.s32 1, %v2737
          %v2739 = vrot.slane %v2730, %v2738
          %v2742 = vadd.f32 %v2728, %v2735
          %v2743 = vadd.f32 %v2729, %v2739
          %vm2744 = vcmp.gt.f32.partialorder %v2742, 0.0
          %vm2745 = vcmp.gt.f32.partialorder %v2743, 0.0
          %v2746 = vmul.f32 %v2742, 0.1
          %v2747 = vmul.f32 %v2743, 0.1
          %v2748 = vsel %vm2744, %v2742, %v2746
          %v2749 = vsel %vm2745, %v2743, %v2747
          %2750 = vst [vmem:[%s301] sm:$0xff] %v2748
          %2751 = vst [vmem:[%s301 + $0x8] sm:$0xff] %v2749
        $region48: #{discriminator_p_forward.9} parent=31 // pred_fallthru
          _
        %s2752 = smul.u32 2, %s26
        %p2753 = scmp.lt.s32.totalorder %s25, 0
        %s2754 = scalar_select %p2753, %s25, 0
        %p2755 = scmp.lt.s32.totalorder %s2752, 7
        %s2756 = scalar_select %p2755, %s2752, 7
        %s2757 = smul.addr %s2754, 8
        %s2758 = sadd.s32 %s2756, %s2757
        %s2759 = smul.addr %s2758, 8
        %s2760 = scalar_lea.vmem %s3, %s2759
        // Predicated region
        $region49: #{discriminator_p_forward.9} parent=31 // pred_check
          %p2761 = pneg %p141
        $region50: #{discriminator_p_forward.9} parent=31 // pred_check_branch
          %2763 = sbr.rel (%p2761) target = $region52
        $region51: #{discriminator_p_forward.9} parent=31 // pred_region
          %s2764 = smul.u32 2, %s26
        $region52: #{discriminator_p_forward.9} parent=31 // pred_fallthru
          _
      $region32: #{discriminator_p_forward.9} parent=5 // pred_fallthru
        _
      %p2765 = scmp.le.s32.totalorder 2, %s15
      // Predicated region
      $region53: #{discriminator_p_forward.9} parent=5 // pred_check
        %p2766 = pneg %p2765
      $region54: #{discriminator_p_forward.9} parent=5 // pred_check_branch
        %2768 = sbr.rel (%p2766) target = $region56
      $region55: #{discriminator_p_forward.9} parent=5 // pred_region
        %s2769 = ssub.s32 %s15, 2
        // Predicated region
        $region57: #{discriminator_p_forward.9} parent=55 // pred_check
          %p2770 = pneg %p147
        $region58: #{discriminator_p_forward.9} parent=55 // pred_check_branch
          %2772 = sbr.rel (%p2770) target = $region60
        $region59: #{discriminator_p_forward.9} parent=55 // pred_region
          %s2773 = smul.u32 2, %s29
          %p2774 = scmp.lt.s32.totalorder %s28, 0
          %s2775 = scalar_select %p2774, %s28, 0
          %p2776 = scmp.lt.s32.totalorder %s2773, 7
          %s2777 = scalar_select %p2776, %s2773, 7
          %s2778 = smul.addr %s2775, 8
          %s2779 = sadd.s32 %s2777, %s2778
          %s2780 = smul.addr %s2779, 8
          %s2781 = scalar_lea.vmem %s3, %s2780
        $region60: #{discriminator_p_forward.9} parent=55 // pred_fallthru
          _
      $region56: #{discriminator_p_forward.9} parent=5 // pred_fallthru
        _
    $region6: #{discriminator_p_forward.9} parent=1 // loop_footer
      %s19 = sadd.s32 1, %s15
    $region7: #{discriminator_p_forward.9} parent=1 // loop_footer_branch
      %14 = sbr.rel target = $region3
    $region8: #{discriminator_p_forward.9} parent=1 // loop_exit
      _
    %2782 = vsyncpa [#allocation4], 1
    %s2783 = scalar_lea.sflag [#allocation4], 1
    %2784 = vsyncpa %s2783, 1
    %2785 = vsyncpa [#allocation6], 1
    %s2786 = scalar_lea.sflag [#allocation6], 1
    %2787 = vsyncpa %s2786, 1

// kernel: discriminator_p_forward.10
$region0: #{discriminator_p_forward.10}
  #allocation0 [shape = 'u32[]', space=smem, size = 0x4, offset = 0x4, fixed_abs, tag = 'smem constant byte address 0x4 - core index']
  #allocation1 [shape = 'u32[144,128]{1,0:T(1,128)}', space=vmem, size = 0x12000, scoped, tag = 'internal scratch']
  #allocation2 [shape = 'f32[8,256]{1,0:T(8,128)}', space=vmem, size = 0x2000, scoped, tag = 'scratch operand']
  %s0 = inlined_call_operand.vmem [shape: bf16[8,5120], index: 0, kind: input, shape index: {}]
  %s1 = inlined_call_operand.hbm [shape: bf16[5120,1024], index: 1, kind: input, shape index: {}]
  %s2 = inlined_call_operand.hbm [shape: f32[1,1024], index: 2, kind: input, shape index: {}]
  %s3 = inlined_call_operand.vmem [shape: f32[8,1024], index: 3, kind: output, shape index: {}]
  %s4 = sld [smem:[#allocation0]]
  $region61: #{discriminator_p_forward.10} parent=0
    _
  %s6 = ssub.s32 1, %s4
  %s7 = scalar_select 0, %s6, %s4
  $region1: #{discriminator_p_forward.10} parent=0
    #allocation3 [shape = 'u8[2621440]{0}', space=vmem, size = 0x280000, scoped, tag = 'input window, operand 1']
    #allocation4 [shape = 's32[2]{0}', space=sflag, size = 0x8, scoped, tag = 'scoped memory for discriminator_p_forward.10']
    #allocation5 [shape = 'u8[2048]{0}', space=vmem, size = 0x800, scoped, tag = 'input window, operand 2']
    #allocation6 [shape = 's32[2]{0}', space=sflag, size = 0x8, scoped, tag = 'scoped memory for discriminator_p_forward.10']
    %8 = vsyncpa [#allocation4], 0
    %s9 = scalar_lea.sflag [#allocation4], 1
    %10 = vsyncpa %s9, 0
    %11 = vsyncpa [#allocation6], 0
    %s12 = scalar_lea.sflag [#allocation6], 1
    %13 = vsyncpa %s12, 0
    loop: start=0, step=1, limit=10
    $region2: #{discriminator_p_forward.10} parent=1 // loop_pre_header
      _
    $region3: #{discriminator_p_forward.10} parent=1 // loop_header
      %s15 = sphi 0, %s19
      %p16 = scmp.ge.s32.totalorder %s15, 10
      %s22 = sphi 0, %s41
      %s23 = sphi 0, %s37
      %s24 = sphi 0, %s33
      %s25 = sphi 0, %s22
      %s26 = sphi 0, %s23
      %s27 = sphi 0, %s24
      %s28 = sphi 0, %s25
      %s29 = sphi 0, %s26
      %s30 = sphi 0, %s27
      %s46 = sphi 0, %s48
      %s49 = sphi 0, %s46
      %s50 = sphi 0, %s49
      %s66 = sphi 0, %s50
      %s74 = sphi 0, %s76
      %s77 = sphi 0, %s74
      %s78 = sphi 0, %s77
      %s94 = sphi 0, %s78
      %s100 = sphi 0, %s102
      %s103 = sphi 0, %s100
      %s104 = sphi 0, %s103
      %s120 = sphi 0, %s104
      %s128 = sphi 0, %s130
      %s131 = sphi 0, %s128
      %s132 = sphi 0, %s131
      %s148 = sphi 0, %s132
    $region4: #{discriminator_p_forward.10} parent=1 // loop_header_branch
      %18 = sbr.rel (%p16) target = $region8
    $region5: #{discriminator_p_forward.10} parent=1 // loop_body
      %s20 = ssub.s32 %s15, 1
      %s21 = ssub.s32 %s15, 2
      %s31 = sadd.s32 1, %s24
      %p32 = scmp.ge.s32.totalorder %s31, 2
      %s33 = scalar_select %p32, 0, %s31
      %s34 = sadd.s32 1, %s23
      %s35 = scalar_select %p32, %s34, %s23
      %p36 = scmp.ge.s32.totalorder %s35, 4
      %s37 = scalar_select %p36, 0, %s35
      %s38 = sadd.s32 1, %s22
      %s39 = scalar_select %p36, %s38, %s22
      %p40 = scmp.ge.s32.totalorder %s39, 1
      %s41 = scalar_select %p40, 0, %s39
      %s42 = ssub.s32 %s22, %s41
      %s43 = ssub.s32 %s24, %s33
      %s44 = sor.u32 %s42, %s43
      %p45 = scmp.eq.s32.totalorder %s44, 0
      %s47 = sadd.s32 %s46, 1
      %s48 = scalar_select %p45, %s46, %s47
      %p51 = pneg %p45
      %p52 = scmp.eq.s32.totalorder %s15, 7
      %p53 = por %p51, %p52
      %p54 = scmp.ne.s32.totalorder %s46, %s49
      %p55 = scmp.eq.s32.totalorder %s15, 0
      %p56 = por %p54, %p55
      %p57 = scmp.ne.s32.totalorder %s46, %s49
      %p58 = scmp.eq.s32.totalorder %s20, 7
      %p59 = por %p57, %p58
      %p60 = scmp.ne.s32.totalorder %s49, %s50
      %p61 = scmp.eq.s32.totalorder %s20, 0
      %p62 = por %p60, %p61
      %p63 = scmp.ne.s32.totalorder %s49, %s50
      %p64 = scmp.eq.s32.totalorder %s21, 7
      %p65 = por %p63, %p64
      %p67 = scmp.ne.s32.totalorder %s50, %s66
      %p68 = scmp.eq.s32.totalorder %s21, 0
      %p69 = por %p67, %p68
      %s70 = ssub.s32 %s24, %s33
      %s71 = ssub.s32 %s23, %s37
      %s72 = sor.u32 %s70, %s71
      %p73 = scmp.eq.s32.totalorder %s72, 0
      %s75 = sadd.s32 %s74, 1
      %s76 = scalar_select %p73, %s74, %s75
      %p79 = pneg %p73
      %p80 = scmp.eq.s32.totalorder %s15, 7
      %p81 = por %p79, %p80
      %p82 = scmp.ne.s32.totalorder %s74, %s77
      %p83 = scmp.eq.s32.totalorder %s15, 0
      %p84 = por %p82, %p83
      %p85 = scmp.ne.s32.totalorder %s74, %s77
      %p86 = scmp.eq.s32.totalorder %s20, 7
      %p87 = por %p85, %p86
      %p88 = scmp.ne.s32.totalorder %s77, %s78
      %p89 = scmp.eq.s32.totalorder %s20, 0
      %p90 = por %p88, %p89
      %p91 = scmp.ne.s32.totalorder %s77, %s78
      %p92 = scmp.eq.s32.totalorder %s21, 7
      %p93 = por %p91, %p92
      %p95 = scmp.ne.s32.totalorder %s78, %s94
      %p96 = scmp.eq.s32.totalorder %s21, 0
      %p97 = por %p95, %p96
      %s98 = ssub.s32 %s23, %s37
      %p99 = scmp.eq.s32.totalorder %s98, 0
      %s101 = sadd.s32 %s100, 1
      %s102 = scalar_select %p99, %s100, %s101
      %p105 = pneg %p99
      %p106 = scmp.eq.s32.totalorder %s15, 7
      %p107 = por %p105, %p106
      %p108 = scmp.ne.s32.totalorder %s100, %s103
      %p109 = scmp.eq.s32.totalorder %s15, 0
      %p110 = por %p108, %p109
      %p111 = scmp.ne.s32.totalorder %s100, %s103
      %p112 = scmp.eq.s32.totalorder %s20, 7
      %p113 = por %p111, %p112
      %p114 = scmp.ne.s32.totalorder %s103, %s104
      %p115 = scmp.eq.s32.totalorder %s20, 0
      %p116 = por %p114, %p115
      %p117 = scmp.ne.s32.totalorder %s103, %s104
      %p118 = scmp.eq.s32.totalorder %s21, 7
      %p119 = por %p117, %p118
      %p121 = scmp.ne.s32.totalorder %s104, %s120
      %p122 = scmp.eq.s32.totalorder %s21, 0
      %p123 = por %p121, %p122
      %s124 = ssub.s32 %s22, %s41
      %s125 = ssub.s32 %s23, %s37
      %s126 = sor.u32 %s124, %s125
      %p127 = scmp.eq.s32.totalorder %s126, 0
      %s129 = sadd.s32 %s128, 1
      %s130 = scalar_select %p127, %s128, %s129
      %p133 = pneg %p127
      %p134 = scmp.eq.s32.totalorder %s15, 7
      %p135 = por %p133, %p134
      %p136 = scmp.ne.s32.totalorder %s128, %s131
      %p137 = scmp.eq.s32.totalorder %s15, 0
      %p138 = por %p136, %p137
      %p139 = scmp.ne.s32.totalorder %s128, %s131
      %p140 = scmp.eq.s32.totalorder %s20, 7
      %p141 = por %p139, %p140
      %p142 = scmp.ne.s32.totalorder %s131, %s132
      %p143 = scmp.eq.s32.totalorder %s20, 0
      %p144 = por %p142, %p143
      %p145 = scmp.ne.s32.totalorder %s131, %s132
      %p146 = scmp.eq.s32.totalorder %s21, 7
      %p147 = por %p145, %p146
      %p149 = scmp.ne.s32.totalorder %s132, %s148
      %p150 = scmp.eq.s32.totalorder %s21, 0
      %p151 = por %p149, %p150
      %p152 = scmp.le.s32.totalorder 1, %s15
      %p153 = scmp.lt.s32.totalorder %s15, 9
      %p154 = pnand %p152, %p153
      %p155 = pneg %p154
      // Predicated region
      $region9: #{discriminator_p_forward.10} parent=5 // pred_check
        _
      $region10: #{discriminator_p_forward.10} parent=5 // pred_check_branch
        %157 = sbr.rel (%p154) target = $region12
      $region11: #{discriminator_p_forward.10} parent=5 // pred_region
        %s158 = ssub.s32 %s15, 1
      $region12: #{discriminator_p_forward.10} parent=5 // pred_fallthru
        _
      %p159 = scmp.lt.s32.totalorder %s15, 8
      // Predicated region
      $region13: #{discriminator_p_forward.10} parent=5 // pred_check
        %p160 = pneg %p159
      $region14: #{discriminator_p_forward.10} parent=5 // pred_check_branch
        %162 = sbr.rel (%p160) target = $region16
      $region15: #{discriminator_p_forward.10} parent=5 // pred_region
        // Predicated region
        $region17: #{discriminator_p_forward.10} parent=15 // pred_check
          %p163 = pneg %p56
        $region18: #{discriminator_p_forward.10} parent=15 // pred_check_branch
          %165 = sbr.rel (%p163) target = $region20
        $region19: #{discriminator_p_forward.10} parent=15 // pred_region
          %s166 = smul.u32 20, %s24
          %p167 = scmp.lt.s32.totalorder %s22, 0
          %s168 = scalar_select %p167, %s22, 0
          %p169 = scmp.lt.s32.totalorder %s166, 39
          %s170 = scalar_select %p169, %s166, 39
          %s171 = smul.addr %s168, 40
          %s172 = sadd.s32 %s170, %s171
          %s173 = smul.addr %s172, 4
          %s174 = scalar_lea.vmem %s0, %s173
          %s175 = smul.u32 20, %s24
        $region20: #{discriminator_p_forward.10} parent=15 // pred_fallthru
          _
        // Predicated region
        $region21: #{discriminator_p_forward.10} parent=15 // pred_check
          %p176 = pneg %p84
        $region22: #{discriminator_p_forward.10} parent=15 // pred_check_branch
          %178 = sbr.rel (%p176) target = $region24
        $region23: #{discriminator_p_forward.10} parent=15 // pred_region
          %s179 = sand.u32 %s74, 1
          %s180 = scalar_lea.sflag [#allocation4], %s179
          %s181 = sand.u32 %s74, 1
          %s182 = smul.addr %s181, 2560
          %s183 = scalar_lea.vmem [#allocation3], %s182
          %s184 = smul.u32 320, %s24
          %s185 = smul.u32 2, %s23
          %s187 = ssub.s32 40960, 40960
          %188 = vsyncadd %s180, %s187
          %s189 = smul.addr %s184, 8
          %s190 = sadd.s32 %s185, %s189
          %s191 = smul.addr %s190, 64
          %s192 = scalar_lea.hbm %s1, %s191
          %s193 = sshll.u32 %s183, 4
          %s194 = int_to_ptr.vmem [resolvable:$true] %s193
          %199 = dma.hbm_to_vmem [thread:$0]  %s192, 40960, %s194, %s180, 512, 128, 8
        $region24: #{discriminator_p_forward.10} parent=15 // pred_fallthru
          _
        // Predicated region
        $region25: #{discriminator_p_forward.10} parent=15 // pred_check
          %p200 = pneg %p110
        $region26: #{discriminator_p_forward.10} parent=15 // pred_check_branch
          %202 = sbr.rel (%p200) target = $region28
        $region27: #{discriminator_p_forward.10} parent=15 // pred_region
          %s203 = sand.u32 %s100, 1
          %s204 = scalar_lea.sflag [#allocation6], %s203
          %s205 = sand.u32 %s100, 1
          %s206 = smul.addr %s205, 2
          %s207 = scalar_lea.vmem [#allocation5], %s206
          %s208 = smul.u32 2, %s23
          %s210 = ssub.s32 32, 32
          %211 = vsyncadd %s204, %s210
          %s212 = smul.addr %s208, 16
          %s213 = scalar_lea.hbm %s2, %s212
          %s215 = sshll.u32 %s207, 4
          %s216 = int_to_ptr.vmem [resolvable:$true] %s215
          %218 = dma.hbm_to_vmem [thread:$0]  %s213, 32, %s216, %s204
        $region28: #{discriminator_p_forward.10} parent=15 // pred_fallthru
          _
      $region16: #{discriminator_p_forward.10} parent=5 // pred_fallthru
        _
      %p219 = scmp.le.s32.totalorder 1, %s15
      %p220 = scmp.lt.s32.totalorder %s15, 9
      %p221 = pnand %p219, %p220
      %p222 = pneg %p221
      // Predicated region
      $region29: #{discriminator_p_forward.10} parent=5 // pred_check
        _
      $region30: #{discriminator_p_forward.10} parent=5 // pred_check_branch
        %224 = sbr.rel (%p221) target = $region32
      $region31: #{discriminator_p_forward.10} parent=5 // pred_region
        %s225 = ssub.s32 %s15, 1
        %s226 = sand.u32 %s77, 1
        %s227 = scalar_lea.sflag [#allocation4], %s226
        %s228 = sand.u32 %s77, 1
        %s229 = smul.addr %s228, 2560
        %s230 = scalar_lea.vmem [#allocation3], %s229
        // Predicated region
        $region33: #{discriminator_p_forward.10} parent=31 // pred_check
          %p231 = pneg %p90
        $region34: #{discriminator_p_forward.10} parent=31 // pred_check_branch
          %233 = sbr.rel (%p231) target = $region36
        $region35: #{discriminator_p_forward.10} parent=31 // pred_region
          %234 = dma.done %s227, 40960
        $region36: #{discriminator_p_forward.10} parent=31 // pred_fallthru
          _
        %s235 = sand.u32 %s103, 1
        %s236 = scalar_lea.sflag [#allocation6], %s235
        %s237 = sand.u32 %s103, 1
        %s238 = smul.addr %s237, 2
        %s239 = scalar_lea.vmem [#allocation5], %s238
        // Predicated region
        $region37: #{discriminator_p_forward.10} parent=31 // pred_check
          %p240 = pneg %p116
        $region38: #{discriminator_p_forward.10} parent=31 // pred_check_branch
          %242 = sbr.rel (%p240) target = $region40
        $region39: #{discriminator_p_forward.10} parent=31 // pred_region
          %243 = dma.done %s236, 32
        $region40: #{discriminator_p_forward.10} parent=31 // pred_fallthru
          _
        %s244 = smul.u32 20, %s27
        %p245 = scmp.lt.s32.totalorder %s25, 0
        %s246 = scalar_select %p245, %s25, 0
        %p247 = scmp.lt.s32.totalorder %s244, 39
        %s248 = scalar_select %p247, %s244, 39
        %s249 = smul.addr %s246, 40
        %s250 = sadd.s32 %s248, %s249
        %s251 = smul.addr %s250, 4
        %s252 = scalar_lea.vmem %s0, %s251
        %p253 = pneg %p62
        %p254 = pneg %p59
        %s255 = sand.u32 %s77, 1
        %s256 = scalar_lea.sflag [#allocation4], %s255
        %s257 = sand.u32 %s77, 1
        %s258 = smul.addr %s257, 2560
        %s259 = scalar_lea.vmem [#allocation3], %s258
        %p260 = pneg %p90
        %p261 = pneg %p87
        %s262 = sand.u32 %s103, 1
        %s263 = scalar_lea.sflag [#allocation6], %s262
        %s264 = sand.u32 %s103, 1
        %s265 = smul.addr %s264, 2
        %s266 = scalar_lea.vmem [#allocation5], %s265
        %p267 = pneg %p116
        %p268 = pneg %p113
        %p269 = pneg %p144
        %p270 = pneg %p141
        %s271 = smul.u32 2, %s26
        %p272 = scmp.lt.s32.totalorder %s25, 0
        %s273 = scalar_select %p272, %s25, 0
        %p274 = scmp.lt.s32.totalorder %s271, 7
        %s275 = scalar_select %p274, %s271, 7
        %s276 = smul.addr %s273, 8
        %s277 = sadd.s32 %s275, %s276
        %s278 = smul.addr %s277, 8
        %s279 = scalar_lea.vmem %s3, %s278
        %s280 = smul.u32 20, %s27
        %p281 = scmp.lt.s32.totalorder %s25, 0
        %s282 = scalar_select %p281, %s25, 0
        %p283 = scmp.lt.s32.totalorder %s280, 39
        %s284 = scalar_select %p283, %s280, 39
        %s285 = smul.addr %s282, 40
        %s286 = sadd.s32 %s284, %s285
        %s287 = smul.addr %s286, 4
        %s288 = scalar_lea.vmem %s0, %s287
        %s289 = smul.u32 20, %s27
        %s290 = smul.u32 320, %s27
        %s291 = smul.u32 2, %s26
        %s292 = smul.u32 2, %s26
        %s293 = smul.u32 2, %s26
        %p294 = scmp.lt.s32.totalorder %s25, 0
        %s295 = scalar_select %p294, %s25, 0
        %p296 = scmp.lt.s32.totalorder %s293, 7
        %s297 = scalar_select %p296, %s293, 7
        %s298 = smul.addr %s295, 8
        %s299 = sadd.s32 %s297, %s298
        %s300 = smul.addr %s299, 8
        %s301 = scalar_lea.vmem %s3, %s300
        %s302 = smul.u32 2, %s26
        %p303 = scmp.eq.s32.totalorder %s27, 0
        // Predicated region
        $region41: #{discriminator_p_forward.10} parent=31 // pred_check
          %p304 = pneg %p303
        $region42: #{discriminator_p_forward.10} parent=31 // pred_check_branch
          %306 = sbr.rel (%p304) target = $region44
        $region43: #{discriminator_p_forward.10} parent=31 // pred_region
          %307 = vst [vmem:[#allocation2] sm:$0xff] 0.0
          %308 = vst [vmem:[#allocation2 + $0x8] sm:$0xff] 0.0
        $region44: #{discriminator_p_forward.10} parent=31 // pred_fallthru
          _
        %v309 = vld [vmem:[#allocation2] sm:$0xff]
        %v310 = vld [vmem:[#allocation2 + $0x8] sm:$0xff]
        %v311 = vld [vmem:[%s288] sm:$0xff]
        %v312 = vld [vmem:[%s288 + $0x8] sm:$0xff]
        %v313 = vld [vmem:[%s288 + $0x10] sm:$0xff]
        %v314 = vld [vmem:[%s288 + $0x18] sm:$0xff]
        %v315 = vld [vmem:[%s288 + $0x20] sm:$0xff]
        %v316 = vld [vmem:[%s288 + $0x28] sm:$0xff]
        %v317 = vld [vmem:[%s288 + $0x30] sm:$0xff]
        %v318 = vld [vmem:[%s288 + $0x38] sm:$0xff]
        %v319 = vld [vmem:[%s288 + $0x40] sm:$0xff]
        %v320 = vld [vmem:[%s288 + $0x48] sm:$0xff]
        %v321 = vld [vmem:[%s230] sm:$0xff]
        %v322 = vld [vmem:[%s230 + $0x8] sm:$0xff]
        %v323 = vld [vmem:[%s230 + $0x10] sm:$0xff]
        %v324 = vld [vmem:[%s230 + $0x18] sm:$0xff]
        %v325 = vld [vmem:[%s230 + $0x20] sm:$0xff]
        %v326 = vld [vmem:[%s230 + $0x28] sm:$0xff]
        %v327 = vld [vmem:[%s230 + $0x30] sm:$0xff]
        %v328 = vld [vmem:[%s230 + $0x38] sm:$0xff]
        %v329 = vld [vmem:[%s230 + $0x40] sm:$0xff]
        %v330 = vld [vmem:[%s230 + $0x48] sm:$0xff]
        %v331 = vld [vmem:[%s230 + $0x50] sm:$0xff]
        %v332 = vld [vmem:[%s230 + $0x58] sm:$0xff]
        %v333 = vld [vmem:[%s230 + $0x60] sm:$0xff]
        %v334 = vld [vmem:[%s230 + $0x68] sm:$0xff]
        %v335 = vld [vmem:[%s230 + $0x70] sm:$0xff]
        %v336 = vld [vmem:[%s230 + $0x78] sm:$0xff]
        %v337 = vld [vmem:[%s230 + $0x80] sm:$0xff]
        %v338 = vld [vmem:[%s230 + $0x88] sm:$0xff]
        %v339 = vld [vmem:[%s230 + $0x90] sm:$0xff]
        %v340 = vld [vmem:[%s230 + $0x98] sm:$0xff]
        %v341 = vld [vmem:[%s230 + $0xa0] sm:$0xff]
        %v342 = vld [vmem:[%s230 + $0xa8] sm:$0xff]
        %v343 = vld [vmem:[%s230 + $0xb0] sm:$0xff]
        %v344 = vld [vmem:[%s230 + $0xb8] sm:$0xff]
        %v345 = vld [vmem:[%s230 + $0xc0] sm:$0xff]
        %v346 = vld [vmem:[%s230 + $0xc8] sm:$0xff]
        %v347 = vld [vmem:[%s230 + $0xd0] sm:$0xff]
        %v348 = vld [vmem:[%s230 + $0xd8] sm:$0xff]
        %v349 = vld [vmem:[%s230 + $0xe0] sm:$0xff]
        %v350 = vld [vmem:[%s230 + $0xe8] sm:$0xff]
        %v351 = vld [vmem:[%s230 + $0xf0] sm:$0xff]
        %v352 = vld [vmem:[%s230 + $0xf8] sm:$0xff]
        %v353 = vld [vmem:[%s230 + $0x100] sm:$0xff]
        %v354 = vld [vmem:[%s230 + $0x108] sm:$0xff]
        %v355 = vld [vmem:[%s230 + $0x110] sm:$0xff]
        %v356 = vld [vmem:[%s230 + $0x118] sm:$0xff]
        %v357 = vld [vmem:[%s230 + $0x120] sm:$0xff]
        %v358 = vld [vmem:[%s230 + $0x128] sm:$0xff]
        %v359 = vld [vmem:[%s230 + $0x130] sm:$0xff]
        %v360 = vld [vmem:[%s230 + $0x138] sm:$0xff]
        %v361 = vld [vmem:[%s230 + $0x140] sm:$0xff]
        %v362 = vld [vmem:[%s230 + $0x148] sm:$0xff]
        %v363 = vld [vmem:[%s230 + $0x150] sm:$0xff]
        %v364 = vld [vmem:[%s230 + $0x158] sm:$0xff]
        %v365 = vld [vmem:[%s230 + $0x160] sm:$0xff]
        %v366 = vld [vmem:[%s230 + $0x168] sm:$0xff]
        %v367 = vld [vmem:[%s230 + $0x170] sm:$0xff]
        %v368 = vld [vmem:[%s230 + $0x178] sm:$0xff]
        %v369 = vld [vmem:[%s230 + $0x180] sm:$0xff]
        %v370 = vld [vmem:[%s230 + $0x188] sm:$0xff]
        %v371 = vld [vmem:[%s230 + $0x190] sm:$0xff]
        %v372 = vld [vmem:[%s230 + $0x198] sm:$0xff]
        %v373 = vld [vmem:[%s230 + $0x1a0] sm:$0xff]
        %v374 = vld [vmem:[%s230 + $0x1a8] sm:$0xff]
        %v375 = vld [vmem:[%s230 + $0x1b0] sm:$0xff]
        %v376 = vld [vmem:[%s230 + $0x1b8] sm:$0xff]
        %v377 = vld [vmem:[%s230 + $0x1c0] sm:$0xff]
        %v378 = vld [vmem:[%s230 + $0x1c8] sm:$0xff]
        %v379 = vld [vmem:[%s230 + $0x1d0] sm:$0xff]
        %v380 = vld [vmem:[%s230 + $0x1d8] sm:$0xff]
        %v381 = vld [vmem:[%s230 + $0x1e0] sm:$0xff]
        %v382 = vld [vmem:[%s230 + $0x1e8] sm:$0xff]
        %v383 = vld [vmem:[%s230 + $0x1f0] sm:$0xff]
        %v384 = vld [vmem:[%s230 + $0x1f8] sm:$0xff]
        %v385 = vld [vmem:[%s230 + $0x200] sm:$0xff]
        %v386 = vld [vmem:[%s230 + $0x208] sm:$0xff]
        %v387 = vld [vmem:[%s230 + $0x210] sm:$0xff]
        %v388 = vld [vmem:[%s230 + $0x218] sm:$0xff]
        %v389 = vld [vmem:[%s230 + $0x220] sm:$0xff]
        %v390 = vld [vmem:[%s230 + $0x228] sm:$0xff]
        %v391 = vld [vmem:[%s230 + $0x230] sm:$0xff]
        %v392 = vld [vmem:[%s230 + $0x238] sm:$0xff]
        %v393 = vld [vmem:[%s230 + $0x240] sm:$0xff]
        %v394 = vld [vmem:[%s230 + $0x248] sm:$0xff]
        %v395 = vld [vmem:[%s230 + $0x250] sm:$0xff]
        %v396 = vld [vmem:[%s230 + $0x258] sm:$0xff]
        %v397 = vld [vmem:[%s230 + $0x260] sm:$0xff]
        %v398 = vld [vmem:[%s230 + $0x268] sm:$0xff]
        %v399 = vld [vmem:[%s230 + $0x270] sm:$0xff]
        %v400 = vld [vmem:[%s230 + $0x278] sm:$0xff]
        %v401 = vld [vmem:[%s230 + $0x280] sm:$0xff]
        %v402 = vld [vmem:[%s230 + $0x288] sm:$0xff]
        %v403 = vld [vmem:[%s230 + $0x290] sm:$0xff]
        %v404 = vld [vmem:[%s230 + $0x298] sm:$0xff]
        %v405 = vld [vmem:[%s230 + $0x2a0] sm:$0xff]
        %v406 = vld [vmem:[%s230 + $0x2a8] sm:$0xff]
        %v407 = vld [vmem:[%s230 + $0x2b0] sm:$0xff]
        %v408 = vld [vmem:[%s230 + $0x2b8] sm:$0xff]
        %v409 = vld [vmem:[%s230 + $0x2c0] sm:$0xff]
        %v410 = vld [vmem:[%s230 + $0x2c8] sm:$0xff]
        %v411 = vld [vmem:[%s230 + $0x2d0] sm:$0xff]
        %v412 = vld [vmem:[%s230 + $0x2d8] sm:$0xff]
        %v413 = vld [vmem:[%s230 + $0x2e0] sm:$0xff]
        %v414 = vld [vmem:[%s230 + $0x2e8] sm:$0xff]
        %v415 = vld [vmem:[%s230 + $0x2f0] sm:$0xff]
        %v416 = vld [vmem:[%s230 + $0x2f8] sm:$0xff]
        %v417 = vld [vmem:[%s230 + $0x300] sm:$0xff]
        %v418 = vld [vmem:[%s230 + $0x308] sm:$0xff]
        %v419 = vld [vmem:[%s230 + $0x310] sm:$0xff]
        %v420 = vld [vmem:[%s230 + $0x318] sm:$0xff]
        %v421 = vld [vmem:[%s230 + $0x320] sm:$0xff]
        %v422 = vld [vmem:[%s230 + $0x328] sm:$0xff]
        %v423 = vld [vmem:[%s230 + $0x330] sm:$0xff]
        %v424 = vld [vmem:[%s230 + $0x338] sm:$0xff]
        %v425 = vld [vmem:[%s230 + $0x340] sm:$0xff]
        %v426 = vld [vmem:[%s230 + $0x348] sm:$0xff]
        %v427 = vld [vmem:[%s230 + $0x350] sm:$0xff]
        %v428 = vld [vmem:[%s230 + $0x358] sm:$0xff]
        %v429 = vld [vmem:[%s230 + $0x360] sm:$0xff]
        %v430 = vld [vmem:[%s230 + $0x368] sm:$0xff]
        %v431 = vld [vmem:[%s230 + $0x370] sm:$0xff]
        %v432 = vld [vmem:[%s230 + $0x378] sm:$0xff]
        %v433 = vld [vmem:[%s230 + $0x380] sm:$0xff]
        %v434 = vld [vmem:[%s230 + $0x388] sm:$0xff]
        %v435 = vld [vmem:[%s230 + $0x390] sm:$0xff]
        %v436 = vld [vmem:[%s230 + $0x398] sm:$0xff]
        %v437 = vld [vmem:[%s230 + $0x3a0] sm:$0xff]
        %v438 = vld [vmem:[%s230 + $0x3a8] sm:$0xff]
        %v439 = vld [vmem:[%s230 + $0x3b0] sm:$0xff]
        %v440 = vld [vmem:[%s230 + $0x3b8] sm:$0xff]
        %v441 = vld [vmem:[%s230 + $0x3c0] sm:$0xff]
        %v442 = vld [vmem:[%s230 + $0x3c8] sm:$0xff]
        %v443 = vld [vmem:[%s230 + $0x3d0] sm:$0xff]
        %v444 = vld [vmem:[%s230 + $0x3d8] sm:$0xff]
        %v445 = vld [vmem:[%s230 + $0x3e0] sm:$0xff]
        %v446 = vld [vmem:[%s230 + $0x3e8] sm:$0xff]
        %v447 = vld [vmem:[%s230 + $0x3f0] sm:$0xff]
        %v448 = vld [vmem:[%s230 + $0x3f8] sm:$0xff]
        %v449 = vld [vmem:[%s230 + $0x400] sm:$0xff]
        %v450 = vld [vmem:[%s230 + $0x408] sm:$0xff]
        %v451 = vld [vmem:[%s230 + $0x410] sm:$0xff]
        %v452 = vld [vmem:[%s230 + $0x418] sm:$0xff]
        %v453 = vld [vmem:[%s230 + $0x420] sm:$0xff]
        %v454 = vld [vmem:[%s230 + $0x428] sm:$0xff]
        %v455 = vld [vmem:[%s230 + $0x430] sm:$0xff]
        %v456 = vld [vmem:[%s230 + $0x438] sm:$0xff]
        %v457 = vld [vmem:[%s230 + $0x440] sm:$0xff]
        %v458 = vld [vmem:[%s230 + $0x448] sm:$0xff]
        %v459 = vld [vmem:[%s230 + $0x450] sm:$0xff]
        %v460 = vld [vmem:[%s230 + $0x458] sm:$0xff]
        %v461 = vld [vmem:[%s230 + $0x460] sm:$0xff]
        %v462 = vld [vmem:[%s230 + $0x468] sm:$0xff]
        %v463 = vld [vmem:[%s230 + $0x470] sm:$0xff]
        %v464 = vld [vmem:[%s230 + $0x478] sm:$0xff]
        %v465 = vld [vmem:[%s230 + $0x480] sm:$0xff]
        %v466 = vld [vmem:[%s230 + $0x488] sm:$0xff]
        %v467 = vld [vmem:[%s230 + $0x490] sm:$0xff]
        %v468 = vld [vmem:[%s230 + $0x498] sm:$0xff]
        %v469 = vld [vmem:[%s230 + $0x4a0] sm:$0xff]
        %v470 = vld [vmem:[%s230 + $0x4a8] sm:$0xff]
        %v471 = vld [vmem:[%s230 + $0x4b0] sm:$0xff]
        %v472 = vld [vmem:[%s230 + $0x4b8] sm:$0xff]
        %v473 = vld [vmem:[%s230 + $0x4c0] sm:$0xff]
        %v474 = vld [vmem:[%s230 + $0x4c8] sm:$0xff]
        %v475 = vld [vmem:[%s230 + $0x4d0] sm:$0xff]
        %v476 = vld [vmem:[%s230 + $0x4d8] sm:$0xff]
        %v477 = vld [vmem:[%s230 + $0x4e0] sm:$0xff]
        %v478 = vld [vmem:[%s230 + $0x4e8] sm:$0xff]
        %v479 = vld [vmem:[%s230 + $0x4f0] sm:$0xff]
        %v480 = vld [vmem:[%s230 + $0x4f8] sm:$0xff]
        %v481 = vld [vmem:[%s230 + $0x500] sm:$0xff]
        %v482 = vld [vmem:[%s230 + $0x508] sm:$0xff]
        %v483 = vld [vmem:[%s230 + $0x510] sm:$0xff]
        %v484 = vld [vmem:[%s230 + $0x518] sm:$0xff]
        %v485 = vld [vmem:[%s230 + $0x520] sm:$0xff]
        %v486 = vld [vmem:[%s230 + $0x528] sm:$0xff]
        %v487 = vld [vmem:[%s230 + $0x530] sm:$0xff]
        %v488 = vld [vmem:[%s230 + $0x538] sm:$0xff]
        %v489 = vld [vmem:[%s230 + $0x540] sm:$0xff]
        %v490 = vld [vmem:[%s230 + $0x548] sm:$0xff]
        %v491 = vld [vmem:[%s230 + $0x550] sm:$0xff]
        %v492 = vld [vmem:[%s230 + $0x558] sm:$0xff]
        %v493 = vld [vmem:[%s230 + $0x560] sm:$0xff]
        %v494 = vld [vmem:[%s230 + $0x568] sm:$0xff]
        %v495 = vld [vmem:[%s230 + $0x570] sm:$0xff]
        %v496 = vld [vmem:[%s230 + $0x578] sm:$0xff]
        %v497 = vld [vmem:[%s230 + $0x580] sm:$0xff]
        %v498 = vld [vmem:[%s230 + $0x588] sm:$0xff]
        %v499 = vld [vmem:[%s230 + $0x590] sm:$0xff]
        %v500 = vld [vmem:[%s230 + $0x598] sm:$0xff]
        %v501 = vld [vmem:[%s230 + $0x5a0] sm:$0xff]
        %v502 = vld [vmem:[%s230 + $0x5a8] sm:$0xff]
        %v503 = vld [vmem:[%s230 + $0x5b0] sm:$0xff]
        %v504 = vld [vmem:[%s230 + $0x5b8] sm:$0xff]
        %v505 = vld [vmem:[%s230 + $0x5c0] sm:$0xff]
        %v506 = vld [vmem:[%s230 + $0x5c8] sm:$0xff]
        %v507 = vld [vmem:[%s230 + $0x5d0] sm:$0xff]
        %v508 = vld [vmem:[%s230 + $0x5d8] sm:$0xff]
        %v509 = vld [vmem:[%s230 + $0x5e0] sm:$0xff]
        %v510 = vld [vmem:[%s230 + $0x5e8] sm:$0xff]
        %v511 = vld [vmem:[%s230 + $0x5f0] sm:$0xff]
        %v512 = vld [vmem:[%s230 + $0x5f8] sm:$0xff]
        %v513 = vld [vmem:[%s230 + $0x600] sm:$0xff]
        %v514 = vld [vmem:[%s230 + $0x608] sm:$0xff]
        %v515 = vld [vmem:[%s230 + $0x610] sm:$0xff]
        %v516 = vld [vmem:[%s230 + $0x618] sm:$0xff]
        %v517 = vld [vmem:[%s230 + $0x620] sm:$0xff]
        %v518 = vld [vmem:[%s230 + $0x628] sm:$0xff]
        %v519 = vld [vmem:[%s230 + $0x630] sm:$0xff]
        %v520 = vld [vmem:[%s230 + $0x638] sm:$0xff]
        %v521 = vld [vmem:[%s230 + $0x640] sm:$0xff]
        %v522 = vld [vmem:[%s230 + $0x648] sm:$0xff]
        %v523 = vld [vmem:[%s230 + $0x650] sm:$0xff]
        %v524 = vld [vmem:[%s230 + $0x658] sm:$0xff]
        %v525 = vld [vmem:[%s230 + $0x660] sm:$0xff]
        %v526 = vld [vmem:[%s230 + $0x668] sm:$0xff]
        %v527 = vld [vmem:[%s230 + $0x670] sm:$0xff]
        %v528 = vld [vmem:[%s230 + $0x678] sm:$0xff]
        %v529 = vld [vmem:[%s230 + $0x680] sm:$0xff]
        %v530 = vld [vmem:[%s230 + $0x688] sm:$0xff]
        %v531 = vld [vmem:[%s230 + $0x690] sm:$0xff]
        %v532 = vld [vmem:[%s230 + $0x698] sm:$0xff]
        %v533 = vld [vmem:[%s230 + $0x6a0] sm:$0xff]
        %v534 = vld [vmem:[%s230 + $0x6a8] sm:$0xff]
        %v535 = vld [vmem:[%s230 + $0x6b0] sm:$0xff]
        %v536 = vld [vmem:[%s230 + $0x6b8] sm:$0xff]
        %v537 = vld [vmem:[%s230 + $0x6c0] sm:$0xff]
        %v538 = vld [vmem:[%s230 + $0x6c8] sm:$0xff]
        %v539 = vld [vmem:[%s230 + $0x6d0] sm:$0xff]
        %v540 = vld [vmem:[%s230 + $0x6d8] sm:$0xff]
        %v541 = vld [vmem:[%s230 + $0x6e0] sm:$0xff]
        %v542 = vld [vmem:[%s230 + $0x6e8] sm:$0xff]
        %v543 = vld [vmem:[%s230 + $0x6f0] sm:$0xff]
        %v544 = vld [vmem:[%s230 + $0x6f8] sm:$0xff]
        %v545 = vld [vmem:[%s230 + $0x700] sm:$0xff]
        %v546 = vld [vmem:[%s230 + $0x708] sm:$0xff]
        %v547 = vld [vmem:[%s230 + $0x710] sm:$0xff]
        %v548 = vld [vmem:[%s230 + $0x718] sm:$0xff]
        %v549 = vld [vmem:[%s230 + $0x720] sm:$0xff]
        %v550 = vld [vmem:[%s230 + $0x728] sm:$0xff]
        %v551 = vld [vmem:[%s230 + $0x730] sm:$0xff]
        %v552 = vld [vmem:[%s230 + $0x738] sm:$0xff]
        %v553 = vld [vmem:[%s230 + $0x740] sm:$0xff]
        %v554 = vld [vmem:[%s230 + $0x748] sm:$0xff]
        %v555 = vld [vmem:[%s230 + $0x750] sm:$0xff]
        %v556 = vld [vmem:[%s230 + $0x758] sm:$0xff]
        %v557 = vld [vmem:[%s230 + $0x760] sm:$0xff]
        %v558 = vld [vmem:[%s230 + $0x768] sm:$0xff]
        %v559 = vld [vmem:[%s230 + $0x770] sm:$0xff]
        %v560 = vld [vmem:[%s230 + $0x778] sm:$0xff]
        %v561 = vld [vmem:[%s230 + $0x780] sm:$0xff]
        %v562 = vld [vmem:[%s230 + $0x788] sm:$0xff]
        %v563 = vld [vmem:[%s230 + $0x790] sm:$0xff]
        %v564 = vld [vmem:[%s230 + $0x798] sm:$0xff]
        %v565 = vld [vmem:[%s230 + $0x7a0] sm:$0xff]
        %v566 = vld [vmem:[%s230 + $0x7a8] sm:$0xff]
        %v567 = vld [vmem:[%s230 + $0x7b0] sm:$0xff]
        %v568 = vld [vmem:[%s230 + $0x7b8] sm:$0xff]
        %v569 = vld [vmem:[%s230 + $0x7c0] sm:$0xff]
        %v570 = vld [vmem:[%s230 + $0x7c8] sm:$0xff]
        %v571 = vld [vmem:[%s230 + $0x7d0] sm:$0xff]
        %v572 = vld [vmem:[%s230 + $0x7d8] sm:$0xff]
        %v573 = vld [vmem:[%s230 + $0x7e0] sm:$0xff]
        %v574 = vld [vmem:[%s230 + $0x7e8] sm:$0xff]
        %v575 = vld [vmem:[%s230 + $0x7f0] sm:$0xff]
        %v576 = vld [vmem:[%s230 + $0x7f8] sm:$0xff]
        %v577 = vld [vmem:[%s230 + $0x800] sm:$0xff]
        %v578 = vld [vmem:[%s230 + $0x808] sm:$0xff]
        %v579 = vld [vmem:[%s230 + $0x810] sm:$0xff]
        %v580 = vld [vmem:[%s230 + $0x818] sm:$0xff]
        %v581 = vld [vmem:[%s230 + $0x820] sm:$0xff]
        %v582 = vld [vmem:[%s230 + $0x828] sm:$0xff]
        %v583 = vld [vmem:[%s230 + $0x830] sm:$0xff]
        %v584 = vld [vmem:[%s230 + $0x838] sm:$0xff]
        %v585 = vld [vmem:[%s230 + $0x840] sm:$0xff]
        %v586 = vld [vmem:[%s230 + $0x848] sm:$0xff]
        %v587 = vld [vmem:[%s230 + $0x850] sm:$0xff]
        %v588 = vld [vmem:[%s230 + $0x858] sm:$0xff]
        %v589 = vld [vmem:[%s230 + $0x860] sm:$0xff]
        %v590 = vld [vmem:[%s230 + $0x868] sm:$0xff]
        %v591 = vld [vmem:[%s230 + $0x870] sm:$0xff]
        %v592 = vld [vmem:[%s230 + $0x878] sm:$0xff]
        %v593 = vld [vmem:[%s230 + $0x880] sm:$0xff]
        %v594 = vld [vmem:[%s230 + $0x888] sm:$0xff]
        %v595 = vld [vmem:[%s230 + $0x890] sm:$0xff]
        %v596 = vld [vmem:[%s230 + $0x898] sm:$0xff]
        %v597 = vld [vmem:[%s230 + $0x8a0] sm:$0xff]
        %v598 = vld [vmem:[%s230 + $0x8a8] sm:$0xff]
        %v599 = vld [vmem:[%s230 + $0x8b0] sm:$0xff]
        %v600 = vld [vmem:[%s230 + $0x8b8] sm:$0xff]
        %v601 = vld [vmem:[%s230 + $0x8c0] sm:$0xff]
        %v602 = vld [vmem:[%s230 + $0x8c8] sm:$0xff]
        %v603 = vld [vmem:[%s230 + $0x8d0] sm:$0xff]
        %v604 = vld [vmem:[%s230 + $0x8d8] sm:$0xff]
        %v605 = vld [vmem:[%s230 + $0x8e0] sm:$0xff]
        %v606 = vld [vmem:[%s230 + $0x8e8] sm:$0xff]
        %v607 = vld [vmem:[%s230 + $0x8f0] sm:$0xff]
        %v608 = vld [vmem:[%s230 + $0x8f8] sm:$0xff]
        %v609 = vld [vmem:[%s230 + $0x900] sm:$0xff]
        %v610 = vld [vmem:[%s230 + $0x908] sm:$0xff]
        %v611 = vld [vmem:[%s230 + $0x910] sm:$0xff]
        %v612 = vld [vmem:[%s230 + $0x918] sm:$0xff]
        %v613 = vld [vmem:[%s230 + $0x920] sm:$0xff]
        %v614 = vld [vmem:[%s230 + $0x928] sm:$0xff]
        %v615 = vld [vmem:[%s230 + $0x930] sm:$0xff]
        %v616 = vld [vmem:[%s230 + $0x938] sm:$0xff]
        %v617 = vld [vmem:[%s230 + $0x940] sm:$0xff]
        %v618 = vld [vmem:[%s230 + $0x948] sm:$0xff]
        %v619 = vld [vmem:[%s230 + $0x950] sm:$0xff]
        %v620 = vld [vmem:[%s230 + $0x958] sm:$0xff]
        %v621 = vld [vmem:[%s230 + $0x960] sm:$0xff]
        %v622 = vld [vmem:[%s230 + $0x968] sm:$0xff]
        %v623 = vld [vmem:[%s230 + $0x970] sm:$0xff]
        %v624 = vld [vmem:[%s230 + $0x978] sm:$0xff]
        %v625 = vld [vmem:[%s230 + $0x980] sm:$0xff]
        %v626 = vld [vmem:[%s230 + $0x988] sm:$0xff]
        %v627 = vld [vmem:[%s230 + $0x990] sm:$0xff]
        %v628 = vld [vmem:[%s230 + $0x998] sm:$0xff]
        %v629 = vld [vmem:[%s230 + $0x9a0] sm:$0xff]
        %v630 = vld [vmem:[%s230 + $0x9a8] sm:$0xff]
        %v631 = vld [vmem:[%s230 + $0x9b0] sm:$0xff]
        %v632 = vld [vmem:[%s230 + $0x9b8] sm:$0xff]
        %v633 = vld [vmem:[%s230 + $0x9c0] sm:$0xff]
        %v634 = vld [vmem:[%s230 + $0x9c8] sm:$0xff]
        %v635 = vld [vmem:[%s230 + $0x9d0] sm:$0xff]
        %v636 = vld [vmem:[%s230 + $0x9d8] sm:$0xff]
        %v637 = vld [vmem:[%s230 + $0x9e0] sm:$0xff]
        %v638 = vld [vmem:[%s230 + $0x9e8] sm:$0xff]
        %v639 = vld [vmem:[%s230 + $0x9f0] sm:$0xff]
        %v640 = vld [vmem:[%s230 + $0x9f8] sm:$0xff]
        %v651 = vunpack.c.l.b16 %v311
        %v652 = vunpack.c.h.b16 %v311
        %v653 = vunpack.c.l.b16 %v312
        %v654 = vunpack.c.h.b16 %v312
        %v655 = vunpack.c.l.b16 %v313
        %v656 = vunpack.c.h.b16 %v313
        %v657 = vunpack.c.l.b16 %v314
        %v658 = vunpack.c.h.b16 %v314
        %v659 = vunpack.c.l.b16 %v315
        %v660 = vunpack.c.h.b16 %v315
        %v661 = vunpack.c.l.b16 %v316
        %v662 = vunpack.c.h.b16 %v316
        %v663 = vunpack.c.l.b16 %v317
        %v664 = vunpack.c.h.b16 %v317
        %v665 = vunpack.c.l.b16 %v318
        %v666 = vunpack.c.h.b16 %v318
        %v667 = vunpack.c.l.b16 %v319
        %v668 = vunpack.c.h.b16 %v319
        %v669 = vunpack.c.l.b16 %v320
        %v670 = vunpack.c.h.b16 %v320
        %v671 = vpack.c.b16 %v651, %v651
        %v672 = vpack.c.b16 %v652, %v652
        %v673 = vpack.c.b16 %v653, %v653
        %v674 = vpack.c.b16 %v654, %v654
        %v675 = vpack.c.b16 %v655, %v655
        %v676 = vpack.c.b16 %v656, %v656
        %v677 = vpack.c.b16 %v657, %v657
        %v678 = vpack.c.b16 %v658, %v658
        %v679 = vpack.c.b16 %v659, %v659
        %v680 = vpack.c.b16 %v660, %v660
        %v681 = vpack.c.b16 %v661, %v661
        %v682 = vpack.c.b16 %v662, %v662
        %v683 = vpack.c.b16 %v663, %v663
        %v684 = vpack.c.b16 %v664, %v664
        %v685 = vpack.c.b16 %v665, %v665
        %v686 = vpack.c.b16 %v666, %v666
        %v687 = vpack.c.b16 %v667, %v667
        %v688 = vpack.c.b16 %v668, %v668
        %v689 = vpack.c.b16 %v669, %v669
        %v690 = vpack.c.b16 %v670, %v670
        %v1031 = vunpack.c.l.b16 %v321
        %v1032 = vunpack.c.h.b16 %v321
        %v1033 = vunpack.c.l.b16 %v322
        %v1034 = vunpack.c.h.b16 %v322
        %v1035 = vunpack.c.l.b16 %v323
        %v1036 = vunpack.c.h.b16 %v323
        %v1037 = vunpack.c.l.b16 %v324
        %v1038 = vunpack.c.h.b16 %v324
        %v1039 = vunpack.c.l.b16 %v325
        %v1040 = vunpack.c.h.b16 %v325
        %v1041 = vunpack.c.l.b16 %v326
        %v1042 = vunpack.c.h.b16 %v326
        %v1043 = vunpack.c.l.b16 %v327
        %v1044 = vunpack.c.h.b16 %v327
        %v1045 = vunpack.c.l.b16 %v328
        %v1046 = vunpack.c.h.b16 %v328
        %v1047 = vunpack.c.l.b16 %v329
        %v1048 = vunpack.c.h.b16 %v329
        %v1049 = vunpack.c.l.b16 %v330
        %v1050 = vunpack.c.h.b16 %v330
        %v1051 = vunpack.c.l.b16 %v331
        %v1052 = vunpack.c.h.b16 %v331
        %v1053 = vunpack.c.l.b16 %v332
        %v1054 = vunpack.c.h.b16 %v332
        %v1055 = vunpack.c.l.b16 %v333
        %v1056 = vunpack.c.h.b16 %v333
        %v1057 = vunpack.c.l.b16 %v334
        %v1058 = vunpack.c.h.b16 %v334
        %v1059 = vunpack.c.l.b16 %v335
        %v1060 = vunpack.c.h.b16 %v335
        %v1061 = vunpack.c.l.b16 %v336
        %v1062 = vunpack.c.h.b16 %v336
        %v1063 = vunpack.c.l.b16 %v337
        %v1064 = vunpack.c.h.b16 %v337
        %v1065 = vunpack.c.l.b16 %v338
        %v1066 = vunpack.c.h.b16 %v338
        %v1067 = vunpack.c.l.b16 %v339
        %v1068 = vunpack.c.h.b16 %v339
        %v1069 = vunpack.c.l.b16 %v340
        %v1070 = vunpack.c.h.b16 %v340
        %v1071 = vunpack.c.l.b16 %v341
        %v1072 = vunpack.c.h.b16 %v341
        %v1073 = vunpack.c.l.b16 %v342
        %v1074 = vunpack.c.h.b16 %v342
        %v1075 = vunpack.c.l.b16 %v343
        %v1076 = vunpack.c.h.b16 %v343
        %v1077 = vunpack.c.l.b16 %v344
        %v1078 = vunpack.c.h.b16 %v344
        %v1079 = vunpack.c.l.b16 %v345
        %v1080 = vunpack.c.h.b16 %v345
        %v1081 = vunpack.c.l.b16 %v346
        %v1082 = vunpack.c.h.b16 %v346
        %v1083 = vunpack.c.l.b16 %v347
        %v1084 = vunpack.c.h.b16 %v347
        %v1085 = vunpack.c.l.b16 %v348
        %v1086 = vunpack.c.h.b16 %v348
        %v1087 = vunpack.c.l.b16 %v349
        %v1088 = vunpack.c.h.b16 %v349
        %v1089 = vunpack.c.l.b16 %v350
        %v1090 = vunpack.c.h.b16 %v350
        %v1091 = vunpack.c.l.b16 %v351
        %v1092 = vunpack.c.h.b16 %v351
        %v1093 = vunpack.c.l.b16 %v352
        %v1094 = vunpack.c.h.b16 %v352
        %v1095 = vunpack.c.l.b16 %v353
        %v1096 = vunpack.c.h.b16 %v353
        %v1097 = vunpack.c.l.b16 %v354
        %v1098 = vunpack.c.h.b16 %v354
        %v1099 = vunpack.c.l.b16 %v355
        %v1100 = vunpack.c.h.b16 %v355
        %v1101 = vunpack.c.l.b16 %v356
        %v1102 = vunpack.c.h.b16 %v356
        %v1103 = vunpack.c.l.b16 %v357
        %v1104 = vunpack.c.h.b16 %v357
        %v1105 = vunpack.c.l.b16 %v358
        %v1106 = vunpack.c.h.b16 %v358
        %v1107 = vunpack.c.l.b16 %v359
        %v1108 = vunpack.c.h.b16 %v359
        %v1109 = vunpack.c.l.b16 %v360
        %v1110 = vunpack.c.h.b16 %v360
        %v1111 = vunpack.c.l.b16 %v361
        %v1112 = vunpack.c.h.b16 %v361
        %v1113 = vunpack.c.l.b16 %v362
        %v1114 = vunpack.c.h.b16 %v362
        %v1115 = vunpack.c.l.b16 %v363
        %v1116 = vunpack.c.h.b16 %v363
        %v1117 = vunpack.c.l.b16 %v364
        %v1118 = vunpack.c.h.b16 %v364
        %v1119 = vunpack.c.l.b16 %v365
        %v1120 = vunpack.c.h.b16 %v365
        %v1121 = vunpack.c.l.b16 %v366
        %v1122 = vunpack.c.h.b16 %v366
        %v1123 = vunpack.c.l.b16 %v367
        %v1124 = vunpack.c.h.b16 %v367
        %v1125 = vunpack.c.l.b16 %v368
        %v1126 = vunpack.c.h.b16 %v368
        %v1127 = vunpack.c.l.b16 %v369
        %v1128 = vunpack.c.h.b16 %v369
        %v1129 = vunpack.c.l.b16 %v370
        %v1130 = vunpack.c.h.b16 %v370
        %v1131 = vunpack.c.l.b16 %v371
        %v1132 = vunpack.c.h.b16 %v371
        %v1133 = vunpack.c.l.b16 %v372
        %v1134 = vunpack.c.h.b16 %v372
        %v1135 = vunpack.c.l.b16 %v373
        %v1136 = vunpack.c.h.b16 %v373
        %v1137 = vunpack.c.l.b16 %v374
        %v1138 = vunpack.c.h.b16 %v374
        %v1139 = vunpack.c.l.b16 %v375
        %v1140 = vunpack.c.h.b16 %v375
        %v1141 = vunpack.c.l.b16 %v376
        %v1142 = vunpack.c.h.b16 %v376
        %v1143 = vunpack.c.l.b16 %v377
        %v1144 = vunpack.c.h.b16 %v377
        %v1145 = vunpack.c.l.b16 %v378
        %v1146 = vunpack.c.h.b16 %v378
        %v1147 = vunpack.c.l.b16 %v379
        %v1148 = vunpack.c.h.b16 %v379
        %v1149 = vunpack.c.l.b16 %v380
        %v1150 = vunpack.c.h.b16 %v380
        %v1151 = vunpack.c.l.b16 %v381
        %v1152 = vunpack.c.h.b16 %v381
        %v1153 = vunpack.c.l.b16 %v382
        %v1154 = vunpack.c.h.b16 %v382
        %v1155 = vunpack.c.l.b16 %v383
        %v1156 = vunpack.c.h.b16 %v383
        %v1157 = vunpack.c.l.b16 %v384
        %v1158 = vunpack.c.h.b16 %v384
        %v1159 = vunpack.c.l.b16 %v385
        %v1160 = vunpack.c.h.b16 %v385
        %v1161 = vunpack.c.l.b16 %v386
        %v1162 = vunpack.c.h.b16 %v386
        %v1163 = vunpack.c.l.b16 %v387
        %v1164 = vunpack.c.h.b16 %v387
        %v1165 = vunpack.c.l.b16 %v388
        %v1166 = vunpack.c.h.b16 %v388
        %v1167 = vunpack.c.l.b16 %v389
        %v1168 = vunpack.c.h.b16 %v389
        %v1169 = vunpack.c.l.b16 %v390
        %v1170 = vunpack.c.h.b16 %v390
        %v1171 = vunpack.c.l.b16 %v391
        %v1172 = vunpack.c.h.b16 %v391
        %v1173 = vunpack.c.l.b16 %v392
        %v1174 = vunpack.c.h.b16 %v392
        %v1175 = vunpack.c.l.b16 %v393
        %v1176 = vunpack.c.h.b16 %v393
        %v1177 = vunpack.c.l.b16 %v394
        %v1178 = vunpack.c.h.b16 %v394
        %v1179 = vunpack.c.l.b16 %v395
        %v1180 = vunpack.c.h.b16 %v395
        %v1181 = vunpack.c.l.b16 %v396
        %v1182 = vunpack.c.h.b16 %v396
        %v1183 = vunpack.c.l.b16 %v397
        %v1184 = vunpack.c.h.b16 %v397
        %v1185 = vunpack.c.l.b16 %v398
        %v1186 = vunpack.c.h.b16 %v398
        %v1187 = vunpack.c.l.b16 %v399
        %v1188 = vunpack.c.h.b16 %v399
        %v1189 = vunpack.c.l.b16 %v400
        %v1190 = vunpack.c.h.b16 %v400
        %v1191 = vunpack.c.l.b16 %v401
        %v1192 = vunpack.c.h.b16 %v401
        %v1193 = vunpack.c.l.b16 %v402
        %v1194 = vunpack.c.h.b16 %v402
        %v1195 = vunpack.c.l.b16 %v403
        %v1196 = vunpack.c.h.b16 %v403
        %v1197 = vunpack.c.l.b16 %v404
        %v1198 = vunpack.c.h.b16 %v404
        %v1199 = vunpack.c.l.b16 %v405
        %v1200 = vunpack.c.h.b16 %v405
        %v1201 = vunpack.c.l.b16 %v406
        %v1202 = vunpack.c.h.b16 %v406
        %v1203 = vunpack.c.l.b16 %v407
        %v1204 = vunpack.c.h.b16 %v407
        %v1205 = vunpack.c.l.b16 %v408
        %v1206 = vunpack.c.h.b16 %v408
        %v1207 = vunpack.c.l.b16 %v409
        %v1208 = vunpack.c.h.b16 %v409
        %v1209 = vunpack.c.l.b16 %v410
        %v1210 = vunpack.c.h.b16 %v410
        %v1211 = vunpack.c.l.b16 %v411
        %v1212 = vunpack.c.h.b16 %v411
        %v1213 = vunpack.c.l.b16 %v412
        %v1214 = vunpack.c.h.b16 %v412
        %v1215 = vunpack.c.l.b16 %v413
        %v1216 = vunpack.c.h.b16 %v413
        %v1217 = vunpack.c.l.b16 %v414
        %v1218 = vunpack.c.h.b16 %v414
        %v1219 = vunpack.c.l.b16 %v415
        %v1220 = vunpack.c.h.b16 %v415
        %v1221 = vunpack.c.l.b16 %v416
        %v1222 = vunpack.c.h.b16 %v416
        %v1223 = vunpack.c.l.b16 %v417
        %v1224 = vunpack.c.h.b16 %v417
        %v1225 = vunpack.c.l.b16 %v418
        %v1226 = vunpack.c.h.b16 %v418
        %v1227 = vunpack.c.l.b16 %v419
        %v1228 = vunpack.c.h.b16 %v419
        %v1229 = vunpack.c.l.b16 %v420
        %v1230 = vunpack.c.h.b16 %v420
        %v1231 = vunpack.c.l.b16 %v421
        %v1232 = vunpack.c.h.b16 %v421
        %v1233 = vunpack.c.l.b16 %v422
        %v1234 = vunpack.c.h.b16 %v422
        %v1235 = vunpack.c.l.b16 %v423
        %v1236 = vunpack.c.h.b16 %v423
        %v1237 = vunpack.c.l.b16 %v424
        %v1238 = vunpack.c.h.b16 %v424
        %v1239 = vunpack.c.l.b16 %v425
        %v1240 = vunpack.c.h.b16 %v425
        %v1241 = vunpack.c.l.b16 %v426
        %v1242 = vunpack.c.h.b16 %v426
        %v1243 = vunpack.c.l.b16 %v427
        %v1244 = vunpack.c.h.b16 %v427
        %v1245 = vunpack.c.l.b16 %v428
        %v1246 = vunpack.c.h.b16 %v428
        %v1247 = vunpack.c.l.b16 %v429
        %v1248 = vunpack.c.h.b16 %v429
        %v1249 = vunpack.c.l.b16 %v430
        %v1250 = vunpack.c.h.b16 %v430
        %v1251 = vunpack.c.l.b16 %v431
        %v1252 = vunpack.c.h.b16 %v431
        %v1253 = vunpack.c.l.b16 %v432
        %v1254 = vunpack.c.h.b16 %v432
        %v1255 = vunpack.c.l.b16 %v433
        %v1256 = vunpack.c.h.b16 %v433
        %v1257 = vunpack.c.l.b16 %v434
        %v1258 = vunpack.c.h.b16 %v434
        %v1259 = vunpack.c.l.b16 %v435
        %v1260 = vunpack.c.h.b16 %v435
        %v1261 = vunpack.c.l.b16 %v436
        %v1262 = vunpack.c.h.b16 %v436
        %v1263 = vunpack.c.l.b16 %v437
        %v1264 = vunpack.c.h.b16 %v437
        %v1265 = vunpack.c.l.b16 %v438
        %v1266 = vunpack.c.h.b16 %v438
        %v1267 = vunpack.c.l.b16 %v439
        %v1268 = vunpack.c.h.b16 %v439
        %v1269 = vunpack.c.l.b16 %v440
        %v1270 = vunpack.c.h.b16 %v440
        %v1271 = vunpack.c.l.b16 %v441
        %v1272 = vunpack.c.h.b16 %v441
        %v1273 = vunpack.c.l.b16 %v442
        %v1274 = vunpack.c.h.b16 %v442
        %v1275 = vunpack.c.l.b16 %v443
        %v1276 = vunpack.c.h.b16 %v443
        %v1277 = vunpack.c.l.b16 %v444
        %v1278 = vunpack.c.h.b16 %v444
        %v1279 = vunpack.c.l.b16 %v445
        %v1280 = vunpack.c.h.b16 %v445
        %v1281 = vunpack.c.l.b16 %v446
        %v1282 = vunpack.c.h.b16 %v446
        %v1283 = vunpack.c.l.b16 %v447
        %v1284 = vunpack.c.h.b16 %v447
        %v1285 = vunpack.c.l.b16 %v448
        %v1286 = vunpack.c.h.b16 %v448
        %v1287 = vunpack.c.l.b16 %v449
        %v1288 = vunpack.c.h.b16 %v449
        %v1289 = vunpack.c.l.b16 %v450
        %v1290 = vunpack.c.h.b16 %v450
        %v1291 = vunpack.c.l.b16 %v451
        %v1292 = vunpack.c.h.b16 %v451
        %v1293 = vunpack.c.l.b16 %v452
        %v1294 = vunpack.c.h.b16 %v452
        %v1295 = vunpack.c.l.b16 %v453
        %v1296 = vunpack.c.h.b16 %v453
        %v1297 = vunpack.c.l.b16 %v454
        %v1298 = vunpack.c.h.b16 %v454
        %v1299 = vunpack.c.l.b16 %v455
        %v1300 = vunpack.c.h.b16 %v455
        %v1301 = vunpack.c.l.b16 %v456
        %v1302 = vunpack.c.h.b16 %v456
        %v1303 = vunpack.c.l.b16 %v457
        %v1304 = vunpack.c.h.b16 %v457
        %v1305 = vunpack.c.l.b16 %v458
        %v1306 = vunpack.c.h.b16 %v458
        %v1307 = vunpack.c.l.b16 %v459
        %v1308 = vunpack.c.h.b16 %v459
        %v1309 = vunpack.c.l.b16 %v460
        %v1310 = vunpack.c.h.b16 %v460
        %v1311 = vunpack.c.l.b16 %v461
        %v1312 = vunpack.c.h.b16 %v461
        %v1313 = vunpack.c.l.b16 %v462
        %v1314 = vunpack.c.h.b16 %v462
        %v1315 = vunpack.c.l.b16 %v463
        %v1316 = vunpack.c.h.b16 %v463
        %v1317 = vunpack.c.l.b16 %v464
        %v1318 = vunpack.c.h.b16 %v464
        %v1319 = vunpack.c.l.b16 %v465
        %v1320 = vunpack.c.h.b16 %v465
        %v1321 = vunpack.c.l.b16 %v466
        %v1322 = vunpack.c.h.b16 %v466
        %v1323 = vunpack.c.l.b16 %v467
        %v1324 = vunpack.c.h.b16 %v467
        %v1325 = vunpack.c.l.b16 %v468
        %v1326 = vunpack.c.h.b16 %v468
        %v1327 = vunpack.c.l.b16 %v469
        %v1328 = vunpack.c.h.b16 %v469
        %v1329 = vunpack.c.l.b16 %v470
        %v1330 = vunpack.c.h.b16 %v470
        %v1331 = vunpack.c.l.b16 %v471
        %v1332 = vunpack.c.h.b16 %v471
        %v1333 = vunpack.c.l.b16 %v472
        %v1334 = vunpack.c.h.b16 %v472
        %v1335 = vunpack.c.l.b16 %v473
        %v1336 = vunpack.c.h.b16 %v473
        %v1337 = vunpack.c.l.b16 %v474
        %v1338 = vunpack.c.h.b16 %v474
        %v1339 = vunpack.c.l.b16 %v475
        %v1340 = vunpack.c.h.b16 %v475
        %v1341 = vunpack.c.l.b16 %v476
        %v1342 = vunpack.c.h.b16 %v476
        %v1343 = vunpack.c.l.b16 %v477
        %v1344 = vunpack.c.h.b16 %v477
        %v1345 = vunpack.c.l.b16 %v478
        %v1346 = vunpack.c.h.b16 %v478
        %v1347 = vunpack.c.l.b16 %v479
        %v1348 = vunpack.c.h.b16 %v479
        %v1349 = vunpack.c.l.b16 %v480
        %v1350 = vunpack.c.h.b16 %v480
        %v1351 = vunpack.c.l.b16 %v481
        %v1352 = vunpack.c.h.b16 %v481
        %v1353 = vunpack.c.l.b16 %v482
        %v1354 = vunpack.c.h.b16 %v482
        %v1355 = vunpack.c.l.b16 %v483
        %v1356 = vunpack.c.h.b16 %v483
        %v1357 = vunpack.c.l.b16 %v484
        %v1358 = vunpack.c.h.b16 %v484
        %v1359 = vunpack.c.l.b16 %v485
        %v1360 = vunpack.c.h.b16 %v485
        %v1361 = vunpack.c.l.b16 %v486
        %v1362 = vunpack.c.h.b16 %v486
        %v1363 = vunpack.c.l.b16 %v487
        %v1364 = vunpack.c.h.b16 %v487
        %v1365 = vunpack.c.l.b16 %v488
        %v1366 = vunpack.c.h.b16 %v488
        %v1367 = vunpack.c.l.b16 %v489
        %v1368 = vunpack.c.h.b16 %v489
        %v1369 = vunpack.c.l.b16 %v490
        %v1370 = vunpack.c.h.b16 %v490
        %v1371 = vunpack.c.l.b16 %v491
        %v1372 = vunpack.c.h.b16 %v491
        %v1373 = vunpack.c.l.b16 %v492
        %v1374 = vunpack.c.h.b16 %v492
        %v1375 = vunpack.c.l.b16 %v493
        %v1376 = vunpack.c.h.b16 %v493
        %v1377 = vunpack.c.l.b16 %v494
        %v1378 = vunpack.c.h.b16 %v494
        %v1379 = vunpack.c.l.b16 %v495
        %v1380 = vunpack.c.h.b16 %v495
        %v1381 = vunpack.c.l.b16 %v496
        %v1382 = vunpack.c.h.b16 %v496
        %v1383 = vunpack.c.l.b16 %v497
        %v1384 = vunpack.c.h.b16 %v497
        %v1385 = vunpack.c.l.b16 %v498
        %v1386 = vunpack.c.h.b16 %v498
        %v1387 = vunpack.c.l.b16 %v499
        %v1388 = vunpack.c.h.b16 %v499
        %v1389 = vunpack.c.l.b16 %v500
        %v1390 = vunpack.c.h.b16 %v500
        %v1391 = vunpack.c.l.b16 %v501
        %v1392 = vunpack.c.h.b16 %v501
        %v1393 = vunpack.c.l.b16 %v502
        %v1394 = vunpack.c.h.b16 %v502
        %v1395 = vunpack.c.l.b16 %v503
        %v1396 = vunpack.c.h.b16 %v503
        %v1397 = vunpack.c.l.b16 %v504
        %v1398 = vunpack.c.h.b16 %v504
        %v1399 = vunpack.c.l.b16 %v505
        %v1400 = vunpack.c.h.b16 %v505
        %v1401 = vunpack.c.l.b16 %v506
        %v1402 = vunpack.c.h.b16 %v506
        %v1403 = vunpack.c.l.b16 %v507
        %v1404 = vunpack.c.h.b16 %v507
        %v1405 = vunpack.c.l.b16 %v508
        %v1406 = vunpack.c.h.b16 %v508
        %v1407 = vunpack.c.l.b16 %v509
        %v1408 = vunpack.c.h.b16 %v509
        %v1409 = vunpack.c.l.b16 %v510
        %v1410 = vunpack.c.h.b16 %v510
        %v1411 = vunpack.c.l.b16 %v511
        %v1412 = vunpack.c.h.b16 %v511
        %v1413 = vunpack.c.l.b16 %v512
        %v1414 = vunpack.c.h.b16 %v512
        %v1415 = vunpack.c.l.b16 %v513
        %v1416 = vunpack.c.h.b16 %v513
        %v1417 = vunpack.c.l.b16 %v514
        %v1418 = vunpack.c.h.b16 %v514
        %v1419 = vunpack.c.l.b16 %v515
        %v1420 = vunpack.c.h.b16 %v515
        %v1421 = vunpack.c.l.b16 %v516
        %v1422 = vunpack.c.h.b16 %v516
        %v1423 = vunpack.c.l.b16 %v517
        %v1424 = vunpack.c.h.b16 %v517
        %v1425 = vunpack.c.l.b16 %v518
        %v1426 = vunpack.c.h.b16 %v518
        %v1427 = vunpack.c.l.b16 %v519
        %v1428 = vunpack.c.h.b16 %v519
        %v1429 = vunpack.c.l.b16 %v520
        %v1430 = vunpack.c.h.b16 %v520
        %v1431 = vunpack.c.l.b16 %v521
        %v1432 = vunpack.c.h.b16 %v521
        %v1433 = vunpack.c.l.b16 %v522
        %v1434 = vunpack.c.h.b16 %v522
        %v1435 = vunpack.c.l.b16 %v523
        %v1436 = vunpack.c.h.b16 %v523
        %v1437 = vunpack.c.l.b16 %v524
        %v1438 = vunpack.c.h.b16 %v524
        %v1439 = vunpack.c.l.b16 %v525
        %v1440 = vunpack.c.h.b16 %v525
        %v1441 = vunpack.c.l.b16 %v526
        %v1442 = vunpack.c.h.b16 %v526
        %v1443 = vunpack.c.l.b16 %v527
        %v1444 = vunpack.c.h.b16 %v527
        %v1445 = vunpack.c.l.b16 %v528
        %v1446 = vunpack.c.h.b16 %v528
        %v1447 = vunpack.c.l.b16 %v529
        %v1448 = vunpack.c.h.b16 %v529
        %v1449 = vunpack.c.l.b16 %v530
        %v1450 = vunpack.c.h.b16 %v530
        %v1451 = vunpack.c.l.b16 %v531
        %v1452 = vunpack.c.h.b16 %v531
        %v1453 = vunpack.c.l.b16 %v532
        %v1454 = vunpack.c.h.b16 %v532
        %v1455 = vunpack.c.l.b16 %v533
        %v1456 = vunpack.c.h.b16 %v533
        %v1457 = vunpack.c.l.b16 %v534
        %v1458 = vunpack.c.h.b16 %v534
        %v1459 = vunpack.c.l.b16 %v535
        %v1460 = vunpack.c.h.b16 %v535
        %v1461 = vunpack.c.l.b16 %v536
        %v1462 = vunpack.c.h.b16 %v536
        %v1463 = vunpack.c.l.b16 %v537
        %v1464 = vunpack.c.h.b16 %v537
        %v1465 = vunpack.c.l.b16 %v538
        %v1466 = vunpack.c.h.b16 %v538
        %v1467 = vunpack.c.l.b16 %v539
        %v1468 = vunpack.c.h.b16 %v539
        %v1469 = vunpack.c.l.b16 %v540
        %v1470 = vunpack.c.h.b16 %v540
        %v1471 = vunpack.c.l.b16 %v541
        %v1472 = vunpack.c.h.b16 %v541
        %v1473 = vunpack.c.l.b16 %v542
        %v1474 = vunpack.c.h.b16 %v542
        %v1475 = vunpack.c.l.b16 %v543
        %v1476 = vunpack.c.h.b16 %v543
        %v1477 = vunpack.c.l.b16 %v544
        %v1478 = vunpack.c.h.b16 %v544
        %v1479 = vunpack.c.l.b16 %v545
        %v1480 = vunpack.c.h.b16 %v545
        %v1481 = vunpack.c.l.b16 %v546
        %v1482 = vunpack.c.h.b16 %v546
        %v1483 = vunpack.c.l.b16 %v547
        %v1484 = vunpack.c.h.b16 %v547
        %v1485 = vunpack.c.l.b16 %v548
        %v1486 = vunpack.c.h.b16 %v548
        %v1487 = vunpack.c.l.b16 %v549
        %v1488 = vunpack.c.h.b16 %v549
        %v1489 = vunpack.c.l.b16 %v550
        %v1490 = vunpack.c.h.b16 %v550
        %v1491 = vunpack.c.l.b16 %v551
        %v1492 = vunpack.c.h.b16 %v551
        %v1493 = vunpack.c.l.b16 %v552
        %v1494 = vunpack.c.h.b16 %v552
        %v1495 = vunpack.c.l.b16 %v553
        %v1496 = vunpack.c.h.b16 %v553
        %v1497 = vunpack.c.l.b16 %v554
        %v1498 = vunpack.c.h.b16 %v554
        %v1499 = vunpack.c.l.b16 %v555
        %v1500 = vunpack.c.h.b16 %v555
        %v1501 = vunpack.c.l.b16 %v556
        %v1502 = vunpack.c.h.b16 %v556
        %v1503 = vunpack.c.l.b16 %v557
        %v1504 = vunpack.c.h.b16 %v557
        %v1505 = vunpack.c.l.b16 %v558
        %v1506 = vunpack.c.h.b16 %v558
        %v1507 = vunpack.c.l.b16 %v559
        %v1508 = vunpack.c.h.b16 %v559
        %v1509 = vunpack.c.l.b16 %v560
        %v1510 = vunpack.c.h.b16 %v560
        %v1511 = vunpack.c.l.b16 %v561
        %v1512 = vunpack.c.h.b16 %v561
        %v1513 = vunpack.c.l.b16 %v562
        %v1514 = vunpack.c.h.b16 %v562
        %v1515 = vunpack.c.l.b16 %v563
        %v1516 = vunpack.c.h.b16 %v563
        %v1517 = vunpack.c.l.b16 %v564
        %v1518 = vunpack.c.h.b16 %v564
        %v1519 = vunpack.c.l.b16 %v565
        %v1520 = vunpack.c.h.b16 %v565
        %v1521 = vunpack.c.l.b16 %v566
        %v1522 = vunpack.c.h.b16 %v566
        %v1523 = vunpack.c.l.b16 %v567
        %v1524 = vunpack.c.h.b16 %v567
        %v1525 = vunpack.c.l.b16 %v568
        %v1526 = vunpack.c.h.b16 %v568
        %v1527 = vunpack.c.l.b16 %v569
        %v1528 = vunpack.c.h.b16 %v569
        %v1529 = vunpack.c.l.b16 %v570
        %v1530 = vunpack.c.h.b16 %v570
        %v1531 = vunpack.c.l.b16 %v571
        %v1532 = vunpack.c.h.b16 %v571
        %v1533 = vunpack.c.l.b16 %v572
        %v1534 = vunpack.c.h.b16 %v572
        %v1535 = vunpack.c.l.b16 %v573
        %v1536 = vunpack.c.h.b16 %v573
        %v1537 = vunpack.c.l.b16 %v574
        %v1538 = vunpack.c.h.b16 %v574
        %v1539 = vunpack.c.l.b16 %v575
        %v1540 = vunpack.c.h.b16 %v575
        %v1541 = vunpack.c.l.b16 %v576
        %v1542 = vunpack.c.h.b16 %v576
        %v1543 = vunpack.c.l.b16 %v577
        %v1544 = vunpack.c.h.b16 %v577
        %v1545 = vunpack.c.l.b16 %v578
        %v1546 = vunpack.c.h.b16 %v578
        %v1547 = vunpack.c.l.b16 %v579
        %v1548 = vunpack.c.h.b16 %v579
        %v1549 = vunpack.c.l.b16 %v580
        %v1550 = vunpack.c.h.b16 %v580
        %v1551 = vunpack.c.l.b16 %v581
        %v1552 = vunpack.c.h.b16 %v581
        %v1553 = vunpack.c.l.b16 %v582
        %v1554 = vunpack.c.h.b16 %v582
        %v1555 = vunpack.c.l.b16 %v583
        %v1556 = vunpack.c.h.b16 %v583
        %v1557 = vunpack.c.l.b16 %v584
        %v1558 = vunpack.c.h.b16 %v584
        %v1559 = vunpack.c.l.b16 %v585
        %v1560 = vunpack.c.h.b16 %v585
        %v1561 = vunpack.c.l.b16 %v586
        %v1562 = vunpack.c.h.b16 %v586
        %v1563 = vunpack.c.l.b16 %v587
        %v1564 = vunpack.c.h.b16 %v587
        %v1565 = vunpack.c.l.b16 %v588
        %v1566 = vunpack.c.h.b16 %v588
        %v1567 = vunpack.c.l.b16 %v589
        %v1568 = vunpack.c.h.b16 %v589
        %v1569 = vunpack.c.l.b16 %v590
        %v1570 = vunpack.c.h.b16 %v590
        %v1571 = vunpack.c.l.b16 %v591
        %v1572 = vunpack.c.h.b16 %v591
        %v1573 = vunpack.c.l.b16 %v592
        %v1574 = vunpack.c.h.b16 %v592
        %v1575 = vunpack.c.l.b16 %v593
        %v1576 = vunpack.c.h.b16 %v593
        %v1577 = vunpack.c.l.b16 %v594
        %v1578 = vunpack.c.h.b16 %v594
        %v1579 = vunpack.c.l.b16 %v595
        %v1580 = vunpack.c.h.b16 %v595
        %v1581 = vunpack.c.l.b16 %v596
        %v1582 = vunpack.c.h.b16 %v596
        %v1583 = vunpack.c.l.b16 %v597
        %v1584 = vunpack.c.h.b16 %v597
        %v1585 = vunpack.c.l.b16 %v598
        %v1586 = vunpack.c.h.b16 %v598
        %v1587 = vunpack.c.l.b16 %v599
        %v1588 = vunpack.c.h.b16 %v599
        %v1589 = vunpack.c.l.b16 %v600
        %v1590 = vunpack.c.h.b16 %v600
        %v1591 = vunpack.c.l.b16 %v601
        %v1592 = vunpack.c.h.b16 %v601
        %v1593 = vunpack.c.l.b16 %v602
        %v1594 = vunpack.c.h.b16 %v602
        %v1595 = vunpack.c.l.b16 %v603
        %v1596 = vunpack.c.h.b16 %v603
        %v1597 = vunpack.c.l.b16 %v604
        %v1598 = vunpack.c.h.b16 %v604
        %v1599 = vunpack.c.l.b16 %v605
        %v1600 = vunpack.c.h.b16 %v605
        %v1601 = vunpack.c.l.b16 %v606
        %v1602 = vunpack.c.h.b16 %v606
        %v1603 = vunpack.c.l.b16 %v607
        %v1604 = vunpack.c.h.b16 %v607
        %v1605 = vunpack.c.l.b16 %v608
        %v1606 = vunpack.c.h.b16 %v608
        %v1607 = vunpack.c.l.b16 %v609
        %v1608 = vunpack.c.h.b16 %v609
        %v1609 = vunpack.c.l.b16 %v610
        %v1610 = vunpack.c.h.b16 %v610
        %v1611 = vunpack.c.l.b16 %v611
        %v1612 = vunpack.c.h.b16 %v611
        %v1613 = vunpack.c.l.b16 %v612
        %v1614 = vunpack.c.h.b16 %v612
        %v1615 = vunpack.c.l.b16 %v613
        %v1616 = vunpack.c.h.b16 %v613
        %v1617 = vunpack.c.l.b16 %v614
        %v1618 = vunpack.c.h.b16 %v614
        %v1619 = vunpack.c.l.b16 %v615
        %v1620 = vunpack.c.h.b16 %v615
        %v1621 = vunpack.c.l.b16 %v616
        %v1622 = vunpack.c.h.b16 %v616
        %v1623 = vunpack.c.l.b16 %v617
        %v1624 = vunpack.c.h.b16 %v617
        %v1625 = vunpack.c.l.b16 %v618
        %v1626 = vunpack.c.h.b16 %v618
        %v1627 = vunpack.c.l.b16 %v619
        %v1628 = vunpack.c.h.b16 %v619
        %v1629 = vunpack.c.l.b16 %v620
        %v1630 = vunpack.c.h.b16 %v620
        %v1631 = vunpack.c.l.b16 %v621
        %v1632 = vunpack.c.h.b16 %v621
        %v1633 = vunpack.c.l.b16 %v622
        %v1634 = vunpack.c.h.b16 %v622
        %v1635 = vunpack.c.l.b16 %v623
        %v1636 = vunpack.c.h.b16 %v623
        %v1637 = vunpack.c.l.b16 %v624
        %v1638 = vunpack.c.h.b16 %v624
        %v1639 = vunpack.c.l.b16 %v625
        %v1640 = vunpack.c.h.b16 %v625
        %v1641 = vunpack.c.l.b16 %v626
        %v1642 = vunpack.c.h.b16 %v626
        %v1643 = vunpack.c.l.b16 %v627
        %v1644 = vunpack.c.h.b16 %v627
        %v1645 = vunpack.c.l.b16 %v628
        %v1646 = vunpack.c.h.b16 %v628
        %v1647 = vunpack.c.l.b16 %v629
        %v1648 = vunpack.c.h.b16 %v629
        %v1649 = vunpack.c.l.b16 %v630
        %v1650 = vunpack.c.h.b16 %v630
        %v1651 = vunpack.c.l.b16 %v631
        %v1652 = vunpack.c.h.b16 %v631
        %v1653 = vunpack.c.l.b16 %v632
        %v1654 = vunpack.c.h.b16 %v632
        %v1655 = vunpack.c.l.b16 %v633
        %v1656 = vunpack.c.h.b16 %v633
        %v1657 = vunpack.c.l.b16 %v634
        %v1658 = vunpack.c.h.b16 %v634
        %v1659 = vunpack.c.l.b16 %v635
        %v1660 = vunpack.c.h.b16 %v635
        %v1661 = vunpack.c.l.b16 %v636
        %v1662 = vunpack.c.h.b16 %v636
        %v1663 = vunpack.c.l.b16 %v637
        %v1664 = vunpack.c.h.b16 %v637
        %v1665 = vunpack.c.l.b16 %v638
        %v1666 = vunpack.c.h.b16 %v638
        %v1667 = vunpack.c.l.b16 %v639
        %v1668 = vunpack.c.h.b16 %v639
        %v1669 = vunpack.c.l.b16 %v640
        %v1670 = vunpack.c.h.b16 %v640
        %v1671 = vpack.c.b16 %v1033, %v1031
        %v1672 = vpack.c.b16 %v1034, %v1032
        %v1673 = vpack.c.b16 %v1037, %v1035
        %v1674 = vpack.c.b16 %v1038, %v1036
        %v1675 = vpack.c.b16 %v1041, %v1039
        %v1676 = vpack.c.b16 %v1042, %v1040
        %v1677 = vpack.c.b16 %v1045, %v1043
        %v1678 = vpack.c.b16 %v1046, %v1044
        %v1679 = vpack.c.b16 %v1049, %v1047
        %v1680 = vpack.c.b16 %v1050, %v1048
        %v1681 = vpack.c.b16 %v1053, %v1051
        %v1682 = vpack.c.b16 %v1054, %v1052
        %v1683 = vpack.c.b16 %v1057, %v1055
        %v1684 = vpack.c.b16 %v1058, %v1056
        %v1685 = vpack.c.b16 %v1061, %v1059
        %v1686 = vpack.c.b16 %v1062, %v1060
        %v1687 = vpack.c.b16 %v1065, %v1063
        %v1688 = vpack.c.b16 %v1066, %v1064
        %v1689 = vpack.c.b16 %v1069, %v1067
        %v1690 = vpack.c.b16 %v1070, %v1068
        %v1691 = vpack.c.b16 %v1073, %v1071
        %v1692 = vpack.c.b16 %v1074, %v1072
        %v1693 = vpack.c.b16 %v1077, %v1075
        %v1694 = vpack.c.b16 %v1078, %v1076
        %v1695 = vpack.c.b16 %v1081, %v1079
        %v1696 = vpack.c.b16 %v1082, %v1080
        %v1697 = vpack.c.b16 %v1085, %v1083
        %v1698 = vpack.c.b16 %v1086, %v1084
        %v1699 = vpack.c.b16 %v1089, %v1087
        %v1700 = vpack.c.b16 %v1090, %v1088
        %v1701 = vpack.c.b16 %v1093, %v1091
        %v1702 = vpack.c.b16 %v1094, %v1092
        %v1703 = vpack.c.b16 %v1097, %v1095
        %v1704 = vpack.c.b16 %v1098, %v1096
        %v1705 = vpack.c.b16 %v1101, %v1099
        %v1706 = vpack.c.b16 %v1102, %v1100
        %v1707 = vpack.c.b16 %v1105, %v1103
        %v1708 = vpack.c.b16 %v1106, %v1104
        %v1709 = vpack.c.b16 %v1109, %v1107
        %v1710 = vpack.c.b16 %v1110, %v1108
        %v1711 = vpack.c.b16 %v1113, %v1111
        %v1712 = vpack.c.b16 %v1114, %v1112
        %v1713 = vpack.c.b16 %v1117, %v1115
        %v1714 = vpack.c.b16 %v1118, %v1116
        %v1715 = vpack.c.b16 %v1121, %v1119
        %v1716 = vpack.c.b16 %v1122, %v1120
        %v1717 = vpack.c.b16 %v1125, %v1123
        %v1718 = vpack.c.b16 %v1126, %v1124
        %v1719 = vpack.c.b16 %v1129, %v1127
        %v1720 = vpack.c.b16 %v1130, %v1128
        %v1721 = vpack.c.b16 %v1133, %v1131
        %v1722 = vpack.c.b16 %v1134, %v1132
        %v1723 = vpack.c.b16 %v1137, %v1135
        %v1724 = vpack.c.b16 %v1138, %v1136
        %v1725 = vpack.c.b16 %v1141, %v1139
        %v1726 = vpack.c.b16 %v1142, %v1140
        %v1727 = vpack.c.b16 %v1145, %v1143
        %v1728 = vpack.c.b16 %v1146, %v1144
        %v1729 = vpack.c.b16 %v1149, %v1147
        %v1730 = vpack.c.b16 %v1150, %v1148
        %v1731 = vpack.c.b16 %v1153, %v1151
        %v1732 = vpack.c.b16 %v1154, %v1152
        %v1733 = vpack.c.b16 %v1157, %v1155
        %v1734 = vpack.c.b16 %v1158, %v1156
        %v1735 = vpack.c.b16 %v1161, %v1159
        %v1736 = vpack.c.b16 %v1162, %v1160
        %v1737 = vpack.c.b16 %v1165, %v1163
        %v1738 = vpack.c.b16 %v1166, %v1164
        %v1739 = vpack.c.b16 %v1169, %v1167
        %v1740 = vpack.c.b16 %v1170, %v1168
        %v1741 = vpack.c.b16 %v1173, %v1171
        %v1742 = vpack.c.b16 %v1174, %v1172
        %v1743 = vpack.c.b16 %v1177, %v1175
        %v1744 = vpack.c.b16 %v1178, %v1176
        %v1745 = vpack.c.b16 %v1181, %v1179
        %v1746 = vpack.c.b16 %v1182, %v1180
        %v1747 = vpack.c.b16 %v1185, %v1183
        %v1748 = vpack.c.b16 %v1186, %v1184
        %v1749 = vpack.c.b16 %v1189, %v1187
        %v1750 = vpack.c.b16 %v1190, %v1188
        %v1751 = vpack.c.b16 %v1193, %v1191
        %v1752 = vpack.c.b16 %v1194, %v1192
        %v1753 = vpack.c.b16 %v1197, %v1195
        %v1754 = vpack.c.b16 %v1198, %v1196
        %v1755 = vpack.c.b16 %v1201, %v1199
        %v1756 = vpack.c.b16 %v1202, %v1200
        %v1757 = vpack.c.b16 %v1205, %v1203
        %v1758 = vpack.c.b16 %v1206, %v1204
        %v1759 = vpack.c.b16 %v1209, %v1207
        %v1760 = vpack.c.b16 %v1210, %v1208
        %v1761 = vpack.c.b16 %v1213, %v1211
        %v1762 = vpack.c.b16 %v1214, %v1212
        %v1763 = vpack.c.b16 %v1217, %v1215
        %v1764 = vpack.c.b16 %v1218, %v1216
        %v1765 = vpack.c.b16 %v1221, %v1219
        %v1766 = vpack.c.b16 %v1222, %v1220
        %v1767 = vpack.c.b16 %v1225, %v1223
        %v1768 = vpack.c.b16 %v1226, %v1224
        %v1769 = vpack.c.b16 %v1229, %v1227
        %v1770 = vpack.c.b16 %v1230, %v1228
        %v1771 = vpack.c.b16 %v1233, %v1231
        %v1772 = vpack.c.b16 %v1234, %v1232
        %v1773 = vpack.c.b16 %v1237, %v1235
        %v1774 = vpack.c.b16 %v1238, %v1236
        %v1775 = vpack.c.b16 %v1241, %v1239
        %v1776 = vpack.c.b16 %v1242, %v1240
        %v1777 = vpack.c.b16 %v1245, %v1243
        %v1778 = vpack.c.b16 %v1246, %v1244
        %v1779 = vpack.c.b16 %v1249, %v1247
        %v1780 = vpack.c.b16 %v1250, %v1248
        %v1781 = vpack.c.b16 %v1253, %v1251
        %v1782 = vpack.c.b16 %v1254, %v1252
        %v1783 = vpack.c.b16 %v1257, %v1255
        %v1784 = vpack.c.b16 %v1258, %v1256
        %v1785 = vpack.c.b16 %v1261, %v1259
        %v1786 = vpack.c.b16 %v1262, %v1260
        %v1787 = vpack.c.b16 %v1265, %v1263
        %v1788 = vpack.c.b16 %v1266, %v1264
        %v1789 = vpack.c.b16 %v1269, %v1267
        %v1790 = vpack.c.b16 %v1270, %v1268
        %v1791 = vpack.c.b16 %v1273, %v1271
        %v1792 = vpack.c.b16 %v1274, %v1272
        %v1793 = vpack.c.b16 %v1277, %v1275
        %v1794 = vpack.c.b16 %v1278, %v1276
        %v1795 = vpack.c.b16 %v1281, %v1279
        %v1796 = vpack.c.b16 %v1282, %v1280
        %v1797 = vpack.c.b16 %v1285, %v1283
        %v1798 = vpack.c.b16 %v1286, %v1284
        %v1799 = vpack.c.b16 %v1289, %v1287
        %v1800 = vpack.c.b16 %v1290, %v1288
        %v1801 = vpack.c.b16 %v1293, %v1291
        %v1802 = vpack.c.b16 %v1294, %v1292
        %v1803 = vpack.c.b16 %v1297, %v1295
        %v1804 = vpack.c.b16 %v1298, %v1296
        %v1805 = vpack.c.b16 %v1301, %v1299
        %v1806 = vpack.c.b16 %v1302, %v1300
        %v1807 = vpack.c.b16 %v1305, %v1303
        %v1808 = vpack.c.b16 %v1306, %v1304
        %v1809 = vpack.c.b16 %v1309, %v1307
        %v1810 = vpack.c.b16 %v1310, %v1308
        %v1811 = vpack.c.b16 %v1313, %v1311
        %v1812 = vpack.c.b16 %v1314, %v1312
        %v1813 = vpack.c.b16 %v1317, %v1315
        %v1814 = vpack.c.b16 %v1318, %v1316
        %v1815 = vpack.c.b16 %v1321, %v1319
        %v1816 = vpack.c.b16 %v1322, %v1320
        %v1817 = vpack.c.b16 %v1325, %v1323
        %v1818 = vpack.c.b16 %v1326, %v1324
        %v1819 = vpack.c.b16 %v1329, %v1327
        %v1820 = vpack.c.b16 %v1330, %v1328
        %v1821 = vpack.c.b16 %v1333, %v1331
        %v1822 = vpack.c.b16 %v1334, %v1332
        %v1823 = vpack.c.b16 %v1337, %v1335
        %v1824 = vpack.c.b16 %v1338, %v1336
        %v1825 = vpack.c.b16 %v1341, %v1339
        %v1826 = vpack.c.b16 %v1342, %v1340
        %v1827 = vpack.c.b16 %v1345, %v1343
        %v1828 = vpack.c.b16 %v1346, %v1344
        %v1829 = vpack.c.b16 %v1349, %v1347
        %v1830 = vpack.c.b16 %v1350, %v1348
        %v1831 = vpack.c.b16 %v1353, %v1351
        %v1832 = vpack.c.b16 %v1354, %v1352
        %v1833 = vpack.c.b16 %v1357, %v1355
        %v1834 = vpack.c.b16 %v1358, %v1356
        %v1835 = vpack.c.b16 %v1361, %v1359
        %v1836 = vpack.c.b16 %v1362, %v1360
        %v1837 = vpack.c.b16 %v1365, %v1363
        %v1838 = vpack.c.b16 %v1366, %v1364
        %v1839 = vpack.c.b16 %v1369, %v1367
        %v1840 = vpack.c.b16 %v1370, %v1368
        %v1841 = vpack.c.b16 %v1373, %v1371
        %v1842 = vpack.c.b16 %v1374, %v1372
        %v1843 = vpack.c.b16 %v1377, %v1375
        %v1844 = vpack.c.b16 %v1378, %v1376
        %v1845 = vpack.c.b16 %v1381, %v1379
        %v1846 = vpack.c.b16 %v1382, %v1380
        %v1847 = vpack.c.b16 %v1385, %v1383
        %v1848 = vpack.c.b16 %v1386, %v1384
        %v1849 = vpack.c.b16 %v1389, %v1387
        %v1850 = vpack.c.b16 %v1390, %v1388
        %v1851 = vpack.c.b16 %v1393, %v1391
        %v1852 = vpack.c.b16 %v1394, %v1392
        %v1853 = vpack.c.b16 %v1397, %v1395
        %v1854 = vpack.c.b16 %v1398, %v1396
        %v1855 = vpack.c.b16 %v1401, %v1399
        %v1856 = vpack.c.b16 %v1402, %v1400
        %v1857 = vpack.c.b16 %v1405, %v1403
        %v1858 = vpack.c.b16 %v1406, %v1404
        %v1859 = vpack.c.b16 %v1409, %v1407
        %v1860 = vpack.c.b16 %v1410, %v1408
        %v1861 = vpack.c.b16 %v1413, %v1411
        %v1862 = vpack.c.b16 %v1414, %v1412
        %v1863 = vpack.c.b16 %v1417, %v1415
        %v1864 = vpack.c.b16 %v1418, %v1416
        %v1865 = vpack.c.b16 %v1421, %v1419
        %v1866 = vpack.c.b16 %v1422, %v1420
        %v1867 = vpack.c.b16 %v1425, %v1423
        %v1868 = vpack.c.b16 %v1426, %v1424
        %v1869 = vpack.c.b16 %v1429, %v1427
        %v1870 = vpack.c.b16 %v1430, %v1428
        %v1871 = vpack.c.b16 %v1433, %v1431
        %v1872 = vpack.c.b16 %v1434, %v1432
        %v1873 = vpack.c.b16 %v1437, %v1435
        %v1874 = vpack.c.b16 %v1438, %v1436
        %v1875 = vpack.c.b16 %v1441, %v1439
        %v1876 = vpack.c.b16 %v1442, %v1440
        %v1877 = vpack.c.b16 %v1445, %v1443
        %v1878 = vpack.c.b16 %v1446, %v1444
        %v1879 = vpack.c.b16 %v1449, %v1447
        %v1880 = vpack.c.b16 %v1450, %v1448
        %v1881 = vpack.c.b16 %v1453, %v1451
        %v1882 = vpack.c.b16 %v1454, %v1452
        %v1883 = vpack.c.b16 %v1457, %v1455
        %v1884 = vpack.c.b16 %v1458, %v1456
        %v1885 = vpack.c.b16 %v1461, %v1459
        %v1886 = vpack.c.b16 %v1462, %v1460
        %v1887 = vpack.c.b16 %v1465, %v1463
        %v1888 = vpack.c.b16 %v1466, %v1464
        %v1889 = vpack.c.b16 %v1469, %v1467
        %v1890 = vpack.c.b16 %v1470, %v1468
        %v1891 = vpack.c.b16 %v1473, %v1471
        %v1892 = vpack.c.b16 %v1474, %v1472
        %v1893 = vpack.c.b16 %v1477, %v1475
        %v1894 = vpack.c.b16 %v1478, %v1476
        %v1895 = vpack.c.b16 %v1481, %v1479
        %v1896 = vpack.c.b16 %v1482, %v1480
        %v1897 = vpack.c.b16 %v1485, %v1483
        %v1898 = vpack.c.b16 %v1486, %v1484
        %v1899 = vpack.c.b16 %v1489, %v1487
        %v1900 = vpack.c.b16 %v1490, %v1488
        %v1901 = vpack.c.b16 %v1493, %v1491
        %v1902 = vpack.c.b16 %v1494, %v1492
        %v1903 = vpack.c.b16 %v1497, %v1495
        %v1904 = vpack.c.b16 %v1498, %v1496
        %v1905 = vpack.c.b16 %v1501, %v1499
        %v1906 = vpack.c.b16 %v1502, %v1500
        %v1907 = vpack.c.b16 %v1505, %v1503
        %v1908 = vpack.c.b16 %v1506, %v1504
        %v1909 = vpack.c.b16 %v1509, %v1507
        %v1910 = vpack.c.b16 %v1510, %v1508
        %v1911 = vpack.c.b16 %v1513, %v1511
        %v1912 = vpack.c.b16 %v1514, %v1512
        %v1913 = vpack.c.b16 %v1517, %v1515
        %v1914 = vpack.c.b16 %v1518, %v1516
        %v1915 = vpack.c.b16 %v1521, %v1519
        %v1916 = vpack.c.b16 %v1522, %v1520
        %v1917 = vpack.c.b16 %v1525, %v1523
        %v1918 = vpack.c.b16 %v1526, %v1524
        %v1919 = vpack.c.b16 %v1529, %v1527
        %v1920 = vpack.c.b16 %v1530, %v1528
        %v1921 = vpack.c.b16 %v1533, %v1531
        %v1922 = vpack.c.b16 %v1534, %v1532
        %v1923 = vpack.c.b16 %v1537, %v1535
        %v1924 = vpack.c.b16 %v1538, %v1536
        %v1925 = vpack.c.b16 %v1541, %v1539
        %v1926 = vpack.c.b16 %v1542, %v1540
        %v1927 = vpack.c.b16 %v1545, %v1543
        %v1928 = vpack.c.b16 %v1546, %v1544
        %v1929 = vpack.c.b16 %v1549, %v1547
        %v1930 = vpack.c.b16 %v1550, %v1548
        %v1931 = vpack.c.b16 %v1553, %v1551
        %v1932 = vpack.c.b16 %v1554, %v1552
        %v1933 = vpack.c.b16 %v1557, %v1555
        %v1934 = vpack.c.b16 %v1558, %v1556
        %v1935 = vpack.c.b16 %v1561, %v1559
        %v1936 = vpack.c.b16 %v1562, %v1560
        %v1937 = vpack.c.b16 %v1565, %v1563
        %v1938 = vpack.c.b16 %v1566, %v1564
        %v1939 = vpack.c.b16 %v1569, %v1567
        %v1940 = vpack.c.b16 %v1570, %v1568
        %v1941 = vpack.c.b16 %v1573, %v1571
        %v1942 = vpack.c.b16 %v1574, %v1572
        %v1943 = vpack.c.b16 %v1577, %v1575
        %v1944 = vpack.c.b16 %v1578, %v1576
        %v1945 = vpack.c.b16 %v1581, %v1579
        %v1946 = vpack.c.b16 %v1582, %v1580
        %v1947 = vpack.c.b16 %v1585, %v1583
        %v1948 = vpack.c.b16 %v1586, %v1584
        %v1949 = vpack.c.b16 %v1589, %v1587
        %v1950 = vpack.c.b16 %v1590, %v1588
        %v1951 = vpack.c.b16 %v1593, %v1591
        %v1952 = vpack.c.b16 %v1594, %v1592
        %v1953 = vpack.c.b16 %v1597, %v1595
        %v1954 = vpack.c.b16 %v1598, %v1596
        %v1955 = vpack.c.b16 %v1601, %v1599
        %v1956 = vpack.c.b16 %v1602, %v1600
        %v1957 = vpack.c.b16 %v1605, %v1603
        %v1958 = vpack.c.b16 %v1606, %v1604
        %v1959 = vpack.c.b16 %v1609, %v1607
        %v1960 = vpack.c.b16 %v1610, %v1608
        %v1961 = vpack.c.b16 %v1613, %v1611
        %v1962 = vpack.c.b16 %v1614, %v1612
        %v1963 = vpack.c.b16 %v1617, %v1615
        %v1964 = vpack.c.b16 %v1618, %v1616
        %v1965 = vpack.c.b16 %v1621, %v1619
        %v1966 = vpack.c.b16 %v1622, %v1620
        %v1967 = vpack.c.b16 %v1625, %v1623
        %v1968 = vpack.c.b16 %v1626, %v1624
        %v1969 = vpack.c.b16 %v1629, %v1627
        %v1970 = vpack.c.b16 %v1630, %v1628
        %v1971 = vpack.c.b16 %v1633, %v1631
        %v1972 = vpack.c.b16 %v1634, %v1632
        %v1973 = vpack.c.b16 %v1637, %v1635
        %v1974 = vpack.c.b16 %v1638, %v1636
        %v1975 = vpack.c.b16 %v1641, %v1639
        %v1976 = vpack.c.b16 %v1642, %v1640
        %v1977 = vpack.c.b16 %v1645, %v1643
        %v1978 = vpack.c.b16 %v1646, %v1644
        %v1979 = vpack.c.b16 %v1649, %v1647
        %v1980 = vpack.c.b16 %v1650, %v1648
        %v1981 = vpack.c.b16 %v1653, %v1651
        %v1982 = vpack.c.b16 %v1654, %v1652
        %v1983 = vpack.c.b16 %v1657, %v1655
        %v1984 = vpack.c.b16 %v1658, %v1656
        %v1985 = vpack.c.b16 %v1661, %v1659
        %v1986 = vpack.c.b16 %v1662, %v1660
        %v1987 = vpack.c.b16 %v1665, %v1663
        %v1988 = vpack.c.b16 %v1666, %v1664
        %v1989 = vpack.c.b16 %v1669, %v1667
        %v1990 = vpack.c.b16 %v1670, %v1668
        %2311 = vmatprep.subr.bf16.mxu0 %v1686
        %2312 = vmatpush1.bf16.msra.mxu0 %v1685
        %2313 = vmatprep.subr.bf16.mxu0 %v1684
        %2314 = vmatpush1.bf16.msra.mxu0 %v1683
        %2315 = vmatprep.subr.bf16.mxu0 %v1682
        %2316 = vmatpush1.bf16.msra.mxu0 %v1681
        %2317 = vmatprep.subr.bf16.mxu0 %v1680
        %2318 = vmatpush1.bf16.msra.mxu0 %v1679
        %2319 = vmatprep.subr.bf16.mxu0 %v1678
        %2320 = vmatpush1.bf16.msra.mxu0 %v1677
        %2321 = vmatprep.subr.bf16.mxu0 %v1676
        %2322 = vmatpush1.bf16.msra.mxu0 %v1675
        %2323 = vmatprep.subr.bf16.mxu0 %v1674
        %2324 = vmatpush1.bf16.msra.mxu0 %v1673
        %2325 = vmatprep.subr.bf16.mxu0 %v1672
        %2326 = vmatpush1.bf16.msra.mxu0 %v1671
        %2327 = vmatprep.subr.bf16.mxu0 %v1702
        %2328 = vmatpush2.bf16.msra.mxu0 %v1701
        %2329 = vmatprep.subr.bf16.mxu0 %v1700
        %2330 = vmatpush2.bf16.msra.mxu0 %v1699
        %2331 = vmatprep.subr.bf16.mxu0 %v1698
        %2332 = vmatpush2.bf16.msra.mxu0 %v1697
        %2333 = vmatprep.subr.bf16.mxu0 %v1696
        %2334 = vmatpush2.bf16.msra.mxu0 %v1695
        %2335 = vmatprep.subr.bf16.mxu0 %v1694
        %2336 = vmatpush2.bf16.msra.mxu0 %v1693
        %2337 = vmatprep.subr.bf16.mxu0 %v1692
        %2338 = vmatpush2.bf16.msra.mxu0 %v1691
        %2339 = vmatprep.subr.bf16.mxu0 %v1690
        %2340 = vmatpush2.bf16.msra.mxu0 %v1689
        %2341 = vmatprep.subr.bf16.mxu0 %v1688
        %2342 = vmatpush2.bf16.msra.mxu0 %v1687
        %2343 = vmatprep.mubr.bf16.mxu0 %v672
        %2344 = vmatmul.mubr.bf16.gmra.mxu0 %v671
        %v2345 = vpop.f32.mrf.mxu0
        %v2346 = vadd.f32 0.0, %v2345
        %v2347 = vpop.f32.mrf.mxu0
        %v2348 = vadd.f32 0.0, %v2347
        %v2349 = vpop.f32.mrf.mxu0
        %v2350 = vpop.f32.mrf.mxu0
        %2351 = vdwg.mxu0
        %2352 = vmatprep.subr.bf16.mxu0 %v1718
        %2353 = vmatpush1.bf16.msra.mxu0 %v1717
        %2354 = vmatprep.subr.bf16.mxu0 %v1716
        %2355 = vmatpush1.bf16.msra.mxu0 %v1715
        %2356 = vmatprep.subr.bf16.mxu0 %v1714
        %2357 = vmatpush1.bf16.msra.mxu0 %v1713
        %2358 = vmatprep.subr.bf16.mxu0 %v1712
        %2359 = vmatpush1.bf16.msra.mxu0 %v1711
        %2360 = vmatprep.subr.bf16.mxu0 %v1710
        %2361 = vmatpush1.bf16.msra.mxu0 %v1709
        %2362 = vmatprep.subr.bf16.mxu0 %v1708
        %2363 = vmatpush1.bf16.msra.mxu0 %v1707
        %2364 = vmatprep.subr.bf16.mxu0 %v1706
        %2365 = vmatpush1.bf16.msra.mxu0 %v1705
        %2366 = vmatprep.subr.bf16.mxu0 %v1704
        %2367 = vmatpush1.bf16.msra.mxu0 %v1703
        %2368 = vmatprep.subr.bf16.mxu0 %v1734
        %2369 = vmatpush2.bf16.msra.mxu0 %v1733
        %2370 = vmatprep.subr.bf16.mxu0 %v1732
        %2371 = vmatpush2.bf16.msra.mxu0 %v1731
        %2372 = vmatprep.subr.bf16.mxu0 %v1730
        %2373 = vmatpush2.bf16.msra.mxu0 %v1729
        %2374 = vmatprep.subr.bf16.mxu0 %v1728
        %2375 = vmatpush2.bf16.msra.mxu0 %v1727
        %2376 = vmatprep.subr.bf16.mxu0 %v1726
        %2377 = vmatpush2.bf16.msra.mxu0 %v1725
        %2378 = vmatprep.subr.bf16.mxu0 %v1724
        %2379 = vmatpush2.bf16.msra.mxu0 %v1723
        %2380 = vmatprep.subr.bf16.mxu0 %v1722
        %2381 = vmatpush2.bf16.msra.mxu0 %v1721
        %2382 = vmatprep.subr.bf16.mxu0 %v1720
        %2383 = vmatpush2.bf16.msra.mxu0 %v1719
        %2384 = vmatprep.mubr.bf16.mxu0 %v674
        %2385 = vmatmul.mubr.bf16.gmra.mxu0 %v673
        %v2386 = vpop.f32.mrf.mxu0
        %v2387 = vadd.f32 %v2346, %v2386
        %v2388 = vpop.f32.mrf.mxu0
        %v2389 = vadd.f32 %v2348, %v2388
        %v2390 = vpop.f32.mrf.mxu0
        %v2391 = vpop.f32.mrf.mxu0
        %2392 = vdwg.mxu0
        %2393 = vmatprep.subr.bf16.mxu0 %v1750
        %2394 = vmatpush1.bf16.msra.mxu0 %v1749
        %2395 = vmatprep.subr.bf16.mxu0 %v1748
        %2396 = vmatpush1.bf16.msra.mxu0 %v1747
        %2397 = vmatprep.subr.bf16.mxu0 %v1746
        %2398 = vmatpush1.bf16.msra.mxu0 %v1745
        %2399 = vmatprep.subr.bf16.mxu0 %v1744
        %2400 = vmatpush1.bf16.msra.mxu0 %v1743
        %2401 = vmatprep.subr.bf16.mxu0 %v1742
        %2402 = vmatpush1.bf16.msra.mxu0 %v1741
        %2403 = vmatprep.subr.bf16.mxu0 %v1740
        %2404 = vmatpush1.bf16.msra.mxu0 %v1739
        %2405 = vmatprep.subr.bf16.mxu0 %v1738
        %2406 = vmatpush1.bf16.msra.mxu0 %v1737
        %2407 = vmatprep.subr.bf16.mxu0 %v1736
        %2408 = vmatpush1.bf16.msra.mxu0 %v1735
        %2409 = vmatprep.subr.bf16.mxu0 %v1766
        %2410 = vmatpush2.bf16.msra.mxu0 %v1765
        %2411 = vmatprep.subr.bf16.mxu0 %v1764
        %2412 = vmatpush2.bf16.msra.mxu0 %v1763
        %2413 = vmatprep.subr.bf16.mxu0 %v1762
        %2414 = vmatpush2.bf16.msra.mxu0 %v1761
        %2415 = vmatprep.subr.bf16.mxu0 %v1760
        %2416 = vmatpush2.bf16.msra.mxu0 %v1759
        %2417 = vmatprep.subr.bf16.mxu0 %v1758
        %2418 = vmatpush2.bf16.msra.mxu0 %v1757
        %2419 = vmatprep.subr.bf16.mxu0 %v1756
        %2420 = vmatpush2.bf16.msra.mxu0 %v1755
        %2421 = vmatprep.subr.bf16.mxu0 %v1754
        %2422 = vmatpush2.bf16.msra.mxu0 %v1753
        %2423 = vmatprep.subr.bf16.mxu0 %v1752
        %2424 = vmatpush2.bf16.msra.mxu0 %v1751
        %2425 = vmatprep.mubr.bf16.mxu0 %v676
        %2426 = vmatmul.mubr.bf16.gmra.mxu0 %v675
        %v2427 = vpop.f32.mrf.mxu0
        %v2428 = vadd.f32 %v2387, %v2427
        %v2429 = vpop.f32.mrf.mxu0
        %v2430 = vadd.f32 %v2389, %v2429
        %v2431 = vpop.f32.mrf.mxu0
        %v2432 = vpop.f32.mrf.mxu0
        %2433 = vdwg.mxu0
        %2434 = vmatprep.subr.bf16.mxu0 %v1782
        %2435 = vmatpush1.bf16.msra.mxu0 %v1781
        %2436 = vmatprep.subr.bf16.mxu0 %v1780
        %2437 = vmatpush1.bf16.msra.mxu0 %v1779
        %2438 = vmatprep.subr.bf16.mxu0 %v1778
        %2439 = vmatpush1.bf16.msra.mxu0 %v1777
        %2440 = vmatprep.subr.bf16.mxu0 %v1776
        %2441 = vmatpush1.bf16.msra.mxu0 %v1775
        %2442 = vmatprep.subr.bf16.mxu0 %v1774
        %2443 = vmatpush1.bf16.msra.mxu0 %v1773
        %2444 = vmatprep.subr.bf16.mxu0 %v1772
        %2445 = vmatpush1.bf16.msra.mxu0 %v1771
        %2446 = vmatprep.subr.bf16.mxu0 %v1770
        %2447 = vmatpush1.bf16.msra.mxu0 %v1769
        %2448 = vmatprep.subr.bf16.mxu0 %v1768
        %2449 = vmatpush1.bf16.msra.mxu0 %v1767
        %2450 = vmatprep.subr.bf16.mxu0 %v1798
        %2451 = vmatpush2.bf16.msra.mxu0 %v1797
        %2452 = vmatprep.subr.bf16.mxu0 %v1796
        %2453 = vmatpush2.bf16.msra.mxu0 %v1795
        %2454 = vmatprep.subr.bf16.mxu0 %v1794
        %2455 = vmatpush2.bf16.msra.mxu0 %v1793
        %2456 = vmatprep.subr.bf16.mxu0 %v1792
        %2457 = vmatpush2.bf16.msra.mxu0 %v1791
        %2458 = vmatprep.subr.bf16.mxu0 %v1790
        %2459 = vmatpush2.bf16.msra.mxu0 %v1789
        %2460 = vmatprep.subr.bf16.mxu0 %v1788
        %2461 = vmatpush2.bf16.msra.mxu0 %v1787
        %2462 = vmatprep.subr.bf16.mxu0 %v1786
        %2463 = vmatpush2.bf16.msra.mxu0 %v1785
        %2464 = vmatprep.subr.bf16.mxu0 %v1784
        %2465 = vmatpush2.bf16.msra.mxu0 %v1783
        %2466 = vmatprep.mubr.bf16.mxu0 %v678
        %2467 = vmatmul.mubr.bf16.gmra.mxu0 %v677
        %v2468 = vpop.f32.mrf.mxu0
        %v2469 = vadd.f32 %v2428, %v2468
        %v2470 = vpop.f32.mrf.mxu0
        %v2471 = vadd.f32 %v2430, %v2470
        %v2472 = vpop.f32.mrf.mxu0
        %v2473 = vpop.f32.mrf.mxu0
        %2474 = vdwg.mxu0
        %2475 = vmatprep.subr.bf16.mxu0 %v1814
        %2476 = vmatpush1.bf16.msra.mxu0 %v1813
        %2477 = vmatprep.subr.bf16.mxu0 %v1812
        %2478 = vmatpush1.bf16.msra.mxu0 %v1811
        %2479 = vmatprep.subr.bf16.mxu0 %v1810
        %2480 = vmatpush1.bf16.msra.mxu0 %v1809
        %2481 = vmatprep.subr.bf16.mxu0 %v1808
        %2482 = vmatpush1.bf16.msra.mxu0 %v1807
        %2483 = vmatprep.subr.bf16.mxu0 %v1806
        %2484 = vmatpush1.bf16.msra.mxu0 %v1805
        %2485 = vmatprep.subr.bf16.mxu0 %v1804
        %2486 = vmatpush1.bf16.msra.mxu0 %v1803
        %2487 = vmatprep.subr.bf16.mxu0 %v1802
        %2488 = vmatpush1.bf16.msra.mxu0 %v1801
        %2489 = vmatprep.subr.bf16.mxu0 %v1800
        %2490 = vmatpush1.bf16.msra.mxu0 %v1799
        %2491 = vmatprep.subr.bf16.mxu0 %v1830
        %2492 = vmatpush2.bf16.msra.mxu0 %v1829
        %2493 = vmatprep.subr.bf16.mxu0 %v1828
        %2494 = vmatpush2.bf16.msra.mxu0 %v1827
        %2495 = vmatprep.subr.bf16.mxu0 %v1826
        %2496 = vmatpush2.bf16.msra.mxu0 %v1825
        %2497 = vmatprep.subr.bf16.mxu0 %v1824
        %2498 = vmatpush2.bf16.msra.mxu0 %v1823
        %2499 = vmatprep.subr.bf16.mxu0 %v1822
        %2500 = vmatpush2.bf16.msra.mxu0 %v1821
        %2501 = vmatprep.subr.bf16.mxu0 %v1820
        %2502 = vmatpush2.bf16.msra.mxu0 %v1819
        %2503 = vmatprep.subr.bf16.mxu0 %v1818
        %2504 = vmatpush2.bf16.msra.mxu0 %v1817
        %2505 = vmatprep.subr.bf16.mxu0 %v1816
        %2506 = vmatpush2.bf16.msra.mxu0 %v1815
        %2507 = vmatprep.mubr.bf16.mxu0 %v680
        %2508 = vmatmul.mubr.bf16.gmra.mxu0 %v679
        %v2509 = vpop.f32.mrf.mxu0
        %v2510 = vadd.f32 %v2469, %v2509
        %v2511 = vpop.f32.mrf.mxu0
        %v2512 = vadd.f32 %v2471, %v2511
        %v2513 = vpop.f32.mrf.mxu0
        %v2514 = vpop.f32.mrf.mxu0
        %2515 = vdwg.mxu0
        %2516 = vmatprep.subr.bf16.mxu0 %v1846
        %2517 = vmatpush1.bf16.msra.mxu0 %v1845
        %2518 = vmatprep.subr.bf16.mxu0 %v1844
        %2519 = vmatpush1.bf16.msra.mxu0 %v1843
        %2520 = vmatprep.subr.bf16.mxu0 %v1842
        %2521 = vmatpush1.bf16.msra.mxu0 %v1841
        %2522 = vmatprep.subr.bf16.mxu0 %v1840
        %2523 = vmatpush1.bf16.msra.mxu0 %v1839
        %2524 = vmatprep.subr.bf16.mxu0 %v1838
        %2525 = vmatpush1.bf16.msra.mxu0 %v1837
        %2526 = vmatprep.subr.bf16.mxu0 %v1836
        %2527 = vmatpush1.bf16.msra.mxu0 %v1835
        %2528 = vmatprep.subr.bf16.mxu0 %v1834
        %2529 = vmatpush1.bf16.msra.mxu0 %v1833
        %2530 = vmatprep.subr.bf16.mxu0 %v1832
        %2531 = vmatpush1.bf16.msra.mxu0 %v1831
        %2532 = vmatprep.subr.bf16.mxu0 %v1862
        %2533 = vmatpush2.bf16.msra.mxu0 %v1861
        %2534 = vmatprep.subr.bf16.mxu0 %v1860
        %2535 = vmatpush2.bf16.msra.mxu0 %v1859
        %2536 = vmatprep.subr.bf16.mxu0 %v1858
        %2537 = vmatpush2.bf16.msra.mxu0 %v1857
        %2538 = vmatprep.subr.bf16.mxu0 %v1856
        %2539 = vmatpush2.bf16.msra.mxu0 %v1855
        %2540 = vmatprep.subr.bf16.mxu0 %v1854
        %2541 = vmatpush2.bf16.msra.mxu0 %v1853
        %2542 = vmatprep.subr.bf16.mxu0 %v1852
        %2543 = vmatpush2.bf16.msra.mxu0 %v1851
        %2544 = vmatprep.subr.bf16.mxu0 %v1850
        %2545 = vmatpush2.bf16.msra.mxu0 %v1849
        %2546 = vmatprep.subr.bf16.mxu0 %v1848
        %2547 = vmatpush2.bf16.msra.mxu0 %v1847
        %2548 = vmatprep.mubr.bf16.mxu0 %v682
        %2549 = vmatmul.mubr.bf16.gmra.mxu0 %v681
        %v2550 = vpop.f32.mrf.mxu0
        %v2551 = vadd.f32 %v2510, %v2550
        %v2552 = vpop.f32.mrf.mxu0
        %v2553 = vadd.f32 %v2512, %v2552
        %v2554 = vpop.f32.mrf.mxu0
        %v2555 = vpop.f32.mrf.mxu0
        %2556 = vdwg.mxu0
        %2557 = vmatprep.subr.bf16.mxu0 %v1878
        %2558 = vmatpush1.bf16.msra.mxu0 %v1877
        %2559 = vmatprep.subr.bf16.mxu0 %v1876
        %2560 = vmatpush1.bf16.msra.mxu0 %v1875
        %2561 = vmatprep.subr.bf16.mxu0 %v1874
        %2562 = vmatpush1.bf16.msra.mxu0 %v1873
        %2563 = vmatprep.subr.bf16.mxu0 %v1872
        %2564 = vmatpush1.bf16.msra.mxu0 %v1871
        %2565 = vmatprep.subr.bf16.mxu0 %v1870
        %2566 = vmatpush1.bf16.msra.mxu0 %v1869
        %2567 = vmatprep.subr.bf16.mxu0 %v1868
        %2568 = vmatpush1.bf16.msra.mxu0 %v1867
        %2569 = vmatprep.subr.bf16.mxu0 %v1866
        %2570 = vmatpush1.bf16.msra.mxu0 %v1865
        %2571 = vmatprep.subr.bf16.mxu0 %v1864
        %2572 = vmatpush1.bf16.msra.mxu0 %v1863
        %2573 = vmatprep.subr.bf16.mxu0 %v1894
        %2574 = vmatpush2.bf16.msra.mxu0 %v1893
        %2575 = vmatprep.subr.bf16.mxu0 %v1892
        %2576 = vmatpush2.bf16.msra.mxu0 %v1891
        %2577 = vmatprep.subr.bf16.mxu0 %v1890
        %2578 = vmatpush2.bf16.msra.mxu0 %v1889
        %2579 = vmatprep.subr.bf16.mxu0 %v1888
        %2580 = vmatpush2.bf16.msra.mxu0 %v1887
        %2581 = vmatprep.subr.bf16.mxu0 %v1886
        %2582 = vmatpush2.bf16.msra.mxu0 %v1885
        %2583 = vmatprep.subr.bf16.mxu0 %v1884
        %2584 = vmatpush2.bf16.msra.mxu0 %v1883
        %2585 = vmatprep.subr.bf16.mxu0 %v1882
        %2586 = vmatpush2.bf16.msra.mxu0 %v1881
        %2587 = vmatprep.subr.bf16.mxu0 %v1880
        %2588 = vmatpush2.bf16.msra.mxu0 %v1879
        %2589 = vmatprep.mubr.bf16.mxu0 %v684
        %2590 = vmatmul.mubr.bf16.gmra.mxu0 %v683
        %v2591 = vpop.f32.mrf.mxu0
        %v2592 = vadd.f32 %v2551, %v2591
        %v2593 = vpop.f32.mrf.mxu0
        %v2594 = vadd.f32 %v2553, %v2593
        %v2595 = vpop.f32.mrf.mxu0
        %v2596 = vpop.f32.mrf.mxu0
        %2597 = vdwg.mxu0
        %2598 = vmatprep.subr.bf16.mxu0 %v1910
        %2599 = vmatpush1.bf16.msra.mxu0 %v1909
        %2600 = vmatprep.subr.bf16.mxu0 %v1908
        %2601 = vmatpush1.bf16.msra.mxu0 %v1907
        %2602 = vmatprep.subr.bf16.mxu0 %v1906
        %2603 = vmatpush1.bf16.msra.mxu0 %v1905
        %2604 = vmatprep.subr.bf16.mxu0 %v1904
        %2605 = vmatpush1.bf16.msra.mxu0 %v1903
        %2606 = vmatprep.subr.bf16.mxu0 %v1902
        %2607 = vmatpush1.bf16.msra.mxu0 %v1901
        %2608 = vmatprep.subr.bf16.mxu0 %v1900
        %2609 = vmatpush1.bf16.msra.mxu0 %v1899
        %2610 = vmatprep.subr.bf16.mxu0 %v1898
        %2611 = vmatpush1.bf16.msra.mxu0 %v1897
        %2612 = vmatprep.subr.bf16.mxu0 %v1896
        %2613 = vmatpush1.bf16.msra.mxu0 %v1895
        %2614 = vmatprep.subr.bf16.mxu0 %v1926
        %2615 = vmatpush2.bf16.msra.mxu0 %v1925
        %2616 = vmatprep.subr.bf16.mxu0 %v1924
        %2617 = vmatpush2.bf16.msra.mxu0 %v1923
        %2618 = vmatprep.subr.bf16.mxu0 %v1922
        %2619 = vmatpush2.bf16.msra.mxu0 %v1921
        %2620 = vmatprep.subr.bf16.mxu0 %v1920
        %2621 = vmatpush2.bf16.msra.mxu0 %v1919
        %2622 = vmatprep.subr.bf16.mxu0 %v1918
        %2623 = vmatpush2.bf16.msra.mxu0 %v1917
        %2624 = vmatprep.subr.bf16.mxu0 %v1916
        %2625 = vmatpush2.bf16.msra.mxu0 %v1915
        %2626 = vmatprep.subr.bf16.mxu0 %v1914
        %2627 = vmatpush2.bf16.msra.mxu0 %v1913
        %2628 = vmatprep.subr.bf16.mxu0 %v1912
        %2629 = vmatpush2.bf16.msra.mxu0 %v1911
        %2630 = vmatprep.mubr.bf16.mxu0 %v686
        %2631 = vmatmul.mubr.bf16.gmra.mxu0 %v685
        %v2632 = vpop.f32.mrf.mxu0
        %v2633 = vadd.f32 %v2592, %v2632
        %v2634 = vpop.f32.mrf.mxu0
        %v2635 = vadd.f32 %v2594, %v2634
        %v2636 = vpop.f32.mrf.mxu0
        %v2637 = vpop.f32.mrf.mxu0
        %2638 = vdwg.mxu0
        %2639 = vmatprep.subr.bf16.mxu0 %v1942
        %2640 = vmatpush1.bf16.msra.mxu0 %v1941
        %2641 = vmatprep.subr.bf16.mxu0 %v1940
        %2642 = vmatpush1.bf16.msra.mxu0 %v1939
        %2643 = vmatprep.subr.bf16.mxu0 %v1938
        %2644 = vmatpush1.bf16.msra.mxu0 %v1937
        %2645 = vmatprep.subr.bf16.mxu0 %v1936
        %2646 = vmatpush1.bf16.msra.mxu0 %v1935
        %2647 = vmatprep.subr.bf16.mxu0 %v1934
        %2648 = vmatpush1.bf16.msra.mxu0 %v1933
        %2649 = vmatprep.subr.bf16.mxu0 %v1932
        %2650 = vmatpush1.bf16.msra.mxu0 %v1931
        %2651 = vmatprep.subr.bf16.mxu0 %v1930
        %2652 = vmatpush1.bf16.msra.mxu0 %v1929
        %2653 = vmatprep.subr.bf16.mxu0 %v1928
        %2654 = vmatpush1.bf16.msra.mxu0 %v1927
        %2655 = vmatprep.subr.bf16.mxu0 %v1958
        %2656 = vmatpush2.bf16.msra.mxu0 %v1957
        %2657 = vmatprep.subr.bf16.mxu0 %v1956
        %2658 = vmatpush2.bf16.msra.mxu0 %v1955
        %2659 = vmatprep.subr.bf16.mxu0 %v1954
        %2660 = vmatpush2.bf16.msra.mxu0 %v1953
        %2661 = vmatprep.subr.bf16.mxu0 %v1952
        %2662 = vmatpush2.bf16.msra.mxu0 %v1951
        %2663 = vmatprep.subr.bf16.mxu0 %v1950
        %2664 = vmatpush2.bf16.msra.mxu0 %v1949
        %2665 = vmatprep.subr.bf16.mxu0 %v1948
        %2666 = vmatpush2.bf16.msra.mxu0 %v1947
        %2667 = vmatprep.subr.bf16.mxu0 %v1946
        %2668 = vmatpush2.bf16.msra.mxu0 %v1945
        %2669 = vmatprep.subr.bf16.mxu0 %v1944
        %2670 = vmatpush2.bf16.msra.mxu0 %v1943
        %2671 = vmatprep.mubr.bf16.mxu0 %v688
        %2672 = vmatmul.mubr.bf16.gmra.mxu0 %v687
        %v2673 = vpop.f32.mrf.mxu0
        %v2674 = vadd.f32 %v2633, %v2673
        %v2675 = vpop.f32.mrf.mxu0
        %v2676 = vadd.f32 %v2635, %v2675
        %v2677 = vpop.f32.mrf.mxu0
        %v2678 = vpop.f32.mrf.mxu0
        %2679 = vdwg.mxu0
        %2680 = vmatprep.subr.bf16.mxu0 %v1974
        %2681 = vmatpush1.bf16.msra.mxu0 %v1973
        %2682 = vmatprep.subr.bf16.mxu0 %v1972
        %2683 = vmatpush1.bf16.msra.mxu0 %v1971
        %2684 = vmatprep.subr.bf16.mxu0 %v1970
        %2685 = vmatpush1.bf16.msra.mxu0 %v1969
        %2686 = vmatprep.subr.bf16.mxu0 %v1968
        %2687 = vmatpush1.bf16.msra.mxu0 %v1967
        %2688 = vmatprep.subr.bf16.mxu0 %v1966
        %2689 = vmatpush1.bf16.msra.mxu0 %v1965
        %2690 = vmatprep.subr.bf16.mxu0 %v1964
        %2691 = vmatpush1.bf16.msra.mxu0 %v1963
        %2692 = vmatprep.subr.bf16.mxu0 %v1962
        %2693 = vmatpush1.bf16.msra.mxu0 %v1961
        %2694 = vmatprep.subr.bf16.mxu0 %v1960
        %2695 = vmatpush1.bf16.msra.mxu0 %v1959
        %2696 = vmatprep.subr.bf16.mxu0 %v1990
        %2697 = vmatpush2.bf16.msra.mxu0 %v1989
        %2698 = vmatprep.subr.bf16.mxu0 %v1988
        %2699 = vmatpush2.bf16.msra.mxu0 %v1987
        %2700 = vmatprep.subr.bf16.mxu0 %v1986
        %2701 = vmatpush2.bf16.msra.mxu0 %v1985
        %2702 = vmatprep.subr.bf16.mxu0 %v1984
        %2703 = vmatpush2.bf16.msra.mxu0 %v1983
        %2704 = vmatprep.subr.bf16.mxu0 %v1982
        %2705 = vmatpush2.bf16.msra.mxu0 %v1981
        %2706 = vmatprep.subr.bf16.mxu0 %v1980
        %2707 = vmatpush2.bf16.msra.mxu0 %v1979
        %2708 = vmatprep.subr.bf16.mxu0 %v1978
        %2709 = vmatpush2.bf16.msra.mxu0 %v1977
        %2710 = vmatprep.subr.bf16.mxu0 %v1976
        %2711 = vmatpush2.bf16.msra.mxu0 %v1975
        %2712 = vmatprep.mubr.bf16.mxu0 %v690
        %2713 = vmatmul.mubr.bf16.gmra.mxu0 %v689
        %v2714 = vpop.f32.mrf.mxu0
        %v2715 = vadd.f32 %v2674, %v2714
        %v2716 = vpop.f32.mrf.mxu0
        %v2717 = vadd.f32 %v2676, %v2716
        %v2718 = vpop.f32.mrf.mxu0
        %v2719 = vpop.f32.mrf.mxu0
        %2720 = vdwg.mxu0
        %v2721 = vadd.f32 %v309, %v2715
        %v2722 = vadd.f32 %v310, %v2717
        %2723 = vst [vmem:[#allocation2] sm:$0xff] %v2721
        %2724 = vst [vmem:[#allocation2 + $0x8] sm:$0xff] %v2722
        %p2725 = scmp.eq.s32.totalorder %s27, 1
        // Predicated region
        $region45: #{discriminator_p_forward.10} parent=31 // pred_check
          %p2726 = pneg %p2725
        $region46: #{discriminator_p_forward.10} parent=31 // pred_check_branch
          %2728 = sbr.rel (%p2726) target = $region48
        $region47: #{discriminator_p_forward.10} parent=31 // pred_region
          %v2729 = vld [vmem:[#allocation2] sm:$0xff]
          %v2730 = vld [vmem:[#allocation2 + $0x8] sm:$0xff]
          %v2731 = vld [vmem:[%s239] sm:$0x3]
          %v2733 = vlaneseq
          %v2734 = vshrl.u32 %v2733, 7
          %v2735 = vsub.s32 0, %v2734
          %v2736 = vrot.slane %v2731, %v2735
          %v2737 = vlaneseq
          %v2738 = vshrl.u32 %v2737, 7
          %v2739 = vsub.s32 1, %v2738
          %v2740 = vrot.slane %v2731, %v2739
          %v2743 = vadd.f32 %v2729, %v2736
          %v2744 = vadd.f32 %v2730, %v2740
          %vm2745 = vcmp.gt.f32.partialorder %v2743, 0.0
          %vm2746 = vcmp.gt.f32.partialorder %v2744, 0.0
          %v2747 = vmul.f32 %v2743, 0.1
          %v2748 = vmul.f32 %v2744, 0.1
          %v2749 = vsel %vm2745, %v2743, %v2747
          %v2750 = vsel %vm2746, %v2744, %v2748
          %2751 = vst [vmem:[%s301] sm:$0xff] %v2749
          %2752 = vst [vmem:[%s301 + $0x8] sm:$0xff] %v2750
        $region48: #{discriminator_p_forward.10} parent=31 // pred_fallthru
          _
        %s2753 = smul.u32 2, %s26
        %p2754 = scmp.lt.s32.totalorder %s25, 0
        %s2755 = scalar_select %p2754, %s25, 0
        %p2756 = scmp.lt.s32.totalorder %s2753, 7
        %s2757 = scalar_select %p2756, %s2753, 7
        %s2758 = smul.addr %s2755, 8
        %s2759 = sadd.s32 %s2757, %s2758
        %s2760 = smul.addr %s2759, 8
        %s2761 = scalar_lea.vmem %s3, %s2760
        // Predicated region
        $region49: #{discriminator_p_forward.10} parent=31 // pred_check
          %p2762 = pneg %p141
        $region50: #{discriminator_p_forward.10} parent=31 // pred_check_branch
          %2764 = sbr.rel (%p2762) target = $region52
        $region51: #{discriminator_p_forward.10} parent=31 // pred_region
          %s2765 = smul.u32 2, %s26
        $region52: #{discriminator_p_forward.10} parent=31 // pred_fallthru
          _
      $region32: #{discriminator_p_forward.10} parent=5 // pred_fallthru
        _
      %p2766 = scmp.le.s32.totalorder 2, %s15
      // Predicated region
      $region53: #{discriminator_p_forward.10} parent=5 // pred_check
        %p2767 = pneg %p2766
      $region54: #{discriminator_p_forward.10} parent=5 // pred_check_branch
        %2769 = sbr.rel (%p2767) target = $region56
      $region55: #{discriminator_p_forward.10} parent=5 // pred_region
        %s2770 = ssub.s32 %s15, 2
        // Predicated region
        $region57: #{discriminator_p_forward.10} parent=55 // pred_check
          %p2771 = pneg %p147
        $region58: #{discriminator_p_forward.10} parent=55 // pred_check_branch
          %2773 = sbr.rel (%p2771) target = $region60
        $region59: #{discriminator_p_forward.10} parent=55 // pred_region
          %s2774 = smul.u32 2, %s29
          %p2775 = scmp.lt.s32.totalorder %s28, 0
          %s2776 = scalar_select %p2775, %s28, 0
          %p2777 = scmp.lt.s32.totalorder %s2774, 7
          %s2778 = scalar_select %p2777, %s2774, 7
          %s2779 = smul.addr %s2776, 8
          %s2780 = sadd.s32 %s2778, %s2779
          %s2781 = smul.addr %s2780, 8
          %s2782 = scalar_lea.vmem %s3, %s2781
        $region60: #{discriminator_p_forward.10} parent=55 // pred_fallthru
          _
      $region56: #{discriminator_p_forward.10} parent=5 // pred_fallthru
        _
    $region6: #{discriminator_p_forward.10} parent=1 // loop_footer
      %s19 = sadd.s32 1, %s15
    $region7: #{discriminator_p_forward.10} parent=1 // loop_footer_branch
      %14 = sbr.rel target = $region3
    $region8: #{discriminator_p_forward.10} parent=1 // loop_exit
      _
    %2783 = vsyncpa [#allocation4], 1
    %s2784 = scalar_lea.sflag [#allocation4], 1
    %2785 = vsyncpa %s2784, 1
    %2786 = vsyncpa [#allocation6], 1
    %s2787 = scalar_lea.sflag [#allocation6], 1
    %2788 = vsyncpa %s2787, 1

// kernel: discriminator_p_forward.11
$region0: #{discriminator_p_forward.11}
  #allocation0 [shape = 'u32[]', space=smem, size = 0x4, offset = 0x4, fixed_abs, tag = 'smem constant byte address 0x4 - core index']
  #allocation1 [shape = 'u32[144,128]{1,0:T(1,128)}', space=vmem, size = 0x12000, scoped, tag = 'internal scratch']
  #allocation2 [shape = 'f32[8,128]{1,0:T(8,128)}', space=vmem, size = 0x1000, scoped, tag = 'scratch operand']
  %s0 = inlined_call_operand.vmem [shape: bf16[8,3072], index: 0, kind: input, shape index: {}]
  %s1 = inlined_call_operand.vmem [shape: bf16[3072,128], index: 1, kind: input, shape index: {}]
  %s2 = inlined_call_operand.vmem [shape: f32[1,128], index: 2, kind: input, shape index: {}]
  %s3 = inlined_call_operand.vmem [shape: f32[8,128], index: 3, kind: output, shape index: {}]
  %s4 = sld [smem:[#allocation0]]
  $region53: #{discriminator_p_forward.11} parent=0
    _
  %s6 = ssub.s32 1, %s4
  %s7 = scalar_select 0, %s6, %s4
  loop: start=0, step=1, limit=4
  $region2: #{discriminator_p_forward.11} parent=0 // loop_pre_header
    _
  $region3: #{discriminator_p_forward.11} parent=0 // loop_header
    %s9 = sphi 0, %s13
    %p10 = scmp.ge.s32.totalorder %s9, 4
    %s16 = sphi 0, %s35
    %s17 = sphi 0, %s31
    %s18 = sphi 0, %s27
    %s19 = sphi 0, %s16
    %s20 = sphi 0, %s17
    %s21 = sphi 0, %s18
    %s22 = sphi 0, %s19
    %s23 = sphi 0, %s20
    %s24 = sphi 0, %s21
    %s40 = sphi 0, %s42
    %s43 = sphi 0, %s40
    %s44 = sphi 0, %s43
    %s60 = sphi 0, %s44
    %s68 = sphi 0, %s70
    %s71 = sphi 0, %s68
    %s72 = sphi 0, %s71
    %s88 = sphi 0, %s72
    %s94 = sphi 0, %s96
    %s97 = sphi 0, %s94
    %s98 = sphi 0, %s97
    %s114 = sphi 0, %s98
    %s122 = sphi 0, %s124
    %s125 = sphi 0, %s122
    %s126 = sphi 0, %s125
    %s142 = sphi 0, %s126
  $region4: #{discriminator_p_forward.11} parent=0 // loop_header_branch
    %12 = sbr.rel (%p10) target = $region8
  $region5: #{discriminator_p_forward.11} parent=0 // loop_body
    %s14 = ssub.s32 %s9, 1
    %s15 = ssub.s32 %s9, 2
    %s25 = sadd.s32 1, %s18
    %p26 = scmp.ge.s32.totalorder %s25, 2
    %s27 = scalar_select %p26, 0, %s25
    %s28 = sadd.s32 1, %s17
    %s29 = scalar_select %p26, %s28, %s17
    %p30 = scmp.ge.s32.totalorder %s29, 1
    %s31 = scalar_select %p30, 0, %s29
    %s32 = sadd.s32 1, %s16
    %s33 = scalar_select %p30, %s32, %s16
    %p34 = scmp.ge.s32.totalorder %s33, 1
    %s35 = scalar_select %p34, 0, %s33
    %s36 = ssub.s32 %s16, %s35
    %s37 = ssub.s32 %s18, %s27
    %s38 = sor.u32 %s36, %s37
    %p39 = scmp.eq.s32.totalorder %s38, 0
    %s41 = sadd.s32 %s40, 1
    %s42 = scalar_select %p39, %s40, %s41
    %p45 = pneg %p39
    %p46 = scmp.eq.s32.totalorder %s9, 1
    %p47 = por %p45, %p46
    %p48 = scmp.ne.s32.totalorder %s40, %s43
    %p49 = scmp.eq.s32.totalorder %s9, 0
    %p50 = por %p48, %p49
    %p51 = scmp.ne.s32.totalorder %s40, %s43
    %p52 = scmp.eq.s32.totalorder %s14, 1
    %p53 = por %p51, %p52
    %p54 = scmp.ne.s32.totalorder %s43, %s44
    %p55 = scmp.eq.s32.totalorder %s14, 0
    %p56 = por %p54, %p55
    %p57 = scmp.ne.s32.totalorder %s43, %s44
    %p58 = scmp.eq.s32.totalorder %s15, 1
    %p59 = por %p57, %p58
    %p61 = scmp.ne.s32.totalorder %s44, %s60
    %p62 = scmp.eq.s32.totalorder %s15, 0
    %p63 = por %p61, %p62
    %s64 = ssub.s32 %s18, %s27
    %s65 = ssub.s32 %s17, %s31
    %s66 = sor.u32 %s64, %s65
    %p67 = scmp.eq.s32.totalorder %s66, 0
    %s69 = sadd.s32 %s68, 1
    %s70 = scalar_select %p67, %s68, %s69
    %p73 = pneg %p67
    %p74 = scmp.eq.s32.totalorder %s9, 1
    %p75 = por %p73, %p74
    %p76 = scmp.ne.s32.totalorder %s68, %s71
    %p77 = scmp.eq.s32.totalorder %s9, 0
    %p78 = por %p76, %p77
    %p79 = scmp.ne.s32.totalorder %s68, %s71
    %p80 = scmp.eq.s32.totalorder %s14, 1
    %p81 = por %p79, %p80
    %p82 = scmp.ne.s32.totalorder %s71, %s72
    %p83 = scmp.eq.s32.totalorder %s14, 0
    %p84 = por %p82, %p83
    %p85 = scmp.ne.s32.totalorder %s71, %s72
    %p86 = scmp.eq.s32.totalorder %s15, 1
    %p87 = por %p85, %p86
    %p89 = scmp.ne.s32.totalorder %s72, %s88
    %p90 = scmp.eq.s32.totalorder %s15, 0
    %p91 = por %p89, %p90
    %s92 = ssub.s32 %s17, %s31
    %p93 = scmp.eq.s32.totalorder %s92, 0
    %s95 = sadd.s32 %s94, 1
    %s96 = scalar_select %p93, %s94, %s95
    %p99 = pneg %p93
    %p100 = scmp.eq.s32.totalorder %s9, 1
    %p101 = por %p99, %p100
    %p102 = scmp.ne.s32.totalorder %s94, %s97
    %p103 = scmp.eq.s32.totalorder %s9, 0
    %p104 = por %p102, %p103
    %p105 = scmp.ne.s32.totalorder %s94, %s97
    %p106 = scmp.eq.s32.totalorder %s14, 1
    %p107 = por %p105, %p106
    %p108 = scmp.ne.s32.totalorder %s97, %s98
    %p109 = scmp.eq.s32.totalorder %s14, 0
    %p110 = por %p108, %p109
    %p111 = scmp.ne.s32.totalorder %s97, %s98
    %p112 = scmp.eq.s32.totalorder %s15, 1
    %p113 = por %p111, %p112
    %p115 = scmp.ne.s32.totalorder %s98, %s114
    %p116 = scmp.eq.s32.totalorder %s15, 0
    %p117 = por %p115, %p116
    %s118 = ssub.s32 %s16, %s35
    %s119 = ssub.s32 %s17, %s31
    %s120 = sor.u32 %s118, %s119
    %p121 = scmp.eq.s32.totalorder %s120, 0
    %s123 = sadd.s32 %s122, 1
    %s124 = scalar_select %p121, %s122, %s123
    %p127 = pneg %p121
    %p128 = scmp.eq.s32.totalorder %s9, 1
    %p129 = por %p127, %p128
    %p130 = scmp.ne.s32.totalorder %s122, %s125
    %p131 = scmp.eq.s32.totalorder %s9, 0
    %p132 = por %p130, %p131
    %p133 = scmp.ne.s32.totalorder %s122, %s125
    %p134 = scmp.eq.s32.totalorder %s14, 1
    %p135 = por %p133, %p134
    %p136 = scmp.ne.s32.totalorder %s125, %s126
    %p137 = scmp.eq.s32.totalorder %s14, 0
    %p138 = por %p136, %p137
    %p139 = scmp.ne.s32.totalorder %s125, %s126
    %p140 = scmp.eq.s32.totalorder %s15, 1
    %p141 = por %p139, %p140
    %p143 = scmp.ne.s32.totalorder %s126, %s142
    %p144 = scmp.eq.s32.totalorder %s15, 0
    %p145 = por %p143, %p144
    %p146 = scmp.le.s32.totalorder 1, %s9
    %p147 = scmp.lt.s32.totalorder %s9, 3
    %p148 = pnand %p146, %p147
    %p149 = pneg %p148
    // Predicated region
    $region9: #{discriminator_p_forward.11} parent=5 // pred_check
      _
    $region10: #{discriminator_p_forward.11} parent=5 // pred_check_branch
      %151 = sbr.rel (%p148) target = $region12
    $region11: #{discriminator_p_forward.11} parent=5 // pred_region
      %s152 = ssub.s32 %s9, 1
      // Predicated region
      $region13: #{discriminator_p_forward.11} parent=11 // pred_check
        %p153 = pneg %p110
      $region14: #{discriminator_p_forward.11} parent=11 // pred_check_branch
        %155 = sbr.rel (%p153) target = $region16
      $region15: #{discriminator_p_forward.11} parent=11 // pred_region
        %p156 = scmp.lt.s32.totalorder %s20, 0
        %s157 = scalar_select %p156, %s20, 0
        %s158 = scalar_lea.vmem %s2, %s157
      $region16: #{discriminator_p_forward.11} parent=11 // pred_fallthru
        _
    $region12: #{discriminator_p_forward.11} parent=5 // pred_fallthru
      _
    %p159 = scmp.lt.s32.totalorder %s9, 2
    // Predicated region
    $region17: #{discriminator_p_forward.11} parent=5 // pred_check
      %p160 = pneg %p159
    $region18: #{discriminator_p_forward.11} parent=5 // pred_check_branch
      %162 = sbr.rel (%p160) target = $region20
    $region19: #{discriminator_p_forward.11} parent=5 // pred_region
      // Predicated region
      $region21: #{discriminator_p_forward.11} parent=19 // pred_check
        %p163 = pneg %p50
      $region22: #{discriminator_p_forward.11} parent=19 // pred_check_branch
        %165 = sbr.rel (%p163) target = $region24
      $region23: #{discriminator_p_forward.11} parent=19 // pred_region
        %s166 = smul.u32 12, %s18
        %p167 = scmp.lt.s32.totalorder %s16, 0
        %s168 = scalar_select %p167, %s16, 0
        %p169 = scmp.lt.s32.totalorder %s166, 23
        %s170 = scalar_select %p169, %s166, 23
        %s171 = smul.addr %s168, 24
        %s172 = sadd.s32 %s170, %s171
        %s173 = smul.addr %s172, 4
        %s174 = scalar_lea.vmem %s0, %s173
        %s175 = smul.u32 12, %s18
      $region24: #{discriminator_p_forward.11} parent=19 // pred_fallthru
        _
      // Predicated region
      $region25: #{discriminator_p_forward.11} parent=19 // pred_check
        %p176 = pneg %p78
      $region26: #{discriminator_p_forward.11} parent=19 // pred_check_branch
        %178 = sbr.rel (%p176) target = $region28
      $region27: #{discriminator_p_forward.11} parent=19 // pred_region
        %s179 = smul.u32 192, %s18
        %p180 = scmp.lt.s32.totalorder %s179, 383
        %s181 = scalar_select %p180, %s179, 383
        %p182 = scmp.lt.s32.totalorder %s17, 0
        %s183 = scalar_select %p182, %s17, 0
        %s184 = sadd.s32 %s183, %s181
        %s185 = smul.addr %s184, 4
        %s186 = scalar_lea.vmem %s1, %s185
        %s187 = smul.u32 192, %s18
      $region28: #{discriminator_p_forward.11} parent=19 // pred_fallthru
        _
    $region20: #{discriminator_p_forward.11} parent=5 // pred_fallthru
      _
    %p188 = scmp.le.s32.totalorder 1, %s9
    %p189 = scmp.lt.s32.totalorder %s9, 3
    %p190 = pnand %p188, %p189
    %p191 = pneg %p190
    // Predicated region
    $region29: #{discriminator_p_forward.11} parent=5 // pred_check
      _
    $region30: #{discriminator_p_forward.11} parent=5 // pred_check_branch
      %193 = sbr.rel (%p190) target = $region32
    $region31: #{discriminator_p_forward.11} parent=5 // pred_region
      %s194 = ssub.s32 %s9, 1
      %s195 = smul.u32 12, %s21
      %p196 = scmp.lt.s32.totalorder %s19, 0
      %s197 = scalar_select %p196, %s19, 0
      %p198 = scmp.lt.s32.totalorder %s195, 23
      %s199 = scalar_select %p198, %s195, 23
      %s200 = smul.addr %s197, 24
      %s201 = sadd.s32 %s199, %s200
      %s202 = smul.addr %s201, 4
      %s203 = scalar_lea.vmem %s0, %s202
      %p204 = pneg %p56
      %p205 = pneg %p53
      %s206 = smul.u32 192, %s21
      %p207 = scmp.lt.s32.totalorder %s206, 383
      %s208 = scalar_select %p207, %s206, 383
      %p209 = scmp.lt.s32.totalorder %s20, 0
      %s210 = scalar_select %p209, %s20, 0
      %s211 = sadd.s32 %s210, %s208
      %s212 = smul.addr %s211, 4
      %s213 = scalar_lea.vmem %s1, %s212
      %p214 = pneg %p84
      %p215 = pneg %p81
      %p216 = scmp.lt.s32.totalorder %s20, 0
      %s217 = scalar_select %p216, %s20, 0
      %s218 = scalar_lea.vmem %s2, %s217
      %p219 = pneg %p110
      %p220 = pneg %p107
      %p221 = pneg %p138
      %p222 = pneg %p135
      %p223 = scmp.lt.s32.totalorder %s19, 0
      %s224 = scalar_select %p223, %s19, 0
      %p225 = scmp.lt.s32.totalorder %s20, 0
      %s226 = scalar_select %p225, %s20, 0
      %s227 = sadd.s32 %s226, %s224
      %s228 = smul.addr %s227, 8
      %s229 = scalar_lea.vmem %s3, %s228
      %s230 = smul.u32 12, %s21
      %p231 = scmp.lt.s32.totalorder %s19, 0
      %s232 = scalar_select %p231, %s19, 0
      %p233 = scmp.lt.s32.totalorder %s230, 23
      %s234 = scalar_select %p233, %s230, 23
      %s235 = smul.addr %s232, 24
      %s236 = sadd.s32 %s234, %s235
      %s237 = smul.addr %s236, 4
      %s238 = scalar_lea.vmem %s0, %s237
      %s239 = smul.u32 12, %s21
      %s240 = smul.u32 192, %s21
      %p241 = scmp.lt.s32.totalorder %s240, 383
      %s242 = scalar_select %p241, %s240, 383
      %p243 = scmp.lt.s32.totalorder %s20, 0
      %s244 = scalar_select %p243, %s20, 0
      %s245 = sadd.s32 %s244, %s242
      %s246 = smul.addr %s245, 4
      %s247 = scalar_lea.vmem %s1, %s246
      %s248 = smul.u32 192, %s21
      %p249 = scmp.lt.s32.totalorder %s20, 0
      %s250 = scalar_select %p249, %s20, 0
      %s251 = scalar_lea.vmem %s2, %s250
      %p252 = scmp.lt.s32.totalorder %s19, 0
      %s253 = scalar_select %p252, %s19, 0
      %p254 = scmp.lt.s32.totalorder %s20, 0
      %s255 = scalar_select %p254, %s20, 0
      %s256 = sadd.s32 %s255, %s253
      %s257 = smul.addr %s256, 8
      %s258 = scalar_lea.vmem %s3, %s257
      %p260 = scmp.eq.s32.totalorder %s21, 0
      // Predicated region
      $region33: #{discriminator_p_forward.11} parent=31 // pred_check
        %p261 = pneg %p260
      $region34: #{discriminator_p_forward.11} parent=31 // pred_check_branch
        %263 = sbr.rel (%p261) target = $region36
      $region35: #{discriminator_p_forward.11} parent=31 // pred_region
        %264 = vst [vmem:[#allocation2] sm:$0xff] 0.0
      $region36: #{discriminator_p_forward.11} parent=31 // pred_fallthru
        _
      %v265 = vld [vmem:[#allocation2] sm:$0xff]
      %v266 = vld [vmem:[%s238] sm:$0xff]
      %v267 = vld [vmem:[%s238 + $0x8] sm:$0xff]
      %v268 = vld [vmem:[%s238 + $0x10] sm:$0xff]
      %v269 = vld [vmem:[%s238 + $0x18] sm:$0xff]
      %v270 = vld [vmem:[%s238 + $0x20] sm:$0xff]
      %v271 = vld [vmem:[%s238 + $0x28] sm:$0xff]
      %v272 = vld [vmem:[%s247] sm:$0xf]
      %v273 = vld [vmem:[%s247 + $0x4] sm:$0xf]
      %v274 = vld [vmem:[%s247 + $0x8] sm:$0xf]
      %v275 = vld [vmem:[%s247 + $0xc] sm:$0xf]
      %v276 = vld [vmem:[%s247 + $0x10] sm:$0xf]
      %v277 = vld [vmem:[%s247 + $0x14] sm:$0xf]
      %v278 = vld [vmem:[%s247 + $0x18] sm:$0xf]
      %v279 = vld [vmem:[%s247 + $0x1c] sm:$0xf]
      %v280 = vld [vmem:[%s247 + $0x20] sm:$0xf]
      %v281 = vld [vmem:[%s247 + $0x24] sm:$0xf]
      %v282 = vld [vmem:[%s247 + $0x28] sm:$0xf]
      %v283 = vld [vmem:[%s247 + $0x2c] sm:$0xf]
      %v284 = vld [vmem:[%s247 + $0x30] sm:$0xf]
      %v285 = vld [vmem:[%s247 + $0x34] sm:$0xf]
      %v286 = vld [vmem:[%s247 + $0x38] sm:$0xf]
      %v287 = vld [vmem:[%s247 + $0x3c] sm:$0xf]
      %v288 = vld [vmem:[%s247 + $0x40] sm:$0xf]
      %v289 = vld [vmem:[%s247 + $0x44] sm:$0xf]
      %v290 = vld [vmem:[%s247 + $0x48] sm:$0xf]
      %v291 = vld [vmem:[%s247 + $0x4c] sm:$0xf]
      %v292 = vld [vmem:[%s247 + $0x50] sm:$0xf]
      %v293 = vld [vmem:[%s247 + $0x54] sm:$0xf]
      %v294 = vld [vmem:[%s247 + $0x58] sm:$0xf]
      %v295 = vld [vmem:[%s247 + $0x5c] sm:$0xf]
      %v296 = vld [vmem:[%s247 + $0x60] sm:$0xf]
      %v297 = vld [vmem:[%s247 + $0x64] sm:$0xf]
      %v298 = vld [vmem:[%s247 + $0x68] sm:$0xf]
      %v299 = vld [vmem:[%s247 + $0x6c] sm:$0xf]
      %v300 = vld [vmem:[%s247 + $0x70] sm:$0xf]
      %v301 = vld [vmem:[%s247 + $0x74] sm:$0xf]
      %v302 = vld [vmem:[%s247 + $0x78] sm:$0xf]
      %v303 = vld [vmem:[%s247 + $0x7c] sm:$0xf]
      %v304 = vld [vmem:[%s247 + $0x80] sm:$0xf]
      %v305 = vld [vmem:[%s247 + $0x84] sm:$0xf]
      %v306 = vld [vmem:[%s247 + $0x88] sm:$0xf]
      %v307 = vld [vmem:[%s247 + $0x8c] sm:$0xf]
      %v308 = vld [vmem:[%s247 + $0x90] sm:$0xf]
      %v309 = vld [vmem:[%s247 + $0x94] sm:$0xf]
      %v310 = vld [vmem:[%s247 + $0x98] sm:$0xf]
      %v311 = vld [vmem:[%s247 + $0x9c] sm:$0xf]
      %v312 = vld [vmem:[%s247 + $0xa0] sm:$0xf]
      %v313 = vld [vmem:[%s247 + $0xa4] sm:$0xf]
      %v314 = vld [vmem:[%s247 + $0xa8] sm:$0xf]
      %v315 = vld [vmem:[%s247 + $0xac] sm:$0xf]
      %v316 = vld [vmem:[%s247 + $0xb0] sm:$0xf]
      %v317 = vld [vmem:[%s247 + $0xb4] sm:$0xf]
      %v318 = vld [vmem:[%s247 + $0xb8] sm:$0xf]
      %v319 = vld [vmem:[%s247 + $0xbc] sm:$0xf]
      %v320 = vld [vmem:[%s247 + $0xc0] sm:$0xf]
      %v321 = vld [vmem:[%s247 + $0xc4] sm:$0xf]
      %v322 = vld [vmem:[%s247 + $0xc8] sm:$0xf]
      %v323 = vld [vmem:[%s247 + $0xcc] sm:$0xf]
      %v324 = vld [vmem:[%s247 + $0xd0] sm:$0xf]
      %v325 = vld [vmem:[%s247 + $0xd4] sm:$0xf]
      %v326 = vld [vmem:[%s247 + $0xd8] sm:$0xf]
      %v327 = vld [vmem:[%s247 + $0xdc] sm:$0xf]
      %v328 = vld [vmem:[%s247 + $0xe0] sm:$0xf]
      %v329 = vld [vmem:[%s247 + $0xe4] sm:$0xf]
      %v330 = vld [vmem:[%s247 + $0xe8] sm:$0xf]
      %v331 = vld [vmem:[%s247 + $0xec] sm:$0xf]
      %v332 = vld [vmem:[%s247 + $0xf0] sm:$0xf]
      %v333 = vld [vmem:[%s247 + $0xf4] sm:$0xf]
      %v334 = vld [vmem:[%s247 + $0xf8] sm:$0xf]
      %v335 = vld [vmem:[%s247 + $0xfc] sm:$0xf]
      %v336 = vld [vmem:[%s247 + $0x100] sm:$0xf]
      %v337 = vld [vmem:[%s247 + $0x104] sm:$0xf]
      %v338 = vld [vmem:[%s247 + $0x108] sm:$0xf]
      %v339 = vld [vmem:[%s247 + $0x10c] sm:$0xf]
      %v340 = vld [vmem:[%s247 + $0x110] sm:$0xf]
      %v341 = vld [vmem:[%s247 + $0x114] sm:$0xf]
      %v342 = vld [vmem:[%s247 + $0x118] sm:$0xf]
      %v343 = vld [vmem:[%s247 + $0x11c] sm:$0xf]
      %v344 = vld [vmem:[%s247 + $0x120] sm:$0xf]
      %v345 = vld [vmem:[%s247 + $0x124] sm:$0xf]
      %v346 = vld [vmem:[%s247 + $0x128] sm:$0xf]
      %v347 = vld [vmem:[%s247 + $0x12c] sm:$0xf]
      %v348 = vld [vmem:[%s247 + $0x130] sm:$0xf]
      %v349 = vld [vmem:[%s247 + $0x134] sm:$0xf]
      %v350 = vld [vmem:[%s247 + $0x138] sm:$0xf]
      %v351 = vld [vmem:[%s247 + $0x13c] sm:$0xf]
      %v352 = vld [vmem:[%s247 + $0x140] sm:$0xf]
      %v353 = vld [vmem:[%s247 + $0x144] sm:$0xf]
      %v354 = vld [vmem:[%s247 + $0x148] sm:$0xf]
      %v355 = vld [vmem:[%s247 + $0x14c] sm:$0xf]
      %v356 = vld [vmem:[%s247 + $0x150] sm:$0xf]
      %v357 = vld [vmem:[%s247 + $0x154] sm:$0xf]
      %v358 = vld [vmem:[%s247 + $0x158] sm:$0xf]
      %v359 = vld [vmem:[%s247 + $0x15c] sm:$0xf]
      %v360 = vld [vmem:[%s247 + $0x160] sm:$0xf]
      %v361 = vld [vmem:[%s247 + $0x164] sm:$0xf]
      %v362 = vld [vmem:[%s247 + $0x168] sm:$0xf]
      %v363 = vld [vmem:[%s247 + $0x16c] sm:$0xf]
      %v364 = vld [vmem:[%s247 + $0x170] sm:$0xf]
      %v365 = vld [vmem:[%s247 + $0x174] sm:$0xf]
      %v366 = vld [vmem:[%s247 + $0x178] sm:$0xf]
      %v367 = vld [vmem:[%s247 + $0x17c] sm:$0xf]
      %v368 = vld [vmem:[%s247 + $0x180] sm:$0xf]
      %v369 = vld [vmem:[%s247 + $0x184] sm:$0xf]
      %v370 = vld [vmem:[%s247 + $0x188] sm:$0xf]
      %v371 = vld [vmem:[%s247 + $0x18c] sm:$0xf]
      %v372 = vld [vmem:[%s247 + $0x190] sm:$0xf]
      %v373 = vld [vmem:[%s247 + $0x194] sm:$0xf]
      %v374 = vld [vmem:[%s247 + $0x198] sm:$0xf]
      %v375 = vld [vmem:[%s247 + $0x19c] sm:$0xf]
      %v376 = vld [vmem:[%s247 + $0x1a0] sm:$0xf]
      %v377 = vld [vmem:[%s247 + $0x1a4] sm:$0xf]
      %v378 = vld [vmem:[%s247 + $0x1a8] sm:$0xf]
      %v379 = vld [vmem:[%s247 + $0x1ac] sm:$0xf]
      %v380 = vld [vmem:[%s247 + $0x1b0] sm:$0xf]
      %v381 = vld [vmem:[%s247 + $0x1b4] sm:$0xf]
      %v382 = vld [vmem:[%s247 + $0x1b8] sm:$0xf]
      %v383 = vld [vmem:[%s247 + $0x1bc] sm:$0xf]
      %v384 = vld [vmem:[%s247 + $0x1c0] sm:$0xf]
      %v385 = vld [vmem:[%s247 + $0x1c4] sm:$0xf]
      %v386 = vld [vmem:[%s247 + $0x1c8] sm:$0xf]
      %v387 = vld [vmem:[%s247 + $0x1cc] sm:$0xf]
      %v388 = vld [vmem:[%s247 + $0x1d0] sm:$0xf]
      %v389 = vld [vmem:[%s247 + $0x1d4] sm:$0xf]
      %v390 = vld [vmem:[%s247 + $0x1d8] sm:$0xf]
      %v391 = vld [vmem:[%s247 + $0x1dc] sm:$0xf]
      %v392 = vld [vmem:[%s247 + $0x1e0] sm:$0xf]
      %v393 = vld [vmem:[%s247 + $0x1e4] sm:$0xf]
      %v394 = vld [vmem:[%s247 + $0x1e8] sm:$0xf]
      %v395 = vld [vmem:[%s247 + $0x1ec] sm:$0xf]
      %v396 = vld [vmem:[%s247 + $0x1f0] sm:$0xf]
      %v397 = vld [vmem:[%s247 + $0x1f4] sm:$0xf]
      %v398 = vld [vmem:[%s247 + $0x1f8] sm:$0xf]
      %v399 = vld [vmem:[%s247 + $0x1fc] sm:$0xf]
      %v400 = vld [vmem:[%s247 + $0x200] sm:$0xf]
      %v401 = vld [vmem:[%s247 + $0x204] sm:$0xf]
      %v402 = vld [vmem:[%s247 + $0x208] sm:$0xf]
      %v403 = vld [vmem:[%s247 + $0x20c] sm:$0xf]
      %v404 = vld [vmem:[%s247 + $0x210] sm:$0xf]
      %v405 = vld [vmem:[%s247 + $0x214] sm:$0xf]
      %v406 = vld [vmem:[%s247 + $0x218] sm:$0xf]
      %v407 = vld [vmem:[%s247 + $0x21c] sm:$0xf]
      %v408 = vld [vmem:[%s247 + $0x220] sm:$0xf]
      %v409 = vld [vmem:[%s247 + $0x224] sm:$0xf]
      %v410 = vld [vmem:[%s247 + $0x228] sm:$0xf]
      %v411 = vld [vmem:[%s247 + $0x22c] sm:$0xf]
      %v412 = vld [vmem:[%s247 + $0x230] sm:$0xf]
      %v413 = vld [vmem:[%s247 + $0x234] sm:$0xf]
      %v414 = vld [vmem:[%s247 + $0x238] sm:$0xf]
      %v415 = vld [vmem:[%s247 + $0x23c] sm:$0xf]
      %v416 = vld [vmem:[%s247 + $0x240] sm:$0xf]
      %v417 = vld [vmem:[%s247 + $0x244] sm:$0xf]
      %v418 = vld [vmem:[%s247 + $0x248] sm:$0xf]
      %v419 = vld [vmem:[%s247 + $0x24c] sm:$0xf]
      %v420 = vld [vmem:[%s247 + $0x250] sm:$0xf]
      %v421 = vld [vmem:[%s247 + $0x254] sm:$0xf]
      %v422 = vld [vmem:[%s247 + $0x258] sm:$0xf]
      %v423 = vld [vmem:[%s247 + $0x25c] sm:$0xf]
      %v424 = vld [vmem:[%s247 + $0x260] sm:$0xf]
      %v425 = vld [vmem:[%s247 + $0x264] sm:$0xf]
      %v426 = vld [vmem:[%s247 + $0x268] sm:$0xf]
      %v427 = vld [vmem:[%s247 + $0x26c] sm:$0xf]
      %v428 = vld [vmem:[%s247 + $0x270] sm:$0xf]
      %v429 = vld [vmem:[%s247 + $0x274] sm:$0xf]
      %v430 = vld [vmem:[%s247 + $0x278] sm:$0xf]
      %v431 = vld [vmem:[%s247 + $0x27c] sm:$0xf]
      %v432 = vld [vmem:[%s247 + $0x280] sm:$0xf]
      %v433 = vld [vmem:[%s247 + $0x284] sm:$0xf]
      %v434 = vld [vmem:[%s247 + $0x288] sm:$0xf]
      %v435 = vld [vmem:[%s247 + $0x28c] sm:$0xf]
      %v436 = vld [vmem:[%s247 + $0x290] sm:$0xf]
      %v437 = vld [vmem:[%s247 + $0x294] sm:$0xf]
      %v438 = vld [vmem:[%s247 + $0x298] sm:$0xf]
      %v439 = vld [vmem:[%s247 + $0x29c] sm:$0xf]
      %v440 = vld [vmem:[%s247 + $0x2a0] sm:$0xf]
      %v441 = vld [vmem:[%s247 + $0x2a4] sm:$0xf]
      %v442 = vld [vmem:[%s247 + $0x2a8] sm:$0xf]
      %v443 = vld [vmem:[%s247 + $0x2ac] sm:$0xf]
      %v444 = vld [vmem:[%s247 + $0x2b0] sm:$0xf]
      %v445 = vld [vmem:[%s247 + $0x2b4] sm:$0xf]
      %v446 = vld [vmem:[%s247 + $0x2b8] sm:$0xf]
      %v447 = vld [vmem:[%s247 + $0x2bc] sm:$0xf]
      %v448 = vld [vmem:[%s247 + $0x2c0] sm:$0xf]
      %v449 = vld [vmem:[%s247 + $0x2c4] sm:$0xf]
      %v450 = vld [vmem:[%s247 + $0x2c8] sm:$0xf]
      %v451 = vld [vmem:[%s247 + $0x2cc] sm:$0xf]
      %v452 = vld [vmem:[%s247 + $0x2d0] sm:$0xf]
      %v453 = vld [vmem:[%s247 + $0x2d4] sm:$0xf]
      %v454 = vld [vmem:[%s247 + $0x2d8] sm:$0xf]
      %v455 = vld [vmem:[%s247 + $0x2dc] sm:$0xf]
      %v456 = vld [vmem:[%s247 + $0x2e0] sm:$0xf]
      %v457 = vld [vmem:[%s247 + $0x2e4] sm:$0xf]
      %v458 = vld [vmem:[%s247 + $0x2e8] sm:$0xf]
      %v459 = vld [vmem:[%s247 + $0x2ec] sm:$0xf]
      %v460 = vld [vmem:[%s247 + $0x2f0] sm:$0xf]
      %v461 = vld [vmem:[%s247 + $0x2f4] sm:$0xf]
      %v462 = vld [vmem:[%s247 + $0x2f8] sm:$0xf]
      %v463 = vld [vmem:[%s247 + $0x2fc] sm:$0xf]
      %v470 = vunpack.c.l.b16 %v266
      %v471 = vunpack.c.h.b16 %v266
      %v472 = vunpack.c.l.b16 %v267
      %v473 = vunpack.c.h.b16 %v267
      %v474 = vunpack.c.l.b16 %v268
      %v475 = vunpack.c.h.b16 %v268
      %v476 = vunpack.c.l.b16 %v269
      %v477 = vunpack.c.h.b16 %v269
      %v478 = vunpack.c.l.b16 %v270
      %v479 = vunpack.c.h.b16 %v270
      %v480 = vunpack.c.l.b16 %v271
      %v481 = vunpack.c.h.b16 %v271
      %v482 = vpack.c.b16 %v470, %v470
      %v483 = vpack.c.b16 %v471, %v471
      %v484 = vpack.c.b16 %v472, %v472
      %v485 = vpack.c.b16 %v473, %v473
      %v486 = vpack.c.b16 %v474, %v474
      %v487 = vpack.c.b16 %v475, %v475
      %v488 = vpack.c.b16 %v476, %v476
      %v489 = vpack.c.b16 %v477, %v477
      %v490 = vpack.c.b16 %v478, %v478
      %v491 = vpack.c.b16 %v479, %v479
      %v492 = vpack.c.b16 %v480, %v480
      %v493 = vpack.c.b16 %v481, %v481
      %v698 = vunpack.c.l.b16 %v272
      %v699 = vunpack.c.l.b16 %v273
      %v700 = vunpack.c.l.b16 %v274
      %v701 = vunpack.c.l.b16 %v275
      %v702 = vunpack.c.l.b16 %v276
      %v703 = vunpack.c.l.b16 %v277
      %v704 = vunpack.c.l.b16 %v278
      %v705 = vunpack.c.l.b16 %v279
      %v706 = vunpack.c.l.b16 %v280
      %v707 = vunpack.c.l.b16 %v281
      %v708 = vunpack.c.l.b16 %v282
      %v709 = vunpack.c.l.b16 %v283
      %v710 = vunpack.c.l.b16 %v284
      %v711 = vunpack.c.l.b16 %v285
      %v712 = vunpack.c.l.b16 %v286
      %v713 = vunpack.c.l.b16 %v287
      %v714 = vunpack.c.l.b16 %v288
      %v715 = vunpack.c.l.b16 %v289
      %v716 = vunpack.c.l.b16 %v290
      %v717 = vunpack.c.l.b16 %v291
      %v718 = vunpack.c.l.b16 %v292
      %v719 = vunpack.c.l.b16 %v293
      %v720 = vunpack.c.l.b16 %v294
      %v721 = vunpack.c.l.b16 %v295
      %v722 = vunpack.c.l.b16 %v296
      %v723 = vunpack.c.l.b16 %v297
      %v724 = vunpack.c.l.b16 %v298
      %v725 = vunpack.c.l.b16 %v299
      %v726 = vunpack.c.l.b16 %v300
      %v727 = vunpack.c.l.b16 %v301
      %v728 = vunpack.c.l.b16 %v302
      %v729 = vunpack.c.l.b16 %v303
      %v730 = vunpack.c.l.b16 %v304
      %v731 = vunpack.c.l.b16 %v305
      %v732 = vunpack.c.l.b16 %v306
      %v733 = vunpack.c.l.b16 %v307
      %v734 = vunpack.c.l.b16 %v308
      %v735 = vunpack.c.l.b16 %v309
      %v736 = vunpack.c.l.b16 %v310
      %v737 = vunpack.c.l.b16 %v311
      %v738 = vunpack.c.l.b16 %v312
      %v739 = vunpack.c.l.b16 %v313
      %v740 = vunpack.c.l.b16 %v314
      %v741 = vunpack.c.l.b16 %v315
      %v742 = vunpack.c.l.b16 %v316
      %v743 = vunpack.c.l.b16 %v317
      %v744 = vunpack.c.l.b16 %v318
      %v745 = vunpack.c.l.b16 %v319
      %v746 = vunpack.c.l.b16 %v320
      %v747 = vunpack.c.l.b16 %v321
      %v748 = vunpack.c.l.b16 %v322
      %v749 = vunpack.c.l.b16 %v323
      %v750 = vunpack.c.l.b16 %v324
      %v751 = vunpack.c.l.b16 %v325
      %v752 = vunpack.c.l.b16 %v326
      %v753 = vunpack.c.l.b16 %v327
      %v754 = vunpack.c.l.b16 %v328
      %v755 = vunpack.c.l.b16 %v329
      %v756 = vunpack.c.l.b16 %v330
      %v757 = vunpack.c.l.b16 %v331
      %v758 = vunpack.c.l.b16 %v332
      %v759 = vunpack.c.l.b16 %v333
      %v760 = vunpack.c.l.b16 %v334
      %v761 = vunpack.c.l.b16 %v335
      %v762 = vunpack.c.l.b16 %v336
      %v763 = vunpack.c.l.b16 %v337
      %v764 = vunpack.c.l.b16 %v338
      %v765 = vunpack.c.l.b16 %v339
      %v766 = vunpack.c.l.b16 %v340
      %v767 = vunpack.c.l.b16 %v341
      %v768 = vunpack.c.l.b16 %v342
      %v769 = vunpack.c.l.b16 %v343
      %v770 = vunpack.c.l.b16 %v344
      %v771 = vunpack.c.l.b16 %v345
      %v772 = vunpack.c.l.b16 %v346
      %v773 = vunpack.c.l.b16 %v347
      %v774 = vunpack.c.l.b16 %v348
      %v775 = vunpack.c.l.b16 %v349
      %v776 = vunpack.c.l.b16 %v350
      %v777 = vunpack.c.l.b16 %v351
      %v778 = vunpack.c.l.b16 %v352
      %v779 = vunpack.c.l.b16 %v353
      %v780 = vunpack.c.l.b16 %v354
      %v781 = vunpack.c.l.b16 %v355
      %v782 = vunpack.c.l.b16 %v356
      %v783 = vunpack.c.l.b16 %v357
      %v784 = vunpack.c.l.b16 %v358
      %v785 = vunpack.c.l.b16 %v359
      %v786 = vunpack.c.l.b16 %v360
      %v787 = vunpack.c.l.b16 %v361
      %v788 = vunpack.c.l.b16 %v362
      %v789 = vunpack.c.l.b16 %v363
      %v790 = vunpack.c.l.b16 %v364
      %v791 = vunpack.c.l.b16 %v365
      %v792 = vunpack.c.l.b16 %v366
      %v793 = vunpack.c.l.b16 %v367
      %v794 = vunpack.c.l.b16 %v368
      %v795 = vunpack.c.l.b16 %v369
      %v796 = vunpack.c.l.b16 %v370
      %v797 = vunpack.c.l.b16 %v371
      %v798 = vunpack.c.l.b16 %v372
      %v799 = vunpack.c.l.b16 %v373
      %v800 = vunpack.c.l.b16 %v374
      %v801 = vunpack.c.l.b16 %v375
      %v802 = vunpack.c.l.b16 %v376
      %v803 = vunpack.c.l.b16 %v377
      %v804 = vunpack.c.l.b16 %v378
      %v805 = vunpack.c.l.b16 %v379
      %v806 = vunpack.c.l.b16 %v380
      %v807 = vunpack.c.l.b16 %v381
      %v808 = vunpack.c.l.b16 %v382
      %v809 = vunpack.c.l.b16 %v383
      %v810 = vunpack.c.l.b16 %v384
      %v811 = vunpack.c.l.b16 %v385
      %v812 = vunpack.c.l.b16 %v386
      %v813 = vunpack.c.l.b16 %v387
      %v814 = vunpack.c.l.b16 %v388
      %v815 = vunpack.c.l.b16 %v389
      %v816 = vunpack.c.l.b16 %v390
      %v817 = vunpack.c.l.b16 %v391
      %v818 = vunpack.c.l.b16 %v392
      %v819 = vunpack.c.l.b16 %v393
      %v820 = vunpack.c.l.b16 %v394
      %v821 = vunpack.c.l.b16 %v395
      %v822 = vunpack.c.l.b16 %v396
      %v823 = vunpack.c.l.b16 %v397
      %v824 = vunpack.c.l.b16 %v398
      %v825 = vunpack.c.l.b16 %v399
      %v826 = vunpack.c.l.b16 %v400
      %v827 = vunpack.c.l.b16 %v401
      %v828 = vunpack.c.l.b16 %v402
      %v829 = vunpack.c.l.b16 %v403
      %v830 = vunpack.c.l.b16 %v404
      %v831 = vunpack.c.l.b16 %v405
      %v832 = vunpack.c.l.b16 %v406
      %v833 = vunpack.c.l.b16 %v407
      %v834 = vunpack.c.l.b16 %v408
      %v835 = vunpack.c.l.b16 %v409
      %v836 = vunpack.c.l.b16 %v410
      %v837 = vunpack.c.l.b16 %v411
      %v838 = vunpack.c.l.b16 %v412
      %v839 = vunpack.c.l.b16 %v413
      %v840 = vunpack.c.l.b16 %v414
      %v841 = vunpack.c.l.b16 %v415
      %v842 = vunpack.c.l.b16 %v416
      %v843 = vunpack.c.l.b16 %v417
      %v844 = vunpack.c.l.b16 %v418
      %v845 = vunpack.c.l.b16 %v419
      %v846 = vunpack.c.l.b16 %v420
      %v847 = vunpack.c.l.b16 %v421
      %v848 = vunpack.c.l.b16 %v422
      %v849 = vunpack.c.l.b16 %v423
      %v850 = vunpack.c.l.b16 %v424
      %v851 = vunpack.c.l.b16 %v425
      %v852 = vunpack.c.l.b16 %v426
      %v853 = vunpack.c.l.b16 %v427
      %v854 = vunpack.c.l.b16 %v428
      %v855 = vunpack.c.l.b16 %v429
      %v856 = vunpack.c.l.b16 %v430
      %v857 = vunpack.c.l.b16 %v431
      %v858 = vunpack.c.l.b16 %v432
      %v859 = vunpack.c.l.b16 %v433
      %v860 = vunpack.c.l.b16 %v434
      %v861 = vunpack.c.l.b16 %v435
      %v862 = vunpack.c.l.b16 %v436
      %v863 = vunpack.c.l.b16 %v437
      %v864 = vunpack.c.l.b16 %v438
      %v865 = vunpack.c.l.b16 %v439
      %v866 = vunpack.c.l.b16 %v440
      %v867 = vunpack.c.l.b16 %v441
      %v868 = vunpack.c.l.b16 %v442
      %v869 = vunpack.c.l.b16 %v443
      %v870 = vunpack.c.l.b16 %v444
      %v871 = vunpack.c.l.b16 %v445
      %v872 = vunpack.c.l.b16 %v446
      %v873 = vunpack.c.l.b16 %v447
      %v874 = vunpack.c.l.b16 %v448
      %v875 = vunpack.c.l.b16 %v449
      %v876 = vunpack.c.l.b16 %v450
      %v877 = vunpack.c.l.b16 %v451
      %v878 = vunpack.c.l.b16 %v452
      %v879 = vunpack.c.l.b16 %v453
      %v880 = vunpack.c.l.b16 %v454
      %v881 = vunpack.c.l.b16 %v455
      %v882 = vunpack.c.l.b16 %v456
      %v883 = vunpack.c.l.b16 %v457
      %v884 = vunpack.c.l.b16 %v458
      %v885 = vunpack.c.l.b16 %v459
      %v886 = vunpack.c.l.b16 %v460
      %v887 = vunpack.c.l.b16 %v461
      %v888 = vunpack.c.l.b16 %v462
      %v889 = vunpack.c.l.b16 %v463
      %v890 = vpack.c.b16 %v699, %v698
      %v891 = vpack.c.b16 %v701, %v700
      %v892 = vpack.c.b16 %v703, %v702
      %v893 = vpack.c.b16 %v705, %v704
      %v894 = vpack.c.b16 %v707, %v706
      %v895 = vpack.c.b16 %v709, %v708
      %v896 = vpack.c.b16 %v711, %v710
      %v897 = vpack.c.b16 %v713, %v712
      %v898 = vpack.c.b16 %v715, %v714
      %v899 = vpack.c.b16 %v717, %v716
      %v900 = vpack.c.b16 %v719, %v718
      %v901 = vpack.c.b16 %v721, %v720
      %v902 = vpack.c.b16 %v723, %v722
      %v903 = vpack.c.b16 %v725, %v724
      %v904 = vpack.c.b16 %v727, %v726
      %v905 = vpack.c.b16 %v729, %v728
      %v906 = vpack.c.b16 %v731, %v730
      %v907 = vpack.c.b16 %v733, %v732
      %v908 = vpack.c.b16 %v735, %v734
      %v909 = vpack.c.b16 %v737, %v736
      %v910 = vpack.c.b16 %v739, %v738
      %v911 = vpack.c.b16 %v741, %v740
      %v912 = vpack.c.b16 %v743, %v742
      %v913 = vpack.c.b16 %v745, %v744
      %v914 = vpack.c.b16 %v747, %v746
      %v915 = vpack.c.b16 %v749, %v748
      %v916 = vpack.c.b16 %v751, %v750
      %v917 = vpack.c.b16 %v753, %v752
      %v918 = vpack.c.b16 %v755, %v754
      %v919 = vpack.c.b16 %v757, %v756
      %v920 = vpack.c.b16 %v759, %v758
      %v921 = vpack.c.b16 %v761, %v760
      %v922 = vpack.c.b16 %v763, %v762
      %v923 = vpack.c.b16 %v765, %v764
      %v924 = vpack.c.b16 %v767, %v766
      %v925 = vpack.c.b16 %v769, %v768
      %v926 = vpack.c.b16 %v771, %v770
      %v927 = vpack.c.b16 %v773, %v772
      %v928 = vpack.c.b16 %v775, %v774
      %v929 = vpack.c.b16 %v777, %v776
      %v930 = vpack.c.b16 %v779, %v778
      %v931 = vpack.c.b16 %v781, %v780
      %v932 = vpack.c.b16 %v783, %v782
      %v933 = vpack.c.b16 %v785, %v784
      %v934 = vpack.c.b16 %v787, %v786
      %v935 = vpack.c.b16 %v789, %v788
      %v936 = vpack.c.b16 %v791, %v790
      %v937 = vpack.c.b16 %v793, %v792
      %v938 = vpack.c.b16 %v795, %v794
      %v939 = vpack.c.b16 %v797, %v796
      %v940 = vpack.c.b16 %v799, %v798
      %v941 = vpack.c.b16 %v801, %v800
      %v942 = vpack.c.b16 %v803, %v802
      %v943 = vpack.c.b16 %v805, %v804
      %v944 = vpack.c.b16 %v807, %v806
      %v945 = vpack.c.b16 %v809, %v808
      %v946 = vpack.c.b16 %v811, %v810
      %v947 = vpack.c.b16 %v813, %v812
      %v948 = vpack.c.b16 %v815, %v814
      %v949 = vpack.c.b16 %v817, %v816
      %v950 = vpack.c.b16 %v819, %v818
      %v951 = vpack.c.b16 %v821, %v820
      %v952 = vpack.c.b16 %v823, %v822
      %v953 = vpack.c.b16 %v825, %v824
      %v954 = vpack.c.b16 %v827, %v826
      %v955 = vpack.c.b16 %v829, %v828
      %v956 = vpack.c.b16 %v831, %v830
      %v957 = vpack.c.b16 %v833, %v832
      %v958 = vpack.c.b16 %v835, %v834
      %v959 = vpack.c.b16 %v837, %v836
      %v960 = vpack.c.b16 %v839, %v838
      %v961 = vpack.c.b16 %v841, %v840
      %v962 = vpack.c.b16 %v843, %v842
      %v963 = vpack.c.b16 %v845, %v844
      %v964 = vpack.c.b16 %v847, %v846
      %v965 = vpack.c.b16 %v849, %v848
      %v966 = vpack.c.b16 %v851, %v850
      %v967 = vpack.c.b16 %v853, %v852
      %v968 = vpack.c.b16 %v855, %v854
      %v969 = vpack.c.b16 %v857, %v856
      %v970 = vpack.c.b16 %v859, %v858
      %v971 = vpack.c.b16 %v861, %v860
      %v972 = vpack.c.b16 %v863, %v862
      %v973 = vpack.c.b16 %v865, %v864
      %v974 = vpack.c.b16 %v867, %v866
      %v975 = vpack.c.b16 %v869, %v868
      %v976 = vpack.c.b16 %v871, %v870
      %v977 = vpack.c.b16 %v873, %v872
      %v978 = vpack.c.b16 %v875, %v874
      %v979 = vpack.c.b16 %v877, %v876
      %v980 = vpack.c.b16 %v879, %v878
      %v981 = vpack.c.b16 %v881, %v880
      %v982 = vpack.c.b16 %v883, %v882
      %v983 = vpack.c.b16 %v885, %v884
      %v984 = vpack.c.b16 %v887, %v886
      %v985 = vpack.c.b16 %v889, %v888
      %1082 = vmatprep.subr.bf16.mxu0 0
      %1083 = vmatpush1.bf16.msra.mxu0 %v897
      %1084 = vmatprep.subr.bf16.mxu0 0
      %1085 = vmatpush1.bf16.msra.mxu0 %v896
      %1086 = vmatprep.subr.bf16.mxu0 0
      %1087 = vmatpush1.bf16.msra.mxu0 %v895
      %1088 = vmatprep.subr.bf16.mxu0 0
      %1089 = vmatpush1.bf16.msra.mxu0 %v894
      %1090 = vmatprep.subr.bf16.mxu0 0
      %1091 = vmatpush1.bf16.msra.mxu0 %v893
      %1092 = vmatprep.subr.bf16.mxu0 0
      %1093 = vmatpush1.bf16.msra.mxu0 %v892
      %1094 = vmatprep.subr.bf16.mxu0 0
      %1095 = vmatpush1.bf16.msra.mxu0 %v891
      %1096 = vmatprep.subr.bf16.mxu0 0
      %1097 = vmatpush1.bf16.msra.mxu0 %v890
      %1098 = vmatprep.subr.bf16.mxu0 0
      %1099 = vmatpush2.bf16.msra.mxu0 %v905
      %1100 = vmatprep.subr.bf16.mxu0 0
      %1101 = vmatpush2.bf16.msra.mxu0 %v904
      %1102 = vmatprep.subr.bf16.mxu0 0
      %1103 = vmatpush2.bf16.msra.mxu0 %v903
      %1104 = vmatprep.subr.bf16.mxu0 0
      %1105 = vmatpush2.bf16.msra.mxu0 %v902
      %1106 = vmatprep.subr.bf16.mxu0 0
      %1107 = vmatpush2.bf16.msra.mxu0 %v901
      %1108 = vmatprep.subr.bf16.mxu0 0
      %1109 = vmatpush2.bf16.msra.mxu0 %v900
      %1110 = vmatprep.subr.bf16.mxu0 0
      %1111 = vmatpush2.bf16.msra.mxu0 %v899
      %1112 = vmatprep.subr.bf16.mxu0 0
      %1113 = vmatpush2.bf16.msra.mxu0 %v898
      %1114 = vmatprep.mubr.bf16.mxu0 %v483
      %1115 = vmatmul.mubr.bf16.gmra.mxu0 %v482
      %v1116 = vpop.f32.mrf.mxu0
      %v1117 = vadd.f32 0.0, %v1116
      %v1118 = vpop.f32.mrf.mxu0
      %v1119 = vpop.f32.mrf.mxu0
      %v1120 = vpop.f32.mrf.mxu0
      %1121 = vdwg.mxu0
      %1122 = vmatprep.subr.bf16.mxu0 0
      %1123 = vmatpush1.bf16.msra.mxu0 %v913
      %1124 = vmatprep.subr.bf16.mxu0 0
      %1125 = vmatpush1.bf16.msra.mxu0 %v912
      %1126 = vmatprep.subr.bf16.mxu0 0
      %1127 = vmatpush1.bf16.msra.mxu0 %v911
      %1128 = vmatprep.subr.bf16.mxu0 0
      %1129 = vmatpush1.bf16.msra.mxu0 %v910
      %1130 = vmatprep.subr.bf16.mxu0 0
      %1131 = vmatpush1.bf16.msra.mxu0 %v909
      %1132 = vmatprep.subr.bf16.mxu0 0
      %1133 = vmatpush1.bf16.msra.mxu0 %v908
      %1134 = vmatprep.subr.bf16.mxu0 0
      %1135 = vmatpush1.bf16.msra.mxu0 %v907
      %1136 = vmatprep.subr.bf16.mxu0 0
      %1137 = vmatpush1.bf16.msra.mxu0 %v906
      %1138 = vmatprep.subr.bf16.mxu0 0
      %1139 = vmatpush2.bf16.msra.mxu0 %v921
      %1140 = vmatprep.subr.bf16.mxu0 0
      %1141 = vmatpush2.bf16.msra.mxu0 %v920
      %1142 = vmatprep.subr.bf16.mxu0 0
      %1143 = vmatpush2.bf16.msra.mxu0 %v919
      %1144 = vmatprep.subr.bf16.mxu0 0
      %1145 = vmatpush2.bf16.msra.mxu0 %v918
      %1146 = vmatprep.subr.bf16.mxu0 0
      %1147 = vmatpush2.bf16.msra.mxu0 %v917
      %1148 = vmatprep.subr.bf16.mxu0 0
      %1149 = vmatpush2.bf16.msra.mxu0 %v916
      %1150 = vmatprep.subr.bf16.mxu0 0
      %1151 = vmatpush2.bf16.msra.mxu0 %v915
      %1152 = vmatprep.subr.bf16.mxu0 0
      %1153 = vmatpush2.bf16.msra.mxu0 %v914
      %1154 = vmatprep.mubr.bf16.mxu0 %v485
      %1155 = vmatmul.mubr.bf16.gmra.mxu0 %v484
      %v1156 = vpop.f32.mrf.mxu0
      %v1157 = vadd.f32 %v1117, %v1156
      %v1158 = vpop.f32.mrf.mxu0
      %v1159 = vpop.f32.mrf.mxu0
      %v1160 = vpop.f32.mrf.mxu0
      %1161 = vdwg.mxu0
      %1162 = vmatprep.subr.bf16.mxu0 0
      %1163 = vmatpush1.bf16.msra.mxu0 %v929
      %1164 = vmatprep.subr.bf16.mxu0 0
      %1165 = vmatpush1.bf16.msra.mxu0 %v928
      %1166 = vmatprep.subr.bf16.mxu0 0
      %1167 = vmatpush1.bf16.msra.mxu0 %v927
      %1168 = vmatprep.subr.bf16.mxu0 0
      %1169 = vmatpush1.bf16.msra.mxu0 %v926
      %1170 = vmatprep.subr.bf16.mxu0 0
      %1171 = vmatpush1.bf16.msra.mxu0 %v925
      %1172 = vmatprep.subr.bf16.mxu0 0
      %1173 = vmatpush1.bf16.msra.mxu0 %v924
      %1174 = vmatprep.subr.bf16.mxu0 0
      %1175 = vmatpush1.bf16.msra.mxu0 %v923
      %1176 = vmatprep.subr.bf16.mxu0 0
      %1177 = vmatpush1.bf16.msra.mxu0 %v922
      %1178 = vmatprep.subr.bf16.mxu0 0
      %1179 = vmatpush2.bf16.msra.mxu0 %v937
      %1180 = vmatprep.subr.bf16.mxu0 0
      %1181 = vmatpush2.bf16.msra.mxu0 %v936
      %1182 = vmatprep.subr.bf16.mxu0 0
      %1183 = vmatpush2.bf16.msra.mxu0 %v935
      %1184 = vmatprep.subr.bf16.mxu0 0
      %1185 = vmatpush2.bf16.msra.mxu0 %v934
      %1186 = vmatprep.subr.bf16.mxu0 0
      %1187 = vmatpush2.bf16.msra.mxu0 %v933
      %1188 = vmatprep.subr.bf16.mxu0 0
      %1189 = vmatpush2.bf16.msra.mxu0 %v932
      %1190 = vmatprep.subr.bf16.mxu0 0
      %1191 = vmatpush2.bf16.msra.mxu0 %v931
      %1192 = vmatprep.subr.bf16.mxu0 0
      %1193 = vmatpush2.bf16.msra.mxu0 %v930
      %1194 = vmatprep.mubr.bf16.mxu0 %v487
      %1195 = vmatmul.mubr.bf16.gmra.mxu0 %v486
      %v1196 = vpop.f32.mrf.mxu0
      %v1197 = vadd.f32 %v1157, %v1196
      %v1198 = vpop.f32.mrf.mxu0
      %v1199 = vpop.f32.mrf.mxu0
      %v1200 = vpop.f32.mrf.mxu0
      %1201 = vdwg.mxu0
      %1202 = vmatprep.subr.bf16.mxu0 0
      %1203 = vmatpush1.bf16.msra.mxu0 %v945
      %1204 = vmatprep.subr.bf16.mxu0 0
      %1205 = vmatpush1.bf16.msra.mxu0 %v944
      %1206 = vmatprep.subr.bf16.mxu0 0
      %1207 = vmatpush1.bf16.msra.mxu0 %v943
      %1208 = vmatprep.subr.bf16.mxu0 0
      %1209 = vmatpush1.bf16.msra.mxu0 %v942
      %1210 = vmatprep.subr.bf16.mxu0 0
      %1211 = vmatpush1.bf16.msra.mxu0 %v941
      %1212 = vmatprep.subr.bf16.mxu0 0
      %1213 = vmatpush1.bf16.msra.mxu0 %v940
      %1214 = vmatprep.subr.bf16.mxu0 0
      %1215 = vmatpush1.bf16.msra.mxu0 %v939
      %1216 = vmatprep.subr.bf16.mxu0 0
      %1217 = vmatpush1.bf16.msra.mxu0 %v938
      %1218 = vmatprep.subr.bf16.mxu0 0
      %1219 = vmatpush2.bf16.msra.mxu0 %v953
      %1220 = vmatprep.subr.bf16.mxu0 0
      %1221 = vmatpush2.bf16.msra.mxu0 %v952
      %1222 = vmatprep.subr.bf16.mxu0 0
      %1223 = vmatpush2.bf16.msra.mxu0 %v951
      %1224 = vmatprep.subr.bf16.mxu0 0
      %1225 = vmatpush2.bf16.msra.mxu0 %v950
      %1226 = vmatprep.subr.bf16.mxu0 0
      %1227 = vmatpush2.bf16.msra.mxu0 %v949
      %1228 = vmatprep.subr.bf16.mxu0 0
      %1229 = vmatpush2.bf16.msra.mxu0 %v948
      %1230 = vmatprep.subr.bf16.mxu0 0
      %1231 = vmatpush2.bf16.msra.mxu0 %v947
      %1232 = vmatprep.subr.bf16.mxu0 0
      %1233 = vmatpush2.bf16.msra.mxu0 %v946
      %1234 = vmatprep.mubr.bf16.mxu0 %v489
      %1235 = vmatmul.mubr.bf16.gmra.mxu0 %v488
      %v1236 = vpop.f32.mrf.mxu0
      %v1237 = vadd.f32 %v1197, %v1236
      %v1238 = vpop.f32.mrf.mxu0
      %v1239 = vpop.f32.mrf.mxu0
      %v1240 = vpop.f32.mrf.mxu0
      %1241 = vdwg.mxu0
      %1242 = vmatprep.subr.bf16.mxu0 0
      %1243 = vmatpush1.bf16.msra.mxu0 %v961
      %1244 = vmatprep.subr.bf16.mxu0 0
      %1245 = vmatpush1.bf16.msra.mxu0 %v960
      %1246 = vmatprep.subr.bf16.mxu0 0
      %1247 = vmatpush1.bf16.msra.mxu0 %v959
      %1248 = vmatprep.subr.bf16.mxu0 0
      %1249 = vmatpush1.bf16.msra.mxu0 %v958
      %1250 = vmatprep.subr.bf16.mxu0 0
      %1251 = vmatpush1.bf16.msra.mxu0 %v957
      %1252 = vmatprep.subr.bf16.mxu0 0
      %1253 = vmatpush1.bf16.msra.mxu0 %v956
      %1254 = vmatprep.subr.bf16.mxu0 0
      %1255 = vmatpush1.bf16.msra.mxu0 %v955
      %1256 = vmatprep.subr.bf16.mxu0 0
      %1257 = vmatpush1.bf16.msra.mxu0 %v954
      %1258 = vmatprep.subr.bf16.mxu0 0
      %1259 = vmatpush2.bf16.msra.mxu0 %v969
      %1260 = vmatprep.subr.bf16.mxu0 0
      %1261 = vmatpush2.bf16.msra.mxu0 %v968
      %1262 = vmatprep.subr.bf16.mxu0 0
      %1263 = vmatpush2.bf16.msra.mxu0 %v967
      %1264 = vmatprep.subr.bf16.mxu0 0
      %1265 = vmatpush2.bf16.msra.mxu0 %v966
      %1266 = vmatprep.subr.bf16.mxu0 0
      %1267 = vmatpush2.bf16.msra.mxu0 %v965
      %1268 = vmatprep.subr.bf16.mxu0 0
      %1269 = vmatpush2.bf16.msra.mxu0 %v964
      %1270 = vmatprep.subr.bf16.mxu0 0
      %1271 = vmatpush2.bf16.msra.mxu0 %v963
      %1272 = vmatprep.subr.bf16.mxu0 0
      %1273 = vmatpush2.bf16.msra.mxu0 %v962
      %1274 = vmatprep.mubr.bf16.mxu0 %v491
      %1275 = vmatmul.mubr.bf16.gmra.mxu0 %v490
      %v1276 = vpop.f32.mrf.mxu0
      %v1277 = vadd.f32 %v1237, %v1276
      %v1278 = vpop.f32.mrf.mxu0
      %v1279 = vpop.f32.mrf.mxu0
      %v1280 = vpop.f32.mrf.mxu0
      %1281 = vdwg.mxu0
      %1282 = vmatprep.subr.bf16.mxu0 0
      %1283 = vmatpush1.bf16.msra.mxu0 %v977
      %1284 = vmatprep.subr.bf16.mxu0 0
      %1285 = vmatpush1.bf16.msra.mxu0 %v976
      %1286 = vmatprep.subr.bf16.mxu0 0
      %1287 = vmatpush1.bf16.msra.mxu0 %v975
      %1288 = vmatprep.subr.bf16.mxu0 0
      %1289 = vmatpush1.bf16.msra.mxu0 %v974
      %1290 = vmatprep.subr.bf16.mxu0 0
      %1291 = vmatpush1.bf16.msra.mxu0 %v973
      %1292 = vmatprep.subr.bf16.mxu0 0
      %1293 = vmatpush1.bf16.msra.mxu0 %v972
      %1294 = vmatprep.subr.bf16.mxu0 0
      %1295 = vmatpush1.bf16.msra.mxu0 %v971
      %1296 = vmatprep.subr.bf16.mxu0 0
      %1297 = vmatpush1.bf16.msra.mxu0 %v970
      %1298 = vmatprep.subr.bf16.mxu0 0
      %1299 = vmatpush2.bf16.msra.mxu0 %v985
      %1300 = vmatprep.subr.bf16.mxu0 0
      %1301 = vmatpush2.bf16.msra.mxu0 %v984
      %1302 = vmatprep.subr.bf16.mxu0 0
      %1303 = vmatpush2.bf16.msra.mxu0 %v983
      %1304 = vmatprep.subr.bf16.mxu0 0
      %1305 = vmatpush2.bf16.msra.mxu0 %v982
      %1306 = vmatprep.subr.bf16.mxu0 0
      %1307 = vmatpush2.bf16.msra.mxu0 %v981
      %1308 = vmatprep.subr.bf16.mxu0 0
      %1309 = vmatpush2.bf16.msra.mxu0 %v980
      %1310 = vmatprep.subr.bf16.mxu0 0
      %1311 = vmatpush2.bf16.msra.mxu0 %v979
      %1312 = vmatprep.subr.bf16.mxu0 0
      %1313 = vmatpush2.bf16.msra.mxu0 %v978
      %1314 = vmatprep.mubr.bf16.mxu0 %v493
      %1315 = vmatmul.mubr.bf16.gmra.mxu0 %v492
      %v1316 = vpop.f32.mrf.mxu0
      %v1317 = vadd.f32 %v1277, %v1316
      %v1318 = vpop.f32.mrf.mxu0
      %v1319 = vpop.f32.mrf.mxu0
      %v1320 = vpop.f32.mrf.mxu0
      %1321 = vdwg.mxu0
      %v1322 = vadd.f32 %v265, %v1317
      %1323 = vst [vmem:[#allocation2] sm:$0xff] %v1322
      %p1324 = scmp.eq.s32.totalorder %s21, 1
      // Predicated region
      $region37: #{discriminator_p_forward.11} parent=31 // pred_check
        %p1325 = pneg %p1324
      $region38: #{discriminator_p_forward.11} parent=31 // pred_check_branch
        %1327 = sbr.rel (%p1325) target = $region40
      $region39: #{discriminator_p_forward.11} parent=31 // pred_region
        %v1328 = vld [vmem:[#allocation2] sm:$0xff]
        %v1329 = vld [vmem:[%s251] sm:$0x1]
        %v1331 = vlaneseq
        %v1332 = vshrl.u32 %v1331, 7
        %v1333 = vsub.s32 0, %v1332
        %v1334 = vrot.slane %v1329, %v1333
        %v1336 = vadd.f32 %v1328, %v1334
        %1337 = vst [vmem:[%s258] sm:$0xff] %v1336
      $region40: #{discriminator_p_forward.11} parent=31 // pred_fallthru
        _
      %p1338 = scmp.lt.s32.totalorder %s19, 0
      %s1339 = scalar_select %p1338, %s19, 0
      %p1340 = scmp.lt.s32.totalorder %s20, 0
      %s1341 = scalar_select %p1340, %s20, 0
      %s1342 = sadd.s32 %s1341, %s1339
      %s1343 = smul.addr %s1342, 8
      %s1344 = scalar_lea.vmem %s3, %s1343
      // Predicated region
      $region41: #{discriminator_p_forward.11} parent=31 // pred_check
        %p1345 = pneg %p135
      $region42: #{discriminator_p_forward.11} parent=31 // pred_check_branch
        %1347 = sbr.rel (%p1345) target = $region44
      $region43: #{discriminator_p_forward.11} parent=31 // pred_region
        _
      $region44: #{discriminator_p_forward.11} parent=31 // pred_fallthru
        _
      // Predicated region
      $region45: #{discriminator_p_forward.11} parent=31 // pred_check
        %p1348 = pneg %p135
      $region46: #{discriminator_p_forward.11} parent=31 // pred_check_branch
        %1350 = sbr.rel (%p1348) target = $region48
      $region47: #{discriminator_p_forward.11} parent=31 // pred_region
        %p1351 = scmp.lt.s32.totalorder %s19, 0
        %s1352 = scalar_select %p1351, %s19, 0
        %p1353 = scmp.lt.s32.totalorder %s20, 0
        %s1354 = scalar_select %p1353, %s20, 0
        %s1355 = sadd.s32 %s1354, %s1352
        %s1356 = smul.addr %s1355, 8
        %s1357 = scalar_lea.vmem %s3, %s1356
      $region48: #{discriminator_p_forward.11} parent=31 // pred_fallthru
        _
    $region32: #{discriminator_p_forward.11} parent=5 // pred_fallthru
      _
    %p1358 = scmp.le.s32.totalorder 2, %s9
    // Predicated region
    $region49: #{discriminator_p_forward.11} parent=5 // pred_check
      %p1359 = pneg %p1358
    $region50: #{discriminator_p_forward.11} parent=5 // pred_check_branch
      %1361 = sbr.rel (%p1359) target = $region52
    $region51: #{discriminator_p_forward.11} parent=5 // pred_region
      %s1362 = ssub.s32 %s9, 2
    $region52: #{discriminator_p_forward.11} parent=5 // pred_fallthru
      _
  $region6: #{discriminator_p_forward.11} parent=0 // loop_footer
    %s13 = sadd.s32 1, %s9
  $region7: #{discriminator_p_forward.11} parent=0 // loop_footer_branch
    %8 = sbr.rel target = $region3
  $region8: #{discriminator_p_forward.11} parent=0 // loop_exit
    _

</llo_original>
